<compile_context>
chip_gen: v7x
topology: tpu7x:2x2x1
jax: 0.10.0
libtpu: 0.0.40
codegen_flags: <defaults>
</compile_context>

<pallas_src>
import numpy as np
import jax
import jax.numpy as jnp
from jax.experimental import pallas as pl
from jax.experimental.pallas import tpu as pltpu

_VMEM_LIMIT = 32 * 1024 * 1024   # above v5e's 16 MiB scoped default, safe on v7x (64 MiB)
_TN_TARGET = 1024                # point tile (multiple of 256 for v6e/v7x MXU)
_NUM_HEADS = 4


# ---------------------------------------------------------------------------
# shared helpers (used identically by kernels and the pure-JAX reference)
# ---------------------------------------------------------------------------
def _mm(a, w):
    """Matmul in the weight's storage dtype (bf16 for heavy layers) with f32 accumulation."""
    return jnp.dot(a.astype(w.dtype), w, preferred_element_type=jnp.float32)


def _const_spec(arr):
    """Whole-array block whose index map is constant across the grid (fetched once)."""
    zeros = (0,) * arr.ndim
    return pl.BlockSpec(arr.shape, lambda *_: zeros)


# ---------------------------------------------------------------------------
# Pallas kernels
# ---------------------------------------------------------------------------
def _make_point_kernel(tn, n_valid, nt, nt_h, per_batch_w1):
    """Point MLP (d->64->128->1024) over a native-layout (d, tn) tile + streamed row max.

    The 1024-wide bias add is hoisted into a per-accumulator finalize and the
    ReLU of the STN pass is hoisted into the FC kernel (both commute with the
    row max), so interior tiles do only matmuls + the sublane max.
    """
    any_mask = (n_valid % tn) != 0

    def kernel(x_ref, w1_ref, b1_ref, w2_ref, b2_ref, w3_ref, b3_ref, gmax_ref):
        h_idx = pl.program_id(1)
        n_idx = pl.program_id(2)

        x = x_ref[0]                                               # (d, tn) native layout
        w1 = w1_ref[0] if per_batch_w1 else w1_ref[...]            # (d, 64)
        # conv1: contract the d axis directly (no wrapper-side transpose of x).
        h = jax.lax.dot_general(x, w1, (((0,), (0,)), ((), ())),
                                preferred_element_type=jnp.float32)            # (tn, 64)
        h = jnp.maximum(h + b1_ref[...], 0.0)
        h = jnp.maximum(_mm(h, w2_ref[...]) + b2_ref[...], 0.0)                # (tn, 128)
        h = _mm(h, w3_ref[...])                                                # (tn, 1024) bias/ReLU hoisted

        @pl.when(n_idx == 0)
        def _():
            gmax_ref[...] = jnp.full(gmax_ref.shape, -jnp.inf, gmax_ref.dtype)

        # Global tile index this block was loaded from (clamped in the index_map
        # for duplicated tiles when nt is odd; max is idempotent).
        t_idx = jnp.minimum(h_idx * nt_h + n_idx, nt - 1)
        if any_mask:
            needs_mask = (t_idx + 1) * tn > n_valid

            @pl.when(jnp.logical_not(needs_mask))
            def _():
                gmax_ref[0, 0] = jnp.maximum(gmax_ref[0, 0],
                                             jnp.max(h, axis=0, keepdims=True))

            @pl.when(needs_mask)
            def _():
                row = t_idx * tn + jax.lax.broadcasted_iota(jnp.int32, (tn, 1), 0)
                hm = jnp.where(row < n_valid, h, -jnp.inf)
                gmax_ref[0, 0] = jnp.maximum(gmax_ref[0, 0],
                                             jnp.max(hm, axis=0, keepdims=True))
        else:
            gmax_ref[0, 0] = jnp.maximum(gmax_ref[0, 0],
                                         jnp.max(h, axis=0, keepdims=True))

        # Finalize: add the hoisted 1024-wide bias once per (batch, half).
        @pl.when(n_idx == nt_h - 1)
        def _():
            gmax_ref[0, 0] = gmax_ref[0, 0] + b3_ref[...]

    return kernel


def _stn_fc_kernel(g_ref, sf1w_ref, sf1b_ref, sf2w_ref, sf2b_ref,
                   sf3w_ref, sf3b_ref, eye_ref, w1k_ref, t_ref, w1e_ref):
    """STN3d FC head (batched, M = B) fused with the trans @ w1 fold."""
    # Combine per-half partial maxes, then apply the ReLU hoisted out of the
    # point kernel (relu(max(x)) == max(relu(x)), exact).
    g = g_ref[:, 0, 0, :]
    for i in range(1, g_ref.shape[1]):                             # static (nh <= 2)
        g = jnp.maximum(g, g_ref[:, i, 0, :])
    g = jnp.maximum(g, 0.0)                                        # (B, 1024)
    g = jnp.maximum(_mm(g, sf1w_ref[...]) + sf1b_ref[...], 0.0)    # (B, 512)
    g = jnp.maximum(_mm(g, sf2w_ref[...]) + sf2b_ref[...], 0.0)    # (B, 256)
    t = (jnp.dot(g, sf3w_ref[...], preferred_element_type=jnp.float32)
         + sf3b_ref[...] + eye_ref[...])                           # (B, d*d)
    t_ref[...] = t
    # Fused fold:  w1_eff = trans @ w1  ==  t @ kron(I_d, w1)  -> (B, d*64).
    w1e_ref[...] = jnp.dot(t, w1k_ref[...], preferred_element_type=jnp.float32)


def _cls_head_kernel(f_ref, w1_ref, b1_ref, w2_ref, b2_ref, w3_ref, b3_ref, out_ref):
    """PointNetCls classifier head (fc1/bn1/relu -> fc2/bn2/relu -> fc3 -> log_softmax)."""
    f = f_ref[:, 0, 0, :]
    for i in range(1, f_ref.shape[1]):                             # combine halves (static)
        f = jnp.maximum(f, f_ref[:, i, 0, :])                      # (B, 1024)
    h = jnp.maximum(jnp.dot(f, w1_ref[...],
                            preferred_element_type=jnp.float32) + b1_ref[...], 0.0)
    # TODO(synk): nn.Dropout(p=0.3) is eval-mode identity here.
    h = jnp.maximum(jnp.dot(h, w2_ref[...],
                            preferred_element_type=jnp.float32) + b2_ref[...], 0.0)
    z = jnp.dot(h, w3_ref[...], preferred_element_type=jnp.float32) + b3_ref[...]
    m = jnp.max(z, axis=-1, keepdims=True)
    out_ref[...] = z - m - jnp.log(jnp.sum(jnp.exp(z - m), axis=-1, keepdims=True))


# ---------------------------------------------------------------------------
# Pallas wrappers
# ---------------------------------------------------------------------------
def pointnetfeat_pallas(x_bcn, p):
    """x_bcn: (B, d, N) float32 in PyTorch NCW layout (consumed natively, no transpose/pad).

    Returns (feat (B, nh, 1, 1024) partial maxes, trans (B, d, d), None).
    """
    B, d, n_pts = x_bcn.shape
    x = x_bcn.astype(jnp.float32)

    tn = _TN_TARGET if n_pts > _TN_TARGET else n_pts
    nt = int(pl.cdiv(n_pts, tn))
    # Split the point axis into two parallel halves only when batch parallelism
    # alone would leave a v7x TensorCore idle (B odd); no-op on v5e/v6e.
    nh = 2 if (nt >= 2 and B % 2 == 1) else 1
    nt_h = int(pl.cdiv(nt, nh))

    x_spec = pl.BlockSpec(
        (1, d, tn), lambda b, h, n: (b, 0, jnp.minimum(h * nt_h + n, nt - 1)))
    gmax_spec = pl.BlockSpec((1, 1, 1, 1024), lambda b, h, n: (b, h, 0, 0))
    gmax_shape = jax.ShapeDtypeStruct((B, nh, 1, 1024), jnp.float32)
    pipe_params = pltpu.CompilerParams(
        dimension_semantics=("parallel", "parallel", "arbitrary"),
        vmem_limit_bytes=_VMEM_LIMIT)

    # ---- pass 1: STN point MLP + streamed global max over points -----------
    stn_w = [p["sw1"], p["sb1"], p["sw2"], p["sb2"], p["sw3"], p["sb3"]]
    g = pl.pallas_call(
        _make_point_kernel(tn, n_pts, nt, nt_h, per_batch_w1=False),
        grid=(B, nh, nt_h),
        in_specs=[x_spec] + [_const_spec(a) for a in stn_w],
        out_specs=gmax_spec,
        out_shape=gmax_shape,
        compiler_params=pipe_params,
    )(x, *stn_w)

    # ---- STN FC head (M = B) fused with the trans @ w1 fold ----------------
    eye = jnp.eye(d, dtype=jnp.float32).reshape(1, d * d)
    w1_kron = jnp.kron(jnp.eye(d, dtype=jnp.float32), p["w1"])     # (d*d, d*64), tiny
    fc_in = [g, p["sf1w"], p["sf1b"], p["sf2w"], p["sf2b"],
             p["sf3w"], p["sf3b"], eye, w1_kron]
    t9, w1e_flat = pl.pallas_call(
        _stn_fc_kernel,
        grid=(1,),
        in_specs=[_const_spec(a) for a in fc_in],
        out_specs=(pl.BlockSpec((B, d * d), lambda *_: (0, 0)),
                   pl.BlockSpec((B, d * 64), lambda *_: (0, 0))),
        out_shape=(jax.ShapeDtypeStruct((B, d * d), jnp.float32),
                   jax.ShapeDtypeStruct((B, d * 64), jnp.float32)),
        compiler_params=pltpu.CompilerParams(dimension_semantics=("arbitrary",)),
    )(*fc_in)
    trans = t9.reshape(B, d, d)
    w1_eff = w1e_flat.reshape(B, d, 64)     # tiny (B, d*64) -> (B, d, 64)

    # ---- pass 2: feature MLP (trans folded into conv1) + streamed max ------
    feat_w = [p["b1"], p["w2"], p["b2"], p["w3"], p["b3"]]
    feat = pl.pallas_call(
        _make_point_kernel(tn, n_pts, nt, nt_h, per_batch_w1=True),
        grid=(B, nh, nt_h),
        in_specs=[x_spec,
                  pl.BlockSpec((1, d, 64), lambda b, h, n: (b, 0, 0))]
                 + [_const_spec(a) for a in feat_w],
        out_specs=gmax_spec,
        out_shape=gmax_shape,
        compiler_params=pipe_params,
    )(x, w1_eff, *feat_w)
    return feat, trans, None       # trans_feat is None (feature_transform=False)


def pointnet_cls_head_pallas(feat, p):
    B = feat.shape[0]
    k = p["cb3"].shape[1]
    w = [p["cw1"], p["cb1"], p["cw2"], p["cb2"], p["cw3"], p["cb3"]]
    return pl.pallas_call(
        _cls_head_kernel,
        grid=(1,),
        in_specs=[_const_spec(feat)] + [_const_spec(a) for a in w],
        out_specs=pl.BlockSpec((B, k), lambda *_: (0, 0)),
        out_shape=jax.ShapeDtypeStruct((B, k), jnp.float32),
        compiler_params=pltpu.CompilerParams(dimension_semantics=("arbitrary",)),
    )(feat, *w)


# ---------------------------------------------------------------------------
# PointCloudTransformer (plain JAX glue, eval-mode dropout)
# ---------------------------------------------------------------------------
def _layer_norm(x, g, b, eps=1e-5):
    m = jnp.mean(x, axis=-1, keepdims=True)
    v = jnp.mean(jnp.square(x - m), axis=-1, keepdims=True)
    return (x - m) * jax.lax.rsqrt(v + eps) * g + b


def _mha(x, lp, num_heads):
    B, S, E = x.shape
    hd = E // num_heads
    q = x @ lp["wq"] + lp["bq"]
    k = x @ lp["wk"] + lp["bk"]
    v = x @ lp["wv"] + lp["bv"]
    split = lambda t: t.reshape(B, S, num_heads, hd).transpose(0, 2, 1, 3)
    q, k, v = split(q), split(k), split(v)
    att = jnp.einsum("bhqd,bhkd->bhqk", q, k) / float(np.sqrt(hd))
    att = jax.nn.softmax(att, axis=-1)
    o = jnp.einsum("bhqk,bhkd->bhqd", att, v)
    o = o.transpose(0, 2, 1, 3).reshape(B, S, E)
    return o @ lp["wo"] + lp["bo"]


def _encoder_layer(x, lp, num_heads):
    # PyTorch TransformerEncoderLayer, norm_first=False (post-norm); dropout = identity (eval).
    x = _layer_norm(x + _mha(x, lp, num_heads), lp["ln1_g"], lp["ln1_b"])
    h = jnp.maximum(x @ lp["wf1"] + lp["bf1"], 0.0)
    x = _layer_norm(x + h @ lp["wf2"] + lp["bf2"], lp["ln2_g"], lp["ln2_b"])
    return x


def transformer_forward(x_bcn, tp, num_heads=_NUM_HEADS):
    B, C, N = x_bcn.shape
    s = x_bcn.reshape(B, C * N, 1).astype(jnp.float32)        # view(B,1,-1).permute(0,2,1)
    h = s @ tp["fc_w"] + tp["fc_b"]                           # (B, C*N, 64)
    for lp in tp["layers"]:
        h = _encoder_layer(h, lp, num_heads)
    h = jnp.maximum(h @ tp["exp_w"] + tp["exp_b"], 0.0)       # (B, C*N, expand_ratio)
    return h.reshape(B, C, -1)                                # (B, C, N*expand_ratio)


# ---------------------------------------------------------------------------
# Full PointNetCls forward
# ---------------------------------------------------------------------------
def pointnetcls_forward(x_bcn, tparams, pparams):
    x_pts = transformer_forward(x_bcn, tparams)               # plain-JAX front end
    feat, trans, trans_feat = pointnetfeat_pallas(x_pts, pparams)
    logp = pointnet_cls_head_pallas(feat, pparams)
    return logp, trans, trans_feat


# ---------------------------------------------------------------------------
# Deterministic parameter construction (PyTorch-style uniform init, BN folded)
# ---------------------------------------------------------------------------
def _uniform_linear(key, fan_in, fan_out):
    kw, kb = jax.random.split(key)
    bound = 1.0 / np.sqrt(fan_in)
    w = jax.random.uniform(kw, (fan_in, fan_out), jnp.float32, -bound, bound)
    b = jax.random.uniform(kb, (1, fan_out), jnp.float32, -bound, bound)
    return w, b


def _fold_bn(w, b, eps=1e-5):
    # eval-mode fresh BN: gamma=1, beta=0, mean=0, var=1 -> pure scale 1/sqrt(1+eps)
    s = jnp.float32(1.0 / np.sqrt(1.0 + eps))
    return w * s, b * s


def make_pointnet_params(key, d, k):
    keys = jax.random.split(key, 12)
    p = {}
    # STN3d
    p["sw1"], p["sb1"] = _fold_bn(*_uniform_linear(keys[0], d, 64))
    p["sw2"], p["sb2"] = _fold_bn(*_uniform_linear(keys[1], 64, 128))
    p["sw3"], p["sb3"] = _fold_bn(*_uniform_linear(keys[2], 128, 1024))
    p["sf1w"], p["sf1b"] = _fold_bn(*_uniform_linear(keys[3], 1024, 512))
    p["sf2w"], p["sf2b"] = _fold_bn(*_uniform_linear(keys[4], 512, 256))
    p["sf3w"], p["sf3b"] = _uniform_linear(keys[5], 256, d * d)          # no BN on fc3
    # PointNetfeat convs
    p["w1"], p["b1"] = _fold_bn(*_uniform_linear(keys[6], d, 64))
    p["w2"], p["b2"] = _fold_bn(*_uniform_linear(keys[7], 64, 128))
    p["w3"], p["b3"] = _fold_bn(*_uniform_linear(keys[8], 128, 1024))
    # classifier head
    p["cw1"], p["cb1"] = _fold_bn(*_uniform_linear(keys[9], 1024, 512))
    p["cw2"], p["cb2"] = _fold_bn(*_uniform_linear(keys[10], 512, 256))
    p["cw3"], p["cb3"] = _uniform_linear(keys[11], 256, k)               # no BN on fc3
    # bf16 storage for MXU-heavy weights (f32 accumulation in-kernel).
    for name in ("sw2", "sw3", "sf1w", "sf2w", "w2", "w3"):
        p[name] = p[name].astype(jnp.bfloat16)
    return p


def make_transformer_params(key, embed_dim=64, ff_dim=256, num_layers=2, expand_ratio=3):
    keys = jax.random.split(key, num_layers + 2)
    p = {}
    p["fc_w"], p["fc_b"] = _uniform_linear(keys[0], 1, embed_dim)
    layers = []
    for i in range(num_layers):
        ks = jax.random.split(keys[1 + i], 6)
        lp = {}
        lp["wq"], lp["bq"] = _uniform_linear(ks[0], embed_dim, embed_dim)
        lp["wk"], lp["bk"] = _uniform_linear(ks[1], embed_dim, embed_dim)
        lp["wv"], lp["bv"] = _uniform_linear(ks[2], embed_dim, embed_dim)
        lp["wo"], lp["bo"] = _uniform_linear(ks[3], embed_dim, embed_dim)
        lp["wf1"], lp["bf1"] = _uniform_linear(ks[4], embed_dim, ff_dim)
        lp["wf2"], lp["bf2"] = _uniform_linear(ks[5], ff_dim, embed_dim)
        lp["ln1_g"] = jnp.ones((embed_dim,), jnp.float32)
        lp["ln1_b"] = jnp.zeros((embed_dim,), jnp.float32)
        lp["ln2_g"] = jnp.ones((embed_dim,), jnp.float32)
        lp["ln2_b"] = jnp.zeros((embed_dim,), jnp.float32)
        layers.append(lp)
    p["layers"] = layers
    p["exp_w"], p["exp_b"] = _uniform_linear(keys[-1], embed_dim, expand_ratio)
    return p


# ---------------------------------------------------------------------------
# Pure-JAX reference (matched math: same folded params, same bf16 weights)
# ---------------------------------------------------------------------------
def ref_pointnet_from_points(x_bcn, p):
    B, d, _ = x_bcn.shape
    relu = lambda v: jnp.maximum(v, 0.0)
    xt = jnp.transpose(x_bcn, (0, 2, 1)).astype(jnp.float32)
    h = relu(_mm(xt, p["sw1"]) + p["sb1"])
    h = relu(_mm(h, p["sw2"]) + p["sb2"])
    h = relu(_mm(h, p["sw3"]) + p["sb3"])
    g = jnp.max(h, axis=1)
    g = relu(_mm(g, p["sf1w"]) + p["sf1b"])
    g = relu(_mm(g, p["sf2w"]) + p["sf2b"])
    t = _mm(g, p["sf3w"]) + p["sf3b"] + jnp.eye(d, dtype=jnp.float32).reshape(1, d * d)
    trans = t.reshape(B, d, d)
    w1_eff = jnp.einsum("bij,jk->bik", trans, p["w1"])
    h = relu(jnp.einsum("bnd,bdc->bnc", xt, w1_eff) + p["b1"])
    h = relu(_mm(h, p["w2"]) + p["b2"])
    h = _mm(h, p["w3"]) + p["b3"]
    feat = jnp.max(h, axis=1)
    h = relu(_mm(feat, p["cw1"]) + p["cb1"])
    h = relu(_mm(h, p["cw2"]) + p["cb2"])
    z = _mm(h, p["cw3"]) + p["cb3"]
    return jax.nn.log_softmax(z, axis=1), trans, feat


# ---------------------------------------------------------------------------
if __name__ == "__main__":
    B, d, n_pts, k = 2, 3, 16, 2     # PointNetCls(k=2, input_dim=3); x: (B, 3, N)

    key = jax.random.PRNGKey(0)
    kx, kt, kp, kx2 = jax.random.split(key, 4)
    x = jax.random.normal(kx, (B, d, n_pts), dtype=jnp.float32)          # PyTorch NCW layout
    tparams = make_transformer_params(kt)
    pparams = make_pointnet_params(kp, d, k)

    logp, trans, trans_feat = jax.jit(pointnetcls_forward)(x, tparams, pparams)
    jax.block_until_ready((logp, trans))
    assert logp.shape == (B, k) and trans.shape == (B, d, d) and trans_feat is None

    # correctness check 1: full forward (single-tile path) vs matched-math reference
    x_pts = transformer_forward(x, tparams)
    logp_ref, trans_ref, _ = ref_pointnet_from_points(x_pts, pparams)
    np.testing.assert_allclose(np.asarray(trans), np.asarray(trans_ref), rtol=1e-2, atol=1e-2)
    np.testing.assert_allclose(np.asarray(logp), np.asarray(logp_ref), rtol=1e-2, atol=1e-2)

    # correctness check 2: multi-tile / ragged-tail / two-half (odd-batch) path
    x2 = jax.random.normal(kx2, (1, d, 2500), dtype=jnp.float32)

    def pointnet_only(xp, pp):
        f, t, _ = pointnetfeat_pallas(xp, pp)
        return pointnet_cls_head_pallas(f, pp), t

    logp2, trans2 = jax.jit(pointnet_only)(x2, pparams)
    jax.block_until_ready((logp2, trans2))
    logp2_ref, trans2_ref, _ = ref_pointnet_from_points(x2, pparams)
    np.testing.assert_allclose(np.asarray(trans2), np.asarray(trans2_ref), rtol=1e-2, atol=1e-2)
    np.testing.assert_allclose(np.asarray(logp2), np.asarray(logp2_ref), rtol=1e-2, atol=1e-2)

    print("KERNEL_OK")
</pallas_src>

<mosaic_0001>
module attributes {stable_mosaic.version = 11 : i64} {
  func.func @kernel(%arg0: i32, %arg1: i32, %arg2: i32, %arg3: memref<1x3x48xf32, #tpu.memory_space<vmem>>, %arg4: memref<3x64xf32, #tpu.memory_space<vmem>>, %arg5: memref<1x64xf32, #tpu.memory_space<vmem>>, %arg6: memref<64x128xbf16, #tpu.memory_space<vmem>>, %arg7: memref<1x128xf32, #tpu.memory_space<vmem>>, %arg8: memref<128x1024xbf16, #tpu.memory_space<vmem>>, %arg9: memref<1x1024xf32, #tpu.memory_space<vmem>>, %arg10: memref<1x1x1x1024xf32, #tpu.memory_space<vmem>>) attributes {dimension_semantics = [#tpu.dimension_semantics<parallel>, #tpu.dimension_semantics<parallel>, #tpu.dimension_semantics<arbitrary>], iteration_bounds = array<i64: 2, 1, 1>, scalar_prefetch = 0 : i64, scratch_operands = 0 : i64, tpu.core_type = #tpu.core_type<tc>, window_params = [{transform_indices = @transform_0, window_bounds = array<i64: 1, 3, 48>}, {pipeline_mode = #tpu.pipeline_mode<synchronous>, transform_indices = @transform_1, window_bounds = array<i64: 3, 64>}, {pipeline_mode = #tpu.pipeline_mode<synchronous>, transform_indices = @transform_2, window_bounds = array<i64: 1, 64>}, {pipeline_mode = #tpu.pipeline_mode<synchronous>, transform_indices = @transform_3, window_bounds = array<i64: 64, 128>}, {pipeline_mode = #tpu.pipeline_mode<synchronous>, transform_indices = @transform_4, window_bounds = array<i64: 1, 128>}, {pipeline_mode = #tpu.pipeline_mode<synchronous>, transform_indices = @transform_5, window_bounds = array<i64: 128, 1024>}, {pipeline_mode = #tpu.pipeline_mode<synchronous>, transform_indices = @transform_6, window_bounds = array<i64: 1, 1024>}, {transform_indices = @transform_7, window_bounds = array<i64: 1, 1, 1, 1024>}]} {
    %c0 = arith.constant 0 : index
    %c0_0 = arith.constant 0 : index
    %c0_1 = arith.constant 0 : index
    %0 = vector.load %arg3[%c0, %c0_0, %c0_1] : memref<1x3x48xf32, #tpu.memory_space<vmem>>, vector<1x3x48xf32>
    %1 = vector.shape_cast %0 : vector<1x3x48xf32> to vector<3x48xf32>
    %c0_2 = arith.constant 0 : index
    %c0_3 = arith.constant 0 : index
    %2 = vector.load %arg4[%c0_2, %c0_3] : memref<3x64xf32, #tpu.memory_space<vmem>>, vector<3x64xf32>
    %cst = arith.constant dense<0.000000e+00> : vector<48x64xf32>
    %3 = tpu.matmul %1, %2, %cst {dimension_numbers = #tpu.dot_dimension_numbers<[0], [0], [1], [1], [0, 1, 1, 1], [], []>} : vector<3x48xf32>, vector<3x64xf32>, vector<48x64xf32> -> vector<48x64xf32>
    %c0_4 = arith.constant 0 : index
    %c0_5 = arith.constant 0 : index
    %4 = vector.load %arg5[%c0_4, %c0_5] : memref<1x64xf32, #tpu.memory_space<vmem>>, vector<1x64xf32>
    %5 = vector.broadcast %4 : vector<1x64xf32> to vector<48x64xf32>
    %6 = arith.addf %3, %5 : vector<48x64xf32>
    %cst_6 = arith.constant 0.000000e+00 : f32
    %7 = vector.broadcast %cst_6 : f32 to vector<48x64xf32>
    %8 = arith.maximumf %6, %7 : vector<48x64xf32>
    %c0_7 = arith.constant 0 : index
    %c0_8 = arith.constant 0 : index
    %9 = vector.load %arg6[%c0_7, %c0_8] : memref<64x128xbf16, #tpu.memory_space<vmem>>, vector<64x128xbf16>
    %10 = arith.truncf %8 : vector<48x64xf32> to vector<48x64xbf16>
    %cst_9 = arith.constant dense<0.000000e+00> : vector<48x128xf32>
    %11 = tpu.matmul %10, %9, %cst_9 {dimension_numbers = #tpu.dot_dimension_numbers<[1], [0], [0], [1], [0, 0, 1, 1], [], []>} : vector<48x64xbf16>, vector<64x128xbf16>, vector<48x128xf32> -> vector<48x128xf32>
    %c0_10 = arith.constant 0 : index
    %c0_11 = arith.constant 0 : index
    %12 = vector.load %arg7[%c0_10, %c0_11] : memref<1x128xf32, #tpu.memory_space<vmem>>, vector<1x128xf32>
    %13 = vector.broadcast %12 : vector<1x128xf32> to vector<48x128xf32>
    %14 = arith.addf %11, %13 : vector<48x128xf32>
    %cst_12 = arith.constant 0.000000e+00 : f32
    %15 = vector.broadcast %cst_12 : f32 to vector<48x128xf32>
    %16 = arith.maximumf %14, %15 : vector<48x128xf32>
    %c0_13 = arith.constant 0 : index
    %c0_14 = arith.constant 0 : index
    %17 = vector.load %arg8[%c0_13, %c0_14] : memref<128x1024xbf16, #tpu.memory_space<vmem>>, vector<128x1024xbf16>
    %18 = arith.truncf %16 : vector<48x128xf32> to vector<48x128xbf16>
    %cst_15 = arith.constant dense<0.000000e+00> : vector<48x1024xf32>
    %19 = tpu.matmul %18, %17, %cst_15 {dimension_numbers = #tpu.dot_dimension_numbers<[1], [0], [0], [1], [0, 0, 1, 1], [], []>} : vector<48x128xbf16>, vector<128x1024xbf16>, vector<48x1024xf32> -> vector<48x1024xf32>
    %c0_i32 = arith.constant 0 : i32
    %20 = arith.cmpi eq, %arg2, %c0_i32 : i32
    %21 = arith.extui %20 : i1 to i32
    %c0_i32_16 = arith.constant 0 : i32
    %22 = arith.cmpi ne, %21, %c0_i32_16 : i32
    scf.if %22 {
      %cst_28 = arith.constant 0xFF800000 : f32
      %34 = vector.broadcast %cst_28 : f32 to vector<1x1x1x1024xf32>
      %c0_29 = arith.constant 0 : index
      %c0_30 = arith.constant 0 : index
      %c0_31 = arith.constant 0 : index
      %c0_32 = arith.constant 0 : index
      %35 = vector.load %arg10[%c0_29, %c0_30, %c0_31, %c0_32] : memref<1x1x1x1024xf32, #tpu.memory_space<vmem>>, vector<1x1x1x1024xf32>
      tpu.vector_store %arg10[%c0_29, %c0_30, %c0_31, %c0_32], %34 {strides = array<i32>} : memref<1x1x1x1024xf32, #tpu.memory_space<vmem>>, vector<1x1x1x1024xf32>,
    } else {
    }
    %c0_17 = arith.constant 0 : index
    %c0_18 = arith.constant 0 : index
    %c0_19 = arith.constant 0 : index
    %c0_20 = arith.constant 0 : index
    %23 = vector.load %arg10[%c0_17, %c0_18, %c0_19, %c0_20] : memref<1x1x1x1024xf32, #tpu.memory_space<vmem>>, vector<1x1x1x1024xf32>
    %24 = vector.shape_cast %23 : vector<1x1x1x1024xf32> to vector<1x1024xf32>
    %cst_21 = arith.constant dense<0xFF800000> : vector<1024xf32>
    %25 = vector.multi_reduction <maximumf>, %19, %cst_21 [0] : vector<48x1024xf32> to vector<1024xf32>
    %26 = vector.shape_cast %25 : vector<1024xf32> to vector<1x1024xf32>
    %27 = arith.maximumf %24, %26 : vector<1x1024xf32>
    %c0_22 = arith.constant 0 : index
    %c0_23 = arith.constant 0 : index
    %c0_24 = arith.constant 0 : index
    %c0_25 = arith.constant 0 : index
    %28 = vector.load %arg10[%c0_22, %c0_23, %c0_24, %c0_25] : memref<1x1x1x1024xf32, #tpu.memory_space<vmem>>, vector<1x1x1x1024xf32>
    %29 = vector.shape_cast %28 : vector<1x1x1x1024xf32> to vector<1x1024xf32>
    %30 = vector.shape_cast %27 : vector<1x1024xf32> to vector<1x1x1x1024xf32>
    tpu.vector_store %arg10[%c0_22, %c0_23, %c0_24, %c0_25], %30 {strides = array<i32>} : memref<1x1x1x1024xf32, #tpu.memory_space<vmem>>, vector<1x1x1x1024xf32>,
    %c0_i32_26 = arith.constant 0 : i32
    %31 = arith.cmpi eq, %arg2, %c0_i32_26 : i32
    %32 = arith.extui %31 : i1 to i32
    %c0_i32_27 = arith.constant 0 : i32
    %33 = arith.cmpi ne, %32, %c0_i32_27 : i32
    scf.if %33 {
      %c0_28 = arith.constant 0 : index
      %c0_29 = arith.constant 0 : index
      %c0_30 = arith.constant 0 : index
      %c0_31 = arith.constant 0 : index
      %34 = vector.load %arg10[%c0_28, %c0_29, %c0_30, %c0_31] : memref<1x1x1x1024xf32, #tpu.memory_space<vmem>>, vector<1x1x1x1024xf32>
      %35 = vector.shape_cast %34 : vector<1x1x1x1024xf32> to vector<1x1024xf32>
      %c0_32 = arith.constant 0 : index
      %c0_33 = arith.constant 0 : index
      %36 = vector.load %arg9[%c0_32, %c0_33] : memref<1x1024xf32, #tpu.memory_space<vmem>>, vector<1x1024xf32>
      %37 = arith.addf %35, %36 : vector<1x1024xf32>
      %c0_34 = arith.constant 0 : index
      %c0_35 = arith.constant 0 : index
      %c0_36 = arith.constant 0 : index
      %c0_37 = arith.constant 0 : index
      %38 = vector.load %arg10[%c0_34, %c0_35, %c0_36, %c0_37] : memref<1x1x1x1024xf32, #tpu.memory_space<vmem>>, vector<1x1x1x1024xf32>
      %39 = vector.shape_cast %38 : vector<1x1x1x1024xf32> to vector<1x1024xf32>
      %40 = vector.shape_cast %37 : vector<1x1024xf32> to vector<1x1x1x1024xf32>
      tpu.vector_store %arg10[%c0_34, %c0_35, %c0_36, %c0_37], %40 {strides = array<i32>} : memref<1x1x1x1024xf32, #tpu.memory_space<vmem>>, vector<1x1x1x1024xf32>,
    } else {
    }
    return
  }
  func.func @transform_0(%arg0: i32, %arg1: i32, %arg2: i32) -> (i32, i32, i32) {
    %c1_i32 = arith.constant 1 : i32
    %0 = arith.muli %arg1, %c1_i32 : i32
    %1 = arith.addi %0, %arg2 : i32
    %c0_i32 = arith.constant 0 : i32
    %2 = arith.minsi %1, %c0_i32 : i32
    %c0_i32_0 = arith.constant 0 : i32
    %c0_i32_1 = arith.constant 0 : i32
    return %arg0, %c0_i32_0, %2 : i32, i32, i32
  }
  func.func @transform_1(%arg0: i32, %arg1: i32, %arg2: i32) -> (i32, i32) {
    %c0_i32 = arith.constant 0 : i32
    %c0_i32_0 = arith.constant 0 : i32
    %c0_i32_1 = arith.constant 0 : i32
    return %c0_i32, %c0_i32_0 : i32, i32
  }
  func.func @transform_2(%arg0: i32, %arg1: i32, %arg2: i32) -> (i32, i32) {
    %c0_i32 = arith.constant 0 : i32
    %c0_i32_0 = arith.constant 0 : i32
    %c0_i32_1 = arith.constant 0 : i32
    return %c0_i32, %c0_i32_0 : i32, i32
  }
  func.func @transform_3(%arg0: i32, %arg1: i32, %arg2: i32) -> (i32, i32) {
    %c0_i32 = arith.constant 0 : i32
    %c0_i32_0 = arith.constant 0 : i32
    %c0_i32_1 = arith.constant 0 : i32
    return %c0_i32, %c0_i32_0 : i32, i32
  }
  func.func @transform_4(%arg0: i32, %arg1: i32, %arg2: i32) -> (i32, i32) {
    %c0_i32 = arith.constant 0 : i32
    %c0_i32_0 = arith.constant 0 : i32
    %c0_i32_1 = arith.constant 0 : i32
    return %c0_i32, %c0_i32_0 : i32, i32
  }
  func.func @transform_5(%arg0: i32, %arg1: i32, %arg2: i32) -> (i32, i32) {
    %c0_i32 = arith.constant 0 : i32
    %c0_i32_0 = arith.constant 0 : i32
    %c0_i32_1 = arith.constant 0 : i32
    return %c0_i32, %c0_i32_0 : i32, i32
  }
  func.func @transform_6(%arg0: i32, %arg1: i32, %arg2: i32) -> (i32, i32) {
    %c0_i32 = arith.constant 0 : i32
    %c0_i32_0 = arith.constant 0 : i32
    %c0_i32_1 = arith.constant 0 : i32
    return %c0_i32, %c0_i32_0 : i32, i32
  }
  func.func @transform_7(%arg0: i32, %arg1: i32, %arg2: i32) -> (i32, i32, i32, i32) {
    %c0_i32 = arith.constant 0 : i32
    %c0_i32_0 = arith.constant 0 : i32
    %c0_i32_1 = arith.constant 0 : i32
    return %arg0, %arg1, %c0_i32, %c0_i32_0 : i32, i32, i32, i32
  }
}

module attributes {stable_mosaic.version = 11 : i64} {
  func.func @_stn_fc_kernel(%arg0: i32, %arg1: memref<2x1x1x1024xf32, #tpu.memory_space<vmem>>, %arg2: memref<1024x512xbf16, #tpu.memory_space<vmem>>, %arg3: memref<1x512xf32, #tpu.memory_space<vmem>>, %arg4: memref<512x256xbf16, #tpu.memory_space<vmem>>, %arg5: memref<1x256xf32, #tpu.memory_space<vmem>>, %arg6: memref<256x9xf32, #tpu.memory_space<vmem>>, %arg7: memref<1x9xf32, #tpu.memory_space<vmem>>, %arg8: memref<1x9xf32, #tpu.memory_space<vmem>>, %arg9: memref<9x192xf32, #tpu.memory_space<vmem>>, %arg10: memref<2x9xf32, #tpu.memory_space<vmem>>, %arg11: memref<2x192xf32, #tpu.memory_space<vmem>>) attributes {dimension_semantics = [#tpu.dimension_semantics<arbitrary>], iteration_bounds = array<i64: 1>, scalar_prefetch = 0 : i64, scratch_operands = 0 : i64, tpu.core_type = #tpu.core_type<tc>, window_params = [{pipeline_mode = #tpu.pipeline_mode<synchronous>, transform_indices = @transform_0, window_bounds = array<i64: 2, 1, 1, 1024>}, {pipeline_mode = #tpu.pipeline_mode<synchronous>, transform_indices = @transform_1, window_bounds = array<i64: 1024, 512>}, {pipeline_mode = #tpu.pipeline_mode<synchronous>, transform_indices = @transform_2, window_bounds = array<i64: 1, 512>}, {pipeline_mode = #tpu.pipeline_mode<synchronous>, transform_indices = @transform_3, window_bounds = array<i64: 512, 256>}, {pipeline_mode = #tpu.pipeline_mode<synchronous>, transform_indices = @transform_4, window_bounds = array<i64: 1, 256>}, {pipeline_mode = #tpu.pipeline_mode<synchronous>, transform_indices = @transform_5, window_bounds = array<i64: 256, 9>}, {pipeline_mode = #tpu.pipeline_mode<synchronous>, transform_indices = @transform_6, window_bounds = array<i64: 1, 9>}, {pipeline_mode = #tpu.pipeline_mode<synchronous>, transform_indices = @transform_7, window_bounds = array<i64: 1, 9>}, {pipeline_mode = #tpu.pipeline_mode<synchronous>, transform_indices = @transform_8, window_bounds = array<i64: 9, 192>}, {pipeline_mode = #tpu.pipeline_mode<synchronous>, transform_indices = @transform_9, window_bounds = array<i64: 2, 9>}, {pipeline_mode = #tpu.pipeline_mode<synchronous>, transform_indices = @transform_10, window_bounds = array<i64: 2, 192>}]} {
    %c0 = arith.constant 0 : index
    %c0_0 = arith.constant 0 : index
    %c0_1 = arith.constant 0 : index
    %c0_2 = arith.constant 0 : index
    %0 = vector.load %arg1[%c0, %c0_0, %c0_1, %c0_2] : memref<2x1x1x1024xf32, #tpu.memory_space<vmem>>, vector<2x1x1x1024xf32>
    %1 = vector.shape_cast %0 : vector<2x1x1x1024xf32> to vector<2x1024xf32>
    %cst = arith.constant 0.000000e+00 : f32
    %2 = vector.broadcast %cst : f32 to vector<2x1024xf32>
    %3 = arith.maximumf %1, %2 : vector<2x1024xf32>
    %c0_3 = arith.constant 0 : index
    %c0_4 = arith.constant 0 : index
    %4 = vector.load %arg2[%c0_3, %c0_4] : memref<1024x512xbf16, #tpu.memory_space<vmem>>, vector<1024x512xbf16>
    %5 = arith.truncf %3 : vector<2x1024xf32> to vector<2x1024xbf16>
    %cst_5 = arith.constant dense<0.000000e+00> : vector<2x512xf32>
    %6 = tpu.matmul %5, %4, %cst_5 {dimension_numbers = #tpu.dot_dimension_numbers<[1], [0], [0], [1], [0, 0, 1, 1], [], []>} : vector<2x1024xbf16>, vector<1024x512xbf16>, vector<2x512xf32> -> vector<2x512xf32>
    %c0_6 = arith.constant 0 : index
    %c0_7 = arith.constant 0 : index
    %7 = vector.load %arg3[%c0_6, %c0_7] : memref<1x512xf32, #tpu.memory_space<vmem>>, vector<1x512xf32>
    %8 = vector.broadcast %7 : vector<1x512xf32> to vector<2x512xf32>
    %9 = arith.addf %6, %8 : vector<2x512xf32>
    %cst_8 = arith.constant 0.000000e+00 : f32
    %10 = vector.broadcast %cst_8 : f32 to vector<2x512xf32>
    %11 = arith.maximumf %9, %10 : vector<2x512xf32>
    %c0_9 = arith.constant 0 : index
    %c0_10 = arith.constant 0 : index
    %12 = vector.load %arg4[%c0_9, %c0_10] : memref<512x256xbf16, #tpu.memory_space<vmem>>, vector<512x256xbf16>
    %13 = arith.truncf %11 : vector<2x512xf32> to vector<2x512xbf16>
    %cst_11 = arith.constant dense<0.000000e+00> : vector<2x256xf32>
    %14 = tpu.matmul %13, %12, %cst_11 {dimension_numbers = #tpu.dot_dimension_numbers<[1], [0], [0], [1], [0, 0, 1, 1], [], []>} : vector<2x512xbf16>, vector<512x256xbf16>, vector<2x256xf32> -> vector<2x256xf32>
    %c0_12 = arith.constant 0 : index
    %c0_13 = arith.constant 0 : index
    %15 = vector.load %arg5[%c0_12, %c0_13] : memref<1x256xf32, #tpu.memory_space<vmem>>, vector<1x256xf32>
    %16 = vector.broadcast %15 : vector<1x256xf32> to vector<2x256xf32>
    %17 = arith.addf %14, %16 : vector<2x256xf32>
    %cst_14 = arith.constant 0.000000e+00 : f32
    %18 = vector.broadcast %cst_14 : f32 to vector<2x256xf32>
    %19 = arith.maximumf %17, %18 : vector<2x256xf32>
    %c0_15 = arith.constant 0 : index
    %c0_16 = arith.constant 0 : index
    %20 = vector.load %arg6[%c0_15, %c0_16] : memref<256x9xf32, #tpu.memory_space<vmem>>, vector<256x9xf32>
    %cst_17 = arith.constant dense<0.000000e+00> : vector<2x9xf32>
    %21 = tpu.matmul %19, %20, %cst_17 {dimension_numbers = #tpu.dot_dimension_numbers<[1], [0], [0], [1], [0, 0, 1, 1], [], []>} : vector<2x256xf32>, vector<256x9xf32>, vector<2x9xf32> -> vector<2x9xf32>
    %c0_18 = arith.constant 0 : index
    %c0_19 = arith.constant 0 : index
    %22 = vector.load %arg7[%c0_18, %c0_19] : memref<1x9xf32, #tpu.memory_space<vmem>>, vector<1x9xf32>
    %23 = vector.broadcast %22 : vector<1x9xf32> to vector<2x9xf32>
    %24 = arith.addf %21, %23 : vector<2x9xf32>
    %c0_20 = arith.constant 0 : index
    %c0_21 = arith.constant 0 : index
    %25 = vector.load %arg8[%c0_20, %c0_21] : memref<1x9xf32, #tpu.memory_space<vmem>>, vector<1x9xf32>
    %26 = vector.broadcast %25 : vector<1x9xf32> to vector<2x9xf32>
    %27 = arith.addf %24, %26 : vector<2x9xf32>
    %c0_22 = arith.constant 0 : index
    %c0_23 = arith.constant 0 : index
    %28 = vector.load %arg10[%c0_22, %c0_23] : memref<2x9xf32, #tpu.memory_space<vmem>>, vector<2x9xf32>
    tpu.vector_store %arg10[%c0_22, %c0_23], %27 {strides = array<i32>} : memref<2x9xf32, #tpu.memory_space<vmem>>, vector<2x9xf32>,
    %c0_24 = arith.constant 0 : index
    %c0_25 = arith.constant 0 : index
    %29 = vector.load %arg9[%c0_24, %c0_25] : memref<9x192xf32, #tpu.memory_space<vmem>>, vector<9x192xf32>
    %cst_26 = arith.constant dense<0.000000e+00> : vector<2x192xf32>
    %30 = tpu.matmul %27, %29, %cst_26 {dimension_numbers = #tpu.dot_dimension_numbers<[1], [0], [0], [1], [0, 0, 1, 1], [], []>} : vector<2x9xf32>, vector<9x192xf32>, vector<2x192xf32> -> vector<2x192xf32>
    %c0_27 = arith.constant 0 : index
    %c0_28 = arith.constant 0 : index
    %31 = vector.load %arg11[%c0_27, %c0_28] : memref<2x192xf32, #tpu.memory_space<vmem>>, vector<2x192xf32>
    tpu.vector_store %arg11[%c0_27, %c0_28], %30 {strides = array<i32>} : memref<2x192xf32, #tpu.memory_space<vmem>>, vector<2x192xf32>,
    return
  }
  func.func @transform_0(%arg0: i32) -> (i32, i32, i32, i32) {
    %c0_i32 = arith.constant 0 : i32
    %c0_i32_0 = arith.constant 0 : i32
    %c0_i32_1 = arith.constant 0 : i32
    %c0_i32_2 = arith.constant 0 : i32
    %c0_i32_3 = arith.constant 0 : i32
    return %c0_i32, %c0_i32_0, %c0_i32_1, %c0_i32_2 : i32, i32, i32, i32
  }
  func.func @transform_1(%arg0: i32) -> (i32, i32) {
    %c0_i32 = arith.constant 0 : i32
    %c0_i32_0 = arith.constant 0 : i32
    %c0_i32_1 = arith.constant 0 : i32
    return %c0_i32, %c0_i32_0 : i32, i32
  }
  func.func @transform_2(%arg0: i32) -> (i32, i32) {
    %c0_i32 = arith.constant 0 : i32
    %c0_i32_0 = arith.constant 0 : i32
    %c0_i32_1 = arith.constant 0 : i32
    return %c0_i32, %c0_i32_0 : i32, i32
  }
  func.func @transform_3(%arg0: i32) -> (i32, i32) {
    %c0_i32 = arith.constant 0 : i32
    %c0_i32_0 = arith.constant 0 : i32
    %c0_i32_1 = arith.constant 0 : i32
    return %c0_i32, %c0_i32_0 : i32, i32
  }
  func.func @transform_4(%arg0: i32) -> (i32, i32) {
    %c0_i32 = arith.constant 0 : i32
    %c0_i32_0 = arith.constant 0 : i32
    %c0_i32_1 = arith.constant 0 : i32
    return %c0_i32, %c0_i32_0 : i32, i32
  }
  func.func @transform_5(%arg0: i32) -> (i32, i32) {
    %c0_i32 = arith.constant 0 : i32
    %c0_i32_0 = arith.constant 0 : i32
    %c0_i32_1 = arith.constant 0 : i32
    return %c0_i32, %c0_i32_0 : i32, i32
  }
  func.func @transform_6(%arg0: i32) -> (i32, i32) {
    %c0_i32 = arith.constant 0 : i32
    %c0_i32_0 = arith.constant 0 : i32
    %c0_i32_1 = arith.constant 0 : i32
    return %c0_i32, %c0_i32_0 : i32, i32
  }
  func.func @transform_7(%arg0: i32) -> (i32, i32) {
    %c0_i32 = arith.constant 0 : i32
    %c0_i32_0 = arith.constant 0 : i32
    %c0_i32_1 = arith.constant 0 : i32
    return %c0_i32, %c0_i32_0 : i32, i32
  }
  func.func @transform_8(%arg0: i32) -> (i32, i32) {
    %c0_i32 = arith.constant 0 : i32
    %c0_i32_0 = arith.constant 0 : i32
    %c0_i32_1 = arith.constant 0 : i32
    return %c0_i32, %c0_i32_0 : i32, i32
  }
  func.func @transform_9(%arg0: i32) -> (i32, i32) {
    %c0_i32 = arith.constant 0 : i32
    %c0_i32_0 = arith.constant 0 : i32
    %c0_i32_1 = arith.constant 0 : i32
    return %c0_i32, %c0_i32_0 : i32, i32
  }
  func.func @transform_10(%arg0: i32) -> (i32, i32) {
    %c0_i32 = arith.constant 0 : i32
    %c0_i32_0 = arith.constant 0 : i32
    %c0_i32_1 = arith.constant 0 : i32
    return %c0_i32, %c0_i32_0 : i32, i32
  }
}

module attributes {stable_mosaic.version = 11 : i64} {
  func.func @kernel(%arg0: i32, %arg1: i32, %arg2: i32, %arg3: memref<1x3x48xf32, #tpu.memory_space<vmem>>, %arg4: memref<1x3x64xf32, #tpu.memory_space<vmem>>, %arg5: memref<1x64xf32, #tpu.memory_space<vmem>>, %arg6: memref<64x128xbf16, #tpu.memory_space<vmem>>, %arg7: memref<1x128xf32, #tpu.memory_space<vmem>>, %arg8: memref<128x1024xbf16, #tpu.memory_space<vmem>>, %arg9: memref<1x1024xf32, #tpu.memory_space<vmem>>, %arg10: memref<1x1x1x1024xf32, #tpu.memory_space<vmem>>) attributes {dimension_semantics = [#tpu.dimension_semantics<parallel>, #tpu.dimension_semantics<parallel>, #tpu.dimension_semantics<arbitrary>], iteration_bounds = array<i64: 2, 1, 1>, scalar_prefetch = 0 : i64, scratch_operands = 0 : i64, tpu.core_type = #tpu.core_type<tc>, window_params = [{transform_indices = @transform_0, window_bounds = array<i64: 1, 3, 48>}, {transform_indices = @transform_1, window_bounds = array<i64: 1, 3, 64>}, {pipeline_mode = #tpu.pipeline_mode<synchronous>, transform_indices = @transform_2, window_bounds = array<i64: 1, 64>}, {pipeline_mode = #tpu.pipeline_mode<synchronous>, transform_indices = @transform_3, window_bounds = array<i64: 64, 128>}, {pipeline_mode = #tpu.pipeline_mode<synchronous>, transform_indices = @transform_4, window_bounds = array<i64: 1, 128>}, {pipeline_mode = #tpu.pipeline_mode<synchronous>, transform_indices = @transform_5, window_bounds = array<i64: 128, 1024>}, {pipeline_mode = #tpu.pipeline_mode<synchronous>, transform_indices = @transform_6, window_bounds = array<i64: 1, 1024>}, {transform_indices = @transform_7, window_bounds = array<i64: 1, 1, 1, 1024>}]} {
    %c0 = arith.constant 0 : index
    %c0_0 = arith.constant 0 : index
    %c0_1 = arith.constant 0 : index
    %0 = vector.load %arg3[%c0, %c0_0, %c0_1] : memref<1x3x48xf32, #tpu.memory_space<vmem>>, vector<1x3x48xf32>
    %1 = vector.shape_cast %0 : vector<1x3x48xf32> to vector<3x48xf32>
    %c0_2 = arith.constant 0 : index
    %c0_3 = arith.constant 0 : index
    %c0_4 = arith.constant 0 : index
    %2 = vector.load %arg4[%c0_2, %c0_3, %c0_4] : memref<1x3x64xf32, #tpu.memory_space<vmem>>, vector<1x3x64xf32>
    %3 = vector.shape_cast %2 : vector<1x3x64xf32> to vector<3x64xf32>
    %cst = arith.constant dense<0.000000e+00> : vector<48x64xf32>
    %4 = tpu.matmul %1, %3, %cst {dimension_numbers = #tpu.dot_dimension_numbers<[0], [0], [1], [1], [0, 1, 1, 1], [], []>} : vector<3x48xf32>, vector<3x64xf32>, vector<48x64xf32> -> vector<48x64xf32>
    %c0_5 = arith.constant 0 : index
    %c0_6 = arith.constant 0 : index
    %5 = vector.load %arg5[%c0_5, %c0_6] : memref<1x64xf32, #tpu.memory_space<vmem>>, vector<1x64xf32>
    %6 = vector.broadcast %5 : vector<1x64xf32> to vector<48x64xf32>
    %7 = arith.addf %4, %6 : vector<48x64xf32>
    %cst_7 = arith.constant 0.000000e+00 : f32
    %8 = vector.broadcast %cst_7 : f32 to vector<48x64xf32>
    %9 = arith.maximumf %7, %8 : vector<48x64xf32>
    %c0_8 = arith.constant 0 : index
    %c0_9 = arith.constant 0 : index
    %10 = vector.load %arg6[%c0_8, %c0_9] : memref<64x128xbf16, #tpu.memory_space<vmem>>, vector<64x128xbf16>
    %11 = arith.truncf %9 : vector<48x64xf32> to vector<48x64xbf16>
    %cst_10 = arith.constant dense<0.000000e+00> : vector<48x128xf32>
    %12 = tpu.matmul %11, %10, %cst_10 {dimension_numbers = #tpu.dot_dimension_numbers<[1], [0], [0], [1], [0, 0, 1, 1], [], []>} : vector<48x64xbf16>, vector<64x128xbf16>, vector<48x128xf32> -> vector<48x128xf32>
    %c0_11 = arith.constant 0 : index
    %c0_12 = arith.constant 0 : index
    %13 = vector.load %arg7[%c0_11, %c0_12] : memref<1x128xf32, #tpu.memory_space<vmem>>, vector<1x128xf32>
    %14 = vector.broadcast %13 : vector<1x128xf32> to vector<48x128xf32>
    %15 = arith.addf %12, %14 : vector<48x128xf32>
    %cst_13 = arith.constant 0.000000e+00 : f32
    %16 = vector.broadcast %cst_13 : f32 to vector<48x128xf32>
    %17 = arith.maximumf %15, %16 : vector<48x128xf32>
    %c0_14 = arith.constant 0 : index
    %c0_15 = arith.constant 0 : index
    %18 = vector.load %arg8[%c0_14, %c0_15] : memref<128x1024xbf16, #tpu.memory_space<vmem>>, vector<128x1024xbf16>
    %19 = arith.truncf %17 : vector<48x128xf32> to vector<48x128xbf16>
    %cst_16 = arith.constant dense<0.000000e+00> : vector<48x1024xf32>
    %20 = tpu.matmul %19, %18, %cst_16 {dimension_numbers = #tpu.dot_dimension_numbers<[1], [0], [0], [1], [0, 0, 1, 1], [], []>} : vector<48x128xbf16>, vector<128x1024xbf16>, vector<48x1024xf32> -> vector<48x1024xf32>
    %c0_i32 = arith.constant 0 : i32
    %21 = arith.cmpi eq, %arg2, %c0_i32 : i32
    %22 = arith.extui %21 : i1 to i32
    %c0_i32_17 = arith.constant 0 : i32
    %23 = arith.cmpi ne, %22, %c0_i32_17 : i32
    scf.if %23 {
      %cst_29 = arith.constant 0xFF800000 : f32
      %35 = vector.broadcast %cst_29 : f32 to vector<1x1x1x1024xf32>
      %c0_30 = arith.constant 0 : index
      %c0_31 = arith.constant 0 : index
      %c0_32 = arith.constant 0 : index
      %c0_33 = arith.constant 0 : index
      %36 = vector.load %arg10[%c0_30, %c0_31, %c0_32, %c0_33] : memref<1x1x1x1024xf32, #tpu.memory_space<vmem>>, vector<1x1x1x1024xf32>
      tpu.vector_store %arg10[%c0_30, %c0_31, %c0_32, %c0_33], %35 {strides = array<i32>} : memref<1x1x1x1024xf32, #tpu.memory_space<vmem>>, vector<1x1x1x1024xf32>,
    } else {
    }
    %c0_18 = arith.constant 0 : index
    %c0_19 = arith.constant 0 : index
    %c0_20 = arith.constant 0 : index
    %c0_21 = arith.constant 0 : index
    %24 = vector.load %arg10[%c0_18, %c0_19, %c0_20, %c0_21] : memref<1x1x1x1024xf32, #tpu.memory_space<vmem>>, vector<1x1x1x1024xf32>
    %25 = vector.shape_cast %24 : vector<1x1x1x1024xf32> to vector<1x1024xf32>
    %cst_22 = arith.constant dense<0xFF800000> : vector<1024xf32>
    %26 = vector.multi_reduction <maximumf>, %20, %cst_22 [0] : vector<48x1024xf32> to vector<1024xf32>
    %27 = vector.shape_cast %26 : vector<1024xf32> to vector<1x1024xf32>
    %28 = arith.maximumf %25, %27 : vector<1x1024xf32>
    %c0_23 = arith.constant 0 : index
    %c0_24 = arith.constant 0 : index
    %c0_25 = arith.constant 0 : index
    %c0_26 = arith.constant 0 : index
    %29 = vector.load %arg10[%c0_23, %c0_24, %c0_25, %c0_26] : memref<1x1x1x1024xf32, #tpu.memory_space<vmem>>, vector<1x1x1x1024xf32>
    %30 = vector.shape_cast %29 : vector<1x1x1x1024xf32> to vector<1x1024xf32>
    %31 = vector.shape_cast %28 : vector<1x1024xf32> to vector<1x1x1x1024xf32>
    tpu.vector_store %arg10[%c0_23, %c0_24, %c0_25, %c0_26], %31 {strides = array<i32>} : memref<1x1x1x1024xf32, #tpu.memory_space<vmem>>, vector<1x1x1x1024xf32>,
    %c0_i32_27 = arith.constant 0 : i32
    %32 = arith.cmpi eq, %arg2, %c0_i32_27 : i32
    %33 = arith.extui %32 : i1 to i32
    %c0_i32_28 = arith.constant 0 : i32
    %34 = arith.cmpi ne, %33, %c0_i32_28 : i32
    scf.if %34 {
      %c0_29 = arith.constant 0 : index
      %c0_30 = arith.constant 0 : index
      %c0_31 = arith.constant 0 : index
      %c0_32 = arith.constant 0 : index
      %35 = vector.load %arg10[%c0_29, %c0_30, %c0_31, %c0_32] : memref<1x1x1x1024xf32, #tpu.memory_space<vmem>>, vector<1x1x1x1024xf32>
      %36 = vector.shape_cast %35 : vector<1x1x1x1024xf32> to vector<1x1024xf32>
      %c0_33 = arith.constant 0 : index
      %c0_34 = arith.constant 0 : index
      %37 = vector.load %arg9[%c0_33, %c0_34] : memref<1x1024xf32, #tpu.memory_space<vmem>>, vector<1x1024xf32>
      %38 = arith.addf %36, %37 : vector<1x1024xf32>
      %c0_35 = arith.constant 0 : index
      %c0_36 = arith.constant 0 : index
      %c0_37 = arith.constant 0 : index
      %c0_38 = arith.constant 0 : index
      %39 = vector.load %arg10[%c0_35, %c0_36, %c0_37, %c0_38] : memref<1x1x1x1024xf32, #tpu.memory_space<vmem>>, vector<1x1x1x1024xf32>
      %40 = vector.shape_cast %39 : vector<1x1x1x1024xf32> to vector<1x1024xf32>
      %41 = vector.shape_cast %38 : vector<1x1024xf32> to vector<1x1x1x1024xf32>
      tpu.vector_store %arg10[%c0_35, %c0_36, %c0_37, %c0_38], %41 {strides = array<i32>} : memref<1x1x1x1024xf32, #tpu.memory_space<vmem>>, vector<1x1x1x1024xf32>,
    } else {
    }
    return
  }
  func.func @transform_0(%arg0: i32, %arg1: i32, %arg2: i32) -> (i32, i32, i32) {
    %c1_i32 = arith.constant 1 : i32
    %0 = arith.muli %arg1, %c1_i32 : i32
    %1 = arith.addi %0, %arg2 : i32
    %c0_i32 = arith.constant 0 : i32
    %2 = arith.minsi %1, %c0_i32 : i32
    %c0_i32_0 = arith.constant 0 : i32
    %c0_i32_1 = arith.constant 0 : i32
    return %arg0, %c0_i32_0, %2 : i32, i32, i32
  }
  func.func @transform_1(%arg0: i32, %arg1: i32, %arg2: i32) -> (i32, i32, i32) {
    %c0_i32 = arith.constant 0 : i32
    %c0_i32_0 = arith.constant 0 : i32
    %c0_i32_1 = arith.constant 0 : i32
    return %arg0, %c0_i32, %c0_i32_0 : i32, i32, i32
  }
  func.func @transform_2(%arg0: i32, %arg1: i32, %arg2: i32) -> (i32, i32) {
    %c0_i32 = arith.constant 0 : i32
    %c0_i32_0 = arith.constant 0 : i32
    %c0_i32_1 = arith.constant 0 : i32
    return %c0_i32, %c0_i32_0 : i32, i32
  }
  func.func @transform_3(%arg0: i32, %arg1: i32, %arg2: i32) -> (i32, i32) {
    %c0_i32 = arith.constant 0 : i32
    %c0_i32_0 = arith.constant 0 : i32
    %c0_i32_1 = arith.constant 0 : i32
    return %c0_i32, %c0_i32_0 : i32, i32
  }
  func.func @transform_4(%arg0: i32, %arg1: i32, %arg2: i32) -> (i32, i32) {
    %c0_i32 = arith.constant 0 : i32
    %c0_i32_0 = arith.constant 0 : i32
    %c0_i32_1 = arith.constant 0 : i32
    return %c0_i32, %c0_i32_0 : i32, i32
  }
  func.func @transform_5(%arg0: i32, %arg1: i32, %arg2: i32) -> (i32, i32) {
    %c0_i32 = arith.constant 0 : i32
    %c0_i32_0 = arith.constant 0 : i32
    %c0_i32_1 = arith.constant 0 : i32
    return %c0_i32, %c0_i32_0 : i32, i32
  }
  func.func @transform_6(%arg0: i32, %arg1: i32, %arg2: i32) -> (i32, i32) {
    %c0_i32 = arith.constant 0 : i32
    %c0_i32_0 = arith.constant 0 : i32
    %c0_i32_1 = arith.constant 0 : i32
    return %c0_i32, %c0_i32_0 : i32, i32
  }
  func.func @transform_7(%arg0: i32, %arg1: i32, %arg2: i32) -> (i32, i32, i32, i32) {
    %c0_i32 = arith.constant 0 : i32
    %c0_i32_0 = arith.constant 0 : i32
    %c0_i32_1 = arith.constant 0 : i32
    return %arg0, %arg1, %c0_i32, %c0_i32_0 : i32, i32, i32, i32
  }
}

module attributes {stable_mosaic.version = 11 : i64} {
  func.func @_cls_head_kernel(%arg0: i32, %arg1: memref<2x1x1x1024xf32, #tpu.memory_space<vmem>>, %arg2: memref<1024x512xf32, #tpu.memory_space<vmem>>, %arg3: memref<1x512xf32, #tpu.memory_space<vmem>>, %arg4: memref<512x256xf32, #tpu.memory_space<vmem>>, %arg5: memref<1x256xf32, #tpu.memory_space<vmem>>, %arg6: memref<256x2xf32, #tpu.memory_space<vmem>>, %arg7: memref<1x2xf32, #tpu.memory_space<vmem>>, %arg8: memref<2x2xf32, #tpu.memory_space<vmem>>) attributes {dimension_semantics = [#tpu.dimension_semantics<arbitrary>], iteration_bounds = array<i64: 1>, scalar_prefetch = 0 : i64, scratch_operands = 0 : i64, tpu.core_type = #tpu.core_type<tc>, window_params = [{pipeline_mode = #tpu.pipeline_mode<synchronous>, transform_indices = @transform_0, window_bounds = array<i64: 2, 1, 1, 1024>}, {pipeline_mode = #tpu.pipeline_mode<synchronous>, transform_indices = @transform_1, window_bounds = array<i64: 1024, 512>}, {pipeline_mode = #tpu.pipeline_mode<synchronous>, transform_indices = @transform_2, window_bounds = array<i64: 1, 512>}, {pipeline_mode = #tpu.pipeline_mode<synchronous>, transform_indices = @transform_3, window_bounds = array<i64: 512, 256>}, {pipeline_mode = #tpu.pipeline_mode<synchronous>, transform_indices = @transform_4, window_bounds = array<i64: 1, 256>}, {pipeline_mode = #tpu.pipeline_mode<synchronous>, transform_indices = @transform_5, window_bounds = array<i64: 256, 2>}, {pipeline_mode = #tpu.pipeline_mode<synchronous>, transform_indices = @transform_6, window_bounds = array<i64: 1, 2>}, {pipeline_mode = #tpu.pipeline_mode<synchronous>, transform_indices = @transform_7, window_bounds = array<i64: 2, 2>}]} {
    %c0 = arith.constant 0 : index
    %c0_0 = arith.constant 0 : index
    %c0_1 = arith.constant 0 : index
    %c0_2 = arith.constant 0 : index
    %0 = vector.load %arg1[%c0, %c0_0, %c0_1, %c0_2] : memref<2x1x1x1024xf32, #tpu.memory_space<vmem>>, vector<2x1x1x1024xf32>
    %1 = vector.shape_cast %0 : vector<2x1x1x1024xf32> to vector<2x1024xf32>
    %c0_3 = arith.constant 0 : index
    %c0_4 = arith.constant 0 : index
    %2 = vector.load %arg2[%c0_3, %c0_4] : memref<1024x512xf32, #tpu.memory_space<vmem>>, vector<1024x512xf32>
    %cst = arith.constant dense<0.000000e+00> : vector<2x512xf32>
    %3 = tpu.matmul %1, %2, %cst {dimension_numbers = #tpu.dot_dimension_numbers<[1], [0], [0], [1], [0, 0, 1, 1], [], []>} : vector<2x1024xf32>, vector<1024x512xf32>, vector<2x512xf32> -> vector<2x512xf32>
    %c0_5 = arith.constant 0 : index
    %c0_6 = arith.constant 0 : index
    %4 = vector.load %arg3[%c0_5, %c0_6] : memref<1x512xf32, #tpu.memory_space<vmem>>, vector<1x512xf32>
    %5 = vector.broadcast %4 : vector<1x512xf32> to vector<2x512xf32>
    %6 = arith.addf %3, %5 : vector<2x512xf32>
    %cst_7 = arith.constant 0.000000e+00 : f32
    %7 = vector.broadcast %cst_7 : f32 to vector<2x512xf32>
    %8 = arith.maximumf %6, %7 : vector<2x512xf32>
    %c0_8 = arith.constant 0 : index
    %c0_9 = arith.constant 0 : index
    %9 = vector.load %arg4[%c0_8, %c0_9] : memref<512x256xf32, #tpu.memory_space<vmem>>, vector<512x256xf32>
    %cst_10 = arith.constant dense<0.000000e+00> : vector<2x256xf32>
    %10 = tpu.matmul %8, %9, %cst_10 {dimension_numbers = #tpu.dot_dimension_numbers<[1], [0], [0], [1], [0, 0, 1, 1], [], []>} : vector<2x512xf32>, vector<512x256xf32>, vector<2x256xf32> -> vector<2x256xf32>
    %c0_11 = arith.constant 0 : index
    %c0_12 = arith.constant 0 : index
    %11 = vector.load %arg5[%c0_11, %c0_12] : memref<1x256xf32, #tpu.memory_space<vmem>>, vector<1x256xf32>
    %12 = vector.broadcast %11 : vector<1x256xf32> to vector<2x256xf32>
    %13 = arith.addf %10, %12 : vector<2x256xf32>
    %cst_13 = arith.constant 0.000000e+00 : f32
    %14 = vector.broadcast %cst_13 : f32 to vector<2x256xf32>
    %15 = arith.maximumf %13, %14 : vector<2x256xf32>
    %c0_14 = arith.constant 0 : index
    %c0_15 = arith.constant 0 : index
    %16 = vector.load %arg6[%c0_14, %c0_15] : memref<256x2xf32, #tpu.memory_space<vmem>>, vector<256x2xf32>
    %cst_16 = arith.constant dense<0.000000e+00> : vector<2x2xf32>
    %17 = tpu.matmul %15, %16, %cst_16 {dimension_numbers = #tpu.dot_dimension_numbers<[1], [0], [0], [1], [0, 0, 1, 1], [], []>} : vector<2x256xf32>, vector<256x2xf32>, vector<2x2xf32> -> vector<2x2xf32>
    %c0_17 = arith.constant 0 : index
    %c0_18 = arith.constant 0 : index
    %18 = vector.load %arg7[%c0_17, %c0_18] : memref<1x2xf32, #tpu.memory_space<vmem>>, vector<1x2xf32>
    %19 = vector.broadcast %18 : vector<1x2xf32> to vector<2x2xf32>
    %20 = arith.addf %17, %19 : vector<2x2xf32>
    %cst_19 = arith.constant dense<0xFF800000> : vector<2xf32>
    %21 = vector.multi_reduction <maximumf>, %20, %cst_19 [1] : vector<2x2xf32> to vector<2xf32>
    %22 = vector.shape_cast %21 : vector<2xf32> to vector<2x1xf32>
    %23 = vector.broadcast %22 : vector<2x1xf32> to vector<2x2xf32>
    %24 = arith.subf %20, %23 : vector<2x2xf32>
    %25 = vector.broadcast %22 : vector<2x1xf32> to vector<2x2xf32>
    %26 = arith.subf %20, %25 : vector<2x2xf32>
    %27 = math.exp %26 : vector<2x2xf32>
    %cst_20 = arith.constant dense<0.000000e+00> : vector<2xf32>
    %28 = vector.multi_reduction <add>, %27, %cst_20 [1] : vector<2x2xf32> to vector<2xf32>
    %29 = vector.shape_cast %28 : vector<2xf32> to vector<2x1xf32>
    %30 = math.log %29 : vector<2x1xf32>
    %31 = vector.broadcast %30 : vector<2x1xf32> to vector<2x2xf32>
    %32 = arith.subf %24, %31 : vector<2x2xf32>
    %c0_21 = arith.constant 0 : index
    %c0_22 = arith.constant 0 : index
    %33 = vector.load %arg8[%c0_21, %c0_22] : memref<2x2xf32, #tpu.memory_space<vmem>>, vector<2x2xf32>
    tpu.vector_store %arg8[%c0_21, %c0_22], %32 {strides = array<i32>} : memref<2x2xf32, #tpu.memory_space<vmem>>, vector<2x2xf32>,
    return
  }
  func.func @transform_0(%arg0: i32) -> (i32, i32, i32, i32) {
    %c0_i32 = arith.constant 0 : i32
    %c0_i32_0 = arith.constant 0 : i32
    %c0_i32_1 = arith.constant 0 : i32
    %c0_i32_2 = arith.constant 0 : i32
    %c0_i32_3 = arith.constant 0 : i32
    return %c0_i32, %c0_i32_0, %c0_i32_1, %c0_i32_2 : i32, i32, i32, i32
  }
  func.func @transform_1(%arg0: i32) -> (i32, i32) {
    %c0_i32 = arith.constant 0 : i32
    %c0_i32_0 = arith.constant 0 : i32
    %c0_i32_1 = arith.constant 0 : i32
    return %c0_i32, %c0_i32_0 : i32, i32
  }
  func.func @transform_2(%arg0: i32) -> (i32, i32) {
    %c0_i32 = arith.constant 0 : i32
    %c0_i32_0 = arith.constant 0 : i32
    %c0_i32_1 = arith.constant 0 : i32
    return %c0_i32, %c0_i32_0 : i32, i32
  }
  func.func @transform_3(%arg0: i32) -> (i32, i32) {
    %c0_i32 = arith.constant 0 : i32
    %c0_i32_0 = arith.constant 0 : i32
    %c0_i32_1 = arith.constant 0 : i32
    return %c0_i32, %c0_i32_0 : i32, i32
  }
  func.func @transform_4(%arg0: i32) -> (i32, i32) {
    %c0_i32 = arith.constant 0 : i32
    %c0_i32_0 = arith.constant 0 : i32
    %c0_i32_1 = arith.constant 0 : i32
    return %c0_i32, %c0_i32_0 : i32, i32
  }
  func.func @transform_5(%arg0: i32) -> (i32, i32) {
    %c0_i32 = arith.constant 0 : i32
    %c0_i32_0 = arith.constant 0 : i32
    %c0_i32_1 = arith.constant 0 : i32
    return %c0_i32, %c0_i32_0 : i32, i32
  }
  func.func @transform_6(%arg0: i32) -> (i32, i32) {
    %c0_i32 = arith.constant 0 : i32
    %c0_i32_0 = arith.constant 0 : i32
    %c0_i32_1 = arith.constant 0 : i32
    return %c0_i32, %c0_i32_0 : i32, i32
  }
  func.func @transform_7(%arg0: i32) -> (i32, i32) {
    %c0_i32 = arith.constant 0 : i32
    %c0_i32_0 = arith.constant 0 : i32
    %c0_i32_1 = arith.constant 0 : i32
    return %c0_i32, %c0_i32_0 : i32, i32
  }
}

</mosaic_0001>

<llo_original>
// kernel: pointnetcls_forward.4
$region0: #{pointnetcls_forward.4}
  #allocation0 [shape = 'u32[]', space=smem, size = 0x4, offset = 0x4, fixed_abs, tag = 'smem constant byte address 0x4 - core index']
  #allocation1 [shape = 'u32[144,128]{1,0:T(1,128)}', space=vmem, size = 0x12000, scoped, tag = 'internal scratch']
  %s0 = inlined_call_operand.vmem [shape: f32[2,3,48], index: 0, kind: input, shape index: {}]
  %s1 = inlined_call_operand.vmem [shape: f32[3,64], index: 1, kind: input, shape index: {}]
  %s2 = inlined_call_operand.vmem [shape: f32[1,64], index: 2, kind: input, shape index: {}]
  %s3 = inlined_call_operand.vmem [shape: bf16[64,128], index: 3, kind: input, shape index: {}]
  %s4 = inlined_call_operand.vmem [shape: f32[1,128], index: 4, kind: input, shape index: {}]
  %s5 = inlined_call_operand.vmem [shape: bf16[128,1024], index: 5, kind: input, shape index: {}]
  %s6 = inlined_call_operand.vmem [shape: f32[1,1024], index: 6, kind: input, shape index: {}]
  %s7 = inlined_call_operand.vmem [shape: f32[2,1,1,1024], index: 7, kind: output, shape index: {}]
  %s8 = sld [smem:[#allocation0]]
  $region69: #{pointnetcls_forward.4} parent=0
    _
  %s10 = ssub.s32 1, %s8
  %s11 = scalar_select 0, %s10, %s8
  loop: start=0, step=1, limit=4
  $region2: #{pointnetcls_forward.4} parent=0 // loop_pre_header
    _
  $region3: #{pointnetcls_forward.4} parent=0 // loop_header
    %s13 = sphi 0, %s17
    %p14 = scmp.ge.s32.totalorder %s13, 4
    %s20 = sphi 0, %s39
    %s21 = sphi 0, %s35
    %s22 = sphi 0, %s31
    %s23 = sphi 0, %s20
    %s24 = sphi 0, %s21
    %s25 = sphi 0, %s22
    %s26 = sphi 0, %s23
    %s27 = sphi 0, %s24
    %s28 = sphi 0, %s25
    %s50 = sphi 0, %s52
    %s53 = sphi 0, %s50
    %s54 = sphi 0, %s53
    %s70 = sphi 0, %s54
    %s74 = sphi 0, %s74
    %s76 = sphi 0, %s74
    %s77 = sphi 0, %s76
    %s91 = sphi 0, %s77
    %s95 = sphi 0, %s95
    %s97 = sphi 0, %s95
    %s98 = sphi 0, %s97
    %s112 = sphi 0, %s98
    %s116 = sphi 0, %s116
    %s118 = sphi 0, %s116
    %s119 = sphi 0, %s118
    %s133 = sphi 0, %s119
    %s137 = sphi 0, %s137
    %s139 = sphi 0, %s137
    %s140 = sphi 0, %s139
    %s154 = sphi 0, %s140
    %s158 = sphi 0, %s158
    %s160 = sphi 0, %s158
    %s161 = sphi 0, %s160
    %s175 = sphi 0, %s161
    %s179 = sphi 0, %s179
    %s181 = sphi 0, %s179
    %s182 = sphi 0, %s181
    %s196 = sphi 0, %s182
    %s204 = sphi 0, %s206
    %s207 = sphi 0, %s204
    %s208 = sphi 0, %s207
    %s224 = sphi 0, %s208
  $region4: #{pointnetcls_forward.4} parent=0 // loop_header_branch
    %16 = sbr.rel (%p14) target = $region8
  $region5: #{pointnetcls_forward.4} parent=0 // loop_body
    %s18 = ssub.s32 %s13, 1
    %s19 = ssub.s32 %s13, 2
    %s29 = sadd.s32 1, %s22
    %p30 = scmp.ge.s32.totalorder %s29, 1
    %s31 = scalar_select %p30, 0, %s29
    %s32 = sadd.s32 1, %s21
    %s33 = scalar_select %p30, %s32, %s21
    %p34 = scmp.ge.s32.totalorder %s33, 1
    %s35 = scalar_select %p34, 0, %s33
    %s36 = sadd.s32 1, %s20
    %s37 = scalar_select %p34, %s36, %s20
    %p38 = scmp.ge.s32.totalorder %s37, 2
    %s39 = scalar_select %p38, 0, %s37
    %s40 = sadd.s32 %s21, %s22
    %p41 = scmp.lt.s32.totalorder %s40, 0
    %s42 = scalar_select %p41, %s40, 0
    %s43 = sadd.s32 %s35, %s31
    %p44 = scmp.lt.s32.totalorder %s43, 0
    %s45 = scalar_select %p44, %s43, 0
    %s46 = ssub.s32 %s20, %s39
    %s47 = ssub.s32 %s42, %s45
    %s48 = sor.u32 %s46, %s47
    %p49 = scmp.eq.s32.totalorder %s48, 0
    %s51 = sadd.s32 %s50, 1
    %s52 = scalar_select %p49, %s50, %s51
    %p55 = pneg %p49
    %p56 = scmp.eq.s32.totalorder %s13, 1
    %p57 = por %p55, %p56
    %p58 = scmp.ne.s32.totalorder %s50, %s53
    %p59 = scmp.eq.s32.totalorder %s13, 0
    %p60 = por %p58, %p59
    %p61 = scmp.ne.s32.totalorder %s50, %s53
    %p62 = scmp.eq.s32.totalorder %s18, 1
    %p63 = por %p61, %p62
    %p64 = scmp.ne.s32.totalorder %s53, %s54
    %p65 = scmp.eq.s32.totalorder %s18, 0
    %p66 = por %p64, %p65
    %p67 = scmp.ne.s32.totalorder %s53, %s54
    %p68 = scmp.eq.s32.totalorder %s19, 1
    %p69 = por %p67, %p68
    %p71 = scmp.ne.s32.totalorder %s54, %s70
    %p72 = scmp.eq.s32.totalorder %s19, 0
    %p73 = por %p71, %p72
    %s75 = sadd.s32 %s74, 1
    %p78 = scmp.eq.s32.totalorder %s13, 1
    %p79 = scmp.ne.s32.totalorder %s74, %s76
    %p80 = scmp.eq.s32.totalorder %s13, 0
    %p81 = por %p79, %p80
    %p82 = scmp.ne.s32.totalorder %s74, %s76
    %p83 = scmp.eq.s32.totalorder %s18, 1
    %p84 = por %p82, %p83
    %p85 = scmp.ne.s32.totalorder %s76, %s77
    %p86 = scmp.eq.s32.totalorder %s18, 0
    %p87 = por %p85, %p86
    %p88 = scmp.ne.s32.totalorder %s76, %s77
    %p89 = scmp.eq.s32.totalorder %s19, 1
    %p90 = por %p88, %p89
    %p92 = scmp.ne.s32.totalorder %s77, %s91
    %p93 = scmp.eq.s32.totalorder %s19, 0
    %p94 = por %p92, %p93
    %s96 = sadd.s32 %s95, 1
    %p99 = scmp.eq.s32.totalorder %s13, 1
    %p100 = scmp.ne.s32.totalorder %s95, %s97
    %p101 = scmp.eq.s32.totalorder %s13, 0
    %p102 = por %p100, %p101
    %p103 = scmp.ne.s32.totalorder %s95, %s97
    %p104 = scmp.eq.s32.totalorder %s18, 1
    %p105 = por %p103, %p104
    %p106 = scmp.ne.s32.totalorder %s97, %s98
    %p107 = scmp.eq.s32.totalorder %s18, 0
    %p108 = por %p106, %p107
    %p109 = scmp.ne.s32.totalorder %s97, %s98
    %p110 = scmp.eq.s32.totalorder %s19, 1
    %p111 = por %p109, %p110
    %p113 = scmp.ne.s32.totalorder %s98, %s112
    %p114 = scmp.eq.s32.totalorder %s19, 0
    %p115 = por %p113, %p114
    %s117 = sadd.s32 %s116, 1
    %p120 = scmp.eq.s32.totalorder %s13, 1
    %p121 = scmp.ne.s32.totalorder %s116, %s118
    %p122 = scmp.eq.s32.totalorder %s13, 0
    %p123 = por %p121, %p122
    %p124 = scmp.ne.s32.totalorder %s116, %s118
    %p125 = scmp.eq.s32.totalorder %s18, 1
    %p126 = por %p124, %p125
    %p127 = scmp.ne.s32.totalorder %s118, %s119
    %p128 = scmp.eq.s32.totalorder %s18, 0
    %p129 = por %p127, %p128
    %p130 = scmp.ne.s32.totalorder %s118, %s119
    %p131 = scmp.eq.s32.totalorder %s19, 1
    %p132 = por %p130, %p131
    %p134 = scmp.ne.s32.totalorder %s119, %s133
    %p135 = scmp.eq.s32.totalorder %s19, 0
    %p136 = por %p134, %p135
    %s138 = sadd.s32 %s137, 1
    %p141 = scmp.eq.s32.totalorder %s13, 1
    %p142 = scmp.ne.s32.totalorder %s137, %s139
    %p143 = scmp.eq.s32.totalorder %s13, 0
    %p144 = por %p142, %p143
    %p145 = scmp.ne.s32.totalorder %s137, %s139
    %p146 = scmp.eq.s32.totalorder %s18, 1
    %p147 = por %p145, %p146
    %p148 = scmp.ne.s32.totalorder %s139, %s140
    %p149 = scmp.eq.s32.totalorder %s18, 0
    %p150 = por %p148, %p149
    %p151 = scmp.ne.s32.totalorder %s139, %s140
    %p152 = scmp.eq.s32.totalorder %s19, 1
    %p153 = por %p151, %p152
    %p155 = scmp.ne.s32.totalorder %s140, %s154
    %p156 = scmp.eq.s32.totalorder %s19, 0
    %p157 = por %p155, %p156
    %s159 = sadd.s32 %s158, 1
    %p162 = scmp.eq.s32.totalorder %s13, 1
    %p163 = scmp.ne.s32.totalorder %s158, %s160
    %p164 = scmp.eq.s32.totalorder %s13, 0
    %p165 = por %p163, %p164
    %p166 = scmp.ne.s32.totalorder %s158, %s160
    %p167 = scmp.eq.s32.totalorder %s18, 1
    %p168 = por %p166, %p167
    %p169 = scmp.ne.s32.totalorder %s160, %s161
    %p170 = scmp.eq.s32.totalorder %s18, 0
    %p171 = por %p169, %p170
    %p172 = scmp.ne.s32.totalorder %s160, %s161
    %p173 = scmp.eq.s32.totalorder %s19, 1
    %p174 = por %p172, %p173
    %p176 = scmp.ne.s32.totalorder %s161, %s175
    %p177 = scmp.eq.s32.totalorder %s19, 0
    %p178 = por %p176, %p177
    %s180 = sadd.s32 %s179, 1
    %p183 = scmp.eq.s32.totalorder %s13, 1
    %p184 = scmp.ne.s32.totalorder %s179, %s181
    %p185 = scmp.eq.s32.totalorder %s13, 0
    %p186 = por %p184, %p185
    %p187 = scmp.ne.s32.totalorder %s179, %s181
    %p188 = scmp.eq.s32.totalorder %s18, 1
    %p189 = por %p187, %p188
    %p190 = scmp.ne.s32.totalorder %s181, %s182
    %p191 = scmp.eq.s32.totalorder %s18, 0
    %p192 = por %p190, %p191
    %p193 = scmp.ne.s32.totalorder %s181, %s182
    %p194 = scmp.eq.s32.totalorder %s19, 1
    %p195 = por %p193, %p194
    %p197 = scmp.ne.s32.totalorder %s182, %s196
    %p198 = scmp.eq.s32.totalorder %s19, 0
    %p199 = por %p197, %p198
    %s200 = ssub.s32 %s20, %s39
    %s201 = ssub.s32 %s21, %s35
    %s202 = sor.u32 %s200, %s201
    %p203 = scmp.eq.s32.totalorder %s202, 0
    %s205 = sadd.s32 %s204, 1
    %s206 = scalar_select %p203, %s204, %s205
    %p209 = pneg %p203
    %p210 = scmp.eq.s32.totalorder %s13, 1
    %p211 = por %p209, %p210
    %p212 = scmp.ne.s32.totalorder %s204, %s207
    %p213 = scmp.eq.s32.totalorder %s13, 0
    %p214 = por %p212, %p213
    %p215 = scmp.ne.s32.totalorder %s204, %s207
    %p216 = scmp.eq.s32.totalorder %s18, 1
    %p217 = por %p215, %p216
    %p218 = scmp.ne.s32.totalorder %s207, %s208
    %p219 = scmp.eq.s32.totalorder %s18, 0
    %p220 = por %p218, %p219
    %p221 = scmp.ne.s32.totalorder %s207, %s208
    %p222 = scmp.eq.s32.totalorder %s19, 1
    %p223 = por %p221, %p222
    %p225 = scmp.ne.s32.totalorder %s208, %s224
    %p226 = scmp.eq.s32.totalorder %s19, 0
    %p227 = por %p225, %p226
    %p228 = scmp.le.s32.totalorder 1, %s13
    %p229 = scmp.lt.s32.totalorder %s13, 3
    %p230 = pnand %p228, %p229
    %p231 = pneg %p230
    // Predicated region
    $region9: #{pointnetcls_forward.4} parent=5 // pred_check
      _
    $region10: #{pointnetcls_forward.4} parent=5 // pred_check_branch
      %233 = sbr.rel (%p230) target = $region12
    $region11: #{pointnetcls_forward.4} parent=5 // pred_region
      %s234 = ssub.s32 %s13, 1
      // Predicated region
      $region13: #{pointnetcls_forward.4} parent=11 // pred_check
        %p235 = pneg %p87
      $region14: #{pointnetcls_forward.4} parent=11 // pred_check_branch
        %237 = sbr.rel (%p235) target = $region16
      $region15: #{pointnetcls_forward.4} parent=11 // pred_region
        _
      $region16: #{pointnetcls_forward.4} parent=11 // pred_fallthru
        _
      // Predicated region
      $region17: #{pointnetcls_forward.4} parent=11 // pred_check
        %p238 = pneg %p108
      $region18: #{pointnetcls_forward.4} parent=11 // pred_check_branch
        %240 = sbr.rel (%p238) target = $region20
      $region19: #{pointnetcls_forward.4} parent=11 // pred_region
        _
      $region20: #{pointnetcls_forward.4} parent=11 // pred_fallthru
        _
      // Predicated region
      $region21: #{pointnetcls_forward.4} parent=11 // pred_check
        %p241 = pneg %p129
      $region22: #{pointnetcls_forward.4} parent=11 // pred_check_branch
        %243 = sbr.rel (%p241) target = $region24
      $region23: #{pointnetcls_forward.4} parent=11 // pred_region
        _
      $region24: #{pointnetcls_forward.4} parent=11 // pred_fallthru
        _
      // Predicated region
      $region25: #{pointnetcls_forward.4} parent=11 // pred_check
        %p244 = pneg %p150
      $region26: #{pointnetcls_forward.4} parent=11 // pred_check_branch
        %246 = sbr.rel (%p244) target = $region28
      $region27: #{pointnetcls_forward.4} parent=11 // pred_region
        _
      $region28: #{pointnetcls_forward.4} parent=11 // pred_fallthru
        _
      // Predicated region
      $region29: #{pointnetcls_forward.4} parent=11 // pred_check
        %p247 = pneg %p171
      $region30: #{pointnetcls_forward.4} parent=11 // pred_check_branch
        %249 = sbr.rel (%p247) target = $region32
      $region31: #{pointnetcls_forward.4} parent=11 // pred_region
        _
      $region32: #{pointnetcls_forward.4} parent=11 // pred_fallthru
        _
      // Predicated region
      $region33: #{pointnetcls_forward.4} parent=11 // pred_check
        %p250 = pneg %p192
      $region34: #{pointnetcls_forward.4} parent=11 // pred_check_branch
        %252 = sbr.rel (%p250) target = $region36
      $region35: #{pointnetcls_forward.4} parent=11 // pred_region
        _
      $region36: #{pointnetcls_forward.4} parent=11 // pred_fallthru
        _
    $region12: #{pointnetcls_forward.4} parent=5 // pred_fallthru
      _
    %p253 = scmp.lt.s32.totalorder %s13, 2
    // Predicated region
    $region37: #{pointnetcls_forward.4} parent=5 // pred_check
      %p254 = pneg %p253
    $region38: #{pointnetcls_forward.4} parent=5 // pred_check_branch
      %256 = sbr.rel (%p254) target = $region40
    $region39: #{pointnetcls_forward.4} parent=5 // pred_region
      // Predicated region
      $region41: #{pointnetcls_forward.4} parent=39 // pred_check
        %p257 = pneg %p60
      $region42: #{pointnetcls_forward.4} parent=39 // pred_check_branch
        %259 = sbr.rel (%p257) target = $region44
      $region43: #{pointnetcls_forward.4} parent=39 // pred_region
        %s260 = sadd.s32 %s21, %s22
        %p261 = scmp.lt.s32.totalorder %s260, 0
        %s262 = scalar_select %p261, %s260, 0
        %p263 = scmp.lt.s32.totalorder %s20, 1
        %s264 = scalar_select %p263, %s20, 1
        %p265 = scmp.lt.s32.totalorder %s262, 0
        %s266 = scalar_select %p265, %s262, 0
        %s267 = sadd.s32 %s266, %s264
        %s268 = smul.addr %s267, 4
        %s269 = scalar_lea.vmem %s0, %s268
        %s270 = sadd.s32 %s21, %s22
        %p271 = scmp.lt.s32.totalorder %s270, 0
        %s272 = scalar_select %p271, %s270, 0
      $region44: #{pointnetcls_forward.4} parent=39 // pred_fallthru
        _
    $region40: #{pointnetcls_forward.4} parent=5 // pred_fallthru
      _
    %p273 = scmp.le.s32.totalorder 1, %s13
    %p274 = scmp.lt.s32.totalorder %s13, 3
    %p275 = pnand %p273, %p274
    %p276 = pneg %p275
    // Predicated region
    $region45: #{pointnetcls_forward.4} parent=5 // pred_check
      _
    $region46: #{pointnetcls_forward.4} parent=5 // pred_check_branch
      %278 = sbr.rel (%p275) target = $region48
    $region47: #{pointnetcls_forward.4} parent=5 // pred_region
      %s279 = ssub.s32 %s13, 1
      %s280 = sadd.s32 %s24, %s25
      %p281 = scmp.lt.s32.totalorder %s280, 0
      %s282 = scalar_select %p281, %s280, 0
      %p283 = scmp.lt.s32.totalorder %s23, 1
      %s284 = scalar_select %p283, %s23, 1
      %p285 = scmp.lt.s32.totalorder %s282, 0
      %s286 = scalar_select %p285, %s282, 0
      %s287 = sadd.s32 %s286, %s284
      %s288 = smul.addr %s287, 4
      %s289 = scalar_lea.vmem %s0, %s288
      %p290 = pneg %p66
      %p291 = pneg %p63
      %p292 = pneg %p87
      %p293 = pneg %p84
      %p294 = pneg %p108
      %p295 = pneg %p105
      %p296 = pneg %p129
      %p297 = pneg %p126
      %p298 = pneg %p150
      %p299 = pneg %p147
      %p300 = pneg %p171
      %p301 = pneg %p168
      %p302 = pneg %p192
      %p303 = pneg %p189
      %p304 = pneg %p220
      %p305 = pneg %p217
      %p306 = scmp.lt.s32.totalorder %s23, 1
      %s307 = scalar_select %p306, %s23, 1
      %p308 = scmp.lt.s32.totalorder %s24, 0
      %s309 = scalar_select %p308, %s24, 0
      %s310 = smul.addr %s309, 8
      %s311 = smul.addr %s307, 8
      %s312 = sadd.s32 %s310, %s311
      %s313 = scalar_lea.vmem %s7, %s312
      %s314 = sadd.s32 %s24, %s25
      %p315 = scmp.lt.s32.totalorder %s314, 0
      %s316 = scalar_select %p315, %s314, 0
      %p317 = scmp.lt.s32.totalorder %s23, 1
      %s318 = scalar_select %p317, %s23, 1
      %p319 = scmp.lt.s32.totalorder %s316, 0
      %s320 = scalar_select %p319, %s316, 0
      %s321 = sadd.s32 %s320, %s318
      %s322 = smul.addr %s321, 4
      %s323 = scalar_lea.vmem %s0, %s322
      %s324 = sadd.s32 %s24, %s25
      %p325 = scmp.lt.s32.totalorder %s324, 0
      %s326 = scalar_select %p325, %s324, 0
      %p327 = scmp.lt.s32.totalorder %s23, 1
      %s328 = scalar_select %p327, %s23, 1
      %p329 = scmp.lt.s32.totalorder %s24, 0
      %s330 = scalar_select %p329, %s24, 0
      %s331 = smul.addr %s330, 8
      %s332 = smul.addr %s328, 8
      %s333 = sadd.s32 %s331, %s332
      %s334 = scalar_lea.vmem %s7, %s333
      %v336 = vld [vmem:[%s323] sm:$0x7]
      %v337 = vld [vmem:[%s1] sm:$0x7]
      %v338 = vld [vmem:[%s2] sm:$0x1]
      %v340 = vlaneseq
      %v341 = vshrl.u32 %v340, 7
      %v342 = vsub.s32 0, %v341
      %v343 = vrot.slane %v338, %v342
      %345 = vxpose.xlu0.b32.start [1/16] %v336, 128
      %346 = vxpose.xlu0.b32.cont [2/16] 0.0, 128
      %347 = vxpose.xlu0.b32.cont [3/16] 0.0, 128
      %348 = vxpose.xlu0.b32.cont [4/16] 0.0, 128
      %349 = vxpose.xlu0.b32.cont [5/16] 0.0, 128
      %350 = vxpose.xlu0.b32.cont [6/16] 0.0, 128
      %351 = vxpose.xlu0.b32.cont [7/16] 0.0, 128
      %352 = vxpose.xlu0.b32.cont [8/16] 0.0, 128
      %353 = vxpose.xlu0.b32.cont [9/16] 0.0, 128
      %354 = vxpose.xlu0.b32.cont [10/16] 0.0, 128
      %355 = vxpose.xlu0.b32.cont [11/16] 0.0, 128
      %356 = vxpose.xlu0.b32.cont [12/16] 0.0, 128
      %357 = vxpose.xlu0.b32.cont [13/16] 0.0, 128
      %358 = vxpose.xlu0.b32.cont [14/16] 0.0, 128
      %359 = vxpose.xlu0.b32.cont [15/16] 0.0, 128
      %360 = vxpose.xlu0.b32.end [16/16] 0.0, 128
      %v361 = vpop.trf.xlu0
      %v362 = vpop.trf.xlu0
      %v363 = vpop.trf.xlu0
      %v364 = vpop.trf.xlu0
      %v365 = vpop.trf.xlu0
      %v366 = vpop.trf.xlu0
      %v367 = vpop.trf.xlu0
      %v368 = vpop.trf.xlu0
      %v369 = vpop.trf.xlu0
      %v370 = vpop.trf.xlu0
      %v371 = vpop.trf.xlu0
      %v372 = vpop.trf.xlu0
      %v373 = vpop.trf.xlu0
      %v374 = vpop.trf.xlu0
      %v375 = vpop.trf.xlu0
      %v376 = vpop.trf.xlu0
      %vm377 = vcmask 23552
      %v379 = vsel %vm377, %v361, 0
      %v382 = vsel %vm377, %v362, 0
      %v385 = vsel %vm377, %v363, 0
      %v388 = vsel %vm377, %v364, 0
      %v391 = vsel %vm377, %v365, 0
      %v394 = vsel %vm377, %v366, 0
      %vm396 = vcmask 1042432
      %v398 = vsel %vm396, %v337, 0
      %400 = vmatprep.subr.mxu0 0.0
      %401 = vmatpush1.msra.mxu0 %v398
      %402 = vmatprep.subr.mxu0 0.0
      %403 = vmatpush1.msra.mxu0 0.0
      %404 = vmatprep.subr.mxu0 0.0
      %405 = vmatpush1.msra.mxu0 0.0
      %406 = vmatprep.subr.mxu0 0.0
      %407 = vmatpush1.msra.mxu0 0.0
      %408 = vmatprep.subr.mxu0 0.0
      %409 = vmatpush1.msra.mxu0 0.0
      %410 = vmatprep.subr.mxu0 0.0
      %411 = vmatpush1.msra.mxu0 0.0
      %412 = vmatprep.subr.mxu0 0.0
      %413 = vmatpush1.msra.mxu0 0.0
      %414 = vmatprep.subr.mxu0 0.0
      %415 = vmatpush1.msra.mxu0 0.0
      %416 = vmatprep.subr.mxu0 0.0
      %417 = vmatpush1.msra.mxu0 0.0
      %418 = vmatprep.subr.mxu0 0.0
      %419 = vmatpush1.msra.mxu0 0.0
      %420 = vmatprep.subr.mxu0 0.0
      %421 = vmatpush1.msra.mxu0 0.0
      %422 = vmatprep.subr.mxu0 0.0
      %423 = vmatpush1.msra.mxu0 0.0
      %424 = vmatprep.subr.mxu0 0.0
      %425 = vmatpush1.msra.mxu0 0.0
      %426 = vmatprep.subr.mxu0 0.0
      %427 = vmatpush1.msra.mxu0 0.0
      %428 = vmatprep.subr.mxu0 0.0
      %429 = vmatpush1.msra.mxu0 0.0
      %430 = vmatprep.subr.mxu0 0.0
      %431 = vmatpush1.msra.mxu0 0.0
      %432 = vmatprep.subr.mxu0 0.0
      %433 = vmatpush1.msra.mxu0 0.0
      %434 = vmatprep.subr.mxu0 0.0
      %435 = vmatpush1.msra.mxu0 0.0
      %436 = vmatprep.subr.mxu0 0.0
      %437 = vmatpush1.msra.mxu0 0.0
      %438 = vmatprep.subr.mxu0 0.0
      %439 = vmatpush1.msra.mxu0 0.0
      %440 = vmatprep.subr.mxu0 0.0
      %441 = vmatpush1.msra.mxu0 0.0
      %442 = vmatprep.subr.mxu0 0.0
      %443 = vmatpush1.msra.mxu0 0.0
      %444 = vmatprep.subr.mxu0 0.0
      %445 = vmatpush1.msra.mxu0 0.0
      %446 = vmatprep.subr.mxu0 0.0
      %447 = vmatpush1.msra.mxu0 0.0
      %448 = vmatprep.subr.mxu0 0.0
      %449 = vmatpush1.msra.mxu0 0.0
      %450 = vmatprep.subr.mxu0 0.0
      %451 = vmatpush1.msra.mxu0 0.0
      %452 = vmatprep.subr.mxu0 0.0
      %453 = vmatpush1.msra.mxu0 0.0
      %454 = vmatprep.subr.mxu0 0.0
      %455 = vmatpush1.msra.mxu0 0.0
      %456 = vmatprep.subr.mxu0 0.0
      %457 = vmatpush1.msra.mxu0 0.0
      %458 = vmatprep.subr.mxu0 0.0
      %459 = vmatpush1.msra.mxu0 0.0
      %460 = vmatprep.subr.mxu0 0.0
      %461 = vmatpush1.msra.mxu0 0.0
      %462 = vmatprep.subr.mxu0 0.0
      %463 = vmatpush1.msra.mxu0 0.0
      %464 = vmatprep.mubr.f32.mxu0 0.0
      %465 = vmatmul.mubr.f32.gmra.mrb[0].mxu0 %v379
      %v466 = vpop.f32.mrb[0].mxu0
      %v467 = vadd.f32 %v343, %v466
      %v468 = vpop.f32.mrb[0].mxu0
      %469 = vmatprep.mubr.f32.mxu0 0.0
      %470 = vmatmul.mubr.f32.gmra.mrb[0].mxu0 %v382
      %v471 = vpop.f32.mrb[0].mxu0
      %v472 = vadd.f32 %v343, %v471
      %v473 = vpop.f32.mrb[0].mxu0
      %474 = vmatprep.mubr.f32.mxu0 0.0
      %475 = vmatmul.mubr.f32.gmra.mrb[0].mxu0 %v385
      %v476 = vpop.f32.mrb[0].mxu0
      %v477 = vadd.f32 %v343, %v476
      %v478 = vpop.f32.mrb[0].mxu0
      %479 = vmatprep.mubr.f32.mxu0 0.0
      %480 = vmatmul.mubr.f32.gmra.mrb[0].mxu0 %v388
      %v481 = vpop.f32.mrb[0].mxu0
      %v482 = vadd.f32 %v343, %v481
      %v483 = vpop.f32.mrb[0].mxu0
      %484 = vmatprep.mubr.f32.mxu0 0.0
      %485 = vmatmul.mubr.f32.gmra.mrb[0].mxu0 %v391
      %v486 = vpop.f32.mrb[0].mxu0
      %v487 = vadd.f32 %v343, %v486
      %v488 = vpop.f32.mrb[0].mxu0
      %489 = vmatprep.mubr.f32.mxu0 0.0
      %490 = vmatmul.mubr.f32.gmra.mrb[0].mxu0 %v394
      %v491 = vpop.f32.mrb[0].mxu0
      %v492 = vadd.f32 %v343, %v491
      %v493 = vpop.f32.mrb[0].mxu0
      %494 = vdwg.mxu0
      %v495 = vmax.f32 %v467, 0.0
      %v496 = vmax.f32 %v472, 0.0
      %v497 = vmax.f32 %v477, 0.0
      %v498 = vmax.f32 %v482, 0.0
      %v499 = vmax.f32 %v487, 0.0
      %v500 = vmax.f32 %v492, 0.0
      %v501 = vld [vmem:[%s3] sm:$0xf]
      %v502 = vld [vmem:[%s3 + $0x4] sm:$0xf]
      %v503 = vld [vmem:[%s3 + $0x8] sm:$0xf]
      %v504 = vld [vmem:[%s3 + $0xc] sm:$0xf]
      %v505 = vld [vmem:[%s3 + $0x10] sm:$0xf]
      %v506 = vld [vmem:[%s3 + $0x14] sm:$0xf]
      %v507 = vld [vmem:[%s3 + $0x18] sm:$0xf]
      %v508 = vld [vmem:[%s3 + $0x1c] sm:$0xf]
      %v509 = vpack.c.bf16 %v496, %v495
      %v510 = vpack.c.bf16 %v498, %v497
      %v511 = vpack.c.bf16 %v500, %v499
      %v512 = vld [vmem:[%s4] sm:$0x1]
      %v514 = vlaneseq
      %v515 = vshrl.u32 %v514, 7
      %v516 = vsub.s32 0, %v515
      %v517 = vrot.slane %v512, %v516
      %v527 = vunpack.c.l.b16 %v501
      %v528 = vunpack.c.l.b16 %v502
      %v529 = vunpack.c.l.b16 %v503
      %v530 = vunpack.c.l.b16 %v504
      %v531 = vunpack.c.l.b16 %v505
      %v532 = vunpack.c.l.b16 %v506
      %v533 = vunpack.c.l.b16 %v507
      %v534 = vunpack.c.l.b16 %v508
      %v535 = vpack.c.b16 %v528, %v527
      %v536 = vpack.c.b16 %v530, %v529
      %v537 = vpack.c.b16 %v532, %v531
      %v538 = vpack.c.b16 %v534, %v533
      %vm543 = vcmask 523264
      %v545 = vsel %vm543, %v509, 0
      %v548 = vsel %vm543, %v510, 0
      %v551 = vsel %vm543, %v511, 0
      %553 = vmatprep.subr.bf16.mxu0 0
      %554 = vmatpush1.bf16.msra.mxu0 %v535
      %555 = vmatprep.subr.bf16.mxu0 0
      %556 = vmatpush1.bf16.msra.mxu0 %v536
      %557 = vmatprep.subr.bf16.mxu0 0
      %558 = vmatpush1.bf16.msra.mxu0 %v537
      %559 = vmatprep.subr.bf16.mxu0 0
      %560 = vmatpush1.bf16.msra.mxu0 %v538
      %561 = vmatprep.subr.bf16.mxu0 0
      %562 = vmatpush1.bf16.msra.mxu0 0
      %563 = vmatprep.subr.bf16.mxu0 0
      %564 = vmatpush1.bf16.msra.mxu0 0
      %565 = vmatprep.subr.bf16.mxu0 0
      %566 = vmatpush1.bf16.msra.mxu0 0
      %567 = vmatprep.subr.bf16.mxu0 0
      %568 = vmatpush1.bf16.msra.mxu0 0
      %569 = vmatprep.subr.bf16.mxu0 0
      %570 = vmatpush1.bf16.msra.mxu0 0
      %571 = vmatprep.subr.bf16.mxu0 0
      %572 = vmatpush1.bf16.msra.mxu0 0
      %573 = vmatprep.subr.bf16.mxu0 0
      %574 = vmatpush1.bf16.msra.mxu0 0
      %575 = vmatprep.subr.bf16.mxu0 0
      %576 = vmatpush1.bf16.msra.mxu0 0
      %577 = vmatprep.subr.bf16.mxu0 0
      %578 = vmatpush1.bf16.msra.mxu0 0
      %579 = vmatprep.subr.bf16.mxu0 0
      %580 = vmatpush1.bf16.msra.mxu0 0
      %581 = vmatprep.subr.bf16.mxu0 0
      %582 = vmatpush1.bf16.msra.mxu0 0
      %583 = vmatprep.subr.bf16.mxu0 0
      %584 = vmatpush1.bf16.msra.mxu0 0
      %585 = vmatprep.mubr.bf16.mxu0 0
      %586 = vmatmul.mubr.bf16.gmra.mrb[0].mxu0 %v545
      %v587 = vpop.f32.mrb[0].mxu0
      %v588 = vadd.f32 %v517, %v587
      %v589 = vpop.f32.mrb[0].mxu0
      %v590 = vpop.f32.mrb[0].mxu0
      %v591 = vadd.f32 %v517, %v590
      %v592 = vpop.f32.mrb[0].mxu0
      %593 = vmatprep.mubr.bf16.mxu0 0
      %594 = vmatmul.mubr.bf16.gmra.mrb[0].mxu0 %v548
      %v595 = vpop.f32.mrb[0].mxu0
      %v596 = vadd.f32 %v517, %v595
      %v597 = vpop.f32.mrb[0].mxu0
      %v598 = vpop.f32.mrb[0].mxu0
      %v599 = vadd.f32 %v517, %v598
      %v600 = vpop.f32.mrb[0].mxu0
      %601 = vmatprep.mubr.bf16.mxu0 0
      %602 = vmatmul.mubr.bf16.gmra.mrb[0].mxu0 %v551
      %v603 = vpop.f32.mrb[0].mxu0
      %v604 = vadd.f32 %v517, %v603
      %v605 = vpop.f32.mrb[0].mxu0
      %v606 = vpop.f32.mrb[0].mxu0
      %v607 = vadd.f32 %v517, %v606
      %v608 = vpop.f32.mrb[0].mxu0
      %609 = vdwg.mxu0
      %v610 = vmax.f32 %v588, 0.0
      %v611 = vmax.f32 %v591, 0.0
      %v612 = vmax.f32 %v596, 0.0
      %v613 = vmax.f32 %v599, 0.0
      %v614 = vmax.f32 %v604, 0.0
      %v615 = vmax.f32 %v607, 0.0
      %v616 = vld [vmem:[%s5] sm:$0xff]
      %v617 = vld [vmem:[%s5 + $0x8] sm:$0xff]
      %v618 = vld [vmem:[%s5 + $0x10] sm:$0xff]
      %v619 = vld [vmem:[%s5 + $0x18] sm:$0xff]
      %v620 = vld [vmem:[%s5 + $0x20] sm:$0xff]
      %v621 = vld [vmem:[%s5 + $0x28] sm:$0xff]
      %v622 = vld [vmem:[%s5 + $0x30] sm:$0xff]
      %v623 = vld [vmem:[%s5 + $0x38] sm:$0xff]
      %v624 = vld [vmem:[%s5 + $0x40] sm:$0xff]
      %v625 = vld [vmem:[%s5 + $0x48] sm:$0xff]
      %v626 = vld [vmem:[%s5 + $0x50] sm:$0xff]
      %v627 = vld [vmem:[%s5 + $0x58] sm:$0xff]
      %v628 = vld [vmem:[%s5 + $0x60] sm:$0xff]
      %v629 = vld [vmem:[%s5 + $0x68] sm:$0xff]
      %v630 = vld [vmem:[%s5 + $0x70] sm:$0xff]
      %v631 = vld [vmem:[%s5 + $0x78] sm:$0xff]
      %v632 = vld [vmem:[%s5 + $0x80] sm:$0xff]
      %v633 = vld [vmem:[%s5 + $0x88] sm:$0xff]
      %v634 = vld [vmem:[%s5 + $0x90] sm:$0xff]
      %v635 = vld [vmem:[%s5 + $0x98] sm:$0xff]
      %v636 = vld [vmem:[%s5 + $0xa0] sm:$0xff]
      %v637 = vld [vmem:[%s5 + $0xa8] sm:$0xff]
      %v638 = vld [vmem:[%s5 + $0xb0] sm:$0xff]
      %v639 = vld [vmem:[%s5 + $0xb8] sm:$0xff]
      %v640 = vld [vmem:[%s5 + $0xc0] sm:$0xff]
      %v641 = vld [vmem:[%s5 + $0xc8] sm:$0xff]
      %v642 = vld [vmem:[%s5 + $0xd0] sm:$0xff]
      %v643 = vld [vmem:[%s5 + $0xd8] sm:$0xff]
      %v644 = vld [vmem:[%s5 + $0xe0] sm:$0xff]
      %v645 = vld [vmem:[%s5 + $0xe8] sm:$0xff]
      %v646 = vld [vmem:[%s5 + $0xf0] sm:$0xff]
      %v647 = vld [vmem:[%s5 + $0xf8] sm:$0xff]
      %v648 = vld [vmem:[%s5 + $0x100] sm:$0xff]
      %v649 = vld [vmem:[%s5 + $0x108] sm:$0xff]
      %v650 = vld [vmem:[%s5 + $0x110] sm:$0xff]
      %v651 = vld [vmem:[%s5 + $0x118] sm:$0xff]
      %v652 = vld [vmem:[%s5 + $0x120] sm:$0xff]
      %v653 = vld [vmem:[%s5 + $0x128] sm:$0xff]
      %v654 = vld [vmem:[%s5 + $0x130] sm:$0xff]
      %v655 = vld [vmem:[%s5 + $0x138] sm:$0xff]
      %v656 = vld [vmem:[%s5 + $0x140] sm:$0xff]
      %v657 = vld [vmem:[%s5 + $0x148] sm:$0xff]
      %v658 = vld [vmem:[%s5 + $0x150] sm:$0xff]
      %v659 = vld [vmem:[%s5 + $0x158] sm:$0xff]
      %v660 = vld [vmem:[%s5 + $0x160] sm:$0xff]
      %v661 = vld [vmem:[%s5 + $0x168] sm:$0xff]
      %v662 = vld [vmem:[%s5 + $0x170] sm:$0xff]
      %v663 = vld [vmem:[%s5 + $0x178] sm:$0xff]
      %v664 = vld [vmem:[%s5 + $0x180] sm:$0xff]
      %v665 = vld [vmem:[%s5 + $0x188] sm:$0xff]
      %v666 = vld [vmem:[%s5 + $0x190] sm:$0xff]
      %v667 = vld [vmem:[%s5 + $0x198] sm:$0xff]
      %v668 = vld [vmem:[%s5 + $0x1a0] sm:$0xff]
      %v669 = vld [vmem:[%s5 + $0x1a8] sm:$0xff]
      %v670 = vld [vmem:[%s5 + $0x1b0] sm:$0xff]
      %v671 = vld [vmem:[%s5 + $0x1b8] sm:$0xff]
      %v672 = vld [vmem:[%s5 + $0x1c0] sm:$0xff]
      %v673 = vld [vmem:[%s5 + $0x1c8] sm:$0xff]
      %v674 = vld [vmem:[%s5 + $0x1d0] sm:$0xff]
      %v675 = vld [vmem:[%s5 + $0x1d8] sm:$0xff]
      %v676 = vld [vmem:[%s5 + $0x1e0] sm:$0xff]
      %v677 = vld [vmem:[%s5 + $0x1e8] sm:$0xff]
      %v678 = vld [vmem:[%s5 + $0x1f0] sm:$0xff]
      %v679 = vld [vmem:[%s5 + $0x1f8] sm:$0xff]
      %v680 = vpack.c.bf16 %v611, %v610
      %v681 = vpack.c.bf16 %v613, %v612
      %v682 = vpack.c.bf16 %v615, %v614
      %v747 = vunpack.c.l.b16 %v616
      %v748 = vunpack.c.h.b16 %v616
      %v749 = vunpack.c.l.b16 %v617
      %v750 = vunpack.c.h.b16 %v617
      %v751 = vunpack.c.l.b16 %v618
      %v752 = vunpack.c.h.b16 %v618
      %v753 = vunpack.c.l.b16 %v619
      %v754 = vunpack.c.h.b16 %v619
      %v755 = vunpack.c.l.b16 %v620
      %v756 = vunpack.c.h.b16 %v620
      %v757 = vunpack.c.l.b16 %v621
      %v758 = vunpack.c.h.b16 %v621
      %v759 = vunpack.c.l.b16 %v622
      %v760 = vunpack.c.h.b16 %v622
      %v761 = vunpack.c.l.b16 %v623
      %v762 = vunpack.c.h.b16 %v623
      %v763 = vunpack.c.l.b16 %v624
      %v764 = vunpack.c.h.b16 %v624
      %v765 = vunpack.c.l.b16 %v625
      %v766 = vunpack.c.h.b16 %v625
      %v767 = vunpack.c.l.b16 %v626
      %v768 = vunpack.c.h.b16 %v626
      %v769 = vunpack.c.l.b16 %v627
      %v770 = vunpack.c.h.b16 %v627
      %v771 = vunpack.c.l.b16 %v628
      %v772 = vunpack.c.h.b16 %v628
      %v773 = vunpack.c.l.b16 %v629
      %v774 = vunpack.c.h.b16 %v629
      %v775 = vunpack.c.l.b16 %v630
      %v776 = vunpack.c.h.b16 %v630
      %v777 = vunpack.c.l.b16 %v631
      %v778 = vunpack.c.h.b16 %v631
      %v779 = vunpack.c.l.b16 %v632
      %v780 = vunpack.c.h.b16 %v632
      %v781 = vunpack.c.l.b16 %v633
      %v782 = vunpack.c.h.b16 %v633
      %v783 = vunpack.c.l.b16 %v634
      %v784 = vunpack.c.h.b16 %v634
      %v785 = vunpack.c.l.b16 %v635
      %v786 = vunpack.c.h.b16 %v635
      %v787 = vunpack.c.l.b16 %v636
      %v788 = vunpack.c.h.b16 %v636
      %v789 = vunpack.c.l.b16 %v637
      %v790 = vunpack.c.h.b16 %v637
      %v791 = vunpack.c.l.b16 %v638
      %v792 = vunpack.c.h.b16 %v638
      %v793 = vunpack.c.l.b16 %v639
      %v794 = vunpack.c.h.b16 %v639
      %v795 = vunpack.c.l.b16 %v640
      %v796 = vunpack.c.h.b16 %v640
      %v797 = vunpack.c.l.b16 %v641
      %v798 = vunpack.c.h.b16 %v641
      %v799 = vunpack.c.l.b16 %v642
      %v800 = vunpack.c.h.b16 %v642
      %v801 = vunpack.c.l.b16 %v643
      %v802 = vunpack.c.h.b16 %v643
      %v803 = vunpack.c.l.b16 %v644
      %v804 = vunpack.c.h.b16 %v644
      %v805 = vunpack.c.l.b16 %v645
      %v806 = vunpack.c.h.b16 %v645
      %v807 = vunpack.c.l.b16 %v646
      %v808 = vunpack.c.h.b16 %v646
      %v809 = vunpack.c.l.b16 %v647
      %v810 = vunpack.c.h.b16 %v647
      %v811 = vunpack.c.l.b16 %v648
      %v812 = vunpack.c.h.b16 %v648
      %v813 = vunpack.c.l.b16 %v649
      %v814 = vunpack.c.h.b16 %v649
      %v815 = vunpack.c.l.b16 %v650
      %v816 = vunpack.c.h.b16 %v650
      %v817 = vunpack.c.l.b16 %v651
      %v818 = vunpack.c.h.b16 %v651
      %v819 = vunpack.c.l.b16 %v652
      %v820 = vunpack.c.h.b16 %v652
      %v821 = vunpack.c.l.b16 %v653
      %v822 = vunpack.c.h.b16 %v653
      %v823 = vunpack.c.l.b16 %v654
      %v824 = vunpack.c.h.b16 %v654
      %v825 = vunpack.c.l.b16 %v655
      %v826 = vunpack.c.h.b16 %v655
      %v827 = vunpack.c.l.b16 %v656
      %v828 = vunpack.c.h.b16 %v656
      %v829 = vunpack.c.l.b16 %v657
      %v830 = vunpack.c.h.b16 %v657
      %v831 = vunpack.c.l.b16 %v658
      %v832 = vunpack.c.h.b16 %v658
      %v833 = vunpack.c.l.b16 %v659
      %v834 = vunpack.c.h.b16 %v659
      %v835 = vunpack.c.l.b16 %v660
      %v836 = vunpack.c.h.b16 %v660
      %v837 = vunpack.c.l.b16 %v661
      %v838 = vunpack.c.h.b16 %v661
      %v839 = vunpack.c.l.b16 %v662
      %v840 = vunpack.c.h.b16 %v662
      %v841 = vunpack.c.l.b16 %v663
      %v842 = vunpack.c.h.b16 %v663
      %v843 = vunpack.c.l.b16 %v664
      %v844 = vunpack.c.h.b16 %v664
      %v845 = vunpack.c.l.b16 %v665
      %v846 = vunpack.c.h.b16 %v665
      %v847 = vunpack.c.l.b16 %v666
      %v848 = vunpack.c.h.b16 %v666
      %v849 = vunpack.c.l.b16 %v667
      %v850 = vunpack.c.h.b16 %v667
      %v851 = vunpack.c.l.b16 %v668
      %v852 = vunpack.c.h.b16 %v668
      %v853 = vunpack.c.l.b16 %v669
      %v854 = vunpack.c.h.b16 %v669
      %v855 = vunpack.c.l.b16 %v670
      %v856 = vunpack.c.h.b16 %v670
      %v857 = vunpack.c.l.b16 %v671
      %v858 = vunpack.c.h.b16 %v671
      %v859 = vunpack.c.l.b16 %v672
      %v860 = vunpack.c.h.b16 %v672
      %v861 = vunpack.c.l.b16 %v673
      %v862 = vunpack.c.h.b16 %v673
      %v863 = vunpack.c.l.b16 %v674
      %v864 = vunpack.c.h.b16 %v674
      %v865 = vunpack.c.l.b16 %v675
      %v866 = vunpack.c.h.b16 %v675
      %v867 = vunpack.c.l.b16 %v676
      %v868 = vunpack.c.h.b16 %v676
      %v869 = vunpack.c.l.b16 %v677
      %v870 = vunpack.c.h.b16 %v677
      %v871 = vunpack.c.l.b16 %v678
      %v872 = vunpack.c.h.b16 %v678
      %v873 = vunpack.c.l.b16 %v679
      %v874 = vunpack.c.h.b16 %v679
      %v875 = vpack.c.b16 %v755, %v747
      %v876 = vpack.c.b16 %v756, %v748
      %v877 = vpack.c.b16 %v757, %v749
      %v878 = vpack.c.b16 %v758, %v750
      %v879 = vpack.c.b16 %v759, %v751
      %v880 = vpack.c.b16 %v760, %v752
      %v881 = vpack.c.b16 %v761, %v753
      %v882 = vpack.c.b16 %v762, %v754
      %v883 = vpack.c.b16 %v771, %v763
      %v884 = vpack.c.b16 %v772, %v764
      %v885 = vpack.c.b16 %v773, %v765
      %v886 = vpack.c.b16 %v774, %v766
      %v887 = vpack.c.b16 %v775, %v767
      %v888 = vpack.c.b16 %v776, %v768
      %v889 = vpack.c.b16 %v777, %v769
      %v890 = vpack.c.b16 %v778, %v770
      %v891 = vpack.c.b16 %v787, %v779
      %v892 = vpack.c.b16 %v788, %v780
      %v893 = vpack.c.b16 %v789, %v781
      %v894 = vpack.c.b16 %v790, %v782
      %v895 = vpack.c.b16 %v791, %v783
      %v896 = vpack.c.b16 %v792, %v784
      %v897 = vpack.c.b16 %v793, %v785
      %v898 = vpack.c.b16 %v794, %v786
      %v899 = vpack.c.b16 %v803, %v795
      %v900 = vpack.c.b16 %v804, %v796
      %v901 = vpack.c.b16 %v805, %v797
      %v902 = vpack.c.b16 %v806, %v798
      %v903 = vpack.c.b16 %v807, %v799
      %v904 = vpack.c.b16 %v808, %v800
      %v905 = vpack.c.b16 %v809, %v801
      %v906 = vpack.c.b16 %v810, %v802
      %v907 = vpack.c.b16 %v819, %v811
      %v908 = vpack.c.b16 %v820, %v812
      %v909 = vpack.c.b16 %v821, %v813
      %v910 = vpack.c.b16 %v822, %v814
      %v911 = vpack.c.b16 %v823, %v815
      %v912 = vpack.c.b16 %v824, %v816
      %v913 = vpack.c.b16 %v825, %v817
      %v914 = vpack.c.b16 %v826, %v818
      %v915 = vpack.c.b16 %v835, %v827
      %v916 = vpack.c.b16 %v836, %v828
      %v917 = vpack.c.b16 %v837, %v829
      %v918 = vpack.c.b16 %v838, %v830
      %v919 = vpack.c.b16 %v839, %v831
      %v920 = vpack.c.b16 %v840, %v832
      %v921 = vpack.c.b16 %v841, %v833
      %v922 = vpack.c.b16 %v842, %v834
      %v923 = vpack.c.b16 %v851, %v843
      %v924 = vpack.c.b16 %v852, %v844
      %v925 = vpack.c.b16 %v853, %v845
      %v926 = vpack.c.b16 %v854, %v846
      %v927 = vpack.c.b16 %v855, %v847
      %v928 = vpack.c.b16 %v856, %v848
      %v929 = vpack.c.b16 %v857, %v849
      %v930 = vpack.c.b16 %v858, %v850
      %v931 = vpack.c.b16 %v867, %v859
      %v932 = vpack.c.b16 %v868, %v860
      %v933 = vpack.c.b16 %v869, %v861
      %v934 = vpack.c.b16 %v870, %v862
      %v935 = vpack.c.b16 %v871, %v863
      %v936 = vpack.c.b16 %v872, %v864
      %v937 = vpack.c.b16 %v873, %v865
      %v938 = vpack.c.b16 %v874, %v866
      %1003 = vmatprep.subr.bf16.mxu0 %v876
      %1004 = vmatpush1.bf16.msra.mxu0 %v875
      %1005 = vmatprep.subr.bf16.mxu0 %v884
      %1006 = vmatpush1.bf16.msra.mxu0 %v883
      %1007 = vmatprep.subr.bf16.mxu0 %v892
      %1008 = vmatpush1.bf16.msra.mxu0 %v891
      %1009 = vmatprep.subr.bf16.mxu0 %v900
      %1010 = vmatpush1.bf16.msra.mxu0 %v899
      %1011 = vmatprep.subr.bf16.mxu0 %v908
      %1012 = vmatpush1.bf16.msra.mxu0 %v907
      %1013 = vmatprep.subr.bf16.mxu0 %v916
      %1014 = vmatpush1.bf16.msra.mxu0 %v915
      %1015 = vmatprep.subr.bf16.mxu0 %v924
      %1016 = vmatpush1.bf16.msra.mxu0 %v923
      %1017 = vmatprep.subr.bf16.mxu0 %v932
      %1018 = vmatpush1.bf16.msra.mxu0 %v931
      %1019 = vmatprep.subr.bf16.mxu0 0
      %1020 = vmatpush1.bf16.msra.mxu0 0
      %1021 = vmatprep.subr.bf16.mxu0 0
      %1022 = vmatpush1.bf16.msra.mxu0 0
      %1023 = vmatprep.subr.bf16.mxu0 0
      %1024 = vmatpush1.bf16.msra.mxu0 0
      %1025 = vmatprep.subr.bf16.mxu0 0
      %1026 = vmatpush1.bf16.msra.mxu0 0
      %1027 = vmatprep.subr.bf16.mxu0 0
      %1028 = vmatpush1.bf16.msra.mxu0 0
      %1029 = vmatprep.subr.bf16.mxu0 0
      %1030 = vmatpush1.bf16.msra.mxu0 0
      %1031 = vmatprep.subr.bf16.mxu0 0
      %1032 = vmatpush1.bf16.msra.mxu0 0
      %1033 = vmatprep.subr.bf16.mxu0 0
      %1034 = vmatpush1.bf16.msra.mxu0 0
      %1035 = vmatprep.mubr.bf16.mxu0 0
      %1036 = vmatmul.mubr.bf16.gmra.mrb[0].mxu0 %v680
      %v1037 = vpop.f32.mrb[0].mxu0
      %v1038 = vadd.f32 0.0, %v1037
      %v1039 = vpop.f32.mrb[0].mxu0
      %v1040 = vadd.f32 0.0, %v1039
      %v1041 = vpop.f32.mrb[0].mxu0
      %v1042 = vadd.f32 0.0, %v1041
      %v1043 = vpop.f32.mrb[0].mxu0
      %v1044 = vadd.f32 0.0, %v1043
      %1045 = vmatprep.mubr.bf16.mxu0 0
      %1046 = vmatmul.mubr.bf16.gmra.mrb[0].mxu0 %v681
      %v1047 = vpop.f32.mrb[0].mxu0
      %v1048 = vadd.f32 0.0, %v1047
      %v1049 = vpop.f32.mrb[0].mxu0
      %v1050 = vadd.f32 0.0, %v1049
      %v1051 = vpop.f32.mrb[0].mxu0
      %v1052 = vadd.f32 0.0, %v1051
      %v1053 = vpop.f32.mrb[0].mxu0
      %v1054 = vadd.f32 0.0, %v1053
      %1055 = vmatprep.mubr.bf16.mxu0 0
      %1056 = vmatmul.mubr.bf16.gmra.mrb[0].mxu0 %v682
      %v1057 = vpop.f32.mrb[0].mxu0
      %v1058 = vadd.f32 0.0, %v1057
      %v1059 = vpop.f32.mrb[0].mxu0
      %v1060 = vadd.f32 0.0, %v1059
      %v1061 = vpop.f32.mrb[0].mxu0
      %v1062 = vadd.f32 0.0, %v1061
      %v1063 = vpop.f32.mrb[0].mxu0
      %v1064 = vadd.f32 0.0, %v1063
      %1065 = vdwg.mxu0
      %1066 = vmatprep.subr.bf16.mxu0 %v878
      %1067 = vmatpush1.bf16.msra.mxu0 %v877
      %1068 = vmatprep.subr.bf16.mxu0 %v886
      %1069 = vmatpush1.bf16.msra.mxu0 %v885
      %1070 = vmatprep.subr.bf16.mxu0 %v894
      %1071 = vmatpush1.bf16.msra.mxu0 %v893
      %1072 = vmatprep.subr.bf16.mxu0 %v902
      %1073 = vmatpush1.bf16.msra.mxu0 %v901
      %1074 = vmatprep.subr.bf16.mxu0 %v910
      %1075 = vmatpush1.bf16.msra.mxu0 %v909
      %1076 = vmatprep.subr.bf16.mxu0 %v918
      %1077 = vmatpush1.bf16.msra.mxu0 %v917
      %1078 = vmatprep.subr.bf16.mxu0 %v926
      %1079 = vmatpush1.bf16.msra.mxu0 %v925
      %1080 = vmatprep.subr.bf16.mxu0 %v934
      %1081 = vmatpush1.bf16.msra.mxu0 %v933
      %1082 = vmatprep.subr.bf16.mxu0 0
      %1083 = vmatpush1.bf16.msra.mxu0 0
      %1084 = vmatprep.subr.bf16.mxu0 0
      %1085 = vmatpush1.bf16.msra.mxu0 0
      %1086 = vmatprep.subr.bf16.mxu0 0
      %1087 = vmatpush1.bf16.msra.mxu0 0
      %1088 = vmatprep.subr.bf16.mxu0 0
      %1089 = vmatpush1.bf16.msra.mxu0 0
      %1090 = vmatprep.subr.bf16.mxu0 0
      %1091 = vmatpush1.bf16.msra.mxu0 0
      %1092 = vmatprep.subr.bf16.mxu0 0
      %1093 = vmatpush1.bf16.msra.mxu0 0
      %1094 = vmatprep.subr.bf16.mxu0 0
      %1095 = vmatpush1.bf16.msra.mxu0 0
      %1096 = vmatprep.subr.bf16.mxu0 0
      %1097 = vmatpush1.bf16.msra.mxu0 0
      %1098 = vmatprep.mubr.bf16.mxu0 0
      %1099 = vmatmul.mubr.bf16.gmra.mrb[0].mxu0 %v680
      %v1100 = vpop.f32.mrb[0].mxu0
      %v1101 = vadd.f32 0.0, %v1100
      %v1102 = vpop.f32.mrb[0].mxu0
      %v1103 = vadd.f32 0.0, %v1102
      %v1104 = vpop.f32.mrb[0].mxu0
      %v1105 = vadd.f32 0.0, %v1104
      %v1106 = vpop.f32.mrb[0].mxu0
      %v1107 = vadd.f32 0.0, %v1106
      %1108 = vmatprep.mubr.bf16.mxu0 0
      %1109 = vmatmul.mubr.bf16.gmra.mrb[0].mxu0 %v681
      %v1110 = vpop.f32.mrb[0].mxu0
      %v1111 = vadd.f32 0.0, %v1110
      %v1112 = vpop.f32.mrb[0].mxu0
      %v1113 = vadd.f32 0.0, %v1112
      %v1114 = vpop.f32.mrb[0].mxu0
      %v1115 = vadd.f32 0.0, %v1114
      %v1116 = vpop.f32.mrb[0].mxu0
      %v1117 = vadd.f32 0.0, %v1116
      %1118 = vmatprep.mubr.bf16.mxu0 0
      %1119 = vmatmul.mubr.bf16.gmra.mrb[0].mxu0 %v682
      %v1120 = vpop.f32.mrb[0].mxu0
      %v1121 = vadd.f32 0.0, %v1120
      %v1122 = vpop.f32.mrb[0].mxu0
      %v1123 = vadd.f32 0.0, %v1122
      %v1124 = vpop.f32.mrb[0].mxu0
      %v1125 = vadd.f32 0.0, %v1124
      %v1126 = vpop.f32.mrb[0].mxu0
      %v1127 = vadd.f32 0.0, %v1126
      %1128 = vdwg.mxu0
      %1129 = vmatprep.subr.bf16.mxu0 %v880
      %1130 = vmatpush1.bf16.msra.mxu0 %v879
      %1131 = vmatprep.subr.bf16.mxu0 %v888
      %1132 = vmatpush1.bf16.msra.mxu0 %v887
      %1133 = vmatprep.subr.bf16.mxu0 %v896
      %1134 = vmatpush1.bf16.msra.mxu0 %v895
      %1135 = vmatprep.subr.bf16.mxu0 %v904
      %1136 = vmatpush1.bf16.msra.mxu0 %v903
      %1137 = vmatprep.subr.bf16.mxu0 %v912
      %1138 = vmatpush1.bf16.msra.mxu0 %v911
      %1139 = vmatprep.subr.bf16.mxu0 %v920
      %1140 = vmatpush1.bf16.msra.mxu0 %v919
      %1141 = vmatprep.subr.bf16.mxu0 %v928
      %1142 = vmatpush1.bf16.msra.mxu0 %v927
      %1143 = vmatprep.subr.bf16.mxu0 %v936
      %1144 = vmatpush1.bf16.msra.mxu0 %v935
      %1145 = vmatprep.subr.bf16.mxu0 0
      %1146 = vmatpush1.bf16.msra.mxu0 0
      %1147 = vmatprep.subr.bf16.mxu0 0
      %1148 = vmatpush1.bf16.msra.mxu0 0
      %1149 = vmatprep.subr.bf16.mxu0 0
      %1150 = vmatpush1.bf16.msra.mxu0 0
      %1151 = vmatprep.subr.bf16.mxu0 0
      %1152 = vmatpush1.bf16.msra.mxu0 0
      %1153 = vmatprep.subr.bf16.mxu0 0
      %1154 = vmatpush1.bf16.msra.mxu0 0
      %1155 = vmatprep.subr.bf16.mxu0 0
      %1156 = vmatpush1.bf16.msra.mxu0 0
      %1157 = vmatprep.subr.bf16.mxu0 0
      %1158 = vmatpush1.bf16.msra.mxu0 0
      %1159 = vmatprep.subr.bf16.mxu0 0
      %1160 = vmatpush1.bf16.msra.mxu0 0
      %1161 = vmatprep.mubr.bf16.mxu0 0
      %1162 = vmatmul.mubr.bf16.gmra.mrb[0].mxu0 %v680
      %v1163 = vpop.f32.mrb[0].mxu0
      %v1164 = vadd.f32 0.0, %v1163
      %v1165 = vpop.f32.mrb[0].mxu0
      %v1166 = vadd.f32 0.0, %v1165
      %v1167 = vpop.f32.mrb[0].mxu0
      %v1168 = vadd.f32 0.0, %v1167
      %v1169 = vpop.f32.mrb[0].mxu0
      %v1170 = vadd.f32 0.0, %v1169
      %1171 = vmatprep.mubr.bf16.mxu0 0
      %1172 = vmatmul.mubr.bf16.gmra.mrb[0].mxu0 %v681
      %v1173 = vpop.f32.mrb[0].mxu0
      %v1174 = vadd.f32 0.0, %v1173
      %v1175 = vpop.f32.mrb[0].mxu0
      %v1176 = vadd.f32 0.0, %v1175
      %v1177 = vpop.f32.mrb[0].mxu0
      %v1178 = vadd.f32 0.0, %v1177
      %v1179 = vpop.f32.mrb[0].mxu0
      %v1180 = vadd.f32 0.0, %v1179
      %1181 = vmatprep.mubr.bf16.mxu0 0
      %1182 = vmatmul.mubr.bf16.gmra.mrb[0].mxu0 %v682
      %v1183 = vpop.f32.mrb[0].mxu0
      %v1184 = vadd.f32 0.0, %v1183
      %v1185 = vpop.f32.mrb[0].mxu0
      %v1186 = vadd.f32 0.0, %v1185
      %v1187 = vpop.f32.mrb[0].mxu0
      %v1188 = vadd.f32 0.0, %v1187
      %v1189 = vpop.f32.mrb[0].mxu0
      %v1190 = vadd.f32 0.0, %v1189
      %1191 = vdwg.mxu0
      %1192 = vmatprep.subr.bf16.mxu0 %v882
      %1193 = vmatpush1.bf16.msra.mxu0 %v881
      %1194 = vmatprep.subr.bf16.mxu0 %v890
      %1195 = vmatpush1.bf16.msra.mxu0 %v889
      %1196 = vmatprep.subr.bf16.mxu0 %v898
      %1197 = vmatpush1.bf16.msra.mxu0 %v897
      %1198 = vmatprep.subr.bf16.mxu0 %v906
      %1199 = vmatpush1.bf16.msra.mxu0 %v905
      %1200 = vmatprep.subr.bf16.mxu0 %v914
      %1201 = vmatpush1.bf16.msra.mxu0 %v913
      %1202 = vmatprep.subr.bf16.mxu0 %v922
      %1203 = vmatpush1.bf16.msra.mxu0 %v921
      %1204 = vmatprep.subr.bf16.mxu0 %v930
      %1205 = vmatpush1.bf16.msra.mxu0 %v929
      %1206 = vmatprep.subr.bf16.mxu0 %v938
      %1207 = vmatpush1.bf16.msra.mxu0 %v937
      %1208 = vmatprep.subr.bf16.mxu0 0
      %1209 = vmatpush1.bf16.msra.mxu0 0
      %1210 = vmatprep.subr.bf16.mxu0 0
      %1211 = vmatpush1.bf16.msra.mxu0 0
      %1212 = vmatprep.subr.bf16.mxu0 0
      %1213 = vmatpush1.bf16.msra.mxu0 0
      %1214 = vmatprep.subr.bf16.mxu0 0
      %1215 = vmatpush1.bf16.msra.mxu0 0
      %1216 = vmatprep.subr.bf16.mxu0 0
      %1217 = vmatpush1.bf16.msra.mxu0 0
      %1218 = vmatprep.subr.bf16.mxu0 0
      %1219 = vmatpush1.bf16.msra.mxu0 0
      %1220 = vmatprep.subr.bf16.mxu0 0
      %1221 = vmatpush1.bf16.msra.mxu0 0
      %1222 = vmatprep.subr.bf16.mxu0 0
      %1223 = vmatpush1.bf16.msra.mxu0 0
      %1224 = vmatprep.mubr.bf16.mxu0 0
      %1225 = vmatmul.mubr.bf16.gmra.mrb[0].mxu0 %v680
      %v1226 = vpop.f32.mrb[0].mxu0
      %v1227 = vadd.f32 0.0, %v1226
      %v1228 = vpop.f32.mrb[0].mxu0
      %v1229 = vadd.f32 0.0, %v1228
      %v1230 = vpop.f32.mrb[0].mxu0
      %v1231 = vadd.f32 0.0, %v1230
      %v1232 = vpop.f32.mrb[0].mxu0
      %v1233 = vadd.f32 0.0, %v1232
      %1234 = vmatprep.mubr.bf16.mxu0 0
      %1235 = vmatmul.mubr.bf16.gmra.mrb[0].mxu0 %v681
      %v1236 = vpop.f32.mrb[0].mxu0
      %v1237 = vadd.f32 0.0, %v1236
      %v1238 = vpop.f32.mrb[0].mxu0
      %v1239 = vadd.f32 0.0, %v1238
      %v1240 = vpop.f32.mrb[0].mxu0
      %v1241 = vadd.f32 0.0, %v1240
      %v1242 = vpop.f32.mrb[0].mxu0
      %v1243 = vadd.f32 0.0, %v1242
      %1244 = vmatprep.mubr.bf16.mxu0 0
      %1245 = vmatmul.mubr.bf16.gmra.mrb[0].mxu0 %v682
      %v1246 = vpop.f32.mrb[0].mxu0
      %v1247 = vadd.f32 0.0, %v1246
      %v1248 = vpop.f32.mrb[0].mxu0
      %v1249 = vadd.f32 0.0, %v1248
      %v1250 = vpop.f32.mrb[0].mxu0
      %v1251 = vadd.f32 0.0, %v1250
      %v1252 = vpop.f32.mrb[0].mxu0
      %v1253 = vadd.f32 0.0, %v1252
      %1254 = vdwg.mxu0
      %p1255 = scmp.eq.s32.totalorder %s25, 0
      // Predicated region
      $region49: #{pointnetcls_forward.4} parent=47 // pred_check
        %p1256 = pneg %p1255
      $region50: #{pointnetcls_forward.4} parent=47 // pred_check_branch
        %1258 = sbr.rel (%p1256) target = $region52
      $region51: #{pointnetcls_forward.4} parent=47 // pred_region
        %1259 = vst [vmem:[%s334] sm:$0xff] -inf
      $region52: #{pointnetcls_forward.4} parent=47 // pred_fallthru
        _
      %v1260 = vld [vmem:[%s334] sm:$0xff]
      %v1261 = vmax.f32 %v1038, %v1042
      %v1262 = vmax.f32 %v1261, %v1048
      %v1263 = vmax.f32 %v1262, %v1052
      %v1264 = vmax.f32 %v1263, %v1058
      %v1265 = vmax.f32 %v1264, %v1062
      %v1266 = vrot.slane %v1265, 4
      %v1267 = vmax.f32 %v1265, %v1266
      %v1268 = vrot.slane %v1267, 2
      %v1269 = vmax.f32 %v1267, %v1268
      %v1270 = vrot.slane %v1269, 1
      %v1271 = vmax.f32 %v1269, %v1270
      %v1272 = vmax.f32 %v1040, %v1044
      %v1273 = vmax.f32 %v1272, %v1050
      %v1274 = vmax.f32 %v1273, %v1054
      %v1275 = vmax.f32 %v1274, %v1060
      %v1276 = vmax.f32 %v1275, %v1064
      %v1277 = vrot.slane %v1276, 4
      %v1278 = vmax.f32 %v1276, %v1277
      %v1279 = vrot.slane %v1278, 2
      %v1280 = vmax.f32 %v1278, %v1279
      %v1281 = vrot.slane %v1280, 1
      %v1282 = vmax.f32 %v1280, %v1281
      %v1283 = vmax.f32 %v1101, %v1105
      %v1284 = vmax.f32 %v1283, %v1111
      %v1285 = vmax.f32 %v1284, %v1115
      %v1286 = vmax.f32 %v1285, %v1121
      %v1287 = vmax.f32 %v1286, %v1125
      %v1288 = vrot.slane %v1287, 4
      %v1289 = vmax.f32 %v1287, %v1288
      %v1290 = vrot.slane %v1289, 2
      %v1291 = vmax.f32 %v1289, %v1290
      %v1292 = vrot.slane %v1291, 1
      %v1293 = vmax.f32 %v1291, %v1292
      %v1294 = vmax.f32 %v1103, %v1107
      %v1295 = vmax.f32 %v1294, %v1113
      %v1296 = vmax.f32 %v1295, %v1117
      %v1297 = vmax.f32 %v1296, %v1123
      %v1298 = vmax.f32 %v1297, %v1127
      %v1299 = vrot.slane %v1298, 4
      %v1300 = vmax.f32 %v1298, %v1299
      %v1301 = vrot.slane %v1300, 2
      %v1302 = vmax.f32 %v1300, %v1301
      %v1303 = vrot.slane %v1302, 1
      %v1304 = vmax.f32 %v1302, %v1303
      %v1305 = vmax.f32 %v1164, %v1168
      %v1306 = vmax.f32 %v1305, %v1174
      %v1307 = vmax.f32 %v1306, %v1178
      %v1308 = vmax.f32 %v1307, %v1184
      %v1309 = vmax.f32 %v1308, %v1188
      %v1310 = vrot.slane %v1309, 4
      %v1311 = vmax.f32 %v1309, %v1310
      %v1312 = vrot.slane %v1311, 2
      %v1313 = vmax.f32 %v1311, %v1312
      %v1314 = vrot.slane %v1313, 1
      %v1315 = vmax.f32 %v1313, %v1314
      %v1316 = vmax.f32 %v1166, %v1170
      %v1317 = vmax.f32 %v1316, %v1176
      %v1318 = vmax.f32 %v1317, %v1180
      %v1319 = vmax.f32 %v1318, %v1186
      %v1320 = vmax.f32 %v1319, %v1190
      %v1321 = vrot.slane %v1320, 4
      %v1322 = vmax.f32 %v1320, %v1321
      %v1323 = vrot.slane %v1322, 2
      %v1324 = vmax.f32 %v1322, %v1323
      %v1325 = vrot.slane %v1324, 1
      %v1326 = vmax.f32 %v1324, %v1325
      %v1327 = vmax.f32 %v1227, %v1231
      %v1328 = vmax.f32 %v1327, %v1237
      %v1329 = vmax.f32 %v1328, %v1241
      %v1330 = vmax.f32 %v1329, %v1247
      %v1331 = vmax.f32 %v1330, %v1251
      %v1332 = vrot.slane %v1331, 4
      %v1333 = vmax.f32 %v1331, %v1332
      %v1334 = vrot.slane %v1333, 2
      %v1335 = vmax.f32 %v1333, %v1334
      %v1336 = vrot.slane %v1335, 1
      %v1337 = vmax.f32 %v1335, %v1336
      %v1338 = vmax.f32 %v1229, %v1233
      %v1339 = vmax.f32 %v1338, %v1239
      %v1340 = vmax.f32 %v1339, %v1243
      %v1341 = vmax.f32 %v1340, %v1249
      %v1342 = vmax.f32 %v1341, %v1253
      %v1343 = vrot.slane %v1342, 4
      %v1344 = vmax.f32 %v1342, %v1343
      %v1345 = vrot.slane %v1344, 2
      %v1346 = vmax.f32 %v1344, %v1345
      %v1347 = vrot.slane %v1346, 1
      %v1348 = vmax.f32 %v1346, %v1347
      %v1357 = vcombine.low %v1271, %v1282
      %v1358 = vcombine.low %v1293, %v1304
      %v1359 = vcombine.low %v1315, %v1326
      %v1360 = vcombine.low %v1337, %v1348
      %v1362 = vunpack.c.l.s4 1966171168
      %v1363 = vunpack.c.0.s8 %v1362
      %v1364 = vlaneseq
      %v1365 = vshrl.u32 %v1364, 7
      %v1366 = vsub.s32 %v1363, %v1365
      %v1367 = vrot.slane %v1357, %v1366
      %v1369 = vunpack.c.l.s4 1966171168
      %v1370 = vunpack.c.0.s8 %v1369
      %v1371 = vlaneseq
      %v1372 = vshrl.u32 %v1371, 7
      %v1373 = vsub.s32 %v1370, %v1372
      %v1374 = vrot.slane %v1358, %v1373
      %v1376 = vunpack.c.l.s4 1966171168
      %v1377 = vunpack.c.0.s8 %v1376
      %v1378 = vlaneseq
      %v1379 = vshrl.u32 %v1378, 7
      %v1380 = vsub.s32 %v1377, %v1379
      %v1381 = vrot.slane %v1359, %v1380
      %v1383 = vunpack.c.l.s4 1966171168
      %v1384 = vunpack.c.0.s8 %v1383
      %v1385 = vlaneseq
      %v1386 = vshrl.u32 %v1385, 7
      %v1387 = vsub.s32 %v1384, %v1386
      %v1388 = vrot.slane %v1360, %v1387
      %v1389 = vcombine.low %v1367, %v1374
      %v1390 = vcombine.low %v1381, %v1388
      %v1392 = vunpack.c.l.s4 1966171168
      %v1393 = vunpack.c.0.s8 %v1392
      %v1394 = vlaneseq
      %v1395 = vshrl.u32 %v1394, 7
      %v1396 = vsub.s32 %v1393, %v1395
      %v1397 = vrot.slane %v1389, %v1396
      %v1399 = vunpack.c.l.s4 1966171168
      %v1400 = vunpack.c.0.s8 %v1399
      %v1401 = vlaneseq
      %v1402 = vshrl.u32 %v1401, 7
      %v1403 = vsub.s32 %v1400, %v1402
      %v1404 = vrot.slane %v1390, %v1403
      %v1405 = vcombine.low %v1397, %v1404
      %v1407 = vmax.f32 %v1260, %v1405
      %1408 = vst [vmem:[%s334] sm:$0xff] %v1407
      // Predicated region
      $region53: #{pointnetcls_forward.4} parent=47 // pred_check
        %p1409 = pneg %p1255
      $region54: #{pointnetcls_forward.4} parent=47 // pred_check_branch
        %1411 = sbr.rel (%p1409) target = $region56
      $region55: #{pointnetcls_forward.4} parent=47 // pred_region
        %v1412 = vld [vmem:[%s334] sm:$0xff]
        %v1413 = vld [vmem:[%s6] sm:$0xff]
        %v1414 = vadd.f32 %v1412, %v1413
        %1415 = vst [vmem:[%s334] sm:$0xff] %v1414
      $region56: #{pointnetcls_forward.4} parent=47 // pred_fallthru
        _
      %p1416 = scmp.lt.s32.totalorder %s23, 1
      %s1417 = scalar_select %p1416, %s23, 1
      %p1418 = scmp.lt.s32.totalorder %s24, 0
      %s1419 = scalar_select %p1418, %s24, 0
      %s1420 = smul.addr %s1419, 8
      %s1421 = smul.addr %s1417, 8
      %s1422 = sadd.s32 %s1420, %s1421
      %s1423 = scalar_lea.vmem %s7, %s1422
      // Predicated region
      $region57: #{pointnetcls_forward.4} parent=47 // pred_check
        %p1424 = pneg %p217
      $region58: #{pointnetcls_forward.4} parent=47 // pred_check_branch
        %1426 = sbr.rel (%p1424) target = $region60
      $region59: #{pointnetcls_forward.4} parent=47 // pred_region
        _
      $region60: #{pointnetcls_forward.4} parent=47 // pred_fallthru
        _
    $region48: #{pointnetcls_forward.4} parent=5 // pred_fallthru
      _
    %p1427 = scmp.le.s32.totalorder 2, %s13
    // Predicated region
    $region61: #{pointnetcls_forward.4} parent=5 // pred_check
      %p1428 = pneg %p1427
    $region62: #{pointnetcls_forward.4} parent=5 // pred_check_branch
      %1430 = sbr.rel (%p1428) target = $region64
    $region63: #{pointnetcls_forward.4} parent=5 // pred_region
      %s1431 = ssub.s32 %s13, 2
      // Predicated region
      $region65: #{pointnetcls_forward.4} parent=63 // pred_check
        %p1432 = pneg %p223
      $region66: #{pointnetcls_forward.4} parent=63 // pred_check_branch
        %1434 = sbr.rel (%p1432) target = $region68
      $region67: #{pointnetcls_forward.4} parent=63 // pred_region
        %p1435 = scmp.lt.s32.totalorder %s26, 1
        %s1436 = scalar_select %p1435, %s26, 1
        %p1437 = scmp.lt.s32.totalorder %s27, 0
        %s1438 = scalar_select %p1437, %s27, 0
        %s1439 = smul.addr %s1438, 8
        %s1440 = smul.addr %s1436, 8
        %s1441 = sadd.s32 %s1439, %s1440
        %s1442 = scalar_lea.vmem %s7, %s1441
      $region68: #{pointnetcls_forward.4} parent=63 // pred_fallthru
        _
    $region64: #{pointnetcls_forward.4} parent=5 // pred_fallthru
      _
  $region6: #{pointnetcls_forward.4} parent=0 // loop_footer
    %s17 = sadd.s32 1, %s13
  $region7: #{pointnetcls_forward.4} parent=0 // loop_footer_branch
    %12 = sbr.rel target = $region3
  $region8: #{pointnetcls_forward.4} parent=0 // loop_exit
    _

// kernel: pointnetcls_forward.6
$region0: #{pointnetcls_forward.6}
  #allocation0 [shape = 'u32[]', space=smem, size = 0x4, offset = 0x4, fixed_abs, tag = 'smem constant byte address 0x4 - core index']
  #allocation1 [shape = 'u32[144,128]{1,0:T(1,128)}', space=vmem, size = 0x12000, scoped, tag = 'internal scratch']
  %s0 = inlined_call_operand.vmem [shape: f32[2,3,48], index: 0, kind: input, shape index: {}]
  %s1 = inlined_call_operand.vmem [shape: f32[2,3,64], index: 1, kind: input, shape index: {}]
  %s2 = inlined_call_operand.vmem [shape: f32[1,64], index: 2, kind: input, shape index: {}]
  %s3 = inlined_call_operand.vmem [shape: bf16[64,128], index: 3, kind: input, shape index: {}]
  %s4 = inlined_call_operand.vmem [shape: f32[1,128], index: 4, kind: input, shape index: {}]
  %s5 = inlined_call_operand.vmem [shape: bf16[128,1024], index: 5, kind: input, shape index: {}]
  %s6 = inlined_call_operand.vmem [shape: f32[1,1024], index: 6, kind: input, shape index: {}]
  %s7 = inlined_call_operand.vmem [shape: f32[2,1,1,1024], index: 7, kind: output, shape index: {}]
  %s8 = sld [smem:[#allocation0]]
  $region69: #{pointnetcls_forward.6} parent=0
    _
  %s10 = ssub.s32 1, %s8
  %s11 = scalar_select 0, %s10, %s8
  loop: start=0, step=1, limit=4
  $region2: #{pointnetcls_forward.6} parent=0 // loop_pre_header
    _
  $region3: #{pointnetcls_forward.6} parent=0 // loop_header
    %s13 = sphi 0, %s17
    %p14 = scmp.ge.s32.totalorder %s13, 4
    %s20 = sphi 0, %s39
    %s21 = sphi 0, %s35
    %s22 = sphi 0, %s31
    %s23 = sphi 0, %s20
    %s24 = sphi 0, %s21
    %s25 = sphi 0, %s22
    %s26 = sphi 0, %s23
    %s27 = sphi 0, %s24
    %s28 = sphi 0, %s25
    %s50 = sphi 0, %s52
    %s53 = sphi 0, %s50
    %s54 = sphi 0, %s53
    %s70 = sphi 0, %s54
    %s76 = sphi 0, %s78
    %s79 = sphi 0, %s76
    %s80 = sphi 0, %s79
    %s96 = sphi 0, %s80
    %s100 = sphi 0, %s100
    %s102 = sphi 0, %s100
    %s103 = sphi 0, %s102
    %s117 = sphi 0, %s103
    %s121 = sphi 0, %s121
    %s123 = sphi 0, %s121
    %s124 = sphi 0, %s123
    %s138 = sphi 0, %s124
    %s142 = sphi 0, %s142
    %s144 = sphi 0, %s142
    %s145 = sphi 0, %s144
    %s159 = sphi 0, %s145
    %s163 = sphi 0, %s163
    %s165 = sphi 0, %s163
    %s166 = sphi 0, %s165
    %s180 = sphi 0, %s166
    %s184 = sphi 0, %s184
    %s186 = sphi 0, %s184
    %s187 = sphi 0, %s186
    %s201 = sphi 0, %s187
    %s209 = sphi 0, %s211
    %s212 = sphi 0, %s209
    %s213 = sphi 0, %s212
    %s229 = sphi 0, %s213
  $region4: #{pointnetcls_forward.6} parent=0 // loop_header_branch
    %16 = sbr.rel (%p14) target = $region8
  $region5: #{pointnetcls_forward.6} parent=0 // loop_body
    %s18 = ssub.s32 %s13, 1
    %s19 = ssub.s32 %s13, 2
    %s29 = sadd.s32 1, %s22
    %p30 = scmp.ge.s32.totalorder %s29, 1
    %s31 = scalar_select %p30, 0, %s29
    %s32 = sadd.s32 1, %s21
    %s33 = scalar_select %p30, %s32, %s21
    %p34 = scmp.ge.s32.totalorder %s33, 1
    %s35 = scalar_select %p34, 0, %s33
    %s36 = sadd.s32 1, %s20
    %s37 = scalar_select %p34, %s36, %s20
    %p38 = scmp.ge.s32.totalorder %s37, 2
    %s39 = scalar_select %p38, 0, %s37
    %s40 = sadd.s32 %s21, %s22
    %p41 = scmp.lt.s32.totalorder %s40, 0
    %s42 = scalar_select %p41, %s40, 0
    %s43 = sadd.s32 %s35, %s31
    %p44 = scmp.lt.s32.totalorder %s43, 0
    %s45 = scalar_select %p44, %s43, 0
    %s46 = ssub.s32 %s20, %s39
    %s47 = ssub.s32 %s42, %s45
    %s48 = sor.u32 %s46, %s47
    %p49 = scmp.eq.s32.totalorder %s48, 0
    %s51 = sadd.s32 %s50, 1
    %s52 = scalar_select %p49, %s50, %s51
    %p55 = pneg %p49
    %p56 = scmp.eq.s32.totalorder %s13, 1
    %p57 = por %p55, %p56
    %p58 = scmp.ne.s32.totalorder %s50, %s53
    %p59 = scmp.eq.s32.totalorder %s13, 0
    %p60 = por %p58, %p59
    %p61 = scmp.ne.s32.totalorder %s50, %s53
    %p62 = scmp.eq.s32.totalorder %s18, 1
    %p63 = por %p61, %p62
    %p64 = scmp.ne.s32.totalorder %s53, %s54
    %p65 = scmp.eq.s32.totalorder %s18, 0
    %p66 = por %p64, %p65
    %p67 = scmp.ne.s32.totalorder %s53, %s54
    %p68 = scmp.eq.s32.totalorder %s19, 1
    %p69 = por %p67, %p68
    %p71 = scmp.ne.s32.totalorder %s54, %s70
    %p72 = scmp.eq.s32.totalorder %s19, 0
    %p73 = por %p71, %p72
    %s74 = ssub.s32 %s20, %s39
    %p75 = scmp.eq.s32.totalorder %s74, 0
    %s77 = sadd.s32 %s76, 1
    %s78 = scalar_select %p75, %s76, %s77
    %p81 = pneg %p75
    %p82 = scmp.eq.s32.totalorder %s13, 1
    %p83 = por %p81, %p82
    %p84 = scmp.ne.s32.totalorder %s76, %s79
    %p85 = scmp.eq.s32.totalorder %s13, 0
    %p86 = por %p84, %p85
    %p87 = scmp.ne.s32.totalorder %s76, %s79
    %p88 = scmp.eq.s32.totalorder %s18, 1
    %p89 = por %p87, %p88
    %p90 = scmp.ne.s32.totalorder %s79, %s80
    %p91 = scmp.eq.s32.totalorder %s18, 0
    %p92 = por %p90, %p91
    %p93 = scmp.ne.s32.totalorder %s79, %s80
    %p94 = scmp.eq.s32.totalorder %s19, 1
    %p95 = por %p93, %p94
    %p97 = scmp.ne.s32.totalorder %s80, %s96
    %p98 = scmp.eq.s32.totalorder %s19, 0
    %p99 = por %p97, %p98
    %s101 = sadd.s32 %s100, 1
    %p104 = scmp.eq.s32.totalorder %s13, 1
    %p105 = scmp.ne.s32.totalorder %s100, %s102
    %p106 = scmp.eq.s32.totalorder %s13, 0
    %p107 = por %p105, %p106
    %p108 = scmp.ne.s32.totalorder %s100, %s102
    %p109 = scmp.eq.s32.totalorder %s18, 1
    %p110 = por %p108, %p109
    %p111 = scmp.ne.s32.totalorder %s102, %s103
    %p112 = scmp.eq.s32.totalorder %s18, 0
    %p113 = por %p111, %p112
    %p114 = scmp.ne.s32.totalorder %s102, %s103
    %p115 = scmp.eq.s32.totalorder %s19, 1
    %p116 = por %p114, %p115
    %p118 = scmp.ne.s32.totalorder %s103, %s117
    %p119 = scmp.eq.s32.totalorder %s19, 0
    %p120 = por %p118, %p119
    %s122 = sadd.s32 %s121, 1
    %p125 = scmp.eq.s32.totalorder %s13, 1
    %p126 = scmp.ne.s32.totalorder %s121, %s123
    %p127 = scmp.eq.s32.totalorder %s13, 0
    %p128 = por %p126, %p127
    %p129 = scmp.ne.s32.totalorder %s121, %s123
    %p130 = scmp.eq.s32.totalorder %s18, 1
    %p131 = por %p129, %p130
    %p132 = scmp.ne.s32.totalorder %s123, %s124
    %p133 = scmp.eq.s32.totalorder %s18, 0
    %p134 = por %p132, %p133
    %p135 = scmp.ne.s32.totalorder %s123, %s124
    %p136 = scmp.eq.s32.totalorder %s19, 1
    %p137 = por %p135, %p136
    %p139 = scmp.ne.s32.totalorder %s124, %s138
    %p140 = scmp.eq.s32.totalorder %s19, 0
    %p141 = por %p139, %p140
    %s143 = sadd.s32 %s142, 1
    %p146 = scmp.eq.s32.totalorder %s13, 1
    %p147 = scmp.ne.s32.totalorder %s142, %s144
    %p148 = scmp.eq.s32.totalorder %s13, 0
    %p149 = por %p147, %p148
    %p150 = scmp.ne.s32.totalorder %s142, %s144
    %p151 = scmp.eq.s32.totalorder %s18, 1
    %p152 = por %p150, %p151
    %p153 = scmp.ne.s32.totalorder %s144, %s145
    %p154 = scmp.eq.s32.totalorder %s18, 0
    %p155 = por %p153, %p154
    %p156 = scmp.ne.s32.totalorder %s144, %s145
    %p157 = scmp.eq.s32.totalorder %s19, 1
    %p158 = por %p156, %p157
    %p160 = scmp.ne.s32.totalorder %s145, %s159
    %p161 = scmp.eq.s32.totalorder %s19, 0
    %p162 = por %p160, %p161
    %s164 = sadd.s32 %s163, 1
    %p167 = scmp.eq.s32.totalorder %s13, 1
    %p168 = scmp.ne.s32.totalorder %s163, %s165
    %p169 = scmp.eq.s32.totalorder %s13, 0
    %p170 = por %p168, %p169
    %p171 = scmp.ne.s32.totalorder %s163, %s165
    %p172 = scmp.eq.s32.totalorder %s18, 1
    %p173 = por %p171, %p172
    %p174 = scmp.ne.s32.totalorder %s165, %s166
    %p175 = scmp.eq.s32.totalorder %s18, 0
    %p176 = por %p174, %p175
    %p177 = scmp.ne.s32.totalorder %s165, %s166
    %p178 = scmp.eq.s32.totalorder %s19, 1
    %p179 = por %p177, %p178
    %p181 = scmp.ne.s32.totalorder %s166, %s180
    %p182 = scmp.eq.s32.totalorder %s19, 0
    %p183 = por %p181, %p182
    %s185 = sadd.s32 %s184, 1
    %p188 = scmp.eq.s32.totalorder %s13, 1
    %p189 = scmp.ne.s32.totalorder %s184, %s186
    %p190 = scmp.eq.s32.totalorder %s13, 0
    %p191 = por %p189, %p190
    %p192 = scmp.ne.s32.totalorder %s184, %s186
    %p193 = scmp.eq.s32.totalorder %s18, 1
    %p194 = por %p192, %p193
    %p195 = scmp.ne.s32.totalorder %s186, %s187
    %p196 = scmp.eq.s32.totalorder %s18, 0
    %p197 = por %p195, %p196
    %p198 = scmp.ne.s32.totalorder %s186, %s187
    %p199 = scmp.eq.s32.totalorder %s19, 1
    %p200 = por %p198, %p199
    %p202 = scmp.ne.s32.totalorder %s187, %s201
    %p203 = scmp.eq.s32.totalorder %s19, 0
    %p204 = por %p202, %p203
    %s205 = ssub.s32 %s20, %s39
    %s206 = ssub.s32 %s21, %s35
    %s207 = sor.u32 %s205, %s206
    %p208 = scmp.eq.s32.totalorder %s207, 0
    %s210 = sadd.s32 %s209, 1
    %s211 = scalar_select %p208, %s209, %s210
    %p214 = pneg %p208
    %p215 = scmp.eq.s32.totalorder %s13, 1
    %p216 = por %p214, %p215
    %p217 = scmp.ne.s32.totalorder %s209, %s212
    %p218 = scmp.eq.s32.totalorder %s13, 0
    %p219 = por %p217, %p218
    %p220 = scmp.ne.s32.totalorder %s209, %s212
    %p221 = scmp.eq.s32.totalorder %s18, 1
    %p222 = por %p220, %p221
    %p223 = scmp.ne.s32.totalorder %s212, %s213
    %p224 = scmp.eq.s32.totalorder %s18, 0
    %p225 = por %p223, %p224
    %p226 = scmp.ne.s32.totalorder %s212, %s213
    %p227 = scmp.eq.s32.totalorder %s19, 1
    %p228 = por %p226, %p227
    %p230 = scmp.ne.s32.totalorder %s213, %s229
    %p231 = scmp.eq.s32.totalorder %s19, 0
    %p232 = por %p230, %p231
    %p233 = scmp.le.s32.totalorder 1, %s13
    %p234 = scmp.lt.s32.totalorder %s13, 3
    %p235 = pnand %p233, %p234
    %p236 = pneg %p235
    // Predicated region
    $region9: #{pointnetcls_forward.6} parent=5 // pred_check
      _
    $region10: #{pointnetcls_forward.6} parent=5 // pred_check_branch
      %238 = sbr.rel (%p235) target = $region12
    $region11: #{pointnetcls_forward.6} parent=5 // pred_region
      %s239 = ssub.s32 %s13, 1
      // Predicated region
      $region13: #{pointnetcls_forward.6} parent=11 // pred_check
        %p240 = pneg %p113
      $region14: #{pointnetcls_forward.6} parent=11 // pred_check_branch
        %242 = sbr.rel (%p240) target = $region16
      $region15: #{pointnetcls_forward.6} parent=11 // pred_region
        _
      $region16: #{pointnetcls_forward.6} parent=11 // pred_fallthru
        _
      // Predicated region
      $region17: #{pointnetcls_forward.6} parent=11 // pred_check
        %p243 = pneg %p134
      $region18: #{pointnetcls_forward.6} parent=11 // pred_check_branch
        %245 = sbr.rel (%p243) target = $region20
      $region19: #{pointnetcls_forward.6} parent=11 // pred_region
        _
      $region20: #{pointnetcls_forward.6} parent=11 // pred_fallthru
        _
      // Predicated region
      $region21: #{pointnetcls_forward.6} parent=11 // pred_check
        %p246 = pneg %p155
      $region22: #{pointnetcls_forward.6} parent=11 // pred_check_branch
        %248 = sbr.rel (%p246) target = $region24
      $region23: #{pointnetcls_forward.6} parent=11 // pred_region
        _
      $region24: #{pointnetcls_forward.6} parent=11 // pred_fallthru
        _
      // Predicated region
      $region25: #{pointnetcls_forward.6} parent=11 // pred_check
        %p249 = pneg %p176
      $region26: #{pointnetcls_forward.6} parent=11 // pred_check_branch
        %251 = sbr.rel (%p249) target = $region28
      $region27: #{pointnetcls_forward.6} parent=11 // pred_region
        _
      $region28: #{pointnetcls_forward.6} parent=11 // pred_fallthru
        _
      // Predicated region
      $region29: #{pointnetcls_forward.6} parent=11 // pred_check
        %p252 = pneg %p197
      $region30: #{pointnetcls_forward.6} parent=11 // pred_check_branch
        %254 = sbr.rel (%p252) target = $region32
      $region31: #{pointnetcls_forward.6} parent=11 // pred_region
        _
      $region32: #{pointnetcls_forward.6} parent=11 // pred_fallthru
        _
    $region12: #{pointnetcls_forward.6} parent=5 // pred_fallthru
      _
    %p255 = scmp.lt.s32.totalorder %s13, 2
    // Predicated region
    $region33: #{pointnetcls_forward.6} parent=5 // pred_check
      %p256 = pneg %p255
    $region34: #{pointnetcls_forward.6} parent=5 // pred_check_branch
      %258 = sbr.rel (%p256) target = $region36
    $region35: #{pointnetcls_forward.6} parent=5 // pred_region
      // Predicated region
      $region37: #{pointnetcls_forward.6} parent=35 // pred_check
        %p259 = pneg %p60
      $region38: #{pointnetcls_forward.6} parent=35 // pred_check_branch
        %261 = sbr.rel (%p259) target = $region40
      $region39: #{pointnetcls_forward.6} parent=35 // pred_region
        %s262 = sadd.s32 %s21, %s22
        %p263 = scmp.lt.s32.totalorder %s262, 0
        %s264 = scalar_select %p263, %s262, 0
        %p265 = scmp.lt.s32.totalorder %s20, 1
        %s266 = scalar_select %p265, %s20, 1
        %p267 = scmp.lt.s32.totalorder %s264, 0
        %s268 = scalar_select %p267, %s264, 0
        %s269 = sadd.s32 %s268, %s266
        %s270 = smul.addr %s269, 4
        %s271 = scalar_lea.vmem %s0, %s270
        %s272 = sadd.s32 %s21, %s22
        %p273 = scmp.lt.s32.totalorder %s272, 0
        %s274 = scalar_select %p273, %s272, 0
      $region40: #{pointnetcls_forward.6} parent=35 // pred_fallthru
        _
      // Predicated region
      $region41: #{pointnetcls_forward.6} parent=35 // pred_check
        %p275 = pneg %p86
      $region42: #{pointnetcls_forward.6} parent=35 // pred_check_branch
        %277 = sbr.rel (%p275) target = $region44
      $region43: #{pointnetcls_forward.6} parent=35 // pred_region
        %p278 = scmp.lt.s32.totalorder %s20, 1
        %s279 = scalar_select %p278, %s20, 1
        %s280 = smul.addr %s279, 4
        %s281 = scalar_lea.vmem %s1, %s280
      $region44: #{pointnetcls_forward.6} parent=35 // pred_fallthru
        _
    $region36: #{pointnetcls_forward.6} parent=5 // pred_fallthru
      _
    %p282 = scmp.le.s32.totalorder 1, %s13
    %p283 = scmp.lt.s32.totalorder %s13, 3
    %p284 = pnand %p282, %p283
    %p285 = pneg %p284
    // Predicated region
    $region45: #{pointnetcls_forward.6} parent=5 // pred_check
      _
    $region46: #{pointnetcls_forward.6} parent=5 // pred_check_branch
      %287 = sbr.rel (%p284) target = $region48
    $region47: #{pointnetcls_forward.6} parent=5 // pred_region
      %s288 = ssub.s32 %s13, 1
      %s289 = sadd.s32 %s24, %s25
      %p290 = scmp.lt.s32.totalorder %s289, 0
      %s291 = scalar_select %p290, %s289, 0
      %p292 = scmp.lt.s32.totalorder %s23, 1
      %s293 = scalar_select %p292, %s23, 1
      %p294 = scmp.lt.s32.totalorder %s291, 0
      %s295 = scalar_select %p294, %s291, 0
      %s296 = sadd.s32 %s295, %s293
      %s297 = smul.addr %s296, 4
      %s298 = scalar_lea.vmem %s0, %s297
      %p299 = pneg %p66
      %p300 = pneg %p63
      %p301 = scmp.lt.s32.totalorder %s23, 1
      %s302 = scalar_select %p301, %s23, 1
      %s303 = smul.addr %s302, 4
      %s304 = scalar_lea.vmem %s1, %s303
      %p305 = pneg %p92
      %p306 = pneg %p89
      %p307 = pneg %p113
      %p308 = pneg %p110
      %p309 = pneg %p134
      %p310 = pneg %p131
      %p311 = pneg %p155
      %p312 = pneg %p152
      %p313 = pneg %p176
      %p314 = pneg %p173
      %p315 = pneg %p197
      %p316 = pneg %p194
      %p317 = pneg %p225
      %p318 = pneg %p222
      %p319 = scmp.lt.s32.totalorder %s23, 1
      %s320 = scalar_select %p319, %s23, 1
      %p321 = scmp.lt.s32.totalorder %s24, 0
      %s322 = scalar_select %p321, %s24, 0
      %s323 = smul.addr %s322, 8
      %s324 = smul.addr %s320, 8
      %s325 = sadd.s32 %s323, %s324
      %s326 = scalar_lea.vmem %s7, %s325
      %s327 = sadd.s32 %s24, %s25
      %p328 = scmp.lt.s32.totalorder %s327, 0
      %s329 = scalar_select %p328, %s327, 0
      %p330 = scmp.lt.s32.totalorder %s23, 1
      %s331 = scalar_select %p330, %s23, 1
      %p332 = scmp.lt.s32.totalorder %s329, 0
      %s333 = scalar_select %p332, %s329, 0
      %s334 = sadd.s32 %s333, %s331
      %s335 = smul.addr %s334, 4
      %s336 = scalar_lea.vmem %s0, %s335
      %s337 = sadd.s32 %s24, %s25
      %p338 = scmp.lt.s32.totalorder %s337, 0
      %s339 = scalar_select %p338, %s337, 0
      %p340 = scmp.lt.s32.totalorder %s23, 1
      %s341 = scalar_select %p340, %s23, 1
      %s342 = smul.addr %s341, 4
      %s343 = scalar_lea.vmem %s1, %s342
      %p344 = scmp.lt.s32.totalorder %s23, 1
      %s345 = scalar_select %p344, %s23, 1
      %p346 = scmp.lt.s32.totalorder %s24, 0
      %s347 = scalar_select %p346, %s24, 0
      %s348 = smul.addr %s347, 8
      %s349 = smul.addr %s345, 8
      %s350 = sadd.s32 %s348, %s349
      %s351 = scalar_lea.vmem %s7, %s350
      %v353 = vld [vmem:[%s336] sm:$0x7]
      %v354 = vld [vmem:[%s343] sm:$0x7]
      %v355 = vld [vmem:[%s2] sm:$0x1]
      %v357 = vlaneseq
      %v358 = vshrl.u32 %v357, 7
      %v359 = vsub.s32 0, %v358
      %v360 = vrot.slane %v355, %v359
      %362 = vxpose.xlu0.b32.start [1/16] %v353, 128
      %363 = vxpose.xlu0.b32.cont [2/16] 0.0, 128
      %364 = vxpose.xlu0.b32.cont [3/16] 0.0, 128
      %365 = vxpose.xlu0.b32.cont [4/16] 0.0, 128
      %366 = vxpose.xlu0.b32.cont [5/16] 0.0, 128
      %367 = vxpose.xlu0.b32.cont [6/16] 0.0, 128
      %368 = vxpose.xlu0.b32.cont [7/16] 0.0, 128
      %369 = vxpose.xlu0.b32.cont [8/16] 0.0, 128
      %370 = vxpose.xlu0.b32.cont [9/16] 0.0, 128
      %371 = vxpose.xlu0.b32.cont [10/16] 0.0, 128
      %372 = vxpose.xlu0.b32.cont [11/16] 0.0, 128
      %373 = vxpose.xlu0.b32.cont [12/16] 0.0, 128
      %374 = vxpose.xlu0.b32.cont [13/16] 0.0, 128
      %375 = vxpose.xlu0.b32.cont [14/16] 0.0, 128
      %376 = vxpose.xlu0.b32.cont [15/16] 0.0, 128
      %377 = vxpose.xlu0.b32.end [16/16] 0.0, 128
      %v378 = vpop.trf.xlu0
      %v379 = vpop.trf.xlu0
      %v380 = vpop.trf.xlu0
      %v381 = vpop.trf.xlu0
      %v382 = vpop.trf.xlu0
      %v383 = vpop.trf.xlu0
      %v384 = vpop.trf.xlu0
      %v385 = vpop.trf.xlu0
      %v386 = vpop.trf.xlu0
      %v387 = vpop.trf.xlu0
      %v388 = vpop.trf.xlu0
      %v389 = vpop.trf.xlu0
      %v390 = vpop.trf.xlu0
      %v391 = vpop.trf.xlu0
      %v392 = vpop.trf.xlu0
      %v393 = vpop.trf.xlu0
      %vm394 = vcmask 23552
      %v396 = vsel %vm394, %v378, 0
      %v399 = vsel %vm394, %v379, 0
      %v402 = vsel %vm394, %v380, 0
      %v405 = vsel %vm394, %v381, 0
      %v408 = vsel %vm394, %v382, 0
      %v411 = vsel %vm394, %v383, 0
      %vm413 = vcmask 1042432
      %v415 = vsel %vm413, %v354, 0
      %417 = vmatprep.subr.mxu0 0.0
      %418 = vmatpush1.msra.mxu0 %v415
      %419 = vmatprep.subr.mxu0 0.0
      %420 = vmatpush1.msra.mxu0 0.0
      %421 = vmatprep.subr.mxu0 0.0
      %422 = vmatpush1.msra.mxu0 0.0
      %423 = vmatprep.subr.mxu0 0.0
      %424 = vmatpush1.msra.mxu0 0.0
      %425 = vmatprep.subr.mxu0 0.0
      %426 = vmatpush1.msra.mxu0 0.0
      %427 = vmatprep.subr.mxu0 0.0
      %428 = vmatpush1.msra.mxu0 0.0
      %429 = vmatprep.subr.mxu0 0.0
      %430 = vmatpush1.msra.mxu0 0.0
      %431 = vmatprep.subr.mxu0 0.0
      %432 = vmatpush1.msra.mxu0 0.0
      %433 = vmatprep.subr.mxu0 0.0
      %434 = vmatpush1.msra.mxu0 0.0
      %435 = vmatprep.subr.mxu0 0.0
      %436 = vmatpush1.msra.mxu0 0.0
      %437 = vmatprep.subr.mxu0 0.0
      %438 = vmatpush1.msra.mxu0 0.0
      %439 = vmatprep.subr.mxu0 0.0
      %440 = vmatpush1.msra.mxu0 0.0
      %441 = vmatprep.subr.mxu0 0.0
      %442 = vmatpush1.msra.mxu0 0.0
      %443 = vmatprep.subr.mxu0 0.0
      %444 = vmatpush1.msra.mxu0 0.0
      %445 = vmatprep.subr.mxu0 0.0
      %446 = vmatpush1.msra.mxu0 0.0
      %447 = vmatprep.subr.mxu0 0.0
      %448 = vmatpush1.msra.mxu0 0.0
      %449 = vmatprep.subr.mxu0 0.0
      %450 = vmatpush1.msra.mxu0 0.0
      %451 = vmatprep.subr.mxu0 0.0
      %452 = vmatpush1.msra.mxu0 0.0
      %453 = vmatprep.subr.mxu0 0.0
      %454 = vmatpush1.msra.mxu0 0.0
      %455 = vmatprep.subr.mxu0 0.0
      %456 = vmatpush1.msra.mxu0 0.0
      %457 = vmatprep.subr.mxu0 0.0
      %458 = vmatpush1.msra.mxu0 0.0
      %459 = vmatprep.subr.mxu0 0.0
      %460 = vmatpush1.msra.mxu0 0.0
      %461 = vmatprep.subr.mxu0 0.0
      %462 = vmatpush1.msra.mxu0 0.0
      %463 = vmatprep.subr.mxu0 0.0
      %464 = vmatpush1.msra.mxu0 0.0
      %465 = vmatprep.subr.mxu0 0.0
      %466 = vmatpush1.msra.mxu0 0.0
      %467 = vmatprep.subr.mxu0 0.0
      %468 = vmatpush1.msra.mxu0 0.0
      %469 = vmatprep.subr.mxu0 0.0
      %470 = vmatpush1.msra.mxu0 0.0
      %471 = vmatprep.subr.mxu0 0.0
      %472 = vmatpush1.msra.mxu0 0.0
      %473 = vmatprep.subr.mxu0 0.0
      %474 = vmatpush1.msra.mxu0 0.0
      %475 = vmatprep.subr.mxu0 0.0
      %476 = vmatpush1.msra.mxu0 0.0
      %477 = vmatprep.subr.mxu0 0.0
      %478 = vmatpush1.msra.mxu0 0.0
      %479 = vmatprep.subr.mxu0 0.0
      %480 = vmatpush1.msra.mxu0 0.0
      %481 = vmatprep.mubr.f32.mxu0 0.0
      %482 = vmatmul.mubr.f32.gmra.mrb[0].mxu0 %v396
      %v483 = vpop.f32.mrb[0].mxu0
      %v484 = vadd.f32 %v360, %v483
      %v485 = vpop.f32.mrb[0].mxu0
      %486 = vmatprep.mubr.f32.mxu0 0.0
      %487 = vmatmul.mubr.f32.gmra.mrb[0].mxu0 %v399
      %v488 = vpop.f32.mrb[0].mxu0
      %v489 = vadd.f32 %v360, %v488
      %v490 = vpop.f32.mrb[0].mxu0
      %491 = vmatprep.mubr.f32.mxu0 0.0
      %492 = vmatmul.mubr.f32.gmra.mrb[0].mxu0 %v402
      %v493 = vpop.f32.mrb[0].mxu0
      %v494 = vadd.f32 %v360, %v493
      %v495 = vpop.f32.mrb[0].mxu0
      %496 = vmatprep.mubr.f32.mxu0 0.0
      %497 = vmatmul.mubr.f32.gmra.mrb[0].mxu0 %v405
      %v498 = vpop.f32.mrb[0].mxu0
      %v499 = vadd.f32 %v360, %v498
      %v500 = vpop.f32.mrb[0].mxu0
      %501 = vmatprep.mubr.f32.mxu0 0.0
      %502 = vmatmul.mubr.f32.gmra.mrb[0].mxu0 %v408
      %v503 = vpop.f32.mrb[0].mxu0
      %v504 = vadd.f32 %v360, %v503
      %v505 = vpop.f32.mrb[0].mxu0
      %506 = vmatprep.mubr.f32.mxu0 0.0
      %507 = vmatmul.mubr.f32.gmra.mrb[0].mxu0 %v411
      %v508 = vpop.f32.mrb[0].mxu0
      %v509 = vadd.f32 %v360, %v508
      %v510 = vpop.f32.mrb[0].mxu0
      %511 = vdwg.mxu0
      %v512 = vmax.f32 %v484, 0.0
      %v513 = vmax.f32 %v489, 0.0
      %v514 = vmax.f32 %v494, 0.0
      %v515 = vmax.f32 %v499, 0.0
      %v516 = vmax.f32 %v504, 0.0
      %v517 = vmax.f32 %v509, 0.0
      %v518 = vld [vmem:[%s3] sm:$0xf]
      %v519 = vld [vmem:[%s3 + $0x4] sm:$0xf]
      %v520 = vld [vmem:[%s3 + $0x8] sm:$0xf]
      %v521 = vld [vmem:[%s3 + $0xc] sm:$0xf]
      %v522 = vld [vmem:[%s3 + $0x10] sm:$0xf]
      %v523 = vld [vmem:[%s3 + $0x14] sm:$0xf]
      %v524 = vld [vmem:[%s3 + $0x18] sm:$0xf]
      %v525 = vld [vmem:[%s3 + $0x1c] sm:$0xf]
      %v526 = vpack.c.bf16 %v513, %v512
      %v527 = vpack.c.bf16 %v515, %v514
      %v528 = vpack.c.bf16 %v517, %v516
      %v529 = vld [vmem:[%s4] sm:$0x1]
      %v531 = vlaneseq
      %v532 = vshrl.u32 %v531, 7
      %v533 = vsub.s32 0, %v532
      %v534 = vrot.slane %v529, %v533
      %v544 = vunpack.c.l.b16 %v518
      %v545 = vunpack.c.l.b16 %v519
      %v546 = vunpack.c.l.b16 %v520
      %v547 = vunpack.c.l.b16 %v521
      %v548 = vunpack.c.l.b16 %v522
      %v549 = vunpack.c.l.b16 %v523
      %v550 = vunpack.c.l.b16 %v524
      %v551 = vunpack.c.l.b16 %v525
      %v552 = vpack.c.b16 %v545, %v544
      %v553 = vpack.c.b16 %v547, %v546
      %v554 = vpack.c.b16 %v549, %v548
      %v555 = vpack.c.b16 %v551, %v550
      %vm560 = vcmask 523264
      %v562 = vsel %vm560, %v526, 0
      %v565 = vsel %vm560, %v527, 0
      %v568 = vsel %vm560, %v528, 0
      %570 = vmatprep.subr.bf16.mxu0 0
      %571 = vmatpush1.bf16.msra.mxu0 %v552
      %572 = vmatprep.subr.bf16.mxu0 0
      %573 = vmatpush1.bf16.msra.mxu0 %v553
      %574 = vmatprep.subr.bf16.mxu0 0
      %575 = vmatpush1.bf16.msra.mxu0 %v554
      %576 = vmatprep.subr.bf16.mxu0 0
      %577 = vmatpush1.bf16.msra.mxu0 %v555
      %578 = vmatprep.subr.bf16.mxu0 0
      %579 = vmatpush1.bf16.msra.mxu0 0
      %580 = vmatprep.subr.bf16.mxu0 0
      %581 = vmatpush1.bf16.msra.mxu0 0
      %582 = vmatprep.subr.bf16.mxu0 0
      %583 = vmatpush1.bf16.msra.mxu0 0
      %584 = vmatprep.subr.bf16.mxu0 0
      %585 = vmatpush1.bf16.msra.mxu0 0
      %586 = vmatprep.subr.bf16.mxu0 0
      %587 = vmatpush1.bf16.msra.mxu0 0
      %588 = vmatprep.subr.bf16.mxu0 0
      %589 = vmatpush1.bf16.msra.mxu0 0
      %590 = vmatprep.subr.bf16.mxu0 0
      %591 = vmatpush1.bf16.msra.mxu0 0
      %592 = vmatprep.subr.bf16.mxu0 0
      %593 = vmatpush1.bf16.msra.mxu0 0
      %594 = vmatprep.subr.bf16.mxu0 0
      %595 = vmatpush1.bf16.msra.mxu0 0
      %596 = vmatprep.subr.bf16.mxu0 0
      %597 = vmatpush1.bf16.msra.mxu0 0
      %598 = vmatprep.subr.bf16.mxu0 0
      %599 = vmatpush1.bf16.msra.mxu0 0
      %600 = vmatprep.subr.bf16.mxu0 0
      %601 = vmatpush1.bf16.msra.mxu0 0
      %602 = vmatprep.mubr.bf16.mxu0 0
      %603 = vmatmul.mubr.bf16.gmra.mrb[0].mxu0 %v562
      %v604 = vpop.f32.mrb[0].mxu0
      %v605 = vadd.f32 %v534, %v604
      %v606 = vpop.f32.mrb[0].mxu0
      %v607 = vpop.f32.mrb[0].mxu0
      %v608 = vadd.f32 %v534, %v607
      %v609 = vpop.f32.mrb[0].mxu0
      %610 = vmatprep.mubr.bf16.mxu0 0
      %611 = vmatmul.mubr.bf16.gmra.mrb[0].mxu0 %v565
      %v612 = vpop.f32.mrb[0].mxu0
      %v613 = vadd.f32 %v534, %v612
      %v614 = vpop.f32.mrb[0].mxu0
      %v615 = vpop.f32.mrb[0].mxu0
      %v616 = vadd.f32 %v534, %v615
      %v617 = vpop.f32.mrb[0].mxu0
      %618 = vmatprep.mubr.bf16.mxu0 0
      %619 = vmatmul.mubr.bf16.gmra.mrb[0].mxu0 %v568
      %v620 = vpop.f32.mrb[0].mxu0
      %v621 = vadd.f32 %v534, %v620
      %v622 = vpop.f32.mrb[0].mxu0
      %v623 = vpop.f32.mrb[0].mxu0
      %v624 = vadd.f32 %v534, %v623
      %v625 = vpop.f32.mrb[0].mxu0
      %626 = vdwg.mxu0
      %v627 = vmax.f32 %v605, 0.0
      %v628 = vmax.f32 %v608, 0.0
      %v629 = vmax.f32 %v613, 0.0
      %v630 = vmax.f32 %v616, 0.0
      %v631 = vmax.f32 %v621, 0.0
      %v632 = vmax.f32 %v624, 0.0
      %v633 = vld [vmem:[%s5] sm:$0xff]
      %v634 = vld [vmem:[%s5 + $0x8] sm:$0xff]
      %v635 = vld [vmem:[%s5 + $0x10] sm:$0xff]
      %v636 = vld [vmem:[%s5 + $0x18] sm:$0xff]
      %v637 = vld [vmem:[%s5 + $0x20] sm:$0xff]
      %v638 = vld [vmem:[%s5 + $0x28] sm:$0xff]
      %v639 = vld [vmem:[%s5 + $0x30] sm:$0xff]
      %v640 = vld [vmem:[%s5 + $0x38] sm:$0xff]
      %v641 = vld [vmem:[%s5 + $0x40] sm:$0xff]
      %v642 = vld [vmem:[%s5 + $0x48] sm:$0xff]
      %v643 = vld [vmem:[%s5 + $0x50] sm:$0xff]
      %v644 = vld [vmem:[%s5 + $0x58] sm:$0xff]
      %v645 = vld [vmem:[%s5 + $0x60] sm:$0xff]
      %v646 = vld [vmem:[%s5 + $0x68] sm:$0xff]
      %v647 = vld [vmem:[%s5 + $0x70] sm:$0xff]
      %v648 = vld [vmem:[%s5 + $0x78] sm:$0xff]
      %v649 = vld [vmem:[%s5 + $0x80] sm:$0xff]
      %v650 = vld [vmem:[%s5 + $0x88] sm:$0xff]
      %v651 = vld [vmem:[%s5 + $0x90] sm:$0xff]
      %v652 = vld [vmem:[%s5 + $0x98] sm:$0xff]
      %v653 = vld [vmem:[%s5 + $0xa0] sm:$0xff]
      %v654 = vld [vmem:[%s5 + $0xa8] sm:$0xff]
      %v655 = vld [vmem:[%s5 + $0xb0] sm:$0xff]
      %v656 = vld [vmem:[%s5 + $0xb8] sm:$0xff]
      %v657 = vld [vmem:[%s5 + $0xc0] sm:$0xff]
      %v658 = vld [vmem:[%s5 + $0xc8] sm:$0xff]
      %v659 = vld [vmem:[%s5 + $0xd0] sm:$0xff]
      %v660 = vld [vmem:[%s5 + $0xd8] sm:$0xff]
      %v661 = vld [vmem:[%s5 + $0xe0] sm:$0xff]
      %v662 = vld [vmem:[%s5 + $0xe8] sm:$0xff]
      %v663 = vld [vmem:[%s5 + $0xf0] sm:$0xff]
      %v664 = vld [vmem:[%s5 + $0xf8] sm:$0xff]
      %v665 = vld [vmem:[%s5 + $0x100] sm:$0xff]
      %v666 = vld [vmem:[%s5 + $0x108] sm:$0xff]
      %v667 = vld [vmem:[%s5 + $0x110] sm:$0xff]
      %v668 = vld [vmem:[%s5 + $0x118] sm:$0xff]
      %v669 = vld [vmem:[%s5 + $0x120] sm:$0xff]
      %v670 = vld [vmem:[%s5 + $0x128] sm:$0xff]
      %v671 = vld [vmem:[%s5 + $0x130] sm:$0xff]
      %v672 = vld [vmem:[%s5 + $0x138] sm:$0xff]
      %v673 = vld [vmem:[%s5 + $0x140] sm:$0xff]
      %v674 = vld [vmem:[%s5 + $0x148] sm:$0xff]
      %v675 = vld [vmem:[%s5 + $0x150] sm:$0xff]
      %v676 = vld [vmem:[%s5 + $0x158] sm:$0xff]
      %v677 = vld [vmem:[%s5 + $0x160] sm:$0xff]
      %v678 = vld [vmem:[%s5 + $0x168] sm:$0xff]
      %v679 = vld [vmem:[%s5 + $0x170] sm:$0xff]
      %v680 = vld [vmem:[%s5 + $0x178] sm:$0xff]
      %v681 = vld [vmem:[%s5 + $0x180] sm:$0xff]
      %v682 = vld [vmem:[%s5 + $0x188] sm:$0xff]
      %v683 = vld [vmem:[%s5 + $0x190] sm:$0xff]
      %v684 = vld [vmem:[%s5 + $0x198] sm:$0xff]
      %v685 = vld [vmem:[%s5 + $0x1a0] sm:$0xff]
      %v686 = vld [vmem:[%s5 + $0x1a8] sm:$0xff]
      %v687 = vld [vmem:[%s5 + $0x1b0] sm:$0xff]
      %v688 = vld [vmem:[%s5 + $0x1b8] sm:$0xff]
      %v689 = vld [vmem:[%s5 + $0x1c0] sm:$0xff]
      %v690 = vld [vmem:[%s5 + $0x1c8] sm:$0xff]
      %v691 = vld [vmem:[%s5 + $0x1d0] sm:$0xff]
      %v692 = vld [vmem:[%s5 + $0x1d8] sm:$0xff]
      %v693 = vld [vmem:[%s5 + $0x1e0] sm:$0xff]
      %v694 = vld [vmem:[%s5 + $0x1e8] sm:$0xff]
      %v695 = vld [vmem:[%s5 + $0x1f0] sm:$0xff]
      %v696 = vld [vmem:[%s5 + $0x1f8] sm:$0xff]
      %v697 = vpack.c.bf16 %v628, %v627
      %v698 = vpack.c.bf16 %v630, %v629
      %v699 = vpack.c.bf16 %v632, %v631
      %v764 = vunpack.c.l.b16 %v633
      %v765 = vunpack.c.h.b16 %v633
      %v766 = vunpack.c.l.b16 %v634
      %v767 = vunpack.c.h.b16 %v634
      %v768 = vunpack.c.l.b16 %v635
      %v769 = vunpack.c.h.b16 %v635
      %v770 = vunpack.c.l.b16 %v636
      %v771 = vunpack.c.h.b16 %v636
      %v772 = vunpack.c.l.b16 %v637
      %v773 = vunpack.c.h.b16 %v637
      %v774 = vunpack.c.l.b16 %v638
      %v775 = vunpack.c.h.b16 %v638
      %v776 = vunpack.c.l.b16 %v639
      %v777 = vunpack.c.h.b16 %v639
      %v778 = vunpack.c.l.b16 %v640
      %v779 = vunpack.c.h.b16 %v640
      %v780 = vunpack.c.l.b16 %v641
      %v781 = vunpack.c.h.b16 %v641
      %v782 = vunpack.c.l.b16 %v642
      %v783 = vunpack.c.h.b16 %v642
      %v784 = vunpack.c.l.b16 %v643
      %v785 = vunpack.c.h.b16 %v643
      %v786 = vunpack.c.l.b16 %v644
      %v787 = vunpack.c.h.b16 %v644
      %v788 = vunpack.c.l.b16 %v645
      %v789 = vunpack.c.h.b16 %v645
      %v790 = vunpack.c.l.b16 %v646
      %v791 = vunpack.c.h.b16 %v646
      %v792 = vunpack.c.l.b16 %v647
      %v793 = vunpack.c.h.b16 %v647
      %v794 = vunpack.c.l.b16 %v648
      %v795 = vunpack.c.h.b16 %v648
      %v796 = vunpack.c.l.b16 %v649
      %v797 = vunpack.c.h.b16 %v649
      %v798 = vunpack.c.l.b16 %v650
      %v799 = vunpack.c.h.b16 %v650
      %v800 = vunpack.c.l.b16 %v651
      %v801 = vunpack.c.h.b16 %v651
      %v802 = vunpack.c.l.b16 %v652
      %v803 = vunpack.c.h.b16 %v652
      %v804 = vunpack.c.l.b16 %v653
      %v805 = vunpack.c.h.b16 %v653
      %v806 = vunpack.c.l.b16 %v654
      %v807 = vunpack.c.h.b16 %v654
      %v808 = vunpack.c.l.b16 %v655
      %v809 = vunpack.c.h.b16 %v655
      %v810 = vunpack.c.l.b16 %v656
      %v811 = vunpack.c.h.b16 %v656
      %v812 = vunpack.c.l.b16 %v657
      %v813 = vunpack.c.h.b16 %v657
      %v814 = vunpack.c.l.b16 %v658
      %v815 = vunpack.c.h.b16 %v658
      %v816 = vunpack.c.l.b16 %v659
      %v817 = vunpack.c.h.b16 %v659
      %v818 = vunpack.c.l.b16 %v660
      %v819 = vunpack.c.h.b16 %v660
      %v820 = vunpack.c.l.b16 %v661
      %v821 = vunpack.c.h.b16 %v661
      %v822 = vunpack.c.l.b16 %v662
      %v823 = vunpack.c.h.b16 %v662
      %v824 = vunpack.c.l.b16 %v663
      %v825 = vunpack.c.h.b16 %v663
      %v826 = vunpack.c.l.b16 %v664
      %v827 = vunpack.c.h.b16 %v664
      %v828 = vunpack.c.l.b16 %v665
      %v829 = vunpack.c.h.b16 %v665
      %v830 = vunpack.c.l.b16 %v666
      %v831 = vunpack.c.h.b16 %v666
      %v832 = vunpack.c.l.b16 %v667
      %v833 = vunpack.c.h.b16 %v667
      %v834 = vunpack.c.l.b16 %v668
      %v835 = vunpack.c.h.b16 %v668
      %v836 = vunpack.c.l.b16 %v669
      %v837 = vunpack.c.h.b16 %v669
      %v838 = vunpack.c.l.b16 %v670
      %v839 = vunpack.c.h.b16 %v670
      %v840 = vunpack.c.l.b16 %v671
      %v841 = vunpack.c.h.b16 %v671
      %v842 = vunpack.c.l.b16 %v672
      %v843 = vunpack.c.h.b16 %v672
      %v844 = vunpack.c.l.b16 %v673
      %v845 = vunpack.c.h.b16 %v673
      %v846 = vunpack.c.l.b16 %v674
      %v847 = vunpack.c.h.b16 %v674
      %v848 = vunpack.c.l.b16 %v675
      %v849 = vunpack.c.h.b16 %v675
      %v850 = vunpack.c.l.b16 %v676
      %v851 = vunpack.c.h.b16 %v676
      %v852 = vunpack.c.l.b16 %v677
      %v853 = vunpack.c.h.b16 %v677
      %v854 = vunpack.c.l.b16 %v678
      %v855 = vunpack.c.h.b16 %v678
      %v856 = vunpack.c.l.b16 %v679
      %v857 = vunpack.c.h.b16 %v679
      %v858 = vunpack.c.l.b16 %v680
      %v859 = vunpack.c.h.b16 %v680
      %v860 = vunpack.c.l.b16 %v681
      %v861 = vunpack.c.h.b16 %v681
      %v862 = vunpack.c.l.b16 %v682
      %v863 = vunpack.c.h.b16 %v682
      %v864 = vunpack.c.l.b16 %v683
      %v865 = vunpack.c.h.b16 %v683
      %v866 = vunpack.c.l.b16 %v684
      %v867 = vunpack.c.h.b16 %v684
      %v868 = vunpack.c.l.b16 %v685
      %v869 = vunpack.c.h.b16 %v685
      %v870 = vunpack.c.l.b16 %v686
      %v871 = vunpack.c.h.b16 %v686
      %v872 = vunpack.c.l.b16 %v687
      %v873 = vunpack.c.h.b16 %v687
      %v874 = vunpack.c.l.b16 %v688
      %v875 = vunpack.c.h.b16 %v688
      %v876 = vunpack.c.l.b16 %v689
      %v877 = vunpack.c.h.b16 %v689
      %v878 = vunpack.c.l.b16 %v690
      %v879 = vunpack.c.h.b16 %v690
      %v880 = vunpack.c.l.b16 %v691
      %v881 = vunpack.c.h.b16 %v691
      %v882 = vunpack.c.l.b16 %v692
      %v883 = vunpack.c.h.b16 %v692
      %v884 = vunpack.c.l.b16 %v693
      %v885 = vunpack.c.h.b16 %v693
      %v886 = vunpack.c.l.b16 %v694
      %v887 = vunpack.c.h.b16 %v694
      %v888 = vunpack.c.l.b16 %v695
      %v889 = vunpack.c.h.b16 %v695
      %v890 = vunpack.c.l.b16 %v696
      %v891 = vunpack.c.h.b16 %v696
      %v892 = vpack.c.b16 %v772, %v764
      %v893 = vpack.c.b16 %v773, %v765
      %v894 = vpack.c.b16 %v774, %v766
      %v895 = vpack.c.b16 %v775, %v767
      %v896 = vpack.c.b16 %v776, %v768
      %v897 = vpack.c.b16 %v777, %v769
      %v898 = vpack.c.b16 %v778, %v770
      %v899 = vpack.c.b16 %v779, %v771
      %v900 = vpack.c.b16 %v788, %v780
      %v901 = vpack.c.b16 %v789, %v781
      %v902 = vpack.c.b16 %v790, %v782
      %v903 = vpack.c.b16 %v791, %v783
      %v904 = vpack.c.b16 %v792, %v784
      %v905 = vpack.c.b16 %v793, %v785
      %v906 = vpack.c.b16 %v794, %v786
      %v907 = vpack.c.b16 %v795, %v787
      %v908 = vpack.c.b16 %v804, %v796
      %v909 = vpack.c.b16 %v805, %v797
      %v910 = vpack.c.b16 %v806, %v798
      %v911 = vpack.c.b16 %v807, %v799
      %v912 = vpack.c.b16 %v808, %v800
      %v913 = vpack.c.b16 %v809, %v801
      %v914 = vpack.c.b16 %v810, %v802
      %v915 = vpack.c.b16 %v811, %v803
      %v916 = vpack.c.b16 %v820, %v812
      %v917 = vpack.c.b16 %v821, %v813
      %v918 = vpack.c.b16 %v822, %v814
      %v919 = vpack.c.b16 %v823, %v815
      %v920 = vpack.c.b16 %v824, %v816
      %v921 = vpack.c.b16 %v825, %v817
      %v922 = vpack.c.b16 %v826, %v818
      %v923 = vpack.c.b16 %v827, %v819
      %v924 = vpack.c.b16 %v836, %v828
      %v925 = vpack.c.b16 %v837, %v829
      %v926 = vpack.c.b16 %v838, %v830
      %v927 = vpack.c.b16 %v839, %v831
      %v928 = vpack.c.b16 %v840, %v832
      %v929 = vpack.c.b16 %v841, %v833
      %v930 = vpack.c.b16 %v842, %v834
      %v931 = vpack.c.b16 %v843, %v835
      %v932 = vpack.c.b16 %v852, %v844
      %v933 = vpack.c.b16 %v853, %v845
      %v934 = vpack.c.b16 %v854, %v846
      %v935 = vpack.c.b16 %v855, %v847
      %v936 = vpack.c.b16 %v856, %v848
      %v937 = vpack.c.b16 %v857, %v849
      %v938 = vpack.c.b16 %v858, %v850
      %v939 = vpack.c.b16 %v859, %v851
      %v940 = vpack.c.b16 %v868, %v860
      %v941 = vpack.c.b16 %v869, %v861
      %v942 = vpack.c.b16 %v870, %v862
      %v943 = vpack.c.b16 %v871, %v863
      %v944 = vpack.c.b16 %v872, %v864
      %v945 = vpack.c.b16 %v873, %v865
      %v946 = vpack.c.b16 %v874, %v866
      %v947 = vpack.c.b16 %v875, %v867
      %v948 = vpack.c.b16 %v884, %v876
      %v949 = vpack.c.b16 %v885, %v877
      %v950 = vpack.c.b16 %v886, %v878
      %v951 = vpack.c.b16 %v887, %v879
      %v952 = vpack.c.b16 %v888, %v880
      %v953 = vpack.c.b16 %v889, %v881
      %v954 = vpack.c.b16 %v890, %v882
      %v955 = vpack.c.b16 %v891, %v883
      %1020 = vmatprep.subr.bf16.mxu0 %v893
      %1021 = vmatpush1.bf16.msra.mxu0 %v892
      %1022 = vmatprep.subr.bf16.mxu0 %v901
      %1023 = vmatpush1.bf16.msra.mxu0 %v900
      %1024 = vmatprep.subr.bf16.mxu0 %v909
      %1025 = vmatpush1.bf16.msra.mxu0 %v908
      %1026 = vmatprep.subr.bf16.mxu0 %v917
      %1027 = vmatpush1.bf16.msra.mxu0 %v916
      %1028 = vmatprep.subr.bf16.mxu0 %v925
      %1029 = vmatpush1.bf16.msra.mxu0 %v924
      %1030 = vmatprep.subr.bf16.mxu0 %v933
      %1031 = vmatpush1.bf16.msra.mxu0 %v932
      %1032 = vmatprep.subr.bf16.mxu0 %v941
      %1033 = vmatpush1.bf16.msra.mxu0 %v940
      %1034 = vmatprep.subr.bf16.mxu0 %v949
      %1035 = vmatpush1.bf16.msra.mxu0 %v948
      %1036 = vmatprep.subr.bf16.mxu0 0
      %1037 = vmatpush1.bf16.msra.mxu0 0
      %1038 = vmatprep.subr.bf16.mxu0 0
      %1039 = vmatpush1.bf16.msra.mxu0 0
      %1040 = vmatprep.subr.bf16.mxu0 0
      %1041 = vmatpush1.bf16.msra.mxu0 0
      %1042 = vmatprep.subr.bf16.mxu0 0
      %1043 = vmatpush1.bf16.msra.mxu0 0
      %1044 = vmatprep.subr.bf16.mxu0 0
      %1045 = vmatpush1.bf16.msra.mxu0 0
      %1046 = vmatprep.subr.bf16.mxu0 0
      %1047 = vmatpush1.bf16.msra.mxu0 0
      %1048 = vmatprep.subr.bf16.mxu0 0
      %1049 = vmatpush1.bf16.msra.mxu0 0
      %1050 = vmatprep.subr.bf16.mxu0 0
      %1051 = vmatpush1.bf16.msra.mxu0 0
      %1052 = vmatprep.mubr.bf16.mxu0 0
      %1053 = vmatmul.mubr.bf16.gmra.mrb[0].mxu0 %v697
      %v1054 = vpop.f32.mrb[0].mxu0
      %v1055 = vadd.f32 0.0, %v1054
      %v1056 = vpop.f32.mrb[0].mxu0
      %v1057 = vadd.f32 0.0, %v1056
      %v1058 = vpop.f32.mrb[0].mxu0
      %v1059 = vadd.f32 0.0, %v1058
      %v1060 = vpop.f32.mrb[0].mxu0
      %v1061 = vadd.f32 0.0, %v1060
      %1062 = vmatprep.mubr.bf16.mxu0 0
      %1063 = vmatmul.mubr.bf16.gmra.mrb[0].mxu0 %v698
      %v1064 = vpop.f32.mrb[0].mxu0
      %v1065 = vadd.f32 0.0, %v1064
      %v1066 = vpop.f32.mrb[0].mxu0
      %v1067 = vadd.f32 0.0, %v1066
      %v1068 = vpop.f32.mrb[0].mxu0
      %v1069 = vadd.f32 0.0, %v1068
      %v1070 = vpop.f32.mrb[0].mxu0
      %v1071 = vadd.f32 0.0, %v1070
      %1072 = vmatprep.mubr.bf16.mxu0 0
      %1073 = vmatmul.mubr.bf16.gmra.mrb[0].mxu0 %v699
      %v1074 = vpop.f32.mrb[0].mxu0
      %v1075 = vadd.f32 0.0, %v1074
      %v1076 = vpop.f32.mrb[0].mxu0
      %v1077 = vadd.f32 0.0, %v1076
      %v1078 = vpop.f32.mrb[0].mxu0
      %v1079 = vadd.f32 0.0, %v1078
      %v1080 = vpop.f32.mrb[0].mxu0
      %v1081 = vadd.f32 0.0, %v1080
      %1082 = vdwg.mxu0
      %1083 = vmatprep.subr.bf16.mxu0 %v895
      %1084 = vmatpush1.bf16.msra.mxu0 %v894
      %1085 = vmatprep.subr.bf16.mxu0 %v903
      %1086 = vmatpush1.bf16.msra.mxu0 %v902
      %1087 = vmatprep.subr.bf16.mxu0 %v911
      %1088 = vmatpush1.bf16.msra.mxu0 %v910
      %1089 = vmatprep.subr.bf16.mxu0 %v919
      %1090 = vmatpush1.bf16.msra.mxu0 %v918
      %1091 = vmatprep.subr.bf16.mxu0 %v927
      %1092 = vmatpush1.bf16.msra.mxu0 %v926
      %1093 = vmatprep.subr.bf16.mxu0 %v935
      %1094 = vmatpush1.bf16.msra.mxu0 %v934
      %1095 = vmatprep.subr.bf16.mxu0 %v943
      %1096 = vmatpush1.bf16.msra.mxu0 %v942
      %1097 = vmatprep.subr.bf16.mxu0 %v951
      %1098 = vmatpush1.bf16.msra.mxu0 %v950
      %1099 = vmatprep.subr.bf16.mxu0 0
      %1100 = vmatpush1.bf16.msra.mxu0 0
      %1101 = vmatprep.subr.bf16.mxu0 0
      %1102 = vmatpush1.bf16.msra.mxu0 0
      %1103 = vmatprep.subr.bf16.mxu0 0
      %1104 = vmatpush1.bf16.msra.mxu0 0
      %1105 = vmatprep.subr.bf16.mxu0 0
      %1106 = vmatpush1.bf16.msra.mxu0 0
      %1107 = vmatprep.subr.bf16.mxu0 0
      %1108 = vmatpush1.bf16.msra.mxu0 0
      %1109 = vmatprep.subr.bf16.mxu0 0
      %1110 = vmatpush1.bf16.msra.mxu0 0
      %1111 = vmatprep.subr.bf16.mxu0 0
      %1112 = vmatpush1.bf16.msra.mxu0 0
      %1113 = vmatprep.subr.bf16.mxu0 0
      %1114 = vmatpush1.bf16.msra.mxu0 0
      %1115 = vmatprep.mubr.bf16.mxu0 0
      %1116 = vmatmul.mubr.bf16.gmra.mrb[0].mxu0 %v697
      %v1117 = vpop.f32.mrb[0].mxu0
      %v1118 = vadd.f32 0.0, %v1117
      %v1119 = vpop.f32.mrb[0].mxu0
      %v1120 = vadd.f32 0.0, %v1119
      %v1121 = vpop.f32.mrb[0].mxu0
      %v1122 = vadd.f32 0.0, %v1121
      %v1123 = vpop.f32.mrb[0].mxu0
      %v1124 = vadd.f32 0.0, %v1123
      %1125 = vmatprep.mubr.bf16.mxu0 0
      %1126 = vmatmul.mubr.bf16.gmra.mrb[0].mxu0 %v698
      %v1127 = vpop.f32.mrb[0].mxu0
      %v1128 = vadd.f32 0.0, %v1127
      %v1129 = vpop.f32.mrb[0].mxu0
      %v1130 = vadd.f32 0.0, %v1129
      %v1131 = vpop.f32.mrb[0].mxu0
      %v1132 = vadd.f32 0.0, %v1131
      %v1133 = vpop.f32.mrb[0].mxu0
      %v1134 = vadd.f32 0.0, %v1133
      %1135 = vmatprep.mubr.bf16.mxu0 0
      %1136 = vmatmul.mubr.bf16.gmra.mrb[0].mxu0 %v699
      %v1137 = vpop.f32.mrb[0].mxu0
      %v1138 = vadd.f32 0.0, %v1137
      %v1139 = vpop.f32.mrb[0].mxu0
      %v1140 = vadd.f32 0.0, %v1139
      %v1141 = vpop.f32.mrb[0].mxu0
      %v1142 = vadd.f32 0.0, %v1141
      %v1143 = vpop.f32.mrb[0].mxu0
      %v1144 = vadd.f32 0.0, %v1143
      %1145 = vdwg.mxu0
      %1146 = vmatprep.subr.bf16.mxu0 %v897
      %1147 = vmatpush1.bf16.msra.mxu0 %v896
      %1148 = vmatprep.subr.bf16.mxu0 %v905
      %1149 = vmatpush1.bf16.msra.mxu0 %v904
      %1150 = vmatprep.subr.bf16.mxu0 %v913
      %1151 = vmatpush1.bf16.msra.mxu0 %v912
      %1152 = vmatprep.subr.bf16.mxu0 %v921
      %1153 = vmatpush1.bf16.msra.mxu0 %v920
      %1154 = vmatprep.subr.bf16.mxu0 %v929
      %1155 = vmatpush1.bf16.msra.mxu0 %v928
      %1156 = vmatprep.subr.bf16.mxu0 %v937
      %1157 = vmatpush1.bf16.msra.mxu0 %v936
      %1158 = vmatprep.subr.bf16.mxu0 %v945
      %1159 = vmatpush1.bf16.msra.mxu0 %v944
      %1160 = vmatprep.subr.bf16.mxu0 %v953
      %1161 = vmatpush1.bf16.msra.mxu0 %v952
      %1162 = vmatprep.subr.bf16.mxu0 0
      %1163 = vmatpush1.bf16.msra.mxu0 0
      %1164 = vmatprep.subr.bf16.mxu0 0
      %1165 = vmatpush1.bf16.msra.mxu0 0
      %1166 = vmatprep.subr.bf16.mxu0 0
      %1167 = vmatpush1.bf16.msra.mxu0 0
      %1168 = vmatprep.subr.bf16.mxu0 0
      %1169 = vmatpush1.bf16.msra.mxu0 0
      %1170 = vmatprep.subr.bf16.mxu0 0
      %1171 = vmatpush1.bf16.msra.mxu0 0
      %1172 = vmatprep.subr.bf16.mxu0 0
      %1173 = vmatpush1.bf16.msra.mxu0 0
      %1174 = vmatprep.subr.bf16.mxu0 0
      %1175 = vmatpush1.bf16.msra.mxu0 0
      %1176 = vmatprep.subr.bf16.mxu0 0
      %1177 = vmatpush1.bf16.msra.mxu0 0
      %1178 = vmatprep.mubr.bf16.mxu0 0
      %1179 = vmatmul.mubr.bf16.gmra.mrb[0].mxu0 %v697
      %v1180 = vpop.f32.mrb[0].mxu0
      %v1181 = vadd.f32 0.0, %v1180
      %v1182 = vpop.f32.mrb[0].mxu0
      %v1183 = vadd.f32 0.0, %v1182
      %v1184 = vpop.f32.mrb[0].mxu0
      %v1185 = vadd.f32 0.0, %v1184
      %v1186 = vpop.f32.mrb[0].mxu0
      %v1187 = vadd.f32 0.0, %v1186
      %1188 = vmatprep.mubr.bf16.mxu0 0
      %1189 = vmatmul.mubr.bf16.gmra.mrb[0].mxu0 %v698
      %v1190 = vpop.f32.mrb[0].mxu0
      %v1191 = vadd.f32 0.0, %v1190
      %v1192 = vpop.f32.mrb[0].mxu0
      %v1193 = vadd.f32 0.0, %v1192
      %v1194 = vpop.f32.mrb[0].mxu0
      %v1195 = vadd.f32 0.0, %v1194
      %v1196 = vpop.f32.mrb[0].mxu0
      %v1197 = vadd.f32 0.0, %v1196
      %1198 = vmatprep.mubr.bf16.mxu0 0
      %1199 = vmatmul.mubr.bf16.gmra.mrb[0].mxu0 %v699
      %v1200 = vpop.f32.mrb[0].mxu0
      %v1201 = vadd.f32 0.0, %v1200
      %v1202 = vpop.f32.mrb[0].mxu0
      %v1203 = vadd.f32 0.0, %v1202
      %v1204 = vpop.f32.mrb[0].mxu0
      %v1205 = vadd.f32 0.0, %v1204
      %v1206 = vpop.f32.mrb[0].mxu0
      %v1207 = vadd.f32 0.0, %v1206
      %1208 = vdwg.mxu0
      %1209 = vmatprep.subr.bf16.mxu0 %v899
      %1210 = vmatpush1.bf16.msra.mxu0 %v898
      %1211 = vmatprep.subr.bf16.mxu0 %v907
      %1212 = vmatpush1.bf16.msra.mxu0 %v906
      %1213 = vmatprep.subr.bf16.mxu0 %v915
      %1214 = vmatpush1.bf16.msra.mxu0 %v914
      %1215 = vmatprep.subr.bf16.mxu0 %v923
      %1216 = vmatpush1.bf16.msra.mxu0 %v922
      %1217 = vmatprep.subr.bf16.mxu0 %v931
      %1218 = vmatpush1.bf16.msra.mxu0 %v930
      %1219 = vmatprep.subr.bf16.mxu0 %v939
      %1220 = vmatpush1.bf16.msra.mxu0 %v938
      %1221 = vmatprep.subr.bf16.mxu0 %v947
      %1222 = vmatpush1.bf16.msra.mxu0 %v946
      %1223 = vmatprep.subr.bf16.mxu0 %v955
      %1224 = vmatpush1.bf16.msra.mxu0 %v954
      %1225 = vmatprep.subr.bf16.mxu0 0
      %1226 = vmatpush1.bf16.msra.mxu0 0
      %1227 = vmatprep.subr.bf16.mxu0 0
      %1228 = vmatpush1.bf16.msra.mxu0 0
      %1229 = vmatprep.subr.bf16.mxu0 0
      %1230 = vmatpush1.bf16.msra.mxu0 0
      %1231 = vmatprep.subr.bf16.mxu0 0
      %1232 = vmatpush1.bf16.msra.mxu0 0
      %1233 = vmatprep.subr.bf16.mxu0 0
      %1234 = vmatpush1.bf16.msra.mxu0 0
      %1235 = vmatprep.subr.bf16.mxu0 0
      %1236 = vmatpush1.bf16.msra.mxu0 0
      %1237 = vmatprep.subr.bf16.mxu0 0
      %1238 = vmatpush1.bf16.msra.mxu0 0
      %1239 = vmatprep.subr.bf16.mxu0 0
      %1240 = vmatpush1.bf16.msra.mxu0 0
      %1241 = vmatprep.mubr.bf16.mxu0 0
      %1242 = vmatmul.mubr.bf16.gmra.mrb[0].mxu0 %v697
      %v1243 = vpop.f32.mrb[0].mxu0
      %v1244 = vadd.f32 0.0, %v1243
      %v1245 = vpop.f32.mrb[0].mxu0
      %v1246 = vadd.f32 0.0, %v1245
      %v1247 = vpop.f32.mrb[0].mxu0
      %v1248 = vadd.f32 0.0, %v1247
      %v1249 = vpop.f32.mrb[0].mxu0
      %v1250 = vadd.f32 0.0, %v1249
      %1251 = vmatprep.mubr.bf16.mxu0 0
      %1252 = vmatmul.mubr.bf16.gmra.mrb[0].mxu0 %v698
      %v1253 = vpop.f32.mrb[0].mxu0
      %v1254 = vadd.f32 0.0, %v1253
      %v1255 = vpop.f32.mrb[0].mxu0
      %v1256 = vadd.f32 0.0, %v1255
      %v1257 = vpop.f32.mrb[0].mxu0
      %v1258 = vadd.f32 0.0, %v1257
      %v1259 = vpop.f32.mrb[0].mxu0
      %v1260 = vadd.f32 0.0, %v1259
      %1261 = vmatprep.mubr.bf16.mxu0 0
      %1262 = vmatmul.mubr.bf16.gmra.mrb[0].mxu0 %v699
      %v1263 = vpop.f32.mrb[0].mxu0
      %v1264 = vadd.f32 0.0, %v1263
      %v1265 = vpop.f32.mrb[0].mxu0
      %v1266 = vadd.f32 0.0, %v1265
      %v1267 = vpop.f32.mrb[0].mxu0
      %v1268 = vadd.f32 0.0, %v1267
      %v1269 = vpop.f32.mrb[0].mxu0
      %v1270 = vadd.f32 0.0, %v1269
      %1271 = vdwg.mxu0
      %p1272 = scmp.eq.s32.totalorder %s25, 0
      // Predicated region
      $region49: #{pointnetcls_forward.6} parent=47 // pred_check
        %p1273 = pneg %p1272
      $region50: #{pointnetcls_forward.6} parent=47 // pred_check_branch
        %1275 = sbr.rel (%p1273) target = $region52
      $region51: #{pointnetcls_forward.6} parent=47 // pred_region
        %1276 = vst [vmem:[%s351] sm:$0xff] -inf
      $region52: #{pointnetcls_forward.6} parent=47 // pred_fallthru
        _
      %v1277 = vld [vmem:[%s351] sm:$0xff]
      %v1278 = vmax.f32 %v1055, %v1059
      %v1279 = vmax.f32 %v1278, %v1065
      %v1280 = vmax.f32 %v1279, %v1069
      %v1281 = vmax.f32 %v1280, %v1075
      %v1282 = vmax.f32 %v1281, %v1079
      %v1283 = vrot.slane %v1282, 4
      %v1284 = vmax.f32 %v1282, %v1283
      %v1285 = vrot.slane %v1284, 2
      %v1286 = vmax.f32 %v1284, %v1285
      %v1287 = vrot.slane %v1286, 1
      %v1288 = vmax.f32 %v1286, %v1287
      %v1289 = vmax.f32 %v1057, %v1061
      %v1290 = vmax.f32 %v1289, %v1067
      %v1291 = vmax.f32 %v1290, %v1071
      %v1292 = vmax.f32 %v1291, %v1077
      %v1293 = vmax.f32 %v1292, %v1081
      %v1294 = vrot.slane %v1293, 4
      %v1295 = vmax.f32 %v1293, %v1294
      %v1296 = vrot.slane %v1295, 2
      %v1297 = vmax.f32 %v1295, %v1296
      %v1298 = vrot.slane %v1297, 1
      %v1299 = vmax.f32 %v1297, %v1298
      %v1300 = vmax.f32 %v1118, %v1122
      %v1301 = vmax.f32 %v1300, %v1128
      %v1302 = vmax.f32 %v1301, %v1132
      %v1303 = vmax.f32 %v1302, %v1138
      %v1304 = vmax.f32 %v1303, %v1142
      %v1305 = vrot.slane %v1304, 4
      %v1306 = vmax.f32 %v1304, %v1305
      %v1307 = vrot.slane %v1306, 2
      %v1308 = vmax.f32 %v1306, %v1307
      %v1309 = vrot.slane %v1308, 1
      %v1310 = vmax.f32 %v1308, %v1309
      %v1311 = vmax.f32 %v1120, %v1124
      %v1312 = vmax.f32 %v1311, %v1130
      %v1313 = vmax.f32 %v1312, %v1134
      %v1314 = vmax.f32 %v1313, %v1140
      %v1315 = vmax.f32 %v1314, %v1144
      %v1316 = vrot.slane %v1315, 4
      %v1317 = vmax.f32 %v1315, %v1316
      %v1318 = vrot.slane %v1317, 2
      %v1319 = vmax.f32 %v1317, %v1318
      %v1320 = vrot.slane %v1319, 1
      %v1321 = vmax.f32 %v1319, %v1320
      %v1322 = vmax.f32 %v1181, %v1185
      %v1323 = vmax.f32 %v1322, %v1191
      %v1324 = vmax.f32 %v1323, %v1195
      %v1325 = vmax.f32 %v1324, %v1201
      %v1326 = vmax.f32 %v1325, %v1205
      %v1327 = vrot.slane %v1326, 4
      %v1328 = vmax.f32 %v1326, %v1327
      %v1329 = vrot.slane %v1328, 2
      %v1330 = vmax.f32 %v1328, %v1329
      %v1331 = vrot.slane %v1330, 1
      %v1332 = vmax.f32 %v1330, %v1331
      %v1333 = vmax.f32 %v1183, %v1187
      %v1334 = vmax.f32 %v1333, %v1193
      %v1335 = vmax.f32 %v1334, %v1197
      %v1336 = vmax.f32 %v1335, %v1203
      %v1337 = vmax.f32 %v1336, %v1207
      %v1338 = vrot.slane %v1337, 4
      %v1339 = vmax.f32 %v1337, %v1338
      %v1340 = vrot.slane %v1339, 2
      %v1341 = vmax.f32 %v1339, %v1340
      %v1342 = vrot.slane %v1341, 1
      %v1343 = vmax.f32 %v1341, %v1342
      %v1344 = vmax.f32 %v1244, %v1248
      %v1345 = vmax.f32 %v1344, %v1254
      %v1346 = vmax.f32 %v1345, %v1258
      %v1347 = vmax.f32 %v1346, %v1264
      %v1348 = vmax.f32 %v1347, %v1268
      %v1349 = vrot.slane %v1348, 4
      %v1350 = vmax.f32 %v1348, %v1349
      %v1351 = vrot.slane %v1350, 2
      %v1352 = vmax.f32 %v1350, %v1351
      %v1353 = vrot.slane %v1352, 1
      %v1354 = vmax.f32 %v1352, %v1353
      %v1355 = vmax.f32 %v1246, %v1250
      %v1356 = vmax.f32 %v1355, %v1256
      %v1357 = vmax.f32 %v1356, %v1260
      %v1358 = vmax.f32 %v1357, %v1266
      %v1359 = vmax.f32 %v1358, %v1270
      %v1360 = vrot.slane %v1359, 4
      %v1361 = vmax.f32 %v1359, %v1360
      %v1362 = vrot.slane %v1361, 2
      %v1363 = vmax.f32 %v1361, %v1362
      %v1364 = vrot.slane %v1363, 1
      %v1365 = vmax.f32 %v1363, %v1364
      %v1374 = vcombine.low %v1288, %v1299
      %v1375 = vcombine.low %v1310, %v1321
      %v1376 = vcombine.low %v1332, %v1343
      %v1377 = vcombine.low %v1354, %v1365
      %v1379 = vunpack.c.l.s4 1966171168
      %v1380 = vunpack.c.0.s8 %v1379
      %v1381 = vlaneseq
      %v1382 = vshrl.u32 %v1381, 7
      %v1383 = vsub.s32 %v1380, %v1382
      %v1384 = vrot.slane %v1374, %v1383
      %v1386 = vunpack.c.l.s4 1966171168
      %v1387 = vunpack.c.0.s8 %v1386
      %v1388 = vlaneseq
      %v1389 = vshrl.u32 %v1388, 7
      %v1390 = vsub.s32 %v1387, %v1389
      %v1391 = vrot.slane %v1375, %v1390
      %v1393 = vunpack.c.l.s4 1966171168
      %v1394 = vunpack.c.0.s8 %v1393
      %v1395 = vlaneseq
      %v1396 = vshrl.u32 %v1395, 7
      %v1397 = vsub.s32 %v1394, %v1396
      %v1398 = vrot.slane %v1376, %v1397
      %v1400 = vunpack.c.l.s4 1966171168
      %v1401 = vunpack.c.0.s8 %v1400
      %v1402 = vlaneseq
      %v1403 = vshrl.u32 %v1402, 7
      %v1404 = vsub.s32 %v1401, %v1403
      %v1405 = vrot.slane %v1377, %v1404
      %v1406 = vcombine.low %v1384, %v1391
      %v1407 = vcombine.low %v1398, %v1405
      %v1409 = vunpack.c.l.s4 1966171168
      %v1410 = vunpack.c.0.s8 %v1409
      %v1411 = vlaneseq
      %v1412 = vshrl.u32 %v1411, 7
      %v1413 = vsub.s32 %v1410, %v1412
      %v1414 = vrot.slane %v1406, %v1413
      %v1416 = vunpack.c.l.s4 1966171168
      %v1417 = vunpack.c.0.s8 %v1416
      %v1418 = vlaneseq
      %v1419 = vshrl.u32 %v1418, 7
      %v1420 = vsub.s32 %v1417, %v1419
      %v1421 = vrot.slane %v1407, %v1420
      %v1422 = vcombine.low %v1414, %v1421
      %v1424 = vmax.f32 %v1277, %v1422
      %1425 = vst [vmem:[%s351] sm:$0xff] %v1424
      // Predicated region
      $region53: #{pointnetcls_forward.6} parent=47 // pred_check
        %p1426 = pneg %p1272
      $region54: #{pointnetcls_forward.6} parent=47 // pred_check_branch
        %1428 = sbr.rel (%p1426) target = $region56
      $region55: #{pointnetcls_forward.6} parent=47 // pred_region
        %v1429 = vld [vmem:[%s351] sm:$0xff]
        %v1430 = vld [vmem:[%s6] sm:$0xff]
        %v1431 = vadd.f32 %v1429, %v1430
        %1432 = vst [vmem:[%s351] sm:$0xff] %v1431
      $region56: #{pointnetcls_forward.6} parent=47 // pred_fallthru
        _
      %p1433 = scmp.lt.s32.totalorder %s23, 1
      %s1434 = scalar_select %p1433, %s23, 1
      %p1435 = scmp.lt.s32.totalorder %s24, 0
      %s1436 = scalar_select %p1435, %s24, 0
      %s1437 = smul.addr %s1436, 8
      %s1438 = smul.addr %s1434, 8
      %s1439 = sadd.s32 %s1437, %s1438
      %s1440 = scalar_lea.vmem %s7, %s1439
      // Predicated region
      $region57: #{pointnetcls_forward.6} parent=47 // pred_check
        %p1441 = pneg %p222
      $region58: #{pointnetcls_forward.6} parent=47 // pred_check_branch
        %1443 = sbr.rel (%p1441) target = $region60
      $region59: #{pointnetcls_forward.6} parent=47 // pred_region
        _
      $region60: #{pointnetcls_forward.6} parent=47 // pred_fallthru
        _
    $region48: #{pointnetcls_forward.6} parent=5 // pred_fallthru
      _
    %p1444 = scmp.le.s32.totalorder 2, %s13
    // Predicated region
    $region61: #{pointnetcls_forward.6} parent=5 // pred_check
      %p1445 = pneg %p1444
    $region62: #{pointnetcls_forward.6} parent=5 // pred_check_branch
      %1447 = sbr.rel (%p1445) target = $region64
    $region63: #{pointnetcls_forward.6} parent=5 // pred_region
      %s1448 = ssub.s32 %s13, 2
      // Predicated region
      $region65: #{pointnetcls_forward.6} parent=63 // pred_check
        %p1449 = pneg %p228
      $region66: #{pointnetcls_forward.6} parent=63 // pred_check_branch
        %1451 = sbr.rel (%p1449) target = $region68
      $region67: #{pointnetcls_forward.6} parent=63 // pred_region
        %p1452 = scmp.lt.s32.totalorder %s26, 1
        %s1453 = scalar_select %p1452, %s26, 1
        %p1454 = scmp.lt.s32.totalorder %s27, 0
        %s1455 = scalar_select %p1454, %s27, 0
        %s1456 = smul.addr %s1455, 8
        %s1457 = smul.addr %s1453, 8
        %s1458 = sadd.s32 %s1456, %s1457
        %s1459 = scalar_lea.vmem %s7, %s1458
      $region68: #{pointnetcls_forward.6} parent=63 // pred_fallthru
        _
    $region64: #{pointnetcls_forward.6} parent=5 // pred_fallthru
      _
  $region6: #{pointnetcls_forward.6} parent=0 // loop_footer
    %s17 = sadd.s32 1, %s13
  $region7: #{pointnetcls_forward.6} parent=0 // loop_footer_branch
    %12 = sbr.rel target = $region3
  $region8: #{pointnetcls_forward.6} parent=0 // loop_exit
    _

// kernel: pointnetcls_forward.5
$region0: #{pointnetcls_forward.5}
  #allocation0 [shape = 'u32[]', space=smem, size = 0x4, offset = 0x4, fixed_abs, tag = 'smem constant byte address 0x4 - core index']
  #allocation1 [shape = 'u32[144,128]{1,0:T(1,128)}', space=vmem, size = 0x12000, scoped, tag = 'internal scratch']
  %s0 = inlined_call_operand.vmem [shape: f32[2,1,1,1024], index: 0, kind: input, shape index: {}]
  %s1 = inlined_call_operand.vmem [shape: bf16[1024,512], index: 1, kind: input, shape index: {}]
  %s2 = inlined_call_operand.vmem [shape: f32[1,512], index: 2, kind: input, shape index: {}]
  %s3 = inlined_call_operand.vmem [shape: bf16[512,256], index: 3, kind: input, shape index: {}]
  %s4 = inlined_call_operand.vmem [shape: f32[1,256], index: 4, kind: input, shape index: {}]
  %s5 = inlined_call_operand.vmem [shape: f32[256,9], index: 5, kind: input, shape index: {}]
  %s6 = inlined_call_operand.vmem [shape: f32[1,9], index: 6, kind: input, shape index: {}]
  %s7 = inlined_call_operand.vmem [shape: f32[1,9], index: 7, kind: input, shape index: {}]
  %s8 = inlined_call_operand.vmem [shape: f32[9,192], index: 8, kind: input, shape index: {}]
  %s9 = inlined_call_operand.vmem [shape: f32[2,9], index: 9, kind: output, shape index: {0}]
  %s10 = inlined_call_operand.vmem [shape: f32[2,192], index: 10, kind: output, shape index: {1}]
  %11 = xla_tuple %s9, %s10
  %s12 = sld [smem:[#allocation0]]
  $region54: #{pointnetcls_forward.5} parent=0
    _
  %s14 = ssub.s32 1, %s12
  %s15 = scalar_select 0, %s14, %s12
  // Predicated region
  $region2: #{pointnetcls_forward.5} parent=0 // pred_check
    _
  $region3: #{pointnetcls_forward.5} parent=0 // pred_check_branch
    %17 = sbr.rel (0) target = $region5
  $region4: #{pointnetcls_forward.5} parent=0 // pred_region
    _
  $region5: #{pointnetcls_forward.5} parent=0 // pred_fallthru
    _
  // Predicated region
  $region6: #{pointnetcls_forward.5} parent=0 // pred_check
    _
  $region7: #{pointnetcls_forward.5} parent=0 // pred_check_branch
    %19 = sbr.rel (0) target = $region9
  $region8: #{pointnetcls_forward.5} parent=0 // pred_region
    _
  $region9: #{pointnetcls_forward.5} parent=0 // pred_fallthru
    _
  // Predicated region
  $region10: #{pointnetcls_forward.5} parent=0 // pred_check
    _
  $region11: #{pointnetcls_forward.5} parent=0 // pred_check_branch
    %21 = sbr.rel (0) target = $region13
  $region12: #{pointnetcls_forward.5} parent=0 // pred_region
    _
  $region13: #{pointnetcls_forward.5} parent=0 // pred_fallthru
    _
  // Predicated region
  $region14: #{pointnetcls_forward.5} parent=0 // pred_check
    _
  $region15: #{pointnetcls_forward.5} parent=0 // pred_check_branch
    %23 = sbr.rel (0) target = $region17
  $region16: #{pointnetcls_forward.5} parent=0 // pred_region
    _
  $region17: #{pointnetcls_forward.5} parent=0 // pred_fallthru
    _
  // Predicated region
  $region18: #{pointnetcls_forward.5} parent=0 // pred_check
    _
  $region19: #{pointnetcls_forward.5} parent=0 // pred_check_branch
    %25 = sbr.rel (0) target = $region21
  $region20: #{pointnetcls_forward.5} parent=0 // pred_region
    _
  $region21: #{pointnetcls_forward.5} parent=0 // pred_fallthru
    _
  // Predicated region
  $region22: #{pointnetcls_forward.5} parent=0 // pred_check
    _
  $region23: #{pointnetcls_forward.5} parent=0 // pred_check_branch
    %27 = sbr.rel (0) target = $region25
  $region24: #{pointnetcls_forward.5} parent=0 // pred_region
    _
  $region25: #{pointnetcls_forward.5} parent=0 // pred_fallthru
    _
  // Predicated region
  $region26: #{pointnetcls_forward.5} parent=0 // pred_check
    _
  $region27: #{pointnetcls_forward.5} parent=0 // pred_check_branch
    %29 = sbr.rel (0) target = $region29
  $region28: #{pointnetcls_forward.5} parent=0 // pred_region
    _
  $region29: #{pointnetcls_forward.5} parent=0 // pred_fallthru
    _
  // Predicated region
  $region30: #{pointnetcls_forward.5} parent=0 // pred_check
    _
  $region31: #{pointnetcls_forward.5} parent=0 // pred_check_branch
    %31 = sbr.rel (0) target = $region33
  $region32: #{pointnetcls_forward.5} parent=0 // pred_region
    _
  $region33: #{pointnetcls_forward.5} parent=0 // pred_fallthru
    _
  // Predicated region
  $region34: #{pointnetcls_forward.5} parent=0 // pred_check
    _
  $region35: #{pointnetcls_forward.5} parent=0 // pred_check_branch
    %33 = sbr.rel (0) target = $region37
  $region36: #{pointnetcls_forward.5} parent=0 // pred_region
    _
  $region37: #{pointnetcls_forward.5} parent=0 // pred_fallthru
    _
  %v34 = vld [vmem:[%s0] sm:$0xff]
  %v35 = vld [vmem:[%s0 + $0x8] sm:$0xff]
  %v36 = vmax.f32 %v34, 0.0
  %v37 = vmax.f32 %v35, 0.0
  %v38 = vld [vmem:[%s1] sm:$0xff]
  %v39 = vld [vmem:[%s1 + $0x8] sm:$0xff]
  %v40 = vld [vmem:[%s1 + $0x10] sm:$0xff]
  %v41 = vld [vmem:[%s1 + $0x18] sm:$0xff]
  %v42 = vld [vmem:[%s1 + $0x20] sm:$0xff]
  %v43 = vld [vmem:[%s1 + $0x28] sm:$0xff]
  %v44 = vld [vmem:[%s1 + $0x30] sm:$0xff]
  %v45 = vld [vmem:[%s1 + $0x38] sm:$0xff]
  %v46 = vld [vmem:[%s1 + $0x40] sm:$0xff]
  %v47 = vld [vmem:[%s1 + $0x48] sm:$0xff]
  %v48 = vld [vmem:[%s1 + $0x50] sm:$0xff]
  %v49 = vld [vmem:[%s1 + $0x58] sm:$0xff]
  %v50 = vld [vmem:[%s1 + $0x60] sm:$0xff]
  %v51 = vld [vmem:[%s1 + $0x68] sm:$0xff]
  %v52 = vld [vmem:[%s1 + $0x70] sm:$0xff]
  %v53 = vld [vmem:[%s1 + $0x78] sm:$0xff]
  %v54 = vld [vmem:[%s1 + $0x80] sm:$0xff]
  %v55 = vld [vmem:[%s1 + $0x88] sm:$0xff]
  %v56 = vld [vmem:[%s1 + $0x90] sm:$0xff]
  %v57 = vld [vmem:[%s1 + $0x98] sm:$0xff]
  %v58 = vld [vmem:[%s1 + $0xa0] sm:$0xff]
  %v59 = vld [vmem:[%s1 + $0xa8] sm:$0xff]
  %v60 = vld [vmem:[%s1 + $0xb0] sm:$0xff]
  %v61 = vld [vmem:[%s1 + $0xb8] sm:$0xff]
  %v62 = vld [vmem:[%s1 + $0xc0] sm:$0xff]
  %v63 = vld [vmem:[%s1 + $0xc8] sm:$0xff]
  %v64 = vld [vmem:[%s1 + $0xd0] sm:$0xff]
  %v65 = vld [vmem:[%s1 + $0xd8] sm:$0xff]
  %v66 = vld [vmem:[%s1 + $0xe0] sm:$0xff]
  %v67 = vld [vmem:[%s1 + $0xe8] sm:$0xff]
  %v68 = vld [vmem:[%s1 + $0xf0] sm:$0xff]
  %v69 = vld [vmem:[%s1 + $0xf8] sm:$0xff]
  %v70 = vld [vmem:[%s1 + $0x100] sm:$0xff]
  %v71 = vld [vmem:[%s1 + $0x108] sm:$0xff]
  %v72 = vld [vmem:[%s1 + $0x110] sm:$0xff]
  %v73 = vld [vmem:[%s1 + $0x118] sm:$0xff]
  %v74 = vld [vmem:[%s1 + $0x120] sm:$0xff]
  %v75 = vld [vmem:[%s1 + $0x128] sm:$0xff]
  %v76 = vld [vmem:[%s1 + $0x130] sm:$0xff]
  %v77 = vld [vmem:[%s1 + $0x138] sm:$0xff]
  %v78 = vld [vmem:[%s1 + $0x140] sm:$0xff]
  %v79 = vld [vmem:[%s1 + $0x148] sm:$0xff]
  %v80 = vld [vmem:[%s1 + $0x150] sm:$0xff]
  %v81 = vld [vmem:[%s1 + $0x158] sm:$0xff]
  %v82 = vld [vmem:[%s1 + $0x160] sm:$0xff]
  %v83 = vld [vmem:[%s1 + $0x168] sm:$0xff]
  %v84 = vld [vmem:[%s1 + $0x170] sm:$0xff]
  %v85 = vld [vmem:[%s1 + $0x178] sm:$0xff]
  %v86 = vld [vmem:[%s1 + $0x180] sm:$0xff]
  %v87 = vld [vmem:[%s1 + $0x188] sm:$0xff]
  %v88 = vld [vmem:[%s1 + $0x190] sm:$0xff]
  %v89 = vld [vmem:[%s1 + $0x198] sm:$0xff]
  %v90 = vld [vmem:[%s1 + $0x1a0] sm:$0xff]
  %v91 = vld [vmem:[%s1 + $0x1a8] sm:$0xff]
  %v92 = vld [vmem:[%s1 + $0x1b0] sm:$0xff]
  %v93 = vld [vmem:[%s1 + $0x1b8] sm:$0xff]
  %v94 = vld [vmem:[%s1 + $0x1c0] sm:$0xff]
  %v95 = vld [vmem:[%s1 + $0x1c8] sm:$0xff]
  %v96 = vld [vmem:[%s1 + $0x1d0] sm:$0xff]
  %v97 = vld [vmem:[%s1 + $0x1d8] sm:$0xff]
  %v98 = vld [vmem:[%s1 + $0x1e0] sm:$0xff]
  %v99 = vld [vmem:[%s1 + $0x1e8] sm:$0xff]
  %v100 = vld [vmem:[%s1 + $0x1f0] sm:$0xff]
  %v101 = vld [vmem:[%s1 + $0x1f8] sm:$0xff]
  %v102 = vld [vmem:[%s1 + $0x200] sm:$0xff]
  %v103 = vld [vmem:[%s1 + $0x208] sm:$0xff]
  %v104 = vld [vmem:[%s1 + $0x210] sm:$0xff]
  %v105 = vld [vmem:[%s1 + $0x218] sm:$0xff]
  %v106 = vld [vmem:[%s1 + $0x220] sm:$0xff]
  %v107 = vld [vmem:[%s1 + $0x228] sm:$0xff]
  %v108 = vld [vmem:[%s1 + $0x230] sm:$0xff]
  %v109 = vld [vmem:[%s1 + $0x238] sm:$0xff]
  %v110 = vld [vmem:[%s1 + $0x240] sm:$0xff]
  %v111 = vld [vmem:[%s1 + $0x248] sm:$0xff]
  %v112 = vld [vmem:[%s1 + $0x250] sm:$0xff]
  %v113 = vld [vmem:[%s1 + $0x258] sm:$0xff]
  %v114 = vld [vmem:[%s1 + $0x260] sm:$0xff]
  %v115 = vld [vmem:[%s1 + $0x268] sm:$0xff]
  %v116 = vld [vmem:[%s1 + $0x270] sm:$0xff]
  %v117 = vld [vmem:[%s1 + $0x278] sm:$0xff]
  %v118 = vld [vmem:[%s1 + $0x280] sm:$0xff]
  %v119 = vld [vmem:[%s1 + $0x288] sm:$0xff]
  %v120 = vld [vmem:[%s1 + $0x290] sm:$0xff]
  %v121 = vld [vmem:[%s1 + $0x298] sm:$0xff]
  %v122 = vld [vmem:[%s1 + $0x2a0] sm:$0xff]
  %v123 = vld [vmem:[%s1 + $0x2a8] sm:$0xff]
  %v124 = vld [vmem:[%s1 + $0x2b0] sm:$0xff]
  %v125 = vld [vmem:[%s1 + $0x2b8] sm:$0xff]
  %v126 = vld [vmem:[%s1 + $0x2c0] sm:$0xff]
  %v127 = vld [vmem:[%s1 + $0x2c8] sm:$0xff]
  %v128 = vld [vmem:[%s1 + $0x2d0] sm:$0xff]
  %v129 = vld [vmem:[%s1 + $0x2d8] sm:$0xff]
  %v130 = vld [vmem:[%s1 + $0x2e0] sm:$0xff]
  %v131 = vld [vmem:[%s1 + $0x2e8] sm:$0xff]
  %v132 = vld [vmem:[%s1 + $0x2f0] sm:$0xff]
  %v133 = vld [vmem:[%s1 + $0x2f8] sm:$0xff]
  %v134 = vld [vmem:[%s1 + $0x300] sm:$0xff]
  %v135 = vld [vmem:[%s1 + $0x308] sm:$0xff]
  %v136 = vld [vmem:[%s1 + $0x310] sm:$0xff]
  %v137 = vld [vmem:[%s1 + $0x318] sm:$0xff]
  %v138 = vld [vmem:[%s1 + $0x320] sm:$0xff]
  %v139 = vld [vmem:[%s1 + $0x328] sm:$0xff]
  %v140 = vld [vmem:[%s1 + $0x330] sm:$0xff]
  %v141 = vld [vmem:[%s1 + $0x338] sm:$0xff]
  %v142 = vld [vmem:[%s1 + $0x340] sm:$0xff]
  %v143 = vld [vmem:[%s1 + $0x348] sm:$0xff]
  %v144 = vld [vmem:[%s1 + $0x350] sm:$0xff]
  %v145 = vld [vmem:[%s1 + $0x358] sm:$0xff]
  %v146 = vld [vmem:[%s1 + $0x360] sm:$0xff]
  %v147 = vld [vmem:[%s1 + $0x368] sm:$0xff]
  %v148 = vld [vmem:[%s1 + $0x370] sm:$0xff]
  %v149 = vld [vmem:[%s1 + $0x378] sm:$0xff]
  %v150 = vld [vmem:[%s1 + $0x380] sm:$0xff]
  %v151 = vld [vmem:[%s1 + $0x388] sm:$0xff]
  %v152 = vld [vmem:[%s1 + $0x390] sm:$0xff]
  %v153 = vld [vmem:[%s1 + $0x398] sm:$0xff]
  %v154 = vld [vmem:[%s1 + $0x3a0] sm:$0xff]
  %v155 = vld [vmem:[%s1 + $0x3a8] sm:$0xff]
  %v156 = vld [vmem:[%s1 + $0x3b0] sm:$0xff]
  %v157 = vld [vmem:[%s1 + $0x3b8] sm:$0xff]
  %v158 = vld [vmem:[%s1 + $0x3c0] sm:$0xff]
  %v159 = vld [vmem:[%s1 + $0x3c8] sm:$0xff]
  %v160 = vld [vmem:[%s1 + $0x3d0] sm:$0xff]
  %v161 = vld [vmem:[%s1 + $0x3d8] sm:$0xff]
  %v162 = vld [vmem:[%s1 + $0x3e0] sm:$0xff]
  %v163 = vld [vmem:[%s1 + $0x3e8] sm:$0xff]
  %v164 = vld [vmem:[%s1 + $0x3f0] sm:$0xff]
  %v165 = vld [vmem:[%s1 + $0x3f8] sm:$0xff]
  %v166 = vld [vmem:[%s1 + $0x400] sm:$0xff]
  %v167 = vld [vmem:[%s1 + $0x408] sm:$0xff]
  %v168 = vld [vmem:[%s1 + $0x410] sm:$0xff]
  %v169 = vld [vmem:[%s1 + $0x418] sm:$0xff]
  %v170 = vld [vmem:[%s1 + $0x420] sm:$0xff]
  %v171 = vld [vmem:[%s1 + $0x428] sm:$0xff]
  %v172 = vld [vmem:[%s1 + $0x430] sm:$0xff]
  %v173 = vld [vmem:[%s1 + $0x438] sm:$0xff]
  %v174 = vld [vmem:[%s1 + $0x440] sm:$0xff]
  %v175 = vld [vmem:[%s1 + $0x448] sm:$0xff]
  %v176 = vld [vmem:[%s1 + $0x450] sm:$0xff]
  %v177 = vld [vmem:[%s1 + $0x458] sm:$0xff]
  %v178 = vld [vmem:[%s1 + $0x460] sm:$0xff]
  %v179 = vld [vmem:[%s1 + $0x468] sm:$0xff]
  %v180 = vld [vmem:[%s1 + $0x470] sm:$0xff]
  %v181 = vld [vmem:[%s1 + $0x478] sm:$0xff]
  %v182 = vld [vmem:[%s1 + $0x480] sm:$0xff]
  %v183 = vld [vmem:[%s1 + $0x488] sm:$0xff]
  %v184 = vld [vmem:[%s1 + $0x490] sm:$0xff]
  %v185 = vld [vmem:[%s1 + $0x498] sm:$0xff]
  %v186 = vld [vmem:[%s1 + $0x4a0] sm:$0xff]
  %v187 = vld [vmem:[%s1 + $0x4a8] sm:$0xff]
  %v188 = vld [vmem:[%s1 + $0x4b0] sm:$0xff]
  %v189 = vld [vmem:[%s1 + $0x4b8] sm:$0xff]
  %v190 = vld [vmem:[%s1 + $0x4c0] sm:$0xff]
  %v191 = vld [vmem:[%s1 + $0x4c8] sm:$0xff]
  %v192 = vld [vmem:[%s1 + $0x4d0] sm:$0xff]
  %v193 = vld [vmem:[%s1 + $0x4d8] sm:$0xff]
  %v194 = vld [vmem:[%s1 + $0x4e0] sm:$0xff]
  %v195 = vld [vmem:[%s1 + $0x4e8] sm:$0xff]
  %v196 = vld [vmem:[%s1 + $0x4f0] sm:$0xff]
  %v197 = vld [vmem:[%s1 + $0x4f8] sm:$0xff]
  %v198 = vld [vmem:[%s1 + $0x500] sm:$0xff]
  %v199 = vld [vmem:[%s1 + $0x508] sm:$0xff]
  %v200 = vld [vmem:[%s1 + $0x510] sm:$0xff]
  %v201 = vld [vmem:[%s1 + $0x518] sm:$0xff]
  %v202 = vld [vmem:[%s1 + $0x520] sm:$0xff]
  %v203 = vld [vmem:[%s1 + $0x528] sm:$0xff]
  %v204 = vld [vmem:[%s1 + $0x530] sm:$0xff]
  %v205 = vld [vmem:[%s1 + $0x538] sm:$0xff]
  %v206 = vld [vmem:[%s1 + $0x540] sm:$0xff]
  %v207 = vld [vmem:[%s1 + $0x548] sm:$0xff]
  %v208 = vld [vmem:[%s1 + $0x550] sm:$0xff]
  %v209 = vld [vmem:[%s1 + $0x558] sm:$0xff]
  %v210 = vld [vmem:[%s1 + $0x560] sm:$0xff]
  %v211 = vld [vmem:[%s1 + $0x568] sm:$0xff]
  %v212 = vld [vmem:[%s1 + $0x570] sm:$0xff]
  %v213 = vld [vmem:[%s1 + $0x578] sm:$0xff]
  %v214 = vld [vmem:[%s1 + $0x580] sm:$0xff]
  %v215 = vld [vmem:[%s1 + $0x588] sm:$0xff]
  %v216 = vld [vmem:[%s1 + $0x590] sm:$0xff]
  %v217 = vld [vmem:[%s1 + $0x598] sm:$0xff]
  %v218 = vld [vmem:[%s1 + $0x5a0] sm:$0xff]
  %v219 = vld [vmem:[%s1 + $0x5a8] sm:$0xff]
  %v220 = vld [vmem:[%s1 + $0x5b0] sm:$0xff]
  %v221 = vld [vmem:[%s1 + $0x5b8] sm:$0xff]
  %v222 = vld [vmem:[%s1 + $0x5c0] sm:$0xff]
  %v223 = vld [vmem:[%s1 + $0x5c8] sm:$0xff]
  %v224 = vld [vmem:[%s1 + $0x5d0] sm:$0xff]
  %v225 = vld [vmem:[%s1 + $0x5d8] sm:$0xff]
  %v226 = vld [vmem:[%s1 + $0x5e0] sm:$0xff]
  %v227 = vld [vmem:[%s1 + $0x5e8] sm:$0xff]
  %v228 = vld [vmem:[%s1 + $0x5f0] sm:$0xff]
  %v229 = vld [vmem:[%s1 + $0x5f8] sm:$0xff]
  %v230 = vld [vmem:[%s1 + $0x600] sm:$0xff]
  %v231 = vld [vmem:[%s1 + $0x608] sm:$0xff]
  %v232 = vld [vmem:[%s1 + $0x610] sm:$0xff]
  %v233 = vld [vmem:[%s1 + $0x618] sm:$0xff]
  %v234 = vld [vmem:[%s1 + $0x620] sm:$0xff]
  %v235 = vld [vmem:[%s1 + $0x628] sm:$0xff]
  %v236 = vld [vmem:[%s1 + $0x630] sm:$0xff]
  %v237 = vld [vmem:[%s1 + $0x638] sm:$0xff]
  %v238 = vld [vmem:[%s1 + $0x640] sm:$0xff]
  %v239 = vld [vmem:[%s1 + $0x648] sm:$0xff]
  %v240 = vld [vmem:[%s1 + $0x650] sm:$0xff]
  %v241 = vld [vmem:[%s1 + $0x658] sm:$0xff]
  %v242 = vld [vmem:[%s1 + $0x660] sm:$0xff]
  %v243 = vld [vmem:[%s1 + $0x668] sm:$0xff]
  %v244 = vld [vmem:[%s1 + $0x670] sm:$0xff]
  %v245 = vld [vmem:[%s1 + $0x678] sm:$0xff]
  %v246 = vld [vmem:[%s1 + $0x680] sm:$0xff]
  %v247 = vld [vmem:[%s1 + $0x688] sm:$0xff]
  %v248 = vld [vmem:[%s1 + $0x690] sm:$0xff]
  %v249 = vld [vmem:[%s1 + $0x698] sm:$0xff]
  %v250 = vld [vmem:[%s1 + $0x6a0] sm:$0xff]
  %v251 = vld [vmem:[%s1 + $0x6a8] sm:$0xff]
  %v252 = vld [vmem:[%s1 + $0x6b0] sm:$0xff]
  %v253 = vld [vmem:[%s1 + $0x6b8] sm:$0xff]
  %v254 = vld [vmem:[%s1 + $0x6c0] sm:$0xff]
  %v255 = vld [vmem:[%s1 + $0x6c8] sm:$0xff]
  %v256 = vld [vmem:[%s1 + $0x6d0] sm:$0xff]
  %v257 = vld [vmem:[%s1 + $0x6d8] sm:$0xff]
  %v258 = vld [vmem:[%s1 + $0x6e0] sm:$0xff]
  %v259 = vld [vmem:[%s1 + $0x6e8] sm:$0xff]
  %v260 = vld [vmem:[%s1 + $0x6f0] sm:$0xff]
  %v261 = vld [vmem:[%s1 + $0x6f8] sm:$0xff]
  %v262 = vld [vmem:[%s1 + $0x700] sm:$0xff]
  %v263 = vld [vmem:[%s1 + $0x708] sm:$0xff]
  %v264 = vld [vmem:[%s1 + $0x710] sm:$0xff]
  %v265 = vld [vmem:[%s1 + $0x718] sm:$0xff]
  %v266 = vld [vmem:[%s1 + $0x720] sm:$0xff]
  %v267 = vld [vmem:[%s1 + $0x728] sm:$0xff]
  %v268 = vld [vmem:[%s1 + $0x730] sm:$0xff]
  %v269 = vld [vmem:[%s1 + $0x738] sm:$0xff]
  %v270 = vld [vmem:[%s1 + $0x740] sm:$0xff]
  %v271 = vld [vmem:[%s1 + $0x748] sm:$0xff]
  %v272 = vld [vmem:[%s1 + $0x750] sm:$0xff]
  %v273 = vld [vmem:[%s1 + $0x758] sm:$0xff]
  %v274 = vld [vmem:[%s1 + $0x760] sm:$0xff]
  %v275 = vld [vmem:[%s1 + $0x768] sm:$0xff]
  %v276 = vld [vmem:[%s1 + $0x770] sm:$0xff]
  %v277 = vld [vmem:[%s1 + $0x778] sm:$0xff]
  %v278 = vld [vmem:[%s1 + $0x780] sm:$0xff]
  %v279 = vld [vmem:[%s1 + $0x788] sm:$0xff]
  %v280 = vld [vmem:[%s1 + $0x790] sm:$0xff]
  %v281 = vld [vmem:[%s1 + $0x798] sm:$0xff]
  %v282 = vld [vmem:[%s1 + $0x7a0] sm:$0xff]
  %v283 = vld [vmem:[%s1 + $0x7a8] sm:$0xff]
  %v284 = vld [vmem:[%s1 + $0x7b0] sm:$0xff]
  %v285 = vld [vmem:[%s1 + $0x7b8] sm:$0xff]
  %v286 = vld [vmem:[%s1 + $0x7c0] sm:$0xff]
  %v287 = vld [vmem:[%s1 + $0x7c8] sm:$0xff]
  %v288 = vld [vmem:[%s1 + $0x7d0] sm:$0xff]
  %v289 = vld [vmem:[%s1 + $0x7d8] sm:$0xff]
  %v290 = vld [vmem:[%s1 + $0x7e0] sm:$0xff]
  %v291 = vld [vmem:[%s1 + $0x7e8] sm:$0xff]
  %v292 = vld [vmem:[%s1 + $0x7f0] sm:$0xff]
  %v293 = vld [vmem:[%s1 + $0x7f8] sm:$0xff]
  %v296 = vlaneseq
  %v297 = vshrl.u32 %v296, 7
  %v298 = vsub.s32 0, %v297
  %v299 = vrot.slane %v36, %v298
  %v300 = vlaneseq
  %v301 = vshrl.u32 %v300, 7
  %v302 = vsub.s32 1, %v301
  %v303 = vrot.slane %v36, %v302
  %v304 = vlaneseq
  %v305 = vshrl.u32 %v304, 7
  %v306 = vsub.s32 2, %v305
  %v307 = vrot.slane %v36, %v306
  %v308 = vlaneseq
  %v309 = vshrl.u32 %v308, 7
  %v310 = vsub.s32 3, %v309
  %v311 = vrot.slane %v36, %v310
  %v312 = vlaneseq
  %v313 = vshrl.u32 %v312, 7
  %v314 = vsub.s32 4, %v313
  %v315 = vrot.slane %v36, %v314
  %v316 = vlaneseq
  %v317 = vshrl.u32 %v316, 7
  %v318 = vsub.s32 5, %v317
  %v319 = vrot.slane %v36, %v318
  %v320 = vlaneseq
  %v321 = vshrl.u32 %v320, 7
  %v322 = vsub.s32 6, %v321
  %v323 = vrot.slane %v36, %v322
  %v324 = vlaneseq
  %v325 = vshrl.u32 %v324, 7
  %v326 = vsub.s32 7, %v325
  %v327 = vrot.slane %v36, %v326
  %v328 = vlaneseq
  %v329 = vshrl.u32 %v328, 7
  %v330 = vsub.s32 0, %v329
  %v331 = vrot.slane %v37, %v330
  %v332 = vlaneseq
  %v333 = vshrl.u32 %v332, 7
  %v334 = vsub.s32 1, %v333
  %v335 = vrot.slane %v37, %v334
  %v336 = vlaneseq
  %v337 = vshrl.u32 %v336, 7
  %v338 = vsub.s32 2, %v337
  %v339 = vrot.slane %v37, %v338
  %v340 = vlaneseq
  %v341 = vshrl.u32 %v340, 7
  %v342 = vsub.s32 3, %v341
  %v343 = vrot.slane %v37, %v342
  %v344 = vlaneseq
  %v345 = vshrl.u32 %v344, 7
  %v346 = vsub.s32 4, %v345
  %v347 = vrot.slane %v37, %v346
  %v348 = vlaneseq
  %v349 = vshrl.u32 %v348, 7
  %v350 = vsub.s32 5, %v349
  %v351 = vrot.slane %v37, %v350
  %v352 = vlaneseq
  %v353 = vshrl.u32 %v352, 7
  %v354 = vsub.s32 6, %v353
  %v355 = vrot.slane %v37, %v354
  %v356 = vlaneseq
  %v357 = vshrl.u32 %v356, 7
  %v358 = vsub.s32 7, %v357
  %v359 = vrot.slane %v37, %v358
  %v376 = vpack.c.bf16 %v299, %v299
  %v377 = vpack.c.bf16 %v303, %v303
  %v378 = vpack.c.bf16 %v307, %v307
  %v379 = vpack.c.bf16 %v311, %v311
  %v380 = vpack.c.bf16 %v315, %v315
  %v381 = vpack.c.bf16 %v319, %v319
  %v382 = vpack.c.bf16 %v323, %v323
  %v383 = vpack.c.bf16 %v327, %v327
  %v384 = vpack.c.bf16 %v331, %v331
  %v385 = vpack.c.bf16 %v335, %v335
  %v386 = vpack.c.bf16 %v339, %v339
  %v387 = vpack.c.bf16 %v343, %v343
  %v388 = vpack.c.bf16 %v347, %v347
  %v389 = vpack.c.bf16 %v351, %v351
  %v390 = vpack.c.bf16 %v355, %v355
  %v391 = vpack.c.bf16 %v359, %v359
  %v392 = vld [vmem:[%s2] sm:$0xf]
  %v394 = vlaneseq
  %v395 = vshrl.u32 %v394, 7
  %v396 = vsub.s32 0, %v395
  %v397 = vrot.slane %v392, %v396
  %v398 = vlaneseq
  %v399 = vshrl.u32 %v398, 7
  %v400 = vsub.s32 1, %v399
  %v401 = vrot.slane %v392, %v400
  %v402 = vlaneseq
  %v403 = vshrl.u32 %v402, 7
  %v404 = vsub.s32 2, %v403
  %v405 = vrot.slane %v392, %v404
  %v406 = vlaneseq
  %v407 = vshrl.u32 %v406, 7
  %v408 = vsub.s32 3, %v407
  %v409 = vrot.slane %v392, %v408
  %v430 = vunpack.c.l.b16 %v376
  %v431 = vunpack.c.l.b16 %v377
  %v432 = vunpack.c.l.b16 %v378
  %v433 = vunpack.c.l.b16 %v379
  %v434 = vunpack.c.l.b16 %v380
  %v435 = vunpack.c.l.b16 %v381
  %v436 = vunpack.c.l.b16 %v382
  %v437 = vunpack.c.l.b16 %v383
  %v438 = vunpack.c.l.b16 %v384
  %v439 = vunpack.c.l.b16 %v385
  %v440 = vunpack.c.l.b16 %v386
  %v441 = vunpack.c.l.b16 %v387
  %v442 = vunpack.c.l.b16 %v388
  %v443 = vunpack.c.l.b16 %v389
  %v444 = vunpack.c.l.b16 %v390
  %v445 = vunpack.c.l.b16 %v391
  %v446 = vrot.slane %v438, 7
  %vm447 = vcmask 1041409
  %v448 = vsel %vm447, %v446, %v430
  %v449 = vrot.slane %v439, 7
  %v450 = vsel %vm447, %v449, %v431
  %v451 = vrot.slane %v440, 7
  %v452 = vsel %vm447, %v451, %v432
  %v453 = vrot.slane %v441, 7
  %v454 = vsel %vm447, %v453, %v433
  %v455 = vrot.slane %v442, 7
  %v456 = vsel %vm447, %v455, %v434
  %v457 = vrot.slane %v443, 7
  %v458 = vsel %vm447, %v457, %v435
  %v459 = vrot.slane %v444, 7
  %v460 = vsel %vm447, %v459, %v436
  %v461 = vrot.slane %v445, 7
  %v462 = vsel %vm447, %v461, %v437
  %v463 = vpack.c.b16 %v448, %v448
  %v464 = vpack.c.b16 %v450, %v450
  %v465 = vpack.c.b16 %v452, %v452
  %v466 = vpack.c.b16 %v454, %v454
  %v467 = vpack.c.b16 %v456, %v456
  %v468 = vpack.c.b16 %v458, %v458
  %v469 = vpack.c.b16 %v460, %v460
  %v470 = vpack.c.b16 %v462, %v462
  %v735 = vunpack.c.l.b16 %v38
  %v736 = vunpack.c.h.b16 %v38
  %v737 = vunpack.c.l.b16 %v39
  %v738 = vunpack.c.h.b16 %v39
  %v739 = vunpack.c.l.b16 %v40
  %v740 = vunpack.c.h.b16 %v40
  %v741 = vunpack.c.l.b16 %v41
  %v742 = vunpack.c.h.b16 %v41
  %v743 = vunpack.c.l.b16 %v42
  %v744 = vunpack.c.h.b16 %v42
  %v745 = vunpack.c.l.b16 %v43
  %v746 = vunpack.c.h.b16 %v43
  %v747 = vunpack.c.l.b16 %v44
  %v748 = vunpack.c.h.b16 %v44
  %v749 = vunpack.c.l.b16 %v45
  %v750 = vunpack.c.h.b16 %v45
  %v751 = vunpack.c.l.b16 %v46
  %v752 = vunpack.c.h.b16 %v46
  %v753 = vunpack.c.l.b16 %v47
  %v754 = vunpack.c.h.b16 %v47
  %v755 = vunpack.c.l.b16 %v48
  %v756 = vunpack.c.h.b16 %v48
  %v757 = vunpack.c.l.b16 %v49
  %v758 = vunpack.c.h.b16 %v49
  %v759 = vunpack.c.l.b16 %v50
  %v760 = vunpack.c.h.b16 %v50
  %v761 = vunpack.c.l.b16 %v51
  %v762 = vunpack.c.h.b16 %v51
  %v763 = vunpack.c.l.b16 %v52
  %v764 = vunpack.c.h.b16 %v52
  %v765 = vunpack.c.l.b16 %v53
  %v766 = vunpack.c.h.b16 %v53
  %v767 = vunpack.c.l.b16 %v54
  %v768 = vunpack.c.h.b16 %v54
  %v769 = vunpack.c.l.b16 %v55
  %v770 = vunpack.c.h.b16 %v55
  %v771 = vunpack.c.l.b16 %v56
  %v772 = vunpack.c.h.b16 %v56
  %v773 = vunpack.c.l.b16 %v57
  %v774 = vunpack.c.h.b16 %v57
  %v775 = vunpack.c.l.b16 %v58
  %v776 = vunpack.c.h.b16 %v58
  %v777 = vunpack.c.l.b16 %v59
  %v778 = vunpack.c.h.b16 %v59
  %v779 = vunpack.c.l.b16 %v60
  %v780 = vunpack.c.h.b16 %v60
  %v781 = vunpack.c.l.b16 %v61
  %v782 = vunpack.c.h.b16 %v61
  %v783 = vunpack.c.l.b16 %v62
  %v784 = vunpack.c.h.b16 %v62
  %v785 = vunpack.c.l.b16 %v63
  %v786 = vunpack.c.h.b16 %v63
  %v787 = vunpack.c.l.b16 %v64
  %v788 = vunpack.c.h.b16 %v64
  %v789 = vunpack.c.l.b16 %v65
  %v790 = vunpack.c.h.b16 %v65
  %v791 = vunpack.c.l.b16 %v66
  %v792 = vunpack.c.h.b16 %v66
  %v793 = vunpack.c.l.b16 %v67
  %v794 = vunpack.c.h.b16 %v67
  %v795 = vunpack.c.l.b16 %v68
  %v796 = vunpack.c.h.b16 %v68
  %v797 = vunpack.c.l.b16 %v69
  %v798 = vunpack.c.h.b16 %v69
  %v799 = vunpack.c.l.b16 %v70
  %v800 = vunpack.c.h.b16 %v70
  %v801 = vunpack.c.l.b16 %v71
  %v802 = vunpack.c.h.b16 %v71
  %v803 = vunpack.c.l.b16 %v72
  %v804 = vunpack.c.h.b16 %v72
  %v805 = vunpack.c.l.b16 %v73
  %v806 = vunpack.c.h.b16 %v73
  %v807 = vunpack.c.l.b16 %v74
  %v808 = vunpack.c.h.b16 %v74
  %v809 = vunpack.c.l.b16 %v75
  %v810 = vunpack.c.h.b16 %v75
  %v811 = vunpack.c.l.b16 %v76
  %v812 = vunpack.c.h.b16 %v76
  %v813 = vunpack.c.l.b16 %v77
  %v814 = vunpack.c.h.b16 %v77
  %v815 = vunpack.c.l.b16 %v78
  %v816 = vunpack.c.h.b16 %v78
  %v817 = vunpack.c.l.b16 %v79
  %v818 = vunpack.c.h.b16 %v79
  %v819 = vunpack.c.l.b16 %v80
  %v820 = vunpack.c.h.b16 %v80
  %v821 = vunpack.c.l.b16 %v81
  %v822 = vunpack.c.h.b16 %v81
  %v823 = vunpack.c.l.b16 %v82
  %v824 = vunpack.c.h.b16 %v82
  %v825 = vunpack.c.l.b16 %v83
  %v826 = vunpack.c.h.b16 %v83
  %v827 = vunpack.c.l.b16 %v84
  %v828 = vunpack.c.h.b16 %v84
  %v829 = vunpack.c.l.b16 %v85
  %v830 = vunpack.c.h.b16 %v85
  %v831 = vunpack.c.l.b16 %v86
  %v832 = vunpack.c.h.b16 %v86
  %v833 = vunpack.c.l.b16 %v87
  %v834 = vunpack.c.h.b16 %v87
  %v835 = vunpack.c.l.b16 %v88
  %v836 = vunpack.c.h.b16 %v88
  %v837 = vunpack.c.l.b16 %v89
  %v838 = vunpack.c.h.b16 %v89
  %v839 = vunpack.c.l.b16 %v90
  %v840 = vunpack.c.h.b16 %v90
  %v841 = vunpack.c.l.b16 %v91
  %v842 = vunpack.c.h.b16 %v91
  %v843 = vunpack.c.l.b16 %v92
  %v844 = vunpack.c.h.b16 %v92
  %v845 = vunpack.c.l.b16 %v93
  %v846 = vunpack.c.h.b16 %v93
  %v847 = vunpack.c.l.b16 %v94
  %v848 = vunpack.c.h.b16 %v94
  %v849 = vunpack.c.l.b16 %v95
  %v850 = vunpack.c.h.b16 %v95
  %v851 = vunpack.c.l.b16 %v96
  %v852 = vunpack.c.h.b16 %v96
  %v853 = vunpack.c.l.b16 %v97
  %v854 = vunpack.c.h.b16 %v97
  %v855 = vunpack.c.l.b16 %v98
  %v856 = vunpack.c.h.b16 %v98
  %v857 = vunpack.c.l.b16 %v99
  %v858 = vunpack.c.h.b16 %v99
  %v859 = vunpack.c.l.b16 %v100
  %v860 = vunpack.c.h.b16 %v100
  %v861 = vunpack.c.l.b16 %v101
  %v862 = vunpack.c.h.b16 %v101
  %v863 = vunpack.c.l.b16 %v102
  %v864 = vunpack.c.h.b16 %v102
  %v865 = vunpack.c.l.b16 %v103
  %v866 = vunpack.c.h.b16 %v103
  %v867 = vunpack.c.l.b16 %v104
  %v868 = vunpack.c.h.b16 %v104
  %v869 = vunpack.c.l.b16 %v105
  %v870 = vunpack.c.h.b16 %v105
  %v871 = vunpack.c.l.b16 %v106
  %v872 = vunpack.c.h.b16 %v106
  %v873 = vunpack.c.l.b16 %v107
  %v874 = vunpack.c.h.b16 %v107
  %v875 = vunpack.c.l.b16 %v108
  %v876 = vunpack.c.h.b16 %v108
  %v877 = vunpack.c.l.b16 %v109
  %v878 = vunpack.c.h.b16 %v109
  %v879 = vunpack.c.l.b16 %v110
  %v880 = vunpack.c.h.b16 %v110
  %v881 = vunpack.c.l.b16 %v111
  %v882 = vunpack.c.h.b16 %v111
  %v883 = vunpack.c.l.b16 %v112
  %v884 = vunpack.c.h.b16 %v112
  %v885 = vunpack.c.l.b16 %v113
  %v886 = vunpack.c.h.b16 %v113
  %v887 = vunpack.c.l.b16 %v114
  %v888 = vunpack.c.h.b16 %v114
  %v889 = vunpack.c.l.b16 %v115
  %v890 = vunpack.c.h.b16 %v115
  %v891 = vunpack.c.l.b16 %v116
  %v892 = vunpack.c.h.b16 %v116
  %v893 = vunpack.c.l.b16 %v117
  %v894 = vunpack.c.h.b16 %v117
  %v895 = vunpack.c.l.b16 %v118
  %v896 = vunpack.c.h.b16 %v118
  %v897 = vunpack.c.l.b16 %v119
  %v898 = vunpack.c.h.b16 %v119
  %v899 = vunpack.c.l.b16 %v120
  %v900 = vunpack.c.h.b16 %v120
  %v901 = vunpack.c.l.b16 %v121
  %v902 = vunpack.c.h.b16 %v121
  %v903 = vunpack.c.l.b16 %v122
  %v904 = vunpack.c.h.b16 %v122
  %v905 = vunpack.c.l.b16 %v123
  %v906 = vunpack.c.h.b16 %v123
  %v907 = vunpack.c.l.b16 %v124
  %v908 = vunpack.c.h.b16 %v124
  %v909 = vunpack.c.l.b16 %v125
  %v910 = vunpack.c.h.b16 %v125
  %v911 = vunpack.c.l.b16 %v126
  %v912 = vunpack.c.h.b16 %v126
  %v913 = vunpack.c.l.b16 %v127
  %v914 = vunpack.c.h.b16 %v127
  %v915 = vunpack.c.l.b16 %v128
  %v916 = vunpack.c.h.b16 %v128
  %v917 = vunpack.c.l.b16 %v129
  %v918 = vunpack.c.h.b16 %v129
  %v919 = vunpack.c.l.b16 %v130
  %v920 = vunpack.c.h.b16 %v130
  %v921 = vunpack.c.l.b16 %v131
  %v922 = vunpack.c.h.b16 %v131
  %v923 = vunpack.c.l.b16 %v132
  %v924 = vunpack.c.h.b16 %v132
  %v925 = vunpack.c.l.b16 %v133
  %v926 = vunpack.c.h.b16 %v133
  %v927 = vunpack.c.l.b16 %v134
  %v928 = vunpack.c.h.b16 %v134
  %v929 = vunpack.c.l.b16 %v135
  %v930 = vunpack.c.h.b16 %v135
  %v931 = vunpack.c.l.b16 %v136
  %v932 = vunpack.c.h.b16 %v136
  %v933 = vunpack.c.l.b16 %v137
  %v934 = vunpack.c.h.b16 %v137
  %v935 = vunpack.c.l.b16 %v138
  %v936 = vunpack.c.h.b16 %v138
  %v937 = vunpack.c.l.b16 %v139
  %v938 = vunpack.c.h.b16 %v139
  %v939 = vunpack.c.l.b16 %v140
  %v940 = vunpack.c.h.b16 %v140
  %v941 = vunpack.c.l.b16 %v141
  %v942 = vunpack.c.h.b16 %v141
  %v943 = vunpack.c.l.b16 %v142
  %v944 = vunpack.c.h.b16 %v142
  %v945 = vunpack.c.l.b16 %v143
  %v946 = vunpack.c.h.b16 %v143
  %v947 = vunpack.c.l.b16 %v144
  %v948 = vunpack.c.h.b16 %v144
  %v949 = vunpack.c.l.b16 %v145
  %v950 = vunpack.c.h.b16 %v145
  %v951 = vunpack.c.l.b16 %v146
  %v952 = vunpack.c.h.b16 %v146
  %v953 = vunpack.c.l.b16 %v147
  %v954 = vunpack.c.h.b16 %v147
  %v955 = vunpack.c.l.b16 %v148
  %v956 = vunpack.c.h.b16 %v148
  %v957 = vunpack.c.l.b16 %v149
  %v958 = vunpack.c.h.b16 %v149
  %v959 = vunpack.c.l.b16 %v150
  %v960 = vunpack.c.h.b16 %v150
  %v961 = vunpack.c.l.b16 %v151
  %v962 = vunpack.c.h.b16 %v151
  %v963 = vunpack.c.l.b16 %v152
  %v964 = vunpack.c.h.b16 %v152
  %v965 = vunpack.c.l.b16 %v153
  %v966 = vunpack.c.h.b16 %v153
  %v967 = vunpack.c.l.b16 %v154
  %v968 = vunpack.c.h.b16 %v154
  %v969 = vunpack.c.l.b16 %v155
  %v970 = vunpack.c.h.b16 %v155
  %v971 = vunpack.c.l.b16 %v156
  %v972 = vunpack.c.h.b16 %v156
  %v973 = vunpack.c.l.b16 %v157
  %v974 = vunpack.c.h.b16 %v157
  %v975 = vunpack.c.l.b16 %v158
  %v976 = vunpack.c.h.b16 %v158
  %v977 = vunpack.c.l.b16 %v159
  %v978 = vunpack.c.h.b16 %v159
  %v979 = vunpack.c.l.b16 %v160
  %v980 = vunpack.c.h.b16 %v160
  %v981 = vunpack.c.l.b16 %v161
  %v982 = vunpack.c.h.b16 %v161
  %v983 = vunpack.c.l.b16 %v162
  %v984 = vunpack.c.h.b16 %v162
  %v985 = vunpack.c.l.b16 %v163
  %v986 = vunpack.c.h.b16 %v163
  %v987 = vunpack.c.l.b16 %v164
  %v988 = vunpack.c.h.b16 %v164
  %v989 = vunpack.c.l.b16 %v165
  %v990 = vunpack.c.h.b16 %v165
  %v991 = vunpack.c.l.b16 %v166
  %v992 = vunpack.c.h.b16 %v166
  %v993 = vunpack.c.l.b16 %v167
  %v994 = vunpack.c.h.b16 %v167
  %v995 = vunpack.c.l.b16 %v168
  %v996 = vunpack.c.h.b16 %v168
  %v997 = vunpack.c.l.b16 %v169
  %v998 = vunpack.c.h.b16 %v169
  %v999 = vunpack.c.l.b16 %v170
  %v1000 = vunpack.c.h.b16 %v170
  %v1001 = vunpack.c.l.b16 %v171
  %v1002 = vunpack.c.h.b16 %v171
  %v1003 = vunpack.c.l.b16 %v172
  %v1004 = vunpack.c.h.b16 %v172
  %v1005 = vunpack.c.l.b16 %v173
  %v1006 = vunpack.c.h.b16 %v173
  %v1007 = vunpack.c.l.b16 %v174
  %v1008 = vunpack.c.h.b16 %v174
  %v1009 = vunpack.c.l.b16 %v175
  %v1010 = vunpack.c.h.b16 %v175
  %v1011 = vunpack.c.l.b16 %v176
  %v1012 = vunpack.c.h.b16 %v176
  %v1013 = vunpack.c.l.b16 %v177
  %v1014 = vunpack.c.h.b16 %v177
  %v1015 = vunpack.c.l.b16 %v178
  %v1016 = vunpack.c.h.b16 %v178
  %v1017 = vunpack.c.l.b16 %v179
  %v1018 = vunpack.c.h.b16 %v179
  %v1019 = vunpack.c.l.b16 %v180
  %v1020 = vunpack.c.h.b16 %v180
  %v1021 = vunpack.c.l.b16 %v181
  %v1022 = vunpack.c.h.b16 %v181
  %v1023 = vunpack.c.l.b16 %v182
  %v1024 = vunpack.c.h.b16 %v182
  %v1025 = vunpack.c.l.b16 %v183
  %v1026 = vunpack.c.h.b16 %v183
  %v1027 = vunpack.c.l.b16 %v184
  %v1028 = vunpack.c.h.b16 %v184
  %v1029 = vunpack.c.l.b16 %v185
  %v1030 = vunpack.c.h.b16 %v185
  %v1031 = vunpack.c.l.b16 %v186
  %v1032 = vunpack.c.h.b16 %v186
  %v1033 = vunpack.c.l.b16 %v187
  %v1034 = vunpack.c.h.b16 %v187
  %v1035 = vunpack.c.l.b16 %v188
  %v1036 = vunpack.c.h.b16 %v188
  %v1037 = vunpack.c.l.b16 %v189
  %v1038 = vunpack.c.h.b16 %v189
  %v1039 = vunpack.c.l.b16 %v190
  %v1040 = vunpack.c.h.b16 %v190
  %v1041 = vunpack.c.l.b16 %v191
  %v1042 = vunpack.c.h.b16 %v191
  %v1043 = vunpack.c.l.b16 %v192
  %v1044 = vunpack.c.h.b16 %v192
  %v1045 = vunpack.c.l.b16 %v193
  %v1046 = vunpack.c.h.b16 %v193
  %v1047 = vunpack.c.l.b16 %v194
  %v1048 = vunpack.c.h.b16 %v194
  %v1049 = vunpack.c.l.b16 %v195
  %v1050 = vunpack.c.h.b16 %v195
  %v1051 = vunpack.c.l.b16 %v196
  %v1052 = vunpack.c.h.b16 %v196
  %v1053 = vunpack.c.l.b16 %v197
  %v1054 = vunpack.c.h.b16 %v197
  %v1055 = vunpack.c.l.b16 %v198
  %v1056 = vunpack.c.h.b16 %v198
  %v1057 = vunpack.c.l.b16 %v199
  %v1058 = vunpack.c.h.b16 %v199
  %v1059 = vunpack.c.l.b16 %v200
  %v1060 = vunpack.c.h.b16 %v200
  %v1061 = vunpack.c.l.b16 %v201
  %v1062 = vunpack.c.h.b16 %v201
  %v1063 = vunpack.c.l.b16 %v202
  %v1064 = vunpack.c.h.b16 %v202
  %v1065 = vunpack.c.l.b16 %v203
  %v1066 = vunpack.c.h.b16 %v203
  %v1067 = vunpack.c.l.b16 %v204
  %v1068 = vunpack.c.h.b16 %v204
  %v1069 = vunpack.c.l.b16 %v205
  %v1070 = vunpack.c.h.b16 %v205
  %v1071 = vunpack.c.l.b16 %v206
  %v1072 = vunpack.c.h.b16 %v206
  %v1073 = vunpack.c.l.b16 %v207
  %v1074 = vunpack.c.h.b16 %v207
  %v1075 = vunpack.c.l.b16 %v208
  %v1076 = vunpack.c.h.b16 %v208
  %v1077 = vunpack.c.l.b16 %v209
  %v1078 = vunpack.c.h.b16 %v209
  %v1079 = vunpack.c.l.b16 %v210
  %v1080 = vunpack.c.h.b16 %v210
  %v1081 = vunpack.c.l.b16 %v211
  %v1082 = vunpack.c.h.b16 %v211
  %v1083 = vunpack.c.l.b16 %v212
  %v1084 = vunpack.c.h.b16 %v212
  %v1085 = vunpack.c.l.b16 %v213
  %v1086 = vunpack.c.h.b16 %v213
  %v1087 = vunpack.c.l.b16 %v214
  %v1088 = vunpack.c.h.b16 %v214
  %v1089 = vunpack.c.l.b16 %v215
  %v1090 = vunpack.c.h.b16 %v215
  %v1091 = vunpack.c.l.b16 %v216
  %v1092 = vunpack.c.h.b16 %v216
  %v1093 = vunpack.c.l.b16 %v217
  %v1094 = vunpack.c.h.b16 %v217
  %v1095 = vunpack.c.l.b16 %v218
  %v1096 = vunpack.c.h.b16 %v218
  %v1097 = vunpack.c.l.b16 %v219
  %v1098 = vunpack.c.h.b16 %v219
  %v1099 = vunpack.c.l.b16 %v220
  %v1100 = vunpack.c.h.b16 %v220
  %v1101 = vunpack.c.l.b16 %v221
  %v1102 = vunpack.c.h.b16 %v221
  %v1103 = vunpack.c.l.b16 %v222
  %v1104 = vunpack.c.h.b16 %v222
  %v1105 = vunpack.c.l.b16 %v223
  %v1106 = vunpack.c.h.b16 %v223
  %v1107 = vunpack.c.l.b16 %v224
  %v1108 = vunpack.c.h.b16 %v224
  %v1109 = vunpack.c.l.b16 %v225
  %v1110 = vunpack.c.h.b16 %v225
  %v1111 = vunpack.c.l.b16 %v226
  %v1112 = vunpack.c.h.b16 %v226
  %v1113 = vunpack.c.l.b16 %v227
  %v1114 = vunpack.c.h.b16 %v227
  %v1115 = vunpack.c.l.b16 %v228
  %v1116 = vunpack.c.h.b16 %v228
  %v1117 = vunpack.c.l.b16 %v229
  %v1118 = vunpack.c.h.b16 %v229
  %v1119 = vunpack.c.l.b16 %v230
  %v1120 = vunpack.c.h.b16 %v230
  %v1121 = vunpack.c.l.b16 %v231
  %v1122 = vunpack.c.h.b16 %v231
  %v1123 = vunpack.c.l.b16 %v232
  %v1124 = vunpack.c.h.b16 %v232
  %v1125 = vunpack.c.l.b16 %v233
  %v1126 = vunpack.c.h.b16 %v233
  %v1127 = vunpack.c.l.b16 %v234
  %v1128 = vunpack.c.h.b16 %v234
  %v1129 = vunpack.c.l.b16 %v235
  %v1130 = vunpack.c.h.b16 %v235
  %v1131 = vunpack.c.l.b16 %v236
  %v1132 = vunpack.c.h.b16 %v236
  %v1133 = vunpack.c.l.b16 %v237
  %v1134 = vunpack.c.h.b16 %v237
  %v1135 = vunpack.c.l.b16 %v238
  %v1136 = vunpack.c.h.b16 %v238
  %v1137 = vunpack.c.l.b16 %v239
  %v1138 = vunpack.c.h.b16 %v239
  %v1139 = vunpack.c.l.b16 %v240
  %v1140 = vunpack.c.h.b16 %v240
  %v1141 = vunpack.c.l.b16 %v241
  %v1142 = vunpack.c.h.b16 %v241
  %v1143 = vunpack.c.l.b16 %v242
  %v1144 = vunpack.c.h.b16 %v242
  %v1145 = vunpack.c.l.b16 %v243
  %v1146 = vunpack.c.h.b16 %v243
  %v1147 = vunpack.c.l.b16 %v244
  %v1148 = vunpack.c.h.b16 %v244
  %v1149 = vunpack.c.l.b16 %v245
  %v1150 = vunpack.c.h.b16 %v245
  %v1151 = vunpack.c.l.b16 %v246
  %v1152 = vunpack.c.h.b16 %v246
  %v1153 = vunpack.c.l.b16 %v247
  %v1154 = vunpack.c.h.b16 %v247
  %v1155 = vunpack.c.l.b16 %v248
  %v1156 = vunpack.c.h.b16 %v248
  %v1157 = vunpack.c.l.b16 %v249
  %v1158 = vunpack.c.h.b16 %v249
  %v1159 = vunpack.c.l.b16 %v250
  %v1160 = vunpack.c.h.b16 %v250
  %v1161 = vunpack.c.l.b16 %v251
  %v1162 = vunpack.c.h.b16 %v251
  %v1163 = vunpack.c.l.b16 %v252
  %v1164 = vunpack.c.h.b16 %v252
  %v1165 = vunpack.c.l.b16 %v253
  %v1166 = vunpack.c.h.b16 %v253
  %v1167 = vunpack.c.l.b16 %v254
  %v1168 = vunpack.c.h.b16 %v254
  %v1169 = vunpack.c.l.b16 %v255
  %v1170 = vunpack.c.h.b16 %v255
  %v1171 = vunpack.c.l.b16 %v256
  %v1172 = vunpack.c.h.b16 %v256
  %v1173 = vunpack.c.l.b16 %v257
  %v1174 = vunpack.c.h.b16 %v257
  %v1175 = vunpack.c.l.b16 %v258
  %v1176 = vunpack.c.h.b16 %v258
  %v1177 = vunpack.c.l.b16 %v259
  %v1178 = vunpack.c.h.b16 %v259
  %v1179 = vunpack.c.l.b16 %v260
  %v1180 = vunpack.c.h.b16 %v260
  %v1181 = vunpack.c.l.b16 %v261
  %v1182 = vunpack.c.h.b16 %v261
  %v1183 = vunpack.c.l.b16 %v262
  %v1184 = vunpack.c.h.b16 %v262
  %v1185 = vunpack.c.l.b16 %v263
  %v1186 = vunpack.c.h.b16 %v263
  %v1187 = vunpack.c.l.b16 %v264
  %v1188 = vunpack.c.h.b16 %v264
  %v1189 = vunpack.c.l.b16 %v265
  %v1190 = vunpack.c.h.b16 %v265
  %v1191 = vunpack.c.l.b16 %v266
  %v1192 = vunpack.c.h.b16 %v266
  %v1193 = vunpack.c.l.b16 %v267
  %v1194 = vunpack.c.h.b16 %v267
  %v1195 = vunpack.c.l.b16 %v268
  %v1196 = vunpack.c.h.b16 %v268
  %v1197 = vunpack.c.l.b16 %v269
  %v1198 = vunpack.c.h.b16 %v269
  %v1199 = vunpack.c.l.b16 %v270
  %v1200 = vunpack.c.h.b16 %v270
  %v1201 = vunpack.c.l.b16 %v271
  %v1202 = vunpack.c.h.b16 %v271
  %v1203 = vunpack.c.l.b16 %v272
  %v1204 = vunpack.c.h.b16 %v272
  %v1205 = vunpack.c.l.b16 %v273
  %v1206 = vunpack.c.h.b16 %v273
  %v1207 = vunpack.c.l.b16 %v274
  %v1208 = vunpack.c.h.b16 %v274
  %v1209 = vunpack.c.l.b16 %v275
  %v1210 = vunpack.c.h.b16 %v275
  %v1211 = vunpack.c.l.b16 %v276
  %v1212 = vunpack.c.h.b16 %v276
  %v1213 = vunpack.c.l.b16 %v277
  %v1214 = vunpack.c.h.b16 %v277
  %v1215 = vunpack.c.l.b16 %v278
  %v1216 = vunpack.c.h.b16 %v278
  %v1217 = vunpack.c.l.b16 %v279
  %v1218 = vunpack.c.h.b16 %v279
  %v1219 = vunpack.c.l.b16 %v280
  %v1220 = vunpack.c.h.b16 %v280
  %v1221 = vunpack.c.l.b16 %v281
  %v1222 = vunpack.c.h.b16 %v281
  %v1223 = vunpack.c.l.b16 %v282
  %v1224 = vunpack.c.h.b16 %v282
  %v1225 = vunpack.c.l.b16 %v283
  %v1226 = vunpack.c.h.b16 %v283
  %v1227 = vunpack.c.l.b16 %v284
  %v1228 = vunpack.c.h.b16 %v284
  %v1229 = vunpack.c.l.b16 %v285
  %v1230 = vunpack.c.h.b16 %v285
  %v1231 = vunpack.c.l.b16 %v286
  %v1232 = vunpack.c.h.b16 %v286
  %v1233 = vunpack.c.l.b16 %v287
  %v1234 = vunpack.c.h.b16 %v287
  %v1235 = vunpack.c.l.b16 %v288
  %v1236 = vunpack.c.h.b16 %v288
  %v1237 = vunpack.c.l.b16 %v289
  %v1238 = vunpack.c.h.b16 %v289
  %v1239 = vunpack.c.l.b16 %v290
  %v1240 = vunpack.c.h.b16 %v290
  %v1241 = vunpack.c.l.b16 %v291
  %v1242 = vunpack.c.h.b16 %v291
  %v1243 = vunpack.c.l.b16 %v292
  %v1244 = vunpack.c.h.b16 %v292
  %v1245 = vunpack.c.l.b16 %v293
  %v1246 = vunpack.c.h.b16 %v293
  %v1247 = vpack.c.b16 %v739, %v735
  %v1248 = vpack.c.b16 %v740, %v736
  %v1249 = vpack.c.b16 %v741, %v737
  %v1250 = vpack.c.b16 %v742, %v738
  %v1251 = vpack.c.b16 %v747, %v743
  %v1252 = vpack.c.b16 %v748, %v744
  %v1253 = vpack.c.b16 %v749, %v745
  %v1254 = vpack.c.b16 %v750, %v746
  %v1255 = vpack.c.b16 %v755, %v751
  %v1256 = vpack.c.b16 %v756, %v752
  %v1257 = vpack.c.b16 %v757, %v753
  %v1258 = vpack.c.b16 %v758, %v754
  %v1259 = vpack.c.b16 %v763, %v759
  %v1260 = vpack.c.b16 %v764, %v760
  %v1261 = vpack.c.b16 %v765, %v761
  %v1262 = vpack.c.b16 %v766, %v762
  %v1263 = vpack.c.b16 %v771, %v767
  %v1264 = vpack.c.b16 %v772, %v768
  %v1265 = vpack.c.b16 %v773, %v769
  %v1266 = vpack.c.b16 %v774, %v770
  %v1267 = vpack.c.b16 %v779, %v775
  %v1268 = vpack.c.b16 %v780, %v776
  %v1269 = vpack.c.b16 %v781, %v777
  %v1270 = vpack.c.b16 %v782, %v778
  %v1271 = vpack.c.b16 %v787, %v783
  %v1272 = vpack.c.b16 %v788, %v784
  %v1273 = vpack.c.b16 %v789, %v785
  %v1274 = vpack.c.b16 %v790, %v786
  %v1275 = vpack.c.b16 %v795, %v791
  %v1276 = vpack.c.b16 %v796, %v792
  %v1277 = vpack.c.b16 %v797, %v793
  %v1278 = vpack.c.b16 %v798, %v794
  %v1279 = vpack.c.b16 %v803, %v799
  %v1280 = vpack.c.b16 %v804, %v800
  %v1281 = vpack.c.b16 %v805, %v801
  %v1282 = vpack.c.b16 %v806, %v802
  %v1283 = vpack.c.b16 %v811, %v807
  %v1284 = vpack.c.b16 %v812, %v808
  %v1285 = vpack.c.b16 %v813, %v809
  %v1286 = vpack.c.b16 %v814, %v810
  %v1287 = vpack.c.b16 %v819, %v815
  %v1288 = vpack.c.b16 %v820, %v816
  %v1289 = vpack.c.b16 %v821, %v817
  %v1290 = vpack.c.b16 %v822, %v818
  %v1291 = vpack.c.b16 %v827, %v823
  %v1292 = vpack.c.b16 %v828, %v824
  %v1293 = vpack.c.b16 %v829, %v825
  %v1294 = vpack.c.b16 %v830, %v826
  %v1295 = vpack.c.b16 %v835, %v831
  %v1296 = vpack.c.b16 %v836, %v832
  %v1297 = vpack.c.b16 %v837, %v833
  %v1298 = vpack.c.b16 %v838, %v834
  %v1299 = vpack.c.b16 %v843, %v839
  %v1300 = vpack.c.b16 %v844, %v840
  %v1301 = vpack.c.b16 %v845, %v841
  %v1302 = vpack.c.b16 %v846, %v842
  %v1303 = vpack.c.b16 %v851, %v847
  %v1304 = vpack.c.b16 %v852, %v848
  %v1305 = vpack.c.b16 %v853, %v849
  %v1306 = vpack.c.b16 %v854, %v850
  %v1307 = vpack.c.b16 %v859, %v855
  %v1308 = vpack.c.b16 %v860, %v856
  %v1309 = vpack.c.b16 %v861, %v857
  %v1310 = vpack.c.b16 %v862, %v858
  %v1311 = vpack.c.b16 %v867, %v863
  %v1312 = vpack.c.b16 %v868, %v864
  %v1313 = vpack.c.b16 %v869, %v865
  %v1314 = vpack.c.b16 %v870, %v866
  %v1315 = vpack.c.b16 %v875, %v871
  %v1316 = vpack.c.b16 %v876, %v872
  %v1317 = vpack.c.b16 %v877, %v873
  %v1318 = vpack.c.b16 %v878, %v874
  %v1319 = vpack.c.b16 %v883, %v879
  %v1320 = vpack.c.b16 %v884, %v880
  %v1321 = vpack.c.b16 %v885, %v881
  %v1322 = vpack.c.b16 %v886, %v882
  %v1323 = vpack.c.b16 %v891, %v887
  %v1324 = vpack.c.b16 %v892, %v888
  %v1325 = vpack.c.b16 %v893, %v889
  %v1326 = vpack.c.b16 %v894, %v890
  %v1327 = vpack.c.b16 %v899, %v895
  %v1328 = vpack.c.b16 %v900, %v896
  %v1329 = vpack.c.b16 %v901, %v897
  %v1330 = vpack.c.b16 %v902, %v898
  %v1331 = vpack.c.b16 %v907, %v903
  %v1332 = vpack.c.b16 %v908, %v904
  %v1333 = vpack.c.b16 %v909, %v905
  %v1334 = vpack.c.b16 %v910, %v906
  %v1335 = vpack.c.b16 %v915, %v911
  %v1336 = vpack.c.b16 %v916, %v912
  %v1337 = vpack.c.b16 %v917, %v913
  %v1338 = vpack.c.b16 %v918, %v914
  %v1339 = vpack.c.b16 %v923, %v919
  %v1340 = vpack.c.b16 %v924, %v920
  %v1341 = vpack.c.b16 %v925, %v921
  %v1342 = vpack.c.b16 %v926, %v922
  %v1343 = vpack.c.b16 %v931, %v927
  %v1344 = vpack.c.b16 %v932, %v928
  %v1345 = vpack.c.b16 %v933, %v929
  %v1346 = vpack.c.b16 %v934, %v930
  %v1347 = vpack.c.b16 %v939, %v935
  %v1348 = vpack.c.b16 %v940, %v936
  %v1349 = vpack.c.b16 %v941, %v937
  %v1350 = vpack.c.b16 %v942, %v938
  %v1351 = vpack.c.b16 %v947, %v943
  %v1352 = vpack.c.b16 %v948, %v944
  %v1353 = vpack.c.b16 %v949, %v945
  %v1354 = vpack.c.b16 %v950, %v946
  %v1355 = vpack.c.b16 %v955, %v951
  %v1356 = vpack.c.b16 %v956, %v952
  %v1357 = vpack.c.b16 %v957, %v953
  %v1358 = vpack.c.b16 %v958, %v954
  %v1359 = vpack.c.b16 %v963, %v959
  %v1360 = vpack.c.b16 %v964, %v960
  %v1361 = vpack.c.b16 %v965, %v961
  %v1362 = vpack.c.b16 %v966, %v962
  %v1363 = vpack.c.b16 %v971, %v967
  %v1364 = vpack.c.b16 %v972, %v968
  %v1365 = vpack.c.b16 %v973, %v969
  %v1366 = vpack.c.b16 %v974, %v970
  %v1367 = vpack.c.b16 %v979, %v975
  %v1368 = vpack.c.b16 %v980, %v976
  %v1369 = vpack.c.b16 %v981, %v977
  %v1370 = vpack.c.b16 %v982, %v978
  %v1371 = vpack.c.b16 %v987, %v983
  %v1372 = vpack.c.b16 %v988, %v984
  %v1373 = vpack.c.b16 %v989, %v985
  %v1374 = vpack.c.b16 %v990, %v986
  %v1375 = vpack.c.b16 %v995, %v991
  %v1376 = vpack.c.b16 %v996, %v992
  %v1377 = vpack.c.b16 %v997, %v993
  %v1378 = vpack.c.b16 %v998, %v994
  %v1379 = vpack.c.b16 %v1003, %v999
  %v1380 = vpack.c.b16 %v1004, %v1000
  %v1381 = vpack.c.b16 %v1005, %v1001
  %v1382 = vpack.c.b16 %v1006, %v1002
  %v1383 = vpack.c.b16 %v1011, %v1007
  %v1384 = vpack.c.b16 %v1012, %v1008
  %v1385 = vpack.c.b16 %v1013, %v1009
  %v1386 = vpack.c.b16 %v1014, %v1010
  %v1387 = vpack.c.b16 %v1019, %v1015
  %v1388 = vpack.c.b16 %v1020, %v1016
  %v1389 = vpack.c.b16 %v1021, %v1017
  %v1390 = vpack.c.b16 %v1022, %v1018
  %v1391 = vpack.c.b16 %v1027, %v1023
  %v1392 = vpack.c.b16 %v1028, %v1024
  %v1393 = vpack.c.b16 %v1029, %v1025
  %v1394 = vpack.c.b16 %v1030, %v1026
  %v1395 = vpack.c.b16 %v1035, %v1031
  %v1396 = vpack.c.b16 %v1036, %v1032
  %v1397 = vpack.c.b16 %v1037, %v1033
  %v1398 = vpack.c.b16 %v1038, %v1034
  %v1399 = vpack.c.b16 %v1043, %v1039
  %v1400 = vpack.c.b16 %v1044, %v1040
  %v1401 = vpack.c.b16 %v1045, %v1041
  %v1402 = vpack.c.b16 %v1046, %v1042
  %v1403 = vpack.c.b16 %v1051, %v1047
  %v1404 = vpack.c.b16 %v1052, %v1048
  %v1405 = vpack.c.b16 %v1053, %v1049
  %v1406 = vpack.c.b16 %v1054, %v1050
  %v1407 = vpack.c.b16 %v1059, %v1055
  %v1408 = vpack.c.b16 %v1060, %v1056
  %v1409 = vpack.c.b16 %v1061, %v1057
  %v1410 = vpack.c.b16 %v1062, %v1058
  %v1411 = vpack.c.b16 %v1067, %v1063
  %v1412 = vpack.c.b16 %v1068, %v1064
  %v1413 = vpack.c.b16 %v1069, %v1065
  %v1414 = vpack.c.b16 %v1070, %v1066
  %v1415 = vpack.c.b16 %v1075, %v1071
  %v1416 = vpack.c.b16 %v1076, %v1072
  %v1417 = vpack.c.b16 %v1077, %v1073
  %v1418 = vpack.c.b16 %v1078, %v1074
  %v1419 = vpack.c.b16 %v1083, %v1079
  %v1420 = vpack.c.b16 %v1084, %v1080
  %v1421 = vpack.c.b16 %v1085, %v1081
  %v1422 = vpack.c.b16 %v1086, %v1082
  %v1423 = vpack.c.b16 %v1091, %v1087
  %v1424 = vpack.c.b16 %v1092, %v1088
  %v1425 = vpack.c.b16 %v1093, %v1089
  %v1426 = vpack.c.b16 %v1094, %v1090
  %v1427 = vpack.c.b16 %v1099, %v1095
  %v1428 = vpack.c.b16 %v1100, %v1096
  %v1429 = vpack.c.b16 %v1101, %v1097
  %v1430 = vpack.c.b16 %v1102, %v1098
  %v1431 = vpack.c.b16 %v1107, %v1103
  %v1432 = vpack.c.b16 %v1108, %v1104
  %v1433 = vpack.c.b16 %v1109, %v1105
  %v1434 = vpack.c.b16 %v1110, %v1106
  %v1435 = vpack.c.b16 %v1115, %v1111
  %v1436 = vpack.c.b16 %v1116, %v1112
  %v1437 = vpack.c.b16 %v1117, %v1113
  %v1438 = vpack.c.b16 %v1118, %v1114
  %v1439 = vpack.c.b16 %v1123, %v1119
  %v1440 = vpack.c.b16 %v1124, %v1120
  %v1441 = vpack.c.b16 %v1125, %v1121
  %v1442 = vpack.c.b16 %v1126, %v1122
  %v1443 = vpack.c.b16 %v1131, %v1127
  %v1444 = vpack.c.b16 %v1132, %v1128
  %v1445 = vpack.c.b16 %v1133, %v1129
  %v1446 = vpack.c.b16 %v1134, %v1130
  %v1447 = vpack.c.b16 %v1139, %v1135
  %v1448 = vpack.c.b16 %v1140, %v1136
  %v1449 = vpack.c.b16 %v1141, %v1137
  %v1450 = vpack.c.b16 %v1142, %v1138
  %v1451 = vpack.c.b16 %v1147, %v1143
  %v1452 = vpack.c.b16 %v1148, %v1144
  %v1453 = vpack.c.b16 %v1149, %v1145
  %v1454 = vpack.c.b16 %v1150, %v1146
  %v1455 = vpack.c.b16 %v1155, %v1151
  %v1456 = vpack.c.b16 %v1156, %v1152
  %v1457 = vpack.c.b16 %v1157, %v1153
  %v1458 = vpack.c.b16 %v1158, %v1154
  %v1459 = vpack.c.b16 %v1163, %v1159
  %v1460 = vpack.c.b16 %v1164, %v1160
  %v1461 = vpack.c.b16 %v1165, %v1161
  %v1462 = vpack.c.b16 %v1166, %v1162
  %v1463 = vpack.c.b16 %v1171, %v1167
  %v1464 = vpack.c.b16 %v1172, %v1168
  %v1465 = vpack.c.b16 %v1173, %v1169
  %v1466 = vpack.c.b16 %v1174, %v1170
  %v1467 = vpack.c.b16 %v1179, %v1175
  %v1468 = vpack.c.b16 %v1180, %v1176
  %v1469 = vpack.c.b16 %v1181, %v1177
  %v1470 = vpack.c.b16 %v1182, %v1178
  %v1471 = vpack.c.b16 %v1187, %v1183
  %v1472 = vpack.c.b16 %v1188, %v1184
  %v1473 = vpack.c.b16 %v1189, %v1185
  %v1474 = vpack.c.b16 %v1190, %v1186
  %v1475 = vpack.c.b16 %v1195, %v1191
  %v1476 = vpack.c.b16 %v1196, %v1192
  %v1477 = vpack.c.b16 %v1197, %v1193
  %v1478 = vpack.c.b16 %v1198, %v1194
  %v1479 = vpack.c.b16 %v1203, %v1199
  %v1480 = vpack.c.b16 %v1204, %v1200
  %v1481 = vpack.c.b16 %v1205, %v1201
  %v1482 = vpack.c.b16 %v1206, %v1202
  %v1483 = vpack.c.b16 %v1211, %v1207
  %v1484 = vpack.c.b16 %v1212, %v1208
  %v1485 = vpack.c.b16 %v1213, %v1209
  %v1486 = vpack.c.b16 %v1214, %v1210
  %v1487 = vpack.c.b16 %v1219, %v1215
  %v1488 = vpack.c.b16 %v1220, %v1216
  %v1489 = vpack.c.b16 %v1221, %v1217
  %v1490 = vpack.c.b16 %v1222, %v1218
  %v1491 = vpack.c.b16 %v1227, %v1223
  %v1492 = vpack.c.b16 %v1228, %v1224
  %v1493 = vpack.c.b16 %v1229, %v1225
  %v1494 = vpack.c.b16 %v1230, %v1226
  %v1495 = vpack.c.b16 %v1235, %v1231
  %v1496 = vpack.c.b16 %v1236, %v1232
  %v1497 = vpack.c.b16 %v1237, %v1233
  %v1498 = vpack.c.b16 %v1238, %v1234
  %v1499 = vpack.c.b16 %v1243, %v1239
  %v1500 = vpack.c.b16 %v1244, %v1240
  %v1501 = vpack.c.b16 %v1245, %v1241
  %v1502 = vpack.c.b16 %v1246, %v1242
  %1759 = vmatprep.subr.bf16.mxu0 %v1248
  %1760 = vmatpush1.bf16.msra.mxu0 %v1247
  %1761 = vmatprep.subr.bf16.mxu0 %v1252
  %1762 = vmatpush1.bf16.msra.mxu0 %v1251
  %1763 = vmatprep.subr.bf16.mxu0 %v1256
  %1764 = vmatpush1.bf16.msra.mxu0 %v1255
  %1765 = vmatprep.subr.bf16.mxu0 %v1260
  %1766 = vmatpush1.bf16.msra.mxu0 %v1259
  %1767 = vmatprep.subr.bf16.mxu0 %v1264
  %1768 = vmatpush1.bf16.msra.mxu0 %v1263
  %1769 = vmatprep.subr.bf16.mxu0 %v1268
  %1770 = vmatpush1.bf16.msra.mxu0 %v1267
  %1771 = vmatprep.subr.bf16.mxu0 %v1272
  %1772 = vmatpush1.bf16.msra.mxu0 %v1271
  %1773 = vmatprep.subr.bf16.mxu0 %v1276
  %1774 = vmatpush1.bf16.msra.mxu0 %v1275
  %1775 = vmatprep.subr.bf16.mxu0 %v1280
  %1776 = vmatpush1.bf16.msra.mxu0 %v1279
  %1777 = vmatprep.subr.bf16.mxu0 %v1284
  %1778 = vmatpush1.bf16.msra.mxu0 %v1283
  %1779 = vmatprep.subr.bf16.mxu0 %v1288
  %1780 = vmatpush1.bf16.msra.mxu0 %v1287
  %1781 = vmatprep.subr.bf16.mxu0 %v1292
  %1782 = vmatpush1.bf16.msra.mxu0 %v1291
  %1783 = vmatprep.subr.bf16.mxu0 %v1296
  %1784 = vmatpush1.bf16.msra.mxu0 %v1295
  %1785 = vmatprep.subr.bf16.mxu0 %v1300
  %1786 = vmatpush1.bf16.msra.mxu0 %v1299
  %1787 = vmatprep.subr.bf16.mxu0 %v1304
  %1788 = vmatpush1.bf16.msra.mxu0 %v1303
  %1789 = vmatprep.subr.bf16.mxu0 %v1308
  %1790 = vmatpush1.bf16.msra.mxu0 %v1307
  %1791 = vmatprep.mubr.bf16.mxu0 %v464
  %1792 = vmatmul.mubr.bf16.gmra.mrb[0].mxu0 %v463
  %v1793 = vpop.f32.mrb[0].mxu0
  %v1794 = vadd.f32 %v397, %v1793
  %v1795 = vpop.f32.mrb[0].mxu0
  %v1796 = vadd.f32 %v401, %v1795
  %v1797 = vpop.f32.mrb[0].mxu0
  %v1798 = vpop.f32.mrb[0].mxu0
  %1799 = vdwg.mxu0
  %1800 = vmatprep.subr.bf16.mxu0 %v1312
  %1801 = vmatpush1.bf16.msra.mxu0 %v1311
  %1802 = vmatprep.subr.bf16.mxu0 %v1316
  %1803 = vmatpush1.bf16.msra.mxu0 %v1315
  %1804 = vmatprep.subr.bf16.mxu0 %v1320
  %1805 = vmatpush1.bf16.msra.mxu0 %v1319
  %1806 = vmatprep.subr.bf16.mxu0 %v1324
  %1807 = vmatpush1.bf16.msra.mxu0 %v1323
  %1808 = vmatprep.subr.bf16.mxu0 %v1328
  %1809 = vmatpush1.bf16.msra.mxu0 %v1327
  %1810 = vmatprep.subr.bf16.mxu0 %v1332
  %1811 = vmatpush1.bf16.msra.mxu0 %v1331
  %1812 = vmatprep.subr.bf16.mxu0 %v1336
  %1813 = vmatpush1.bf16.msra.mxu0 %v1335
  %1814 = vmatprep.subr.bf16.mxu0 %v1340
  %1815 = vmatpush1.bf16.msra.mxu0 %v1339
  %1816 = vmatprep.subr.bf16.mxu0 %v1344
  %1817 = vmatpush1.bf16.msra.mxu0 %v1343
  %1818 = vmatprep.subr.bf16.mxu0 %v1348
  %1819 = vmatpush1.bf16.msra.mxu0 %v1347
  %1820 = vmatprep.subr.bf16.mxu0 %v1352
  %1821 = vmatpush1.bf16.msra.mxu0 %v1351
  %1822 = vmatprep.subr.bf16.mxu0 %v1356
  %1823 = vmatpush1.bf16.msra.mxu0 %v1355
  %1824 = vmatprep.subr.bf16.mxu0 %v1360
  %1825 = vmatpush1.bf16.msra.mxu0 %v1359
  %1826 = vmatprep.subr.bf16.mxu0 %v1364
  %1827 = vmatpush1.bf16.msra.mxu0 %v1363
  %1828 = vmatprep.subr.bf16.mxu0 %v1368
  %1829 = vmatpush1.bf16.msra.mxu0 %v1367
  %1830 = vmatprep.subr.bf16.mxu0 %v1372
  %1831 = vmatpush1.bf16.msra.mxu0 %v1371
  %1832 = vmatprep.mubr.bf16.mxu0 %v466
  %1833 = vmatmul.mubr.bf16.gmra.mrb[0].mxu0 %v465
  %v1834 = vpop.f32.mrb[0].mxu0
  %v1835 = vadd.f32 %v1794, %v1834
  %v1836 = vpop.f32.mrb[0].mxu0
  %v1837 = vadd.f32 %v1796, %v1836
  %v1838 = vpop.f32.mrb[0].mxu0
  %v1839 = vpop.f32.mrb[0].mxu0
  %1840 = vdwg.mxu0
  %1841 = vmatprep.subr.bf16.mxu0 %v1376
  %1842 = vmatpush1.bf16.msra.mxu0 %v1375
  %1843 = vmatprep.subr.bf16.mxu0 %v1380
  %1844 = vmatpush1.bf16.msra.mxu0 %v1379
  %1845 = vmatprep.subr.bf16.mxu0 %v1384
  %1846 = vmatpush1.bf16.msra.mxu0 %v1383
  %1847 = vmatprep.subr.bf16.mxu0 %v1388
  %1848 = vmatpush1.bf16.msra.mxu0 %v1387
  %1849 = vmatprep.subr.bf16.mxu0 %v1392
  %1850 = vmatpush1.bf16.msra.mxu0 %v1391
  %1851 = vmatprep.subr.bf16.mxu0 %v1396
  %1852 = vmatpush1.bf16.msra.mxu0 %v1395
  %1853 = vmatprep.subr.bf16.mxu0 %v1400
  %1854 = vmatpush1.bf16.msra.mxu0 %v1399
  %1855 = vmatprep.subr.bf16.mxu0 %v1404
  %1856 = vmatpush1.bf16.msra.mxu0 %v1403
  %1857 = vmatprep.subr.bf16.mxu0 %v1408
  %1858 = vmatpush1.bf16.msra.mxu0 %v1407
  %1859 = vmatprep.subr.bf16.mxu0 %v1412
  %1860 = vmatpush1.bf16.msra.mxu0 %v1411
  %1861 = vmatprep.subr.bf16.mxu0 %v1416
  %1862 = vmatpush1.bf16.msra.mxu0 %v1415
  %1863 = vmatprep.subr.bf16.mxu0 %v1420
  %1864 = vmatpush1.bf16.msra.mxu0 %v1419
  %1865 = vmatprep.subr.bf16.mxu0 %v1424
  %1866 = vmatpush1.bf16.msra.mxu0 %v1423
  %1867 = vmatprep.subr.bf16.mxu0 %v1428
  %1868 = vmatpush1.bf16.msra.mxu0 %v1427
  %1869 = vmatprep.subr.bf16.mxu0 %v1432
  %1870 = vmatpush1.bf16.msra.mxu0 %v1431
  %1871 = vmatprep.subr.bf16.mxu0 %v1436
  %1872 = vmatpush1.bf16.msra.mxu0 %v1435
  %1873 = vmatprep.mubr.bf16.mxu0 %v468
  %1874 = vmatmul.mubr.bf16.gmra.mrb[0].mxu0 %v467
  %v1875 = vpop.f32.mrb[0].mxu0
  %v1876 = vadd.f32 %v1835, %v1875
  %v1877 = vpop.f32.mrb[0].mxu0
  %v1878 = vadd.f32 %v1837, %v1877
  %v1879 = vpop.f32.mrb[0].mxu0
  %v1880 = vpop.f32.mrb[0].mxu0
  %1881 = vdwg.mxu0
  %1882 = vmatprep.subr.bf16.mxu0 %v1440
  %1883 = vmatpush1.bf16.msra.mxu0 %v1439
  %1884 = vmatprep.subr.bf16.mxu0 %v1444
  %1885 = vmatpush1.bf16.msra.mxu0 %v1443
  %1886 = vmatprep.subr.bf16.mxu0 %v1448
  %1887 = vmatpush1.bf16.msra.mxu0 %v1447
  %1888 = vmatprep.subr.bf16.mxu0 %v1452
  %1889 = vmatpush1.bf16.msra.mxu0 %v1451
  %1890 = vmatprep.subr.bf16.mxu0 %v1456
  %1891 = vmatpush1.bf16.msra.mxu0 %v1455
  %1892 = vmatprep.subr.bf16.mxu0 %v1460
  %1893 = vmatpush1.bf16.msra.mxu0 %v1459
  %1894 = vmatprep.subr.bf16.mxu0 %v1464
  %1895 = vmatpush1.bf16.msra.mxu0 %v1463
  %1896 = vmatprep.subr.bf16.mxu0 %v1468
  %1897 = vmatpush1.bf16.msra.mxu0 %v1467
  %1898 = vmatprep.subr.bf16.mxu0 %v1472
  %1899 = vmatpush1.bf16.msra.mxu0 %v1471
  %1900 = vmatprep.subr.bf16.mxu0 %v1476
  %1901 = vmatpush1.bf16.msra.mxu0 %v1475
  %1902 = vmatprep.subr.bf16.mxu0 %v1480
  %1903 = vmatpush1.bf16.msra.mxu0 %v1479
  %1904 = vmatprep.subr.bf16.mxu0 %v1484
  %1905 = vmatpush1.bf16.msra.mxu0 %v1483
  %1906 = vmatprep.subr.bf16.mxu0 %v1488
  %1907 = vmatpush1.bf16.msra.mxu0 %v1487
  %1908 = vmatprep.subr.bf16.mxu0 %v1492
  %1909 = vmatpush1.bf16.msra.mxu0 %v1491
  %1910 = vmatprep.subr.bf16.mxu0 %v1496
  %1911 = vmatpush1.bf16.msra.mxu0 %v1495
  %1912 = vmatprep.subr.bf16.mxu0 %v1500
  %1913 = vmatpush1.bf16.msra.mxu0 %v1499
  %1914 = vmatprep.mubr.bf16.mxu0 %v470
  %1915 = vmatmul.mubr.bf16.gmra.mrb[0].mxu0 %v469
  %v1916 = vpop.f32.mrb[0].mxu0
  %v1917 = vadd.f32 %v1876, %v1916
  %v1918 = vpop.f32.mrb[0].mxu0
  %v1919 = vadd.f32 %v1878, %v1918
  %v1920 = vpop.f32.mrb[0].mxu0
  %v1921 = vpop.f32.mrb[0].mxu0
  %1922 = vdwg.mxu0
  %1923 = vmatprep.subr.bf16.mxu0 %v1250
  %1924 = vmatpush1.bf16.msra.mxu0 %v1249
  %1925 = vmatprep.subr.bf16.mxu0 %v1254
  %1926 = vmatpush1.bf16.msra.mxu0 %v1253
  %1927 = vmatprep.subr.bf16.mxu0 %v1258
  %1928 = vmatpush1.bf16.msra.mxu0 %v1257
  %1929 = vmatprep.subr.bf16.mxu0 %v1262
  %1930 = vmatpush1.bf16.msra.mxu0 %v1261
  %1931 = vmatprep.subr.bf16.mxu0 %v1266
  %1932 = vmatpush1.bf16.msra.mxu0 %v1265
  %1933 = vmatprep.subr.bf16.mxu0 %v1270
  %1934 = vmatpush1.bf16.msra.mxu0 %v1269
  %1935 = vmatprep.subr.bf16.mxu0 %v1274
  %1936 = vmatpush1.bf16.msra.mxu0 %v1273
  %1937 = vmatprep.subr.bf16.mxu0 %v1278
  %1938 = vmatpush1.bf16.msra.mxu0 %v1277
  %1939 = vmatprep.subr.bf16.mxu0 %v1282
  %1940 = vmatpush1.bf16.msra.mxu0 %v1281
  %1941 = vmatprep.subr.bf16.mxu0 %v1286
  %1942 = vmatpush1.bf16.msra.mxu0 %v1285
  %1943 = vmatprep.subr.bf16.mxu0 %v1290
  %1944 = vmatpush1.bf16.msra.mxu0 %v1289
  %1945 = vmatprep.subr.bf16.mxu0 %v1294
  %1946 = vmatpush1.bf16.msra.mxu0 %v1293
  %1947 = vmatprep.subr.bf16.mxu0 %v1298
  %1948 = vmatpush1.bf16.msra.mxu0 %v1297
  %1949 = vmatprep.subr.bf16.mxu0 %v1302
  %1950 = vmatpush1.bf16.msra.mxu0 %v1301
  %1951 = vmatprep.subr.bf16.mxu0 %v1306
  %1952 = vmatpush1.bf16.msra.mxu0 %v1305
  %1953 = vmatprep.subr.bf16.mxu0 %v1310
  %1954 = vmatpush1.bf16.msra.mxu0 %v1309
  %1955 = vmatprep.mubr.bf16.mxu0 %v464
  %1956 = vmatmul.mubr.bf16.gmra.mrb[0].mxu0 %v463
  %v1957 = vpop.f32.mrb[0].mxu0
  %v1958 = vadd.f32 %v405, %v1957
  %v1959 = vpop.f32.mrb[0].mxu0
  %v1960 = vadd.f32 %v409, %v1959
  %v1961 = vpop.f32.mrb[0].mxu0
  %v1962 = vpop.f32.mrb[0].mxu0
  %1963 = vdwg.mxu0
  %1964 = vmatprep.subr.bf16.mxu0 %v1314
  %1965 = vmatpush1.bf16.msra.mxu0 %v1313
  %1966 = vmatprep.subr.bf16.mxu0 %v1318
  %1967 = vmatpush1.bf16.msra.mxu0 %v1317
  %1968 = vmatprep.subr.bf16.mxu0 %v1322
  %1969 = vmatpush1.bf16.msra.mxu0 %v1321
  %1970 = vmatprep.subr.bf16.mxu0 %v1326
  %1971 = vmatpush1.bf16.msra.mxu0 %v1325
  %1972 = vmatprep.subr.bf16.mxu0 %v1330
  %1973 = vmatpush1.bf16.msra.mxu0 %v1329
  %1974 = vmatprep.subr.bf16.mxu0 %v1334
  %1975 = vmatpush1.bf16.msra.mxu0 %v1333
  %1976 = vmatprep.subr.bf16.mxu0 %v1338
  %1977 = vmatpush1.bf16.msra.mxu0 %v1337
  %1978 = vmatprep.subr.bf16.mxu0 %v1342
  %1979 = vmatpush1.bf16.msra.mxu0 %v1341
  %1980 = vmatprep.subr.bf16.mxu0 %v1346
  %1981 = vmatpush1.bf16.msra.mxu0 %v1345
  %1982 = vmatprep.subr.bf16.mxu0 %v1350
  %1983 = vmatpush1.bf16.msra.mxu0 %v1349
  %1984 = vmatprep.subr.bf16.mxu0 %v1354
  %1985 = vmatpush1.bf16.msra.mxu0 %v1353
  %1986 = vmatprep.subr.bf16.mxu0 %v1358
  %1987 = vmatpush1.bf16.msra.mxu0 %v1357
  %1988 = vmatprep.subr.bf16.mxu0 %v1362
  %1989 = vmatpush1.bf16.msra.mxu0 %v1361
  %1990 = vmatprep.subr.bf16.mxu0 %v1366
  %1991 = vmatpush1.bf16.msra.mxu0 %v1365
  %1992 = vmatprep.subr.bf16.mxu0 %v1370
  %1993 = vmatpush1.bf16.msra.mxu0 %v1369
  %1994 = vmatprep.subr.bf16.mxu0 %v1374
  %1995 = vmatpush1.bf16.msra.mxu0 %v1373
  %1996 = vmatprep.mubr.bf16.mxu0 %v466
  %1997 = vmatmul.mubr.bf16.gmra.mrb[0].mxu0 %v465
  %v1998 = vpop.f32.mrb[0].mxu0
  %v1999 = vadd.f32 %v1958, %v1998
  %v2000 = vpop.f32.mrb[0].mxu0
  %v2001 = vadd.f32 %v1960, %v2000
  %v2002 = vpop.f32.mrb[0].mxu0
  %v2003 = vpop.f32.mrb[0].mxu0
  %2004 = vdwg.mxu0
  %2005 = vmatprep.subr.bf16.mxu0 %v1378
  %2006 = vmatpush1.bf16.msra.mxu0 %v1377
  %2007 = vmatprep.subr.bf16.mxu0 %v1382
  %2008 = vmatpush1.bf16.msra.mxu0 %v1381
  %2009 = vmatprep.subr.bf16.mxu0 %v1386
  %2010 = vmatpush1.bf16.msra.mxu0 %v1385
  %2011 = vmatprep.subr.bf16.mxu0 %v1390
  %2012 = vmatpush1.bf16.msra.mxu0 %v1389
  %2013 = vmatprep.subr.bf16.mxu0 %v1394
  %2014 = vmatpush1.bf16.msra.mxu0 %v1393
  %2015 = vmatprep.subr.bf16.mxu0 %v1398
  %2016 = vmatpush1.bf16.msra.mxu0 %v1397
  %2017 = vmatprep.subr.bf16.mxu0 %v1402
  %2018 = vmatpush1.bf16.msra.mxu0 %v1401
  %2019 = vmatprep.subr.bf16.mxu0 %v1406
  %2020 = vmatpush1.bf16.msra.mxu0 %v1405
  %2021 = vmatprep.subr.bf16.mxu0 %v1410
  %2022 = vmatpush1.bf16.msra.mxu0 %v1409
  %2023 = vmatprep.subr.bf16.mxu0 %v1414
  %2024 = vmatpush1.bf16.msra.mxu0 %v1413
  %2025 = vmatprep.subr.bf16.mxu0 %v1418
  %2026 = vmatpush1.bf16.msra.mxu0 %v1417
  %2027 = vmatprep.subr.bf16.mxu0 %v1422
  %2028 = vmatpush1.bf16.msra.mxu0 %v1421
  %2029 = vmatprep.subr.bf16.mxu0 %v1426
  %2030 = vmatpush1.bf16.msra.mxu0 %v1425
  %2031 = vmatprep.subr.bf16.mxu0 %v1430
  %2032 = vmatpush1.bf16.msra.mxu0 %v1429
  %2033 = vmatprep.subr.bf16.mxu0 %v1434
  %2034 = vmatpush1.bf16.msra.mxu0 %v1433
  %2035 = vmatprep.subr.bf16.mxu0 %v1438
  %2036 = vmatpush1.bf16.msra.mxu0 %v1437
  %2037 = vmatprep.mubr.bf16.mxu0 %v468
  %2038 = vmatmul.mubr.bf16.gmra.mrb[0].mxu0 %v467
  %v2039 = vpop.f32.mrb[0].mxu0
  %v2040 = vadd.f32 %v1999, %v2039
  %v2041 = vpop.f32.mrb[0].mxu0
  %v2042 = vadd.f32 %v2001, %v2041
  %v2043 = vpop.f32.mrb[0].mxu0
  %v2044 = vpop.f32.mrb[0].mxu0
  %2045 = vdwg.mxu0
  %2046 = vmatprep.subr.bf16.mxu0 %v1442
  %2047 = vmatpush1.bf16.msra.mxu0 %v1441
  %2048 = vmatprep.subr.bf16.mxu0 %v1446
  %2049 = vmatpush1.bf16.msra.mxu0 %v1445
  %2050 = vmatprep.subr.bf16.mxu0 %v1450
  %2051 = vmatpush1.bf16.msra.mxu0 %v1449
  %2052 = vmatprep.subr.bf16.mxu0 %v1454
  %2053 = vmatpush1.bf16.msra.mxu0 %v1453
  %2054 = vmatprep.subr.bf16.mxu0 %v1458
  %2055 = vmatpush1.bf16.msra.mxu0 %v1457
  %2056 = vmatprep.subr.bf16.mxu0 %v1462
  %2057 = vmatpush1.bf16.msra.mxu0 %v1461
  %2058 = vmatprep.subr.bf16.mxu0 %v1466
  %2059 = vmatpush1.bf16.msra.mxu0 %v1465
  %2060 = vmatprep.subr.bf16.mxu0 %v1470
  %2061 = vmatpush1.bf16.msra.mxu0 %v1469
  %2062 = vmatprep.subr.bf16.mxu0 %v1474
  %2063 = vmatpush1.bf16.msra.mxu0 %v1473
  %2064 = vmatprep.subr.bf16.mxu0 %v1478
  %2065 = vmatpush1.bf16.msra.mxu0 %v1477
  %2066 = vmatprep.subr.bf16.mxu0 %v1482
  %2067 = vmatpush1.bf16.msra.mxu0 %v1481
  %2068 = vmatprep.subr.bf16.mxu0 %v1486
  %2069 = vmatpush1.bf16.msra.mxu0 %v1485
  %2070 = vmatprep.subr.bf16.mxu0 %v1490
  %2071 = vmatpush1.bf16.msra.mxu0 %v1489
  %2072 = vmatprep.subr.bf16.mxu0 %v1494
  %2073 = vmatpush1.bf16.msra.mxu0 %v1493
  %2074 = vmatprep.subr.bf16.mxu0 %v1498
  %2075 = vmatpush1.bf16.msra.mxu0 %v1497
  %2076 = vmatprep.subr.bf16.mxu0 %v1502
  %2077 = vmatpush1.bf16.msra.mxu0 %v1501
  %2078 = vmatprep.mubr.bf16.mxu0 %v470
  %2079 = vmatmul.mubr.bf16.gmra.mrb[0].mxu0 %v469
  %v2080 = vpop.f32.mrb[0].mxu0
  %v2081 = vadd.f32 %v2040, %v2080
  %v2082 = vpop.f32.mrb[0].mxu0
  %v2083 = vadd.f32 %v2042, %v2082
  %v2084 = vpop.f32.mrb[0].mxu0
  %v2085 = vpop.f32.mrb[0].mxu0
  %2086 = vdwg.mxu0
  %v2087 = vmax.f32 %v1917, 0.0
  %v2088 = vmax.f32 %v1919, 0.0
  %v2089 = vmax.f32 %v2081, 0.0
  %v2090 = vmax.f32 %v2083, 0.0
  %v2091 = vld [vmem:[%s3] sm:$0xff]
  %v2092 = vld [vmem:[%s3 + $0x8] sm:$0xff]
  %v2093 = vld [vmem:[%s3 + $0x10] sm:$0xff]
  %v2094 = vld [vmem:[%s3 + $0x18] sm:$0xff]
  %v2095 = vld [vmem:[%s3 + $0x20] sm:$0xff]
  %v2096 = vld [vmem:[%s3 + $0x28] sm:$0xff]
  %v2097 = vld [vmem:[%s3 + $0x30] sm:$0xff]
  %v2098 = vld [vmem:[%s3 + $0x38] sm:$0xff]
  %v2099 = vld [vmem:[%s3 + $0x40] sm:$0xff]
  %v2100 = vld [vmem:[%s3 + $0x48] sm:$0xff]
  %v2101 = vld [vmem:[%s3 + $0x50] sm:$0xff]
  %v2102 = vld [vmem:[%s3 + $0x58] sm:$0xff]
  %v2103 = vld [vmem:[%s3 + $0x60] sm:$0xff]
  %v2104 = vld [vmem:[%s3 + $0x68] sm:$0xff]
  %v2105 = vld [vmem:[%s3 + $0x70] sm:$0xff]
  %v2106 = vld [vmem:[%s3 + $0x78] sm:$0xff]
  %v2107 = vld [vmem:[%s3 + $0x80] sm:$0xff]
  %v2108 = vld [vmem:[%s3 + $0x88] sm:$0xff]
  %v2109 = vld [vmem:[%s3 + $0x90] sm:$0xff]
  %v2110 = vld [vmem:[%s3 + $0x98] sm:$0xff]
  %v2111 = vld [vmem:[%s3 + $0xa0] sm:$0xff]
  %v2112 = vld [vmem:[%s3 + $0xa8] sm:$0xff]
  %v2113 = vld [vmem:[%s3 + $0xb0] sm:$0xff]
  %v2114 = vld [vmem:[%s3 + $0xb8] sm:$0xff]
  %v2115 = vld [vmem:[%s3 + $0xc0] sm:$0xff]
  %v2116 = vld [vmem:[%s3 + $0xc8] sm:$0xff]
  %v2117 = vld [vmem:[%s3 + $0xd0] sm:$0xff]
  %v2118 = vld [vmem:[%s3 + $0xd8] sm:$0xff]
  %v2119 = vld [vmem:[%s3 + $0xe0] sm:$0xff]
  %v2120 = vld [vmem:[%s3 + $0xe8] sm:$0xff]
  %v2121 = vld [vmem:[%s3 + $0xf0] sm:$0xff]
  %v2122 = vld [vmem:[%s3 + $0xf8] sm:$0xff]
  %v2123 = vld [vmem:[%s3 + $0x100] sm:$0xff]
  %v2124 = vld [vmem:[%s3 + $0x108] sm:$0xff]
  %v2125 = vld [vmem:[%s3 + $0x110] sm:$0xff]
  %v2126 = vld [vmem:[%s3 + $0x118] sm:$0xff]
  %v2127 = vld [vmem:[%s3 + $0x120] sm:$0xff]
  %v2128 = vld [vmem:[%s3 + $0x128] sm:$0xff]
  %v2129 = vld [vmem:[%s3 + $0x130] sm:$0xff]
  %v2130 = vld [vmem:[%s3 + $0x138] sm:$0xff]
  %v2131 = vld [vmem:[%s3 + $0x140] sm:$0xff]
  %v2132 = vld [vmem:[%s3 + $0x148] sm:$0xff]
  %v2133 = vld [vmem:[%s3 + $0x150] sm:$0xff]
  %v2134 = vld [vmem:[%s3 + $0x158] sm:$0xff]
  %v2135 = vld [vmem:[%s3 + $0x160] sm:$0xff]
  %v2136 = vld [vmem:[%s3 + $0x168] sm:$0xff]
  %v2137 = vld [vmem:[%s3 + $0x170] sm:$0xff]
  %v2138 = vld [vmem:[%s3 + $0x178] sm:$0xff]
  %v2139 = vld [vmem:[%s3 + $0x180] sm:$0xff]
  %v2140 = vld [vmem:[%s3 + $0x188] sm:$0xff]
  %v2141 = vld [vmem:[%s3 + $0x190] sm:$0xff]
  %v2142 = vld [vmem:[%s3 + $0x198] sm:$0xff]
  %v2143 = vld [vmem:[%s3 + $0x1a0] sm:$0xff]
  %v2144 = vld [vmem:[%s3 + $0x1a8] sm:$0xff]
  %v2145 = vld [vmem:[%s3 + $0x1b0] sm:$0xff]
  %v2146 = vld [vmem:[%s3 + $0x1b8] sm:$0xff]
  %v2147 = vld [vmem:[%s3 + $0x1c0] sm:$0xff]
  %v2148 = vld [vmem:[%s3 + $0x1c8] sm:$0xff]
  %v2149 = vld [vmem:[%s3 + $0x1d0] sm:$0xff]
  %v2150 = vld [vmem:[%s3 + $0x1d8] sm:$0xff]
  %v2151 = vld [vmem:[%s3 + $0x1e0] sm:$0xff]
  %v2152 = vld [vmem:[%s3 + $0x1e8] sm:$0xff]
  %v2153 = vld [vmem:[%s3 + $0x1f0] sm:$0xff]
  %v2154 = vld [vmem:[%s3 + $0x1f8] sm:$0xff]
  %v2155 = vpack.c.bf16 %v2087, %v2087
  %v2156 = vpack.c.bf16 %v2088, %v2088
  %v2157 = vpack.c.bf16 %v2089, %v2089
  %v2158 = vpack.c.bf16 %v2090, %v2090
  %v2159 = vld [vmem:[%s4] sm:$0x3]
  %v2161 = vlaneseq
  %v2162 = vshrl.u32 %v2161, 7
  %v2163 = vsub.s32 0, %v2162
  %v2164 = vrot.slane %v2159, %v2163
  %v2165 = vlaneseq
  %v2166 = vshrl.u32 %v2165, 7
  %v2167 = vsub.s32 1, %v2166
  %v2168 = vrot.slane %v2159, %v2167
  %v2235 = vunpack.c.l.b16 %v2091
  %v2236 = vunpack.c.h.b16 %v2091
  %v2237 = vunpack.c.l.b16 %v2092
  %v2238 = vunpack.c.h.b16 %v2092
  %v2239 = vunpack.c.l.b16 %v2093
  %v2240 = vunpack.c.h.b16 %v2093
  %v2241 = vunpack.c.l.b16 %v2094
  %v2242 = vunpack.c.h.b16 %v2094
  %v2243 = vunpack.c.l.b16 %v2095
  %v2244 = vunpack.c.h.b16 %v2095
  %v2245 = vunpack.c.l.b16 %v2096
  %v2246 = vunpack.c.h.b16 %v2096
  %v2247 = vunpack.c.l.b16 %v2097
  %v2248 = vunpack.c.h.b16 %v2097
  %v2249 = vunpack.c.l.b16 %v2098
  %v2250 = vunpack.c.h.b16 %v2098
  %v2251 = vunpack.c.l.b16 %v2099
  %v2252 = vunpack.c.h.b16 %v2099
  %v2253 = vunpack.c.l.b16 %v2100
  %v2254 = vunpack.c.h.b16 %v2100
  %v2255 = vunpack.c.l.b16 %v2101
  %v2256 = vunpack.c.h.b16 %v2101
  %v2257 = vunpack.c.l.b16 %v2102
  %v2258 = vunpack.c.h.b16 %v2102
  %v2259 = vunpack.c.l.b16 %v2103
  %v2260 = vunpack.c.h.b16 %v2103
  %v2261 = vunpack.c.l.b16 %v2104
  %v2262 = vunpack.c.h.b16 %v2104
  %v2263 = vunpack.c.l.b16 %v2105
  %v2264 = vunpack.c.h.b16 %v2105
  %v2265 = vunpack.c.l.b16 %v2106
  %v2266 = vunpack.c.h.b16 %v2106
  %v2267 = vunpack.c.l.b16 %v2107
  %v2268 = vunpack.c.h.b16 %v2107
  %v2269 = vunpack.c.l.b16 %v2108
  %v2270 = vunpack.c.h.b16 %v2108
  %v2271 = vunpack.c.l.b16 %v2109
  %v2272 = vunpack.c.h.b16 %v2109
  %v2273 = vunpack.c.l.b16 %v2110
  %v2274 = vunpack.c.h.b16 %v2110
  %v2275 = vunpack.c.l.b16 %v2111
  %v2276 = vunpack.c.h.b16 %v2111
  %v2277 = vunpack.c.l.b16 %v2112
  %v2278 = vunpack.c.h.b16 %v2112
  %v2279 = vunpack.c.l.b16 %v2113
  %v2280 = vunpack.c.h.b16 %v2113
  %v2281 = vunpack.c.l.b16 %v2114
  %v2282 = vunpack.c.h.b16 %v2114
  %v2283 = vunpack.c.l.b16 %v2115
  %v2284 = vunpack.c.h.b16 %v2115
  %v2285 = vunpack.c.l.b16 %v2116
  %v2286 = vunpack.c.h.b16 %v2116
  %v2287 = vunpack.c.l.b16 %v2117
  %v2288 = vunpack.c.h.b16 %v2117
  %v2289 = vunpack.c.l.b16 %v2118
  %v2290 = vunpack.c.h.b16 %v2118
  %v2291 = vunpack.c.l.b16 %v2119
  %v2292 = vunpack.c.h.b16 %v2119
  %v2293 = vunpack.c.l.b16 %v2120
  %v2294 = vunpack.c.h.b16 %v2120
  %v2295 = vunpack.c.l.b16 %v2121
  %v2296 = vunpack.c.h.b16 %v2121
  %v2297 = vunpack.c.l.b16 %v2122
  %v2298 = vunpack.c.h.b16 %v2122
  %v2299 = vunpack.c.l.b16 %v2123
  %v2300 = vunpack.c.h.b16 %v2123
  %v2301 = vunpack.c.l.b16 %v2124
  %v2302 = vunpack.c.h.b16 %v2124
  %v2303 = vunpack.c.l.b16 %v2125
  %v2304 = vunpack.c.h.b16 %v2125
  %v2305 = vunpack.c.l.b16 %v2126
  %v2306 = vunpack.c.h.b16 %v2126
  %v2307 = vunpack.c.l.b16 %v2127
  %v2308 = vunpack.c.h.b16 %v2127
  %v2309 = vunpack.c.l.b16 %v2128
  %v2310 = vunpack.c.h.b16 %v2128
  %v2311 = vunpack.c.l.b16 %v2129
  %v2312 = vunpack.c.h.b16 %v2129
  %v2313 = vunpack.c.l.b16 %v2130
  %v2314 = vunpack.c.h.b16 %v2130
  %v2315 = vunpack.c.l.b16 %v2131
  %v2316 = vunpack.c.h.b16 %v2131
  %v2317 = vunpack.c.l.b16 %v2132
  %v2318 = vunpack.c.h.b16 %v2132
  %v2319 = vunpack.c.l.b16 %v2133
  %v2320 = vunpack.c.h.b16 %v2133
  %v2321 = vunpack.c.l.b16 %v2134
  %v2322 = vunpack.c.h.b16 %v2134
  %v2323 = vunpack.c.l.b16 %v2135
  %v2324 = vunpack.c.h.b16 %v2135
  %v2325 = vunpack.c.l.b16 %v2136
  %v2326 = vunpack.c.h.b16 %v2136
  %v2327 = vunpack.c.l.b16 %v2137
  %v2328 = vunpack.c.h.b16 %v2137
  %v2329 = vunpack.c.l.b16 %v2138
  %v2330 = vunpack.c.h.b16 %v2138
  %v2331 = vunpack.c.l.b16 %v2139
  %v2332 = vunpack.c.h.b16 %v2139
  %v2333 = vunpack.c.l.b16 %v2140
  %v2334 = vunpack.c.h.b16 %v2140
  %v2335 = vunpack.c.l.b16 %v2141
  %v2336 = vunpack.c.h.b16 %v2141
  %v2337 = vunpack.c.l.b16 %v2142
  %v2338 = vunpack.c.h.b16 %v2142
  %v2339 = vunpack.c.l.b16 %v2143
  %v2340 = vunpack.c.h.b16 %v2143
  %v2341 = vunpack.c.l.b16 %v2144
  %v2342 = vunpack.c.h.b16 %v2144
  %v2343 = vunpack.c.l.b16 %v2145
  %v2344 = vunpack.c.h.b16 %v2145
  %v2345 = vunpack.c.l.b16 %v2146
  %v2346 = vunpack.c.h.b16 %v2146
  %v2347 = vunpack.c.l.b16 %v2147
  %v2348 = vunpack.c.h.b16 %v2147
  %v2349 = vunpack.c.l.b16 %v2148
  %v2350 = vunpack.c.h.b16 %v2148
  %v2351 = vunpack.c.l.b16 %v2149
  %v2352 = vunpack.c.h.b16 %v2149
  %v2353 = vunpack.c.l.b16 %v2150
  %v2354 = vunpack.c.h.b16 %v2150
  %v2355 = vunpack.c.l.b16 %v2151
  %v2356 = vunpack.c.h.b16 %v2151
  %v2357 = vunpack.c.l.b16 %v2152
  %v2358 = vunpack.c.h.b16 %v2152
  %v2359 = vunpack.c.l.b16 %v2153
  %v2360 = vunpack.c.h.b16 %v2153
  %v2361 = vunpack.c.l.b16 %v2154
  %v2362 = vunpack.c.h.b16 %v2154
  %v2363 = vpack.c.b16 %v2237, %v2235
  %v2364 = vpack.c.b16 %v2238, %v2236
  %v2365 = vpack.c.b16 %v2241, %v2239
  %v2366 = vpack.c.b16 %v2242, %v2240
  %v2367 = vpack.c.b16 %v2245, %v2243
  %v2368 = vpack.c.b16 %v2246, %v2244
  %v2369 = vpack.c.b16 %v2249, %v2247
  %v2370 = vpack.c.b16 %v2250, %v2248
  %v2371 = vpack.c.b16 %v2253, %v2251
  %v2372 = vpack.c.b16 %v2254, %v2252
  %v2373 = vpack.c.b16 %v2257, %v2255
  %v2374 = vpack.c.b16 %v2258, %v2256
  %v2375 = vpack.c.b16 %v2261, %v2259
  %v2376 = vpack.c.b16 %v2262, %v2260
  %v2377 = vpack.c.b16 %v2265, %v2263
  %v2378 = vpack.c.b16 %v2266, %v2264
  %v2379 = vpack.c.b16 %v2269, %v2267
  %v2380 = vpack.c.b16 %v2270, %v2268
  %v2381 = vpack.c.b16 %v2273, %v2271
  %v2382 = vpack.c.b16 %v2274, %v2272
  %v2383 = vpack.c.b16 %v2277, %v2275
  %v2384 = vpack.c.b16 %v2278, %v2276
  %v2385 = vpack.c.b16 %v2281, %v2279
  %v2386 = vpack.c.b16 %v2282, %v2280
  %v2387 = vpack.c.b16 %v2285, %v2283
  %v2388 = vpack.c.b16 %v2286, %v2284
  %v2389 = vpack.c.b16 %v2289, %v2287
  %v2390 = vpack.c.b16 %v2290, %v2288
  %v2391 = vpack.c.b16 %v2293, %v2291
  %v2392 = vpack.c.b16 %v2294, %v2292
  %v2393 = vpack.c.b16 %v2297, %v2295
  %v2394 = vpack.c.b16 %v2298, %v2296
  %v2395 = vpack.c.b16 %v2301, %v2299
  %v2396 = vpack.c.b16 %v2302, %v2300
  %v2397 = vpack.c.b16 %v2305, %v2303
  %v2398 = vpack.c.b16 %v2306, %v2304
  %v2399 = vpack.c.b16 %v2309, %v2307
  %v2400 = vpack.c.b16 %v2310, %v2308
  %v2401 = vpack.c.b16 %v2313, %v2311
  %v2402 = vpack.c.b16 %v2314, %v2312
  %v2403 = vpack.c.b16 %v2317, %v2315
  %v2404 = vpack.c.b16 %v2318, %v2316
  %v2405 = vpack.c.b16 %v2321, %v2319
  %v2406 = vpack.c.b16 %v2322, %v2320
  %v2407 = vpack.c.b16 %v2325, %v2323
  %v2408 = vpack.c.b16 %v2326, %v2324
  %v2409 = vpack.c.b16 %v2329, %v2327
  %v2410 = vpack.c.b16 %v2330, %v2328
  %v2411 = vpack.c.b16 %v2333, %v2331
  %v2412 = vpack.c.b16 %v2334, %v2332
  %v2413 = vpack.c.b16 %v2337, %v2335
  %v2414 = vpack.c.b16 %v2338, %v2336
  %v2415 = vpack.c.b16 %v2341, %v2339
  %v2416 = vpack.c.b16 %v2342, %v2340
  %v2417 = vpack.c.b16 %v2345, %v2343
  %v2418 = vpack.c.b16 %v2346, %v2344
  %v2419 = vpack.c.b16 %v2349, %v2347
  %v2420 = vpack.c.b16 %v2350, %v2348
  %v2421 = vpack.c.b16 %v2353, %v2351
  %v2422 = vpack.c.b16 %v2354, %v2352
  %v2423 = vpack.c.b16 %v2357, %v2355
  %v2424 = vpack.c.b16 %v2358, %v2356
  %v2425 = vpack.c.b16 %v2361, %v2359
  %v2426 = vpack.c.b16 %v2362, %v2360
  %2491 = vmatprep.subr.bf16.mxu0 %v2364
  %2492 = vmatpush1.bf16.msra.mxu0 %v2363
  %2493 = vmatprep.subr.bf16.mxu0 %v2366
  %2494 = vmatpush1.bf16.msra.mxu0 %v2365
  %2495 = vmatprep.subr.bf16.mxu0 %v2368
  %2496 = vmatpush1.bf16.msra.mxu0 %v2367
  %2497 = vmatprep.subr.bf16.mxu0 %v2370
  %2498 = vmatpush1.bf16.msra.mxu0 %v2369
  %2499 = vmatprep.subr.bf16.mxu0 %v2372
  %2500 = vmatpush1.bf16.msra.mxu0 %v2371
  %2501 = vmatprep.subr.bf16.mxu0 %v2374
  %2502 = vmatpush1.bf16.msra.mxu0 %v2373
  %2503 = vmatprep.subr.bf16.mxu0 %v2376
  %2504 = vmatpush1.bf16.msra.mxu0 %v2375
  %2505 = vmatprep.subr.bf16.mxu0 %v2378
  %2506 = vmatpush1.bf16.msra.mxu0 %v2377
  %2507 = vmatprep.subr.bf16.mxu0 %v2380
  %2508 = vmatpush1.bf16.msra.mxu0 %v2379
  %2509 = vmatprep.subr.bf16.mxu0 %v2382
  %2510 = vmatpush1.bf16.msra.mxu0 %v2381
  %2511 = vmatprep.subr.bf16.mxu0 %v2384
  %2512 = vmatpush1.bf16.msra.mxu0 %v2383
  %2513 = vmatprep.subr.bf16.mxu0 %v2386
  %2514 = vmatpush1.bf16.msra.mxu0 %v2385
  %2515 = vmatprep.subr.bf16.mxu0 %v2388
  %2516 = vmatpush1.bf16.msra.mxu0 %v2387
  %2517 = vmatprep.subr.bf16.mxu0 %v2390
  %2518 = vmatpush1.bf16.msra.mxu0 %v2389
  %2519 = vmatprep.subr.bf16.mxu0 %v2392
  %2520 = vmatpush1.bf16.msra.mxu0 %v2391
  %2521 = vmatprep.subr.bf16.mxu0 %v2394
  %2522 = vmatpush1.bf16.msra.mxu0 %v2393
  %2523 = vmatprep.mubr.bf16.mxu0 %v2156
  %2524 = vmatmul.mubr.bf16.gmra.mrb[0].mxu0 %v2155
  %v2525 = vpop.f32.mrb[0].mxu0
  %v2526 = vadd.f32 %v2164, %v2525
  %v2527 = vpop.f32.mrb[0].mxu0
  %v2528 = vadd.f32 %v2168, %v2527
  %v2529 = vpop.f32.mrb[0].mxu0
  %v2530 = vpop.f32.mrb[0].mxu0
  %2531 = vdwg.mxu0
  %2532 = vmatprep.subr.bf16.mxu0 %v2396
  %2533 = vmatpush1.bf16.msra.mxu0 %v2395
  %2534 = vmatprep.subr.bf16.mxu0 %v2398
  %2535 = vmatpush1.bf16.msra.mxu0 %v2397
  %2536 = vmatprep.subr.bf16.mxu0 %v2400
  %2537 = vmatpush1.bf16.msra.mxu0 %v2399
  %2538 = vmatprep.subr.bf16.mxu0 %v2402
  %2539 = vmatpush1.bf16.msra.mxu0 %v2401
  %2540 = vmatprep.subr.bf16.mxu0 %v2404
  %2541 = vmatpush1.bf16.msra.mxu0 %v2403
  %2542 = vmatprep.subr.bf16.mxu0 %v2406
  %2543 = vmatpush1.bf16.msra.mxu0 %v2405
  %2544 = vmatprep.subr.bf16.mxu0 %v2408
  %2545 = vmatpush1.bf16.msra.mxu0 %v2407
  %2546 = vmatprep.subr.bf16.mxu0 %v2410
  %2547 = vmatpush1.bf16.msra.mxu0 %v2409
  %2548 = vmatprep.subr.bf16.mxu0 %v2412
  %2549 = vmatpush1.bf16.msra.mxu0 %v2411
  %2550 = vmatprep.subr.bf16.mxu0 %v2414
  %2551 = vmatpush1.bf16.msra.mxu0 %v2413
  %2552 = vmatprep.subr.bf16.mxu0 %v2416
  %2553 = vmatpush1.bf16.msra.mxu0 %v2415
  %2554 = vmatprep.subr.bf16.mxu0 %v2418
  %2555 = vmatpush1.bf16.msra.mxu0 %v2417
  %2556 = vmatprep.subr.bf16.mxu0 %v2420
  %2557 = vmatpush1.bf16.msra.mxu0 %v2419
  %2558 = vmatprep.subr.bf16.mxu0 %v2422
  %2559 = vmatpush1.bf16.msra.mxu0 %v2421
  %2560 = vmatprep.subr.bf16.mxu0 %v2424
  %2561 = vmatpush1.bf16.msra.mxu0 %v2423
  %2562 = vmatprep.subr.bf16.mxu0 %v2426
  %2563 = vmatpush1.bf16.msra.mxu0 %v2425
  %2564 = vmatprep.mubr.bf16.mxu0 %v2158
  %2565 = vmatmul.mubr.bf16.gmra.mrb[0].mxu0 %v2157
  %v2566 = vpop.f32.mrb[0].mxu0
  %v2567 = vadd.f32 %v2526, %v2566
  %v2568 = vpop.f32.mrb[0].mxu0
  %v2569 = vadd.f32 %v2528, %v2568
  %v2570 = vpop.f32.mrb[0].mxu0
  %v2571 = vpop.f32.mrb[0].mxu0
  %2572 = vdwg.mxu0
  %v2573 = vmax.f32 %v2567, 0.0
  %v2574 = vmax.f32 %v2569, 0.0
  %v2575 = vld [vmem:[%s5] sm:$0xff]
  %v2576 = vld [vmem:[%s5 + $0x8] sm:$0xff]
  %v2577 = vld [vmem:[%s5 + $0x10] sm:$0xff]
  %v2578 = vld [vmem:[%s5 + $0x18] sm:$0xff]
  %v2579 = vld [vmem:[%s5 + $0x20] sm:$0xff]
  %v2580 = vld [vmem:[%s5 + $0x28] sm:$0xff]
  %v2581 = vld [vmem:[%s5 + $0x30] sm:$0xff]
  %v2582 = vld [vmem:[%s5 + $0x38] sm:$0xff]
  %v2583 = vld [vmem:[%s5 + $0x40] sm:$0xff]
  %v2584 = vld [vmem:[%s5 + $0x48] sm:$0xff]
  %v2585 = vld [vmem:[%s5 + $0x50] sm:$0xff]
  %v2586 = vld [vmem:[%s5 + $0x58] sm:$0xff]
  %v2587 = vld [vmem:[%s5 + $0x60] sm:$0xff]
  %v2588 = vld [vmem:[%s5 + $0x68] sm:$0xff]
  %v2589 = vld [vmem:[%s5 + $0x70] sm:$0xff]
  %v2590 = vld [vmem:[%s5 + $0x78] sm:$0xff]
  %v2591 = vld [vmem:[%s5 + $0x80] sm:$0xff]
  %v2592 = vld [vmem:[%s5 + $0x88] sm:$0xff]
  %v2593 = vld [vmem:[%s5 + $0x90] sm:$0xff]
  %v2594 = vld [vmem:[%s5 + $0x98] sm:$0xff]
  %v2595 = vld [vmem:[%s5 + $0xa0] sm:$0xff]
  %v2596 = vld [vmem:[%s5 + $0xa8] sm:$0xff]
  %v2597 = vld [vmem:[%s5 + $0xb0] sm:$0xff]
  %v2598 = vld [vmem:[%s5 + $0xb8] sm:$0xff]
  %v2599 = vld [vmem:[%s5 + $0xc0] sm:$0xff]
  %v2600 = vld [vmem:[%s5 + $0xc8] sm:$0xff]
  %v2601 = vld [vmem:[%s5 + $0xd0] sm:$0xff]
  %v2602 = vld [vmem:[%s5 + $0xd8] sm:$0xff]
  %v2603 = vld [vmem:[%s5 + $0xe0] sm:$0xff]
  %v2604 = vld [vmem:[%s5 + $0xe8] sm:$0xff]
  %v2605 = vld [vmem:[%s5 + $0xf0] sm:$0xff]
  %v2606 = vld [vmem:[%s5 + $0xf8] sm:$0xff]
  %v2607 = vld [vmem:[%s6] sm:$0x1]
  %v2609 = vlaneseq
  %v2610 = vshrl.u32 %v2609, 7
  %v2611 = vsub.s32 0, %v2610
  %v2612 = vrot.slane %v2607, %v2611
  %2614 = vmatprep.subr.mxu0 0.0
  %2615 = vmatpush1.msra.mxu0 %v2575
  %2616 = vmatprep.subr.mxu0 0.0
  %2617 = vmatpush1.msra.mxu0 %v2576
  %2618 = vmatprep.subr.mxu0 0.0
  %2619 = vmatpush1.msra.mxu0 %v2577
  %2620 = vmatprep.subr.mxu0 0.0
  %2621 = vmatpush1.msra.mxu0 %v2578
  %2622 = vmatprep.subr.mxu0 0.0
  %2623 = vmatpush1.msra.mxu0 %v2579
  %2624 = vmatprep.subr.mxu0 0.0
  %2625 = vmatpush1.msra.mxu0 %v2580
  %2626 = vmatprep.subr.mxu0 0.0
  %2627 = vmatpush1.msra.mxu0 %v2581
  %2628 = vmatprep.subr.mxu0 0.0
  %2629 = vmatpush1.msra.mxu0 %v2582
  %2630 = vmatprep.subr.mxu0 0.0
  %2631 = vmatpush1.msra.mxu0 %v2583
  %2632 = vmatprep.subr.mxu0 0.0
  %2633 = vmatpush1.msra.mxu0 %v2584
  %2634 = vmatprep.subr.mxu0 0.0
  %2635 = vmatpush1.msra.mxu0 %v2585
  %2636 = vmatprep.subr.mxu0 0.0
  %2637 = vmatpush1.msra.mxu0 %v2586
  %2638 = vmatprep.subr.mxu0 0.0
  %2639 = vmatpush1.msra.mxu0 %v2587
  %2640 = vmatprep.subr.mxu0 0.0
  %2641 = vmatpush1.msra.mxu0 %v2588
  %2642 = vmatprep.subr.mxu0 0.0
  %2643 = vmatpush1.msra.mxu0 %v2589
  %2644 = vmatprep.subr.mxu0 0.0
  %2645 = vmatpush1.msra.mxu0 %v2590
  %2646 = vmatprep.subr.mxu0 0.0
  %2647 = vmatpush1.msra.mxu0 %v2591
  %2648 = vmatprep.subr.mxu0 0.0
  %2649 = vmatpush1.msra.mxu0 %v2592
  %2650 = vmatprep.subr.mxu0 0.0
  %2651 = vmatpush1.msra.mxu0 %v2593
  %2652 = vmatprep.subr.mxu0 0.0
  %2653 = vmatpush1.msra.mxu0 %v2594
  %2654 = vmatprep.subr.mxu0 0.0
  %2655 = vmatpush1.msra.mxu0 %v2595
  %2656 = vmatprep.subr.mxu0 0.0
  %2657 = vmatpush1.msra.mxu0 %v2596
  %2658 = vmatprep.subr.mxu0 0.0
  %2659 = vmatpush1.msra.mxu0 %v2597
  %2660 = vmatprep.subr.mxu0 0.0
  %2661 = vmatpush1.msra.mxu0 %v2598
  %2662 = vmatprep.subr.mxu0 0.0
  %2663 = vmatpush1.msra.mxu0 %v2599
  %2664 = vmatprep.subr.mxu0 0.0
  %2665 = vmatpush1.msra.mxu0 %v2600
  %2666 = vmatprep.subr.mxu0 0.0
  %2667 = vmatpush1.msra.mxu0 %v2601
  %2668 = vmatprep.subr.mxu0 0.0
  %2669 = vmatpush1.msra.mxu0 %v2602
  %2670 = vmatprep.subr.mxu0 0.0
  %2671 = vmatpush1.msra.mxu0 %v2603
  %2672 = vmatprep.subr.mxu0 0.0
  %2673 = vmatpush1.msra.mxu0 %v2604
  %2674 = vmatprep.subr.mxu0 0.0
  %2675 = vmatpush1.msra.mxu0 %v2605
  %2676 = vmatprep.subr.mxu0 0.0
  %2677 = vmatpush1.msra.mxu0 %v2606
  %2678 = vmatprep.mubr.f32.mxu0 %v2574
  %2679 = vmatmul.mubr.f32.gmra.mrb[0].mxu0 %v2573
  %v2680 = vpop.f32.mrb[0].mxu0
  %v2681 = vadd.f32 %v2612, %v2680
  %v2682 = vpop.f32.mrb[0].mxu0
  %2683 = vdwg.mxu0
  %v2684 = vld [vmem:[%s7] sm:$0x1]
  %v2686 = vlaneseq
  %v2687 = vshrl.u32 %v2686, 7
  %v2688 = vsub.s32 0, %v2687
  %v2689 = vrot.slane %v2684, %v2688
  %v2691 = vadd.f32 %v2681, %v2689
  %vm2692 = vcmask 66560
  %2693 = vst.msk [vmem:[%s9] sm:$0x3] %vm2692, %v2691
  %v2694 = vld [vmem:[%s8] sm:$0xff]
  %v2695 = vld [vmem:[%s8 + $0x8] sm:$0xff]
  %v2696 = vld [vmem:[%s8 + $0x10] sm:$0x1]
  %v2697 = vld [vmem:[%s8 + $0x18] sm:$0x1]
  %vm2698 = vcmask 72704
  %v2700 = vsel %vm2698, %v2691, 0
  %vm2702 = vcmask 1040384
  %v2704 = vsel %vm2702, %v2696, 0
  %v2707 = vsel %vm2702, %v2697, 0
  %2709 = vmatprep.subr.mxu0 %v2695
  %2710 = vmatpush1.msra.mxu0 %v2694
  %2711 = vmatprep.subr.mxu0 %v2707
  %2712 = vmatpush1.msra.mxu0 %v2704
  %2713 = vmatprep.subr.mxu0 0.0
  %2714 = vmatpush1.msra.mxu0 0.0
  %2715 = vmatprep.subr.mxu0 0.0
  %2716 = vmatpush1.msra.mxu0 0.0
  %2717 = vmatprep.subr.mxu0 0.0
  %2718 = vmatpush1.msra.mxu0 0.0
  %2719 = vmatprep.subr.mxu0 0.0
  %2720 = vmatpush1.msra.mxu0 0.0
  %2721 = vmatprep.subr.mxu0 0.0
  %2722 = vmatpush1.msra.mxu0 0.0
  %2723 = vmatprep.subr.mxu0 0.0
  %2724 = vmatpush1.msra.mxu0 0.0
  %2725 = vmatprep.subr.mxu0 0.0
  %2726 = vmatpush1.msra.mxu0 0.0
  %2727 = vmatprep.subr.mxu0 0.0
  %2728 = vmatpush1.msra.mxu0 0.0
  %2729 = vmatprep.subr.mxu0 0.0
  %2730 = vmatpush1.msra.mxu0 0.0
  %2731 = vmatprep.subr.mxu0 0.0
  %2732 = vmatpush1.msra.mxu0 0.0
  %2733 = vmatprep.subr.mxu0 0.0
  %2734 = vmatpush1.msra.mxu0 0.0
  %2735 = vmatprep.subr.mxu0 0.0
  %2736 = vmatpush1.msra.mxu0 0.0
  %2737 = vmatprep.subr.mxu0 0.0
  %2738 = vmatpush1.msra.mxu0 0.0
  %2739 = vmatprep.subr.mxu0 0.0
  %2740 = vmatpush1.msra.mxu0 0.0
  %2741 = vmatprep.subr.mxu0 0.0
  %2742 = vmatpush1.msra.mxu0 0.0
  %2743 = vmatprep.subr.mxu0 0.0
  %2744 = vmatpush1.msra.mxu0 0.0
  %2745 = vmatprep.subr.mxu0 0.0
  %2746 = vmatpush1.msra.mxu0 0.0
  %2747 = vmatprep.subr.mxu0 0.0
  %2748 = vmatpush1.msra.mxu0 0.0
  %2749 = vmatprep.subr.mxu0 0.0
  %2750 = vmatpush1.msra.mxu0 0.0
  %2751 = vmatprep.subr.mxu0 0.0
  %2752 = vmatpush1.msra.mxu0 0.0
  %2753 = vmatprep.subr.mxu0 0.0
  %2754 = vmatpush1.msra.mxu0 0.0
  %2755 = vmatprep.subr.mxu0 0.0
  %2756 = vmatpush1.msra.mxu0 0.0
  %2757 = vmatprep.subr.mxu0 0.0
  %2758 = vmatpush1.msra.mxu0 0.0
  %2759 = vmatprep.subr.mxu0 0.0
  %2760 = vmatpush1.msra.mxu0 0.0
  %2761 = vmatprep.subr.mxu0 0.0
  %2762 = vmatpush1.msra.mxu0 0.0
  %2763 = vmatprep.subr.mxu0 0.0
  %2764 = vmatpush1.msra.mxu0 0.0
  %2765 = vmatprep.subr.mxu0 0.0
  %2766 = vmatpush1.msra.mxu0 0.0
  %2767 = vmatprep.subr.mxu0 0.0
  %2768 = vmatpush1.msra.mxu0 0.0
  %2769 = vmatprep.subr.mxu0 0.0
  %2770 = vmatpush1.msra.mxu0 0.0
  %2771 = vmatprep.subr.mxu0 0.0
  %2772 = vmatpush1.msra.mxu0 0.0
  %2773 = vmatprep.mubr.f32.mxu0 0.0
  %2774 = vmatmul.mubr.f32.gmra.mrb[0].mxu0 %v2700
  %v2775 = vpop.f32.mrb[0].mxu0
  %v2776 = vadd.f32 0.0, %v2775
  %v2777 = vpop.f32.mrb[0].mxu0
  %v2778 = vadd.f32 0.0, %v2777
  %2779 = vdwg.mxu0
  %v2782 = vcombine.low %v2776, %v2778
  %v2784 = vunpack.c.l.s4 1983009808
  %v2785 = vunpack.c.0.s8 %v2784
  %v2786 = vlaneseq
  %v2787 = vshrl.u32 %v2786, 7
  %v2788 = vsub.s32 %v2785, %v2787
  %v2789 = vrot.slane %v2782, %v2788
  %vm2791 = vcmask 1041408
  %vm2792 = vcmask 519170
  %vm2793 = vmor %vm2792, %vm2791
  %2794 = vst.msk [vmem:[%s10] sm:$0xf] %vm2793, %v2789
  // Predicated region
  $region38: #{pointnetcls_forward.5} parent=0 // pred_check
    _
  $region39: #{pointnetcls_forward.5} parent=0 // pred_check_branch
    %2796 = sbr.rel (0) target = $region41
  $region40: #{pointnetcls_forward.5} parent=0 // pred_region
    _
  $region41: #{pointnetcls_forward.5} parent=0 // pred_fallthru
    _
  // Predicated region
  $region42: #{pointnetcls_forward.5} parent=0 // pred_check
    _
  $region43: #{pointnetcls_forward.5} parent=0 // pred_check_branch
    %2798 = sbr.rel (0) target = $region45
  $region44: #{pointnetcls_forward.5} parent=0 // pred_region
    _
  $region45: #{pointnetcls_forward.5} parent=0 // pred_fallthru
    _
  // Predicated region
  $region46: #{pointnetcls_forward.5} parent=0 // pred_check
    _
  $region47: #{pointnetcls_forward.5} parent=0 // pred_check_branch
    %2800 = sbr.rel (0) target = $region49
  $region48: #{pointnetcls_forward.5} parent=0 // pred_region
    _
  $region49: #{pointnetcls_forward.5} parent=0 // pred_fallthru
    _
  // Predicated region
  $region50: #{pointnetcls_forward.5} parent=0 // pred_check
    _
  $region51: #{pointnetcls_forward.5} parent=0 // pred_check_branch
    %2802 = sbr.rel (0) target = $region53
  $region52: #{pointnetcls_forward.5} parent=0 // pred_region
    _
  $region53: #{pointnetcls_forward.5} parent=0 // pred_fallthru
    _

// kernel: pointnetcls_forward.7
$region0: #{pointnetcls_forward.7}
  #allocation0 [shape = 'u32[]', space=smem, size = 0x4, offset = 0x4, fixed_abs, tag = 'smem constant byte address 0x4 - core index']
  #allocation1 [shape = 'u32[144,128]{1,0:T(1,128)}', space=vmem, size = 0x12000, scoped, tag = 'internal scratch']
  %s0 = inlined_call_operand.vmem [shape: f32[2,1,1,1024], index: 0, kind: input, shape index: {}]
  %s1 = inlined_call_operand.vmem [shape: f32[1024,512], index: 1, kind: input, shape index: {}]
  %s2 = inlined_call_operand.vmem [shape: f32[1,512], index: 2, kind: input, shape index: {}]
  %s3 = inlined_call_operand.vmem [shape: f32[512,256], index: 3, kind: input, shape index: {}]
  %s4 = inlined_call_operand.vmem [shape: f32[1,256], index: 4, kind: input, shape index: {}]
  %s5 = inlined_call_operand.vmem [shape: f32[256,2], index: 5, kind: input, shape index: {}]
  %s6 = inlined_call_operand.vmem [shape: f32[1,2], index: 6, kind: input, shape index: {}]
  %s7 = inlined_call_operand.hbm [shape: f32[2,2], index: 7, kind: output, shape index: {}]
  %s8 = sld [smem:[#allocation0]]
  $region38: #{pointnetcls_forward.7} parent=0
    _
  %s10 = ssub.s32 1, %s8
  %s11 = scalar_select 0, %s10, %s8
  $region1: #{pointnetcls_forward.7} parent=0
    #allocation2 [shape = 'u8[1024]{0}', space=vmem, size = 0x400, scoped, tag = 'output window, operand 0, single buffered']
    #allocation3 [shape = 's32[1]{0}', space=sflag, size = 0x4, scoped, tag = 'scoped memory for pointnetcls_forward.7']
    %12 = vsyncpa [#allocation3], 0
    // Predicated region
    $region2: #{pointnetcls_forward.7} parent=1 // pred_check
      _
    $region3: #{pointnetcls_forward.7} parent=1 // pred_check_branch
      %14 = sbr.rel (0) target = $region5
    $region4: #{pointnetcls_forward.7} parent=1 // pred_region
      _
    $region5: #{pointnetcls_forward.7} parent=1 // pred_fallthru
      _
    // Predicated region
    $region6: #{pointnetcls_forward.7} parent=1 // pred_check
      _
    $region7: #{pointnetcls_forward.7} parent=1 // pred_check_branch
      %16 = sbr.rel (0) target = $region9
    $region8: #{pointnetcls_forward.7} parent=1 // pred_region
      _
    $region9: #{pointnetcls_forward.7} parent=1 // pred_fallthru
      _
    // Predicated region
    $region10: #{pointnetcls_forward.7} parent=1 // pred_check
      _
    $region11: #{pointnetcls_forward.7} parent=1 // pred_check_branch
      %18 = sbr.rel (0) target = $region13
    $region12: #{pointnetcls_forward.7} parent=1 // pred_region
      _
    $region13: #{pointnetcls_forward.7} parent=1 // pred_fallthru
      _
    // Predicated region
    $region14: #{pointnetcls_forward.7} parent=1 // pred_check
      _
    $region15: #{pointnetcls_forward.7} parent=1 // pred_check_branch
      %20 = sbr.rel (0) target = $region17
    $region16: #{pointnetcls_forward.7} parent=1 // pred_region
      _
    $region17: #{pointnetcls_forward.7} parent=1 // pred_fallthru
      _
    // Predicated region
    $region18: #{pointnetcls_forward.7} parent=1 // pred_check
      _
    $region19: #{pointnetcls_forward.7} parent=1 // pred_check_branch
      %22 = sbr.rel (0) target = $region21
    $region20: #{pointnetcls_forward.7} parent=1 // pred_region
      _
    $region21: #{pointnetcls_forward.7} parent=1 // pred_fallthru
      _
    // Predicated region
    $region22: #{pointnetcls_forward.7} parent=1 // pred_check
      _
    $region23: #{pointnetcls_forward.7} parent=1 // pred_check_branch
      %24 = sbr.rel (0) target = $region25
    $region24: #{pointnetcls_forward.7} parent=1 // pred_region
      _
    $region25: #{pointnetcls_forward.7} parent=1 // pred_fallthru
      _
    // Predicated region
    $region26: #{pointnetcls_forward.7} parent=1 // pred_check
      _
    $region27: #{pointnetcls_forward.7} parent=1 // pred_check_branch
      %26 = sbr.rel (0) target = $region29
    $region28: #{pointnetcls_forward.7} parent=1 // pred_region
      _
    $region29: #{pointnetcls_forward.7} parent=1 // pred_fallthru
      _
    %v27 = vld [vmem:[%s0] sm:$0xff]
    %v28 = vld [vmem:[%s0 + $0x8] sm:$0xff]
    %v29 = vld [vmem:[%s1] sm:$0xff]
    %v30 = vld [vmem:[%s1 + $0x8] sm:$0xff]
    %v31 = vld [vmem:[%s1 + $0x10] sm:$0xff]
    %v32 = vld [vmem:[%s1 + $0x18] sm:$0xff]
    %v33 = vld [vmem:[%s1 + $0x20] sm:$0xff]
    %v34 = vld [vmem:[%s1 + $0x28] sm:$0xff]
    %v35 = vld [vmem:[%s1 + $0x30] sm:$0xff]
    %v36 = vld [vmem:[%s1 + $0x38] sm:$0xff]
    %v37 = vld [vmem:[%s1 + $0x40] sm:$0xff]
    %v38 = vld [vmem:[%s1 + $0x48] sm:$0xff]
    %v39 = vld [vmem:[%s1 + $0x50] sm:$0xff]
    %v40 = vld [vmem:[%s1 + $0x58] sm:$0xff]
    %v41 = vld [vmem:[%s1 + $0x60] sm:$0xff]
    %v42 = vld [vmem:[%s1 + $0x68] sm:$0xff]
    %v43 = vld [vmem:[%s1 + $0x70] sm:$0xff]
    %v44 = vld [vmem:[%s1 + $0x78] sm:$0xff]
    %v45 = vld [vmem:[%s1 + $0x80] sm:$0xff]
    %v46 = vld [vmem:[%s1 + $0x88] sm:$0xff]
    %v47 = vld [vmem:[%s1 + $0x90] sm:$0xff]
    %v48 = vld [vmem:[%s1 + $0x98] sm:$0xff]
    %v49 = vld [vmem:[%s1 + $0xa0] sm:$0xff]
    %v50 = vld [vmem:[%s1 + $0xa8] sm:$0xff]
    %v51 = vld [vmem:[%s1 + $0xb0] sm:$0xff]
    %v52 = vld [vmem:[%s1 + $0xb8] sm:$0xff]
    %v53 = vld [vmem:[%s1 + $0xc0] sm:$0xff]
    %v54 = vld [vmem:[%s1 + $0xc8] sm:$0xff]
    %v55 = vld [vmem:[%s1 + $0xd0] sm:$0xff]
    %v56 = vld [vmem:[%s1 + $0xd8] sm:$0xff]
    %v57 = vld [vmem:[%s1 + $0xe0] sm:$0xff]
    %v58 = vld [vmem:[%s1 + $0xe8] sm:$0xff]
    %v59 = vld [vmem:[%s1 + $0xf0] sm:$0xff]
    %v60 = vld [vmem:[%s1 + $0xf8] sm:$0xff]
    %v61 = vld [vmem:[%s1 + $0x100] sm:$0xff]
    %v62 = vld [vmem:[%s1 + $0x108] sm:$0xff]
    %v63 = vld [vmem:[%s1 + $0x110] sm:$0xff]
    %v64 = vld [vmem:[%s1 + $0x118] sm:$0xff]
    %v65 = vld [vmem:[%s1 + $0x120] sm:$0xff]
    %v66 = vld [vmem:[%s1 + $0x128] sm:$0xff]
    %v67 = vld [vmem:[%s1 + $0x130] sm:$0xff]
    %v68 = vld [vmem:[%s1 + $0x138] sm:$0xff]
    %v69 = vld [vmem:[%s1 + $0x140] sm:$0xff]
    %v70 = vld [vmem:[%s1 + $0x148] sm:$0xff]
    %v71 = vld [vmem:[%s1 + $0x150] sm:$0xff]
    %v72 = vld [vmem:[%s1 + $0x158] sm:$0xff]
    %v73 = vld [vmem:[%s1 + $0x160] sm:$0xff]
    %v74 = vld [vmem:[%s1 + $0x168] sm:$0xff]
    %v75 = vld [vmem:[%s1 + $0x170] sm:$0xff]
    %v76 = vld [vmem:[%s1 + $0x178] sm:$0xff]
    %v77 = vld [vmem:[%s1 + $0x180] sm:$0xff]
    %v78 = vld [vmem:[%s1 + $0x188] sm:$0xff]
    %v79 = vld [vmem:[%s1 + $0x190] sm:$0xff]
    %v80 = vld [vmem:[%s1 + $0x198] sm:$0xff]
    %v81 = vld [vmem:[%s1 + $0x1a0] sm:$0xff]
    %v82 = vld [vmem:[%s1 + $0x1a8] sm:$0xff]
    %v83 = vld [vmem:[%s1 + $0x1b0] sm:$0xff]
    %v84 = vld [vmem:[%s1 + $0x1b8] sm:$0xff]
    %v85 = vld [vmem:[%s1 + $0x1c0] sm:$0xff]
    %v86 = vld [vmem:[%s1 + $0x1c8] sm:$0xff]
    %v87 = vld [vmem:[%s1 + $0x1d0] sm:$0xff]
    %v88 = vld [vmem:[%s1 + $0x1d8] sm:$0xff]
    %v89 = vld [vmem:[%s1 + $0x1e0] sm:$0xff]
    %v90 = vld [vmem:[%s1 + $0x1e8] sm:$0xff]
    %v91 = vld [vmem:[%s1 + $0x1f0] sm:$0xff]
    %v92 = vld [vmem:[%s1 + $0x1f8] sm:$0xff]
    %v93 = vld [vmem:[%s1 + $0x200] sm:$0xff]
    %v94 = vld [vmem:[%s1 + $0x208] sm:$0xff]
    %v95 = vld [vmem:[%s1 + $0x210] sm:$0xff]
    %v96 = vld [vmem:[%s1 + $0x218] sm:$0xff]
    %v97 = vld [vmem:[%s1 + $0x220] sm:$0xff]
    %v98 = vld [vmem:[%s1 + $0x228] sm:$0xff]
    %v99 = vld [vmem:[%s1 + $0x230] sm:$0xff]
    %v100 = vld [vmem:[%s1 + $0x238] sm:$0xff]
    %v101 = vld [vmem:[%s1 + $0x240] sm:$0xff]
    %v102 = vld [vmem:[%s1 + $0x248] sm:$0xff]
    %v103 = vld [vmem:[%s1 + $0x250] sm:$0xff]
    %v104 = vld [vmem:[%s1 + $0x258] sm:$0xff]
    %v105 = vld [vmem:[%s1 + $0x260] sm:$0xff]
    %v106 = vld [vmem:[%s1 + $0x268] sm:$0xff]
    %v107 = vld [vmem:[%s1 + $0x270] sm:$0xff]
    %v108 = vld [vmem:[%s1 + $0x278] sm:$0xff]
    %v109 = vld [vmem:[%s1 + $0x280] sm:$0xff]
    %v110 = vld [vmem:[%s1 + $0x288] sm:$0xff]
    %v111 = vld [vmem:[%s1 + $0x290] sm:$0xff]
    %v112 = vld [vmem:[%s1 + $0x298] sm:$0xff]
    %v113 = vld [vmem:[%s1 + $0x2a0] sm:$0xff]
    %v114 = vld [vmem:[%s1 + $0x2a8] sm:$0xff]
    %v115 = vld [vmem:[%s1 + $0x2b0] sm:$0xff]
    %v116 = vld [vmem:[%s1 + $0x2b8] sm:$0xff]
    %v117 = vld [vmem:[%s1 + $0x2c0] sm:$0xff]
    %v118 = vld [vmem:[%s1 + $0x2c8] sm:$0xff]
    %v119 = vld [vmem:[%s1 + $0x2d0] sm:$0xff]
    %v120 = vld [vmem:[%s1 + $0x2d8] sm:$0xff]
    %v121 = vld [vmem:[%s1 + $0x2e0] sm:$0xff]
    %v122 = vld [vmem:[%s1 + $0x2e8] sm:$0xff]
    %v123 = vld [vmem:[%s1 + $0x2f0] sm:$0xff]
    %v124 = vld [vmem:[%s1 + $0x2f8] sm:$0xff]
    %v125 = vld [vmem:[%s1 + $0x300] sm:$0xff]
    %v126 = vld [vmem:[%s1 + $0x308] sm:$0xff]
    %v127 = vld [vmem:[%s1 + $0x310] sm:$0xff]
    %v128 = vld [vmem:[%s1 + $0x318] sm:$0xff]
    %v129 = vld [vmem:[%s1 + $0x320] sm:$0xff]
    %v130 = vld [vmem:[%s1 + $0x328] sm:$0xff]
    %v131 = vld [vmem:[%s1 + $0x330] sm:$0xff]
    %v132 = vld [vmem:[%s1 + $0x338] sm:$0xff]
    %v133 = vld [vmem:[%s1 + $0x340] sm:$0xff]
    %v134 = vld [vmem:[%s1 + $0x348] sm:$0xff]
    %v135 = vld [vmem:[%s1 + $0x350] sm:$0xff]
    %v136 = vld [vmem:[%s1 + $0x358] sm:$0xff]
    %v137 = vld [vmem:[%s1 + $0x360] sm:$0xff]
    %v138 = vld [vmem:[%s1 + $0x368] sm:$0xff]
    %v139 = vld [vmem:[%s1 + $0x370] sm:$0xff]
    %v140 = vld [vmem:[%s1 + $0x378] sm:$0xff]
    %v141 = vld [vmem:[%s1 + $0x380] sm:$0xff]
    %v142 = vld [vmem:[%s1 + $0x388] sm:$0xff]
    %v143 = vld [vmem:[%s1 + $0x390] sm:$0xff]
    %v144 = vld [vmem:[%s1 + $0x398] sm:$0xff]
    %v145 = vld [vmem:[%s1 + $0x3a0] sm:$0xff]
    %v146 = vld [vmem:[%s1 + $0x3a8] sm:$0xff]
    %v147 = vld [vmem:[%s1 + $0x3b0] sm:$0xff]
    %v148 = vld [vmem:[%s1 + $0x3b8] sm:$0xff]
    %v149 = vld [vmem:[%s1 + $0x3c0] sm:$0xff]
    %v150 = vld [vmem:[%s1 + $0x3c8] sm:$0xff]
    %v151 = vld [vmem:[%s1 + $0x3d0] sm:$0xff]
    %v152 = vld [vmem:[%s1 + $0x3d8] sm:$0xff]
    %v153 = vld [vmem:[%s1 + $0x3e0] sm:$0xff]
    %v154 = vld [vmem:[%s1 + $0x3e8] sm:$0xff]
    %v155 = vld [vmem:[%s1 + $0x3f0] sm:$0xff]
    %v156 = vld [vmem:[%s1 + $0x3f8] sm:$0xff]
    %v157 = vld [vmem:[%s1 + $0x400] sm:$0xff]
    %v158 = vld [vmem:[%s1 + $0x408] sm:$0xff]
    %v159 = vld [vmem:[%s1 + $0x410] sm:$0xff]
    %v160 = vld [vmem:[%s1 + $0x418] sm:$0xff]
    %v161 = vld [vmem:[%s1 + $0x420] sm:$0xff]
    %v162 = vld [vmem:[%s1 + $0x428] sm:$0xff]
    %v163 = vld [vmem:[%s1 + $0x430] sm:$0xff]
    %v164 = vld [vmem:[%s1 + $0x438] sm:$0xff]
    %v165 = vld [vmem:[%s1 + $0x440] sm:$0xff]
    %v166 = vld [vmem:[%s1 + $0x448] sm:$0xff]
    %v167 = vld [vmem:[%s1 + $0x450] sm:$0xff]
    %v168 = vld [vmem:[%s1 + $0x458] sm:$0xff]
    %v169 = vld [vmem:[%s1 + $0x460] sm:$0xff]
    %v170 = vld [vmem:[%s1 + $0x468] sm:$0xff]
    %v171 = vld [vmem:[%s1 + $0x470] sm:$0xff]
    %v172 = vld [vmem:[%s1 + $0x478] sm:$0xff]
    %v173 = vld [vmem:[%s1 + $0x480] sm:$0xff]
    %v174 = vld [vmem:[%s1 + $0x488] sm:$0xff]
    %v175 = vld [vmem:[%s1 + $0x490] sm:$0xff]
    %v176 = vld [vmem:[%s1 + $0x498] sm:$0xff]
    %v177 = vld [vmem:[%s1 + $0x4a0] sm:$0xff]
    %v178 = vld [vmem:[%s1 + $0x4a8] sm:$0xff]
    %v179 = vld [vmem:[%s1 + $0x4b0] sm:$0xff]
    %v180 = vld [vmem:[%s1 + $0x4b8] sm:$0xff]
    %v181 = vld [vmem:[%s1 + $0x4c0] sm:$0xff]
    %v182 = vld [vmem:[%s1 + $0x4c8] sm:$0xff]
    %v183 = vld [vmem:[%s1 + $0x4d0] sm:$0xff]
    %v184 = vld [vmem:[%s1 + $0x4d8] sm:$0xff]
    %v185 = vld [vmem:[%s1 + $0x4e0] sm:$0xff]
    %v186 = vld [vmem:[%s1 + $0x4e8] sm:$0xff]
    %v187 = vld [vmem:[%s1 + $0x4f0] sm:$0xff]
    %v188 = vld [vmem:[%s1 + $0x4f8] sm:$0xff]
    %v189 = vld [vmem:[%s1 + $0x500] sm:$0xff]
    %v190 = vld [vmem:[%s1 + $0x508] sm:$0xff]
    %v191 = vld [vmem:[%s1 + $0x510] sm:$0xff]
    %v192 = vld [vmem:[%s1 + $0x518] sm:$0xff]
    %v193 = vld [vmem:[%s1 + $0x520] sm:$0xff]
    %v194 = vld [vmem:[%s1 + $0x528] sm:$0xff]
    %v195 = vld [vmem:[%s1 + $0x530] sm:$0xff]
    %v196 = vld [vmem:[%s1 + $0x538] sm:$0xff]
    %v197 = vld [vmem:[%s1 + $0x540] sm:$0xff]
    %v198 = vld [vmem:[%s1 + $0x548] sm:$0xff]
    %v199 = vld [vmem:[%s1 + $0x550] sm:$0xff]
    %v200 = vld [vmem:[%s1 + $0x558] sm:$0xff]
    %v201 = vld [vmem:[%s1 + $0x560] sm:$0xff]
    %v202 = vld [vmem:[%s1 + $0x568] sm:$0xff]
    %v203 = vld [vmem:[%s1 + $0x570] sm:$0xff]
    %v204 = vld [vmem:[%s1 + $0x578] sm:$0xff]
    %v205 = vld [vmem:[%s1 + $0x580] sm:$0xff]
    %v206 = vld [vmem:[%s1 + $0x588] sm:$0xff]
    %v207 = vld [vmem:[%s1 + $0x590] sm:$0xff]
    %v208 = vld [vmem:[%s1 + $0x598] sm:$0xff]
    %v209 = vld [vmem:[%s1 + $0x5a0] sm:$0xff]
    %v210 = vld [vmem:[%s1 + $0x5a8] sm:$0xff]
    %v211 = vld [vmem:[%s1 + $0x5b0] sm:$0xff]
    %v212 = vld [vmem:[%s1 + $0x5b8] sm:$0xff]
    %v213 = vld [vmem:[%s1 + $0x5c0] sm:$0xff]
    %v214 = vld [vmem:[%s1 + $0x5c8] sm:$0xff]
    %v215 = vld [vmem:[%s1 + $0x5d0] sm:$0xff]
    %v216 = vld [vmem:[%s1 + $0x5d8] sm:$0xff]
    %v217 = vld [vmem:[%s1 + $0x5e0] sm:$0xff]
    %v218 = vld [vmem:[%s1 + $0x5e8] sm:$0xff]
    %v219 = vld [vmem:[%s1 + $0x5f0] sm:$0xff]
    %v220 = vld [vmem:[%s1 + $0x5f8] sm:$0xff]
    %v221 = vld [vmem:[%s1 + $0x600] sm:$0xff]
    %v222 = vld [vmem:[%s1 + $0x608] sm:$0xff]
    %v223 = vld [vmem:[%s1 + $0x610] sm:$0xff]
    %v224 = vld [vmem:[%s1 + $0x618] sm:$0xff]
    %v225 = vld [vmem:[%s1 + $0x620] sm:$0xff]
    %v226 = vld [vmem:[%s1 + $0x628] sm:$0xff]
    %v227 = vld [vmem:[%s1 + $0x630] sm:$0xff]
    %v228 = vld [vmem:[%s1 + $0x638] sm:$0xff]
    %v229 = vld [vmem:[%s1 + $0x640] sm:$0xff]
    %v230 = vld [vmem:[%s1 + $0x648] sm:$0xff]
    %v231 = vld [vmem:[%s1 + $0x650] sm:$0xff]
    %v232 = vld [vmem:[%s1 + $0x658] sm:$0xff]
    %v233 = vld [vmem:[%s1 + $0x660] sm:$0xff]
    %v234 = vld [vmem:[%s1 + $0x668] sm:$0xff]
    %v235 = vld [vmem:[%s1 + $0x670] sm:$0xff]
    %v236 = vld [vmem:[%s1 + $0x678] sm:$0xff]
    %v237 = vld [vmem:[%s1 + $0x680] sm:$0xff]
    %v238 = vld [vmem:[%s1 + $0x688] sm:$0xff]
    %v239 = vld [vmem:[%s1 + $0x690] sm:$0xff]
    %v240 = vld [vmem:[%s1 + $0x698] sm:$0xff]
    %v241 = vld [vmem:[%s1 + $0x6a0] sm:$0xff]
    %v242 = vld [vmem:[%s1 + $0x6a8] sm:$0xff]
    %v243 = vld [vmem:[%s1 + $0x6b0] sm:$0xff]
    %v244 = vld [vmem:[%s1 + $0x6b8] sm:$0xff]
    %v245 = vld [vmem:[%s1 + $0x6c0] sm:$0xff]
    %v246 = vld [vmem:[%s1 + $0x6c8] sm:$0xff]
    %v247 = vld [vmem:[%s1 + $0x6d0] sm:$0xff]
    %v248 = vld [vmem:[%s1 + $0x6d8] sm:$0xff]
    %v249 = vld [vmem:[%s1 + $0x6e0] sm:$0xff]
    %v250 = vld [vmem:[%s1 + $0x6e8] sm:$0xff]
    %v251 = vld [vmem:[%s1 + $0x6f0] sm:$0xff]
    %v252 = vld [vmem:[%s1 + $0x6f8] sm:$0xff]
    %v253 = vld [vmem:[%s1 + $0x700] sm:$0xff]
    %v254 = vld [vmem:[%s1 + $0x708] sm:$0xff]
    %v255 = vld [vmem:[%s1 + $0x710] sm:$0xff]
    %v256 = vld [vmem:[%s1 + $0x718] sm:$0xff]
    %v257 = vld [vmem:[%s1 + $0x720] sm:$0xff]
    %v258 = vld [vmem:[%s1 + $0x728] sm:$0xff]
    %v259 = vld [vmem:[%s1 + $0x730] sm:$0xff]
    %v260 = vld [vmem:[%s1 + $0x738] sm:$0xff]
    %v261 = vld [vmem:[%s1 + $0x740] sm:$0xff]
    %v262 = vld [vmem:[%s1 + $0x748] sm:$0xff]
    %v263 = vld [vmem:[%s1 + $0x750] sm:$0xff]
    %v264 = vld [vmem:[%s1 + $0x758] sm:$0xff]
    %v265 = vld [vmem:[%s1 + $0x760] sm:$0xff]
    %v266 = vld [vmem:[%s1 + $0x768] sm:$0xff]
    %v267 = vld [vmem:[%s1 + $0x770] sm:$0xff]
    %v268 = vld [vmem:[%s1 + $0x778] sm:$0xff]
    %v269 = vld [vmem:[%s1 + $0x780] sm:$0xff]
    %v270 = vld [vmem:[%s1 + $0x788] sm:$0xff]
    %v271 = vld [vmem:[%s1 + $0x790] sm:$0xff]
    %v272 = vld [vmem:[%s1 + $0x798] sm:$0xff]
    %v273 = vld [vmem:[%s1 + $0x7a0] sm:$0xff]
    %v274 = vld [vmem:[%s1 + $0x7a8] sm:$0xff]
    %v275 = vld [vmem:[%s1 + $0x7b0] sm:$0xff]
    %v276 = vld [vmem:[%s1 + $0x7b8] sm:$0xff]
    %v277 = vld [vmem:[%s1 + $0x7c0] sm:$0xff]
    %v278 = vld [vmem:[%s1 + $0x7c8] sm:$0xff]
    %v279 = vld [vmem:[%s1 + $0x7d0] sm:$0xff]
    %v280 = vld [vmem:[%s1 + $0x7d8] sm:$0xff]
    %v281 = vld [vmem:[%s1 + $0x7e0] sm:$0xff]
    %v282 = vld [vmem:[%s1 + $0x7e8] sm:$0xff]
    %v283 = vld [vmem:[%s1 + $0x7f0] sm:$0xff]
    %v284 = vld [vmem:[%s1 + $0x7f8] sm:$0xff]
    %v285 = vld [vmem:[%s1 + $0x800] sm:$0xff]
    %v286 = vld [vmem:[%s1 + $0x808] sm:$0xff]
    %v287 = vld [vmem:[%s1 + $0x810] sm:$0xff]
    %v288 = vld [vmem:[%s1 + $0x818] sm:$0xff]
    %v289 = vld [vmem:[%s1 + $0x820] sm:$0xff]
    %v290 = vld [vmem:[%s1 + $0x828] sm:$0xff]
    %v291 = vld [vmem:[%s1 + $0x830] sm:$0xff]
    %v292 = vld [vmem:[%s1 + $0x838] sm:$0xff]
    %v293 = vld [vmem:[%s1 + $0x840] sm:$0xff]
    %v294 = vld [vmem:[%s1 + $0x848] sm:$0xff]
    %v295 = vld [vmem:[%s1 + $0x850] sm:$0xff]
    %v296 = vld [vmem:[%s1 + $0x858] sm:$0xff]
    %v297 = vld [vmem:[%s1 + $0x860] sm:$0xff]
    %v298 = vld [vmem:[%s1 + $0x868] sm:$0xff]
    %v299 = vld [vmem:[%s1 + $0x870] sm:$0xff]
    %v300 = vld [vmem:[%s1 + $0x878] sm:$0xff]
    %v301 = vld [vmem:[%s1 + $0x880] sm:$0xff]
    %v302 = vld [vmem:[%s1 + $0x888] sm:$0xff]
    %v303 = vld [vmem:[%s1 + $0x890] sm:$0xff]
    %v304 = vld [vmem:[%s1 + $0x898] sm:$0xff]
    %v305 = vld [vmem:[%s1 + $0x8a0] sm:$0xff]
    %v306 = vld [vmem:[%s1 + $0x8a8] sm:$0xff]
    %v307 = vld [vmem:[%s1 + $0x8b0] sm:$0xff]
    %v308 = vld [vmem:[%s1 + $0x8b8] sm:$0xff]
    %v309 = vld [vmem:[%s1 + $0x8c0] sm:$0xff]
    %v310 = vld [vmem:[%s1 + $0x8c8] sm:$0xff]
    %v311 = vld [vmem:[%s1 + $0x8d0] sm:$0xff]
    %v312 = vld [vmem:[%s1 + $0x8d8] sm:$0xff]
    %v313 = vld [vmem:[%s1 + $0x8e0] sm:$0xff]
    %v314 = vld [vmem:[%s1 + $0x8e8] sm:$0xff]
    %v315 = vld [vmem:[%s1 + $0x8f0] sm:$0xff]
    %v316 = vld [vmem:[%s1 + $0x8f8] sm:$0xff]
    %v317 = vld [vmem:[%s1 + $0x900] sm:$0xff]
    %v318 = vld [vmem:[%s1 + $0x908] sm:$0xff]
    %v319 = vld [vmem:[%s1 + $0x910] sm:$0xff]
    %v320 = vld [vmem:[%s1 + $0x918] sm:$0xff]
    %v321 = vld [vmem:[%s1 + $0x920] sm:$0xff]
    %v322 = vld [vmem:[%s1 + $0x928] sm:$0xff]
    %v323 = vld [vmem:[%s1 + $0x930] sm:$0xff]
    %v324 = vld [vmem:[%s1 + $0x938] sm:$0xff]
    %v325 = vld [vmem:[%s1 + $0x940] sm:$0xff]
    %v326 = vld [vmem:[%s1 + $0x948] sm:$0xff]
    %v327 = vld [vmem:[%s1 + $0x950] sm:$0xff]
    %v328 = vld [vmem:[%s1 + $0x958] sm:$0xff]
    %v329 = vld [vmem:[%s1 + $0x960] sm:$0xff]
    %v330 = vld [vmem:[%s1 + $0x968] sm:$0xff]
    %v331 = vld [vmem:[%s1 + $0x970] sm:$0xff]
    %v332 = vld [vmem:[%s1 + $0x978] sm:$0xff]
    %v333 = vld [vmem:[%s1 + $0x980] sm:$0xff]
    %v334 = vld [vmem:[%s1 + $0x988] sm:$0xff]
    %v335 = vld [vmem:[%s1 + $0x990] sm:$0xff]
    %v336 = vld [vmem:[%s1 + $0x998] sm:$0xff]
    %v337 = vld [vmem:[%s1 + $0x9a0] sm:$0xff]
    %v338 = vld [vmem:[%s1 + $0x9a8] sm:$0xff]
    %v339 = vld [vmem:[%s1 + $0x9b0] sm:$0xff]
    %v340 = vld [vmem:[%s1 + $0x9b8] sm:$0xff]
    %v341 = vld [vmem:[%s1 + $0x9c0] sm:$0xff]
    %v342 = vld [vmem:[%s1 + $0x9c8] sm:$0xff]
    %v343 = vld [vmem:[%s1 + $0x9d0] sm:$0xff]
    %v344 = vld [vmem:[%s1 + $0x9d8] sm:$0xff]
    %v345 = vld [vmem:[%s1 + $0x9e0] sm:$0xff]
    %v346 = vld [vmem:[%s1 + $0x9e8] sm:$0xff]
    %v347 = vld [vmem:[%s1 + $0x9f0] sm:$0xff]
    %v348 = vld [vmem:[%s1 + $0x9f8] sm:$0xff]
    %v349 = vld [vmem:[%s1 + $0xa00] sm:$0xff]
    %v350 = vld [vmem:[%s1 + $0xa08] sm:$0xff]
    %v351 = vld [vmem:[%s1 + $0xa10] sm:$0xff]
    %v352 = vld [vmem:[%s1 + $0xa18] sm:$0xff]
    %v353 = vld [vmem:[%s1 + $0xa20] sm:$0xff]
    %v354 = vld [vmem:[%s1 + $0xa28] sm:$0xff]
    %v355 = vld [vmem:[%s1 + $0xa30] sm:$0xff]
    %v356 = vld [vmem:[%s1 + $0xa38] sm:$0xff]
    %v357 = vld [vmem:[%s1 + $0xa40] sm:$0xff]
    %v358 = vld [vmem:[%s1 + $0xa48] sm:$0xff]
    %v359 = vld [vmem:[%s1 + $0xa50] sm:$0xff]
    %v360 = vld [vmem:[%s1 + $0xa58] sm:$0xff]
    %v361 = vld [vmem:[%s1 + $0xa60] sm:$0xff]
    %v362 = vld [vmem:[%s1 + $0xa68] sm:$0xff]
    %v363 = vld [vmem:[%s1 + $0xa70] sm:$0xff]
    %v364 = vld [vmem:[%s1 + $0xa78] sm:$0xff]
    %v365 = vld [vmem:[%s1 + $0xa80] sm:$0xff]
    %v366 = vld [vmem:[%s1 + $0xa88] sm:$0xff]
    %v367 = vld [vmem:[%s1 + $0xa90] sm:$0xff]
    %v368 = vld [vmem:[%s1 + $0xa98] sm:$0xff]
    %v369 = vld [vmem:[%s1 + $0xaa0] sm:$0xff]
    %v370 = vld [vmem:[%s1 + $0xaa8] sm:$0xff]
    %v371 = vld [vmem:[%s1 + $0xab0] sm:$0xff]
    %v372 = vld [vmem:[%s1 + $0xab8] sm:$0xff]
    %v373 = vld [vmem:[%s1 + $0xac0] sm:$0xff]
    %v374 = vld [vmem:[%s1 + $0xac8] sm:$0xff]
    %v375 = vld [vmem:[%s1 + $0xad0] sm:$0xff]
    %v376 = vld [vmem:[%s1 + $0xad8] sm:$0xff]
    %v377 = vld [vmem:[%s1 + $0xae0] sm:$0xff]
    %v378 = vld [vmem:[%s1 + $0xae8] sm:$0xff]
    %v379 = vld [vmem:[%s1 + $0xaf0] sm:$0xff]
    %v380 = vld [vmem:[%s1 + $0xaf8] sm:$0xff]
    %v381 = vld [vmem:[%s1 + $0xb00] sm:$0xff]
    %v382 = vld [vmem:[%s1 + $0xb08] sm:$0xff]
    %v383 = vld [vmem:[%s1 + $0xb10] sm:$0xff]
    %v384 = vld [vmem:[%s1 + $0xb18] sm:$0xff]
    %v385 = vld [vmem:[%s1 + $0xb20] sm:$0xff]
    %v386 = vld [vmem:[%s1 + $0xb28] sm:$0xff]
    %v387 = vld [vmem:[%s1 + $0xb30] sm:$0xff]
    %v388 = vld [vmem:[%s1 + $0xb38] sm:$0xff]
    %v389 = vld [vmem:[%s1 + $0xb40] sm:$0xff]
    %v390 = vld [vmem:[%s1 + $0xb48] sm:$0xff]
    %v391 = vld [vmem:[%s1 + $0xb50] sm:$0xff]
    %v392 = vld [vmem:[%s1 + $0xb58] sm:$0xff]
    %v393 = vld [vmem:[%s1 + $0xb60] sm:$0xff]
    %v394 = vld [vmem:[%s1 + $0xb68] sm:$0xff]
    %v395 = vld [vmem:[%s1 + $0xb70] sm:$0xff]
    %v396 = vld [vmem:[%s1 + $0xb78] sm:$0xff]
    %v397 = vld [vmem:[%s1 + $0xb80] sm:$0xff]
    %v398 = vld [vmem:[%s1 + $0xb88] sm:$0xff]
    %v399 = vld [vmem:[%s1 + $0xb90] sm:$0xff]
    %v400 = vld [vmem:[%s1 + $0xb98] sm:$0xff]
    %v401 = vld [vmem:[%s1 + $0xba0] sm:$0xff]
    %v402 = vld [vmem:[%s1 + $0xba8] sm:$0xff]
    %v403 = vld [vmem:[%s1 + $0xbb0] sm:$0xff]
    %v404 = vld [vmem:[%s1 + $0xbb8] sm:$0xff]
    %v405 = vld [vmem:[%s1 + $0xbc0] sm:$0xff]
    %v406 = vld [vmem:[%s1 + $0xbc8] sm:$0xff]
    %v407 = vld [vmem:[%s1 + $0xbd0] sm:$0xff]
    %v408 = vld [vmem:[%s1 + $0xbd8] sm:$0xff]
    %v409 = vld [vmem:[%s1 + $0xbe0] sm:$0xff]
    %v410 = vld [vmem:[%s1 + $0xbe8] sm:$0xff]
    %v411 = vld [vmem:[%s1 + $0xbf0] sm:$0xff]
    %v412 = vld [vmem:[%s1 + $0xbf8] sm:$0xff]
    %v413 = vld [vmem:[%s1 + $0xc00] sm:$0xff]
    %v414 = vld [vmem:[%s1 + $0xc08] sm:$0xff]
    %v415 = vld [vmem:[%s1 + $0xc10] sm:$0xff]
    %v416 = vld [vmem:[%s1 + $0xc18] sm:$0xff]
    %v417 = vld [vmem:[%s1 + $0xc20] sm:$0xff]
    %v418 = vld [vmem:[%s1 + $0xc28] sm:$0xff]
    %v419 = vld [vmem:[%s1 + $0xc30] sm:$0xff]
    %v420 = vld [vmem:[%s1 + $0xc38] sm:$0xff]
    %v421 = vld [vmem:[%s1 + $0xc40] sm:$0xff]
    %v422 = vld [vmem:[%s1 + $0xc48] sm:$0xff]
    %v423 = vld [vmem:[%s1 + $0xc50] sm:$0xff]
    %v424 = vld [vmem:[%s1 + $0xc58] sm:$0xff]
    %v425 = vld [vmem:[%s1 + $0xc60] sm:$0xff]
    %v426 = vld [vmem:[%s1 + $0xc68] sm:$0xff]
    %v427 = vld [vmem:[%s1 + $0xc70] sm:$0xff]
    %v428 = vld [vmem:[%s1 + $0xc78] sm:$0xff]
    %v429 = vld [vmem:[%s1 + $0xc80] sm:$0xff]
    %v430 = vld [vmem:[%s1 + $0xc88] sm:$0xff]
    %v431 = vld [vmem:[%s1 + $0xc90] sm:$0xff]
    %v432 = vld [vmem:[%s1 + $0xc98] sm:$0xff]
    %v433 = vld [vmem:[%s1 + $0xca0] sm:$0xff]
    %v434 = vld [vmem:[%s1 + $0xca8] sm:$0xff]
    %v435 = vld [vmem:[%s1 + $0xcb0] sm:$0xff]
    %v436 = vld [vmem:[%s1 + $0xcb8] sm:$0xff]
    %v437 = vld [vmem:[%s1 + $0xcc0] sm:$0xff]
    %v438 = vld [vmem:[%s1 + $0xcc8] sm:$0xff]
    %v439 = vld [vmem:[%s1 + $0xcd0] sm:$0xff]
    %v440 = vld [vmem:[%s1 + $0xcd8] sm:$0xff]
    %v441 = vld [vmem:[%s1 + $0xce0] sm:$0xff]
    %v442 = vld [vmem:[%s1 + $0xce8] sm:$0xff]
    %v443 = vld [vmem:[%s1 + $0xcf0] sm:$0xff]
    %v444 = vld [vmem:[%s1 + $0xcf8] sm:$0xff]
    %v445 = vld [vmem:[%s1 + $0xd00] sm:$0xff]
    %v446 = vld [vmem:[%s1 + $0xd08] sm:$0xff]
    %v447 = vld [vmem:[%s1 + $0xd10] sm:$0xff]
    %v448 = vld [vmem:[%s1 + $0xd18] sm:$0xff]
    %v449 = vld [vmem:[%s1 + $0xd20] sm:$0xff]
    %v450 = vld [vmem:[%s1 + $0xd28] sm:$0xff]
    %v451 = vld [vmem:[%s1 + $0xd30] sm:$0xff]
    %v452 = vld [vmem:[%s1 + $0xd38] sm:$0xff]
    %v453 = vld [vmem:[%s1 + $0xd40] sm:$0xff]
    %v454 = vld [vmem:[%s1 + $0xd48] sm:$0xff]
    %v455 = vld [vmem:[%s1 + $0xd50] sm:$0xff]
    %v456 = vld [vmem:[%s1 + $0xd58] sm:$0xff]
    %v457 = vld [vmem:[%s1 + $0xd60] sm:$0xff]
    %v458 = vld [vmem:[%s1 + $0xd68] sm:$0xff]
    %v459 = vld [vmem:[%s1 + $0xd70] sm:$0xff]
    %v460 = vld [vmem:[%s1 + $0xd78] sm:$0xff]
    %v461 = vld [vmem:[%s1 + $0xd80] sm:$0xff]
    %v462 = vld [vmem:[%s1 + $0xd88] sm:$0xff]
    %v463 = vld [vmem:[%s1 + $0xd90] sm:$0xff]
    %v464 = vld [vmem:[%s1 + $0xd98] sm:$0xff]
    %v465 = vld [vmem:[%s1 + $0xda0] sm:$0xff]
    %v466 = vld [vmem:[%s1 + $0xda8] sm:$0xff]
    %v467 = vld [vmem:[%s1 + $0xdb0] sm:$0xff]
    %v468 = vld [vmem:[%s1 + $0xdb8] sm:$0xff]
    %v469 = vld [vmem:[%s1 + $0xdc0] sm:$0xff]
    %v470 = vld [vmem:[%s1 + $0xdc8] sm:$0xff]
    %v471 = vld [vmem:[%s1 + $0xdd0] sm:$0xff]
    %v472 = vld [vmem:[%s1 + $0xdd8] sm:$0xff]
    %v473 = vld [vmem:[%s1 + $0xde0] sm:$0xff]
    %v474 = vld [vmem:[%s1 + $0xde8] sm:$0xff]
    %v475 = vld [vmem:[%s1 + $0xdf0] sm:$0xff]
    %v476 = vld [vmem:[%s1 + $0xdf8] sm:$0xff]
    %v477 = vld [vmem:[%s1 + $0xe00] sm:$0xff]
    %v478 = vld [vmem:[%s1 + $0xe08] sm:$0xff]
    %v479 = vld [vmem:[%s1 + $0xe10] sm:$0xff]
    %v480 = vld [vmem:[%s1 + $0xe18] sm:$0xff]
    %v481 = vld [vmem:[%s1 + $0xe20] sm:$0xff]
    %v482 = vld [vmem:[%s1 + $0xe28] sm:$0xff]
    %v483 = vld [vmem:[%s1 + $0xe30] sm:$0xff]
    %v484 = vld [vmem:[%s1 + $0xe38] sm:$0xff]
    %v485 = vld [vmem:[%s1 + $0xe40] sm:$0xff]
    %v486 = vld [vmem:[%s1 + $0xe48] sm:$0xff]
    %v487 = vld [vmem:[%s1 + $0xe50] sm:$0xff]
    %v488 = vld [vmem:[%s1 + $0xe58] sm:$0xff]
    %v489 = vld [vmem:[%s1 + $0xe60] sm:$0xff]
    %v490 = vld [vmem:[%s1 + $0xe68] sm:$0xff]
    %v491 = vld [vmem:[%s1 + $0xe70] sm:$0xff]
    %v492 = vld [vmem:[%s1 + $0xe78] sm:$0xff]
    %v493 = vld [vmem:[%s1 + $0xe80] sm:$0xff]
    %v494 = vld [vmem:[%s1 + $0xe88] sm:$0xff]
    %v495 = vld [vmem:[%s1 + $0xe90] sm:$0xff]
    %v496 = vld [vmem:[%s1 + $0xe98] sm:$0xff]
    %v497 = vld [vmem:[%s1 + $0xea0] sm:$0xff]
    %v498 = vld [vmem:[%s1 + $0xea8] sm:$0xff]
    %v499 = vld [vmem:[%s1 + $0xeb0] sm:$0xff]
    %v500 = vld [vmem:[%s1 + $0xeb8] sm:$0xff]
    %v501 = vld [vmem:[%s1 + $0xec0] sm:$0xff]
    %v502 = vld [vmem:[%s1 + $0xec8] sm:$0xff]
    %v503 = vld [vmem:[%s1 + $0xed0] sm:$0xff]
    %v504 = vld [vmem:[%s1 + $0xed8] sm:$0xff]
    %v505 = vld [vmem:[%s1 + $0xee0] sm:$0xff]
    %v506 = vld [vmem:[%s1 + $0xee8] sm:$0xff]
    %v507 = vld [vmem:[%s1 + $0xef0] sm:$0xff]
    %v508 = vld [vmem:[%s1 + $0xef8] sm:$0xff]
    %v509 = vld [vmem:[%s1 + $0xf00] sm:$0xff]
    %v510 = vld [vmem:[%s1 + $0xf08] sm:$0xff]
    %v511 = vld [vmem:[%s1 + $0xf10] sm:$0xff]
    %v512 = vld [vmem:[%s1 + $0xf18] sm:$0xff]
    %v513 = vld [vmem:[%s1 + $0xf20] sm:$0xff]
    %v514 = vld [vmem:[%s1 + $0xf28] sm:$0xff]
    %v515 = vld [vmem:[%s1 + $0xf30] sm:$0xff]
    %v516 = vld [vmem:[%s1 + $0xf38] sm:$0xff]
    %v517 = vld [vmem:[%s1 + $0xf40] sm:$0xff]
    %v518 = vld [vmem:[%s1 + $0xf48] sm:$0xff]
    %v519 = vld [vmem:[%s1 + $0xf50] sm:$0xff]
    %v520 = vld [vmem:[%s1 + $0xf58] sm:$0xff]
    %v521 = vld [vmem:[%s1 + $0xf60] sm:$0xff]
    %v522 = vld [vmem:[%s1 + $0xf68] sm:$0xff]
    %v523 = vld [vmem:[%s1 + $0xf70] sm:$0xff]
    %v524 = vld [vmem:[%s1 + $0xf78] sm:$0xff]
    %v525 = vld [vmem:[%s1 + $0xf80] sm:$0xff]
    %v526 = vld [vmem:[%s1 + $0xf88] sm:$0xff]
    %v527 = vld [vmem:[%s1 + $0xf90] sm:$0xff]
    %v528 = vld [vmem:[%s1 + $0xf98] sm:$0xff]
    %v529 = vld [vmem:[%s1 + $0xfa0] sm:$0xff]
    %v530 = vld [vmem:[%s1 + $0xfa8] sm:$0xff]
    %v531 = vld [vmem:[%s1 + $0xfb0] sm:$0xff]
    %v532 = vld [vmem:[%s1 + $0xfb8] sm:$0xff]
    %v533 = vld [vmem:[%s1 + $0xfc0] sm:$0xff]
    %v534 = vld [vmem:[%s1 + $0xfc8] sm:$0xff]
    %v535 = vld [vmem:[%s1 + $0xfd0] sm:$0xff]
    %v536 = vld [vmem:[%s1 + $0xfd8] sm:$0xff]
    %v537 = vld [vmem:[%s1 + $0xfe0] sm:$0xff]
    %v538 = vld [vmem:[%s1 + $0xfe8] sm:$0xff]
    %v539 = vld [vmem:[%s1 + $0xff0] sm:$0xff]
    %v540 = vld [vmem:[%s1 + $0xff8] sm:$0xff]
    %v541 = vld [vmem:[%s2] sm:$0xf]
    %v543 = vlaneseq
    %v544 = vshrl.u32 %v543, 7
    %v545 = vsub.s32 0, %v544
    %v546 = vrot.slane %v541, %v545
    %v547 = vlaneseq
    %v548 = vshrl.u32 %v547, 7
    %v549 = vsub.s32 1, %v548
    %v550 = vrot.slane %v541, %v549
    %v551 = vlaneseq
    %v552 = vshrl.u32 %v551, 7
    %v553 = vsub.s32 2, %v552
    %v554 = vrot.slane %v541, %v553
    %v555 = vlaneseq
    %v556 = vshrl.u32 %v555, 7
    %v557 = vsub.s32 3, %v556
    %v558 = vrot.slane %v541, %v557
    %v565 = vcombine.low %v27, %v28
    %v566 = vcombine.high %v27, %v28
    %v568 = vunpack.c.l.s4 1966171168
    %v569 = vunpack.c.0.s8 %v568
    %v570 = vlaneseq
    %v571 = vshrl.u32 %v570, 7
    %v572 = vsub.s32 %v569, %v571
    %v573 = vrot.slane %v565, %v572
    %v575 = vunpack.c.l.s4 1966171168
    %v576 = vunpack.c.0.s8 %v575
    %v577 = vlaneseq
    %v578 = vshrl.u32 %v577, 7
    %v579 = vsub.s32 %v576, %v578
    %v580 = vrot.slane %v566, %v579
    %v581 = vcombine.high %v573, %v573
    %v582 = vcombine.high %v580, %v580
    %v584 = vunpack.c.l.s4 1966171168
    %v585 = vunpack.c.0.s8 %v584
    %v586 = vlaneseq
    %v587 = vshrl.u32 %v586, 7
    %v588 = vsub.s32 %v585, %v587
    %v589 = vrot.slane %v573, %v588
    %v591 = vunpack.c.l.s4 1966171168
    %v592 = vunpack.c.0.s8 %v591
    %v593 = vlaneseq
    %v594 = vshrl.u32 %v593, 7
    %v595 = vsub.s32 %v592, %v594
    %v596 = vrot.slane %v580, %v595
    %v598 = vunpack.c.l.s4 1966171168
    %v599 = vunpack.c.0.s8 %v598
    %v600 = vlaneseq
    %v601 = vshrl.u32 %v600, 7
    %v602 = vsub.s32 %v599, %v601
    %v603 = vrot.slane %v581, %v602
    %v605 = vunpack.c.l.s4 1966171168
    %v606 = vunpack.c.0.s8 %v605
    %v607 = vlaneseq
    %v608 = vshrl.u32 %v607, 7
    %v609 = vsub.s32 %v606, %v608
    %v610 = vrot.slane %v582, %v609
    %v611 = vcombine.high %v589, %v589
    %v612 = vcombine.high %v596, %v596
    %v613 = vcombine.high %v603, %v603
    %v614 = vcombine.high %v610, %v610
    %623 = vmatprep.subr.mxu0 %v30
    %624 = vmatpush1.msra.mxu0 %v29
    %625 = vmatprep.subr.mxu0 %v34
    %626 = vmatpush1.msra.mxu0 %v33
    %627 = vmatprep.subr.mxu0 %v38
    %628 = vmatpush1.msra.mxu0 %v37
    %629 = vmatprep.subr.mxu0 %v42
    %630 = vmatpush1.msra.mxu0 %v41
    %631 = vmatprep.subr.mxu0 %v46
    %632 = vmatpush1.msra.mxu0 %v45
    %633 = vmatprep.subr.mxu0 %v50
    %634 = vmatpush1.msra.mxu0 %v49
    %635 = vmatprep.subr.mxu0 %v54
    %636 = vmatpush1.msra.mxu0 %v53
    %637 = vmatprep.subr.mxu0 %v58
    %638 = vmatpush1.msra.mxu0 %v57
    %639 = vmatprep.subr.mxu0 %v62
    %640 = vmatpush1.msra.mxu0 %v61
    %641 = vmatprep.subr.mxu0 %v66
    %642 = vmatpush1.msra.mxu0 %v65
    %643 = vmatprep.subr.mxu0 %v70
    %644 = vmatpush1.msra.mxu0 %v69
    %645 = vmatprep.subr.mxu0 %v74
    %646 = vmatpush1.msra.mxu0 %v73
    %647 = vmatprep.subr.mxu0 %v78
    %648 = vmatpush1.msra.mxu0 %v77
    %649 = vmatprep.subr.mxu0 %v82
    %650 = vmatpush1.msra.mxu0 %v81
    %651 = vmatprep.subr.mxu0 %v86
    %652 = vmatpush1.msra.mxu0 %v85
    %653 = vmatprep.subr.mxu0 %v90
    %654 = vmatpush1.msra.mxu0 %v89
    %655 = vmatprep.subr.mxu0 %v94
    %656 = vmatpush1.msra.mxu0 %v93
    %657 = vmatprep.subr.mxu0 %v98
    %658 = vmatpush1.msra.mxu0 %v97
    %659 = vmatprep.subr.mxu0 %v102
    %660 = vmatpush1.msra.mxu0 %v101
    %661 = vmatprep.subr.mxu0 %v106
    %662 = vmatpush1.msra.mxu0 %v105
    %663 = vmatprep.subr.mxu0 %v110
    %664 = vmatpush1.msra.mxu0 %v109
    %665 = vmatprep.subr.mxu0 %v114
    %666 = vmatpush1.msra.mxu0 %v113
    %667 = vmatprep.subr.mxu0 %v118
    %668 = vmatpush1.msra.mxu0 %v117
    %669 = vmatprep.subr.mxu0 %v122
    %670 = vmatpush1.msra.mxu0 %v121
    %671 = vmatprep.subr.mxu0 %v126
    %672 = vmatpush1.msra.mxu0 %v125
    %673 = vmatprep.subr.mxu0 %v130
    %674 = vmatpush1.msra.mxu0 %v129
    %675 = vmatprep.subr.mxu0 %v134
    %676 = vmatpush1.msra.mxu0 %v133
    %677 = vmatprep.subr.mxu0 %v138
    %678 = vmatpush1.msra.mxu0 %v137
    %679 = vmatprep.subr.mxu0 %v142
    %680 = vmatpush1.msra.mxu0 %v141
    %681 = vmatprep.subr.mxu0 %v146
    %682 = vmatpush1.msra.mxu0 %v145
    %683 = vmatprep.subr.mxu0 %v150
    %684 = vmatpush1.msra.mxu0 %v149
    %685 = vmatprep.subr.mxu0 %v154
    %686 = vmatpush1.msra.mxu0 %v153
    %687 = vmatprep.mubr.f32.mxu0 %v603
    %688 = vmatmul.mubr.f32.gmra.mrb[0].mxu0 %v589
    %v689 = vpop.f32.mrb[0].mxu0
    %v690 = vadd.f32 %v546, %v689
    %v691 = vpop.f32.mrb[0].mxu0
    %v692 = vadd.f32 %v550, %v691
    %693 = vdwg.mxu0
    %694 = vmatprep.subr.mxu0 %v158
    %695 = vmatpush1.msra.mxu0 %v157
    %696 = vmatprep.subr.mxu0 %v162
    %697 = vmatpush1.msra.mxu0 %v161
    %698 = vmatprep.subr.mxu0 %v166
    %699 = vmatpush1.msra.mxu0 %v165
    %700 = vmatprep.subr.mxu0 %v170
    %701 = vmatpush1.msra.mxu0 %v169
    %702 = vmatprep.subr.mxu0 %v174
    %703 = vmatpush1.msra.mxu0 %v173
    %704 = vmatprep.subr.mxu0 %v178
    %705 = vmatpush1.msra.mxu0 %v177
    %706 = vmatprep.subr.mxu0 %v182
    %707 = vmatpush1.msra.mxu0 %v181
    %708 = vmatprep.subr.mxu0 %v186
    %709 = vmatpush1.msra.mxu0 %v185
    %710 = vmatprep.subr.mxu0 %v190
    %711 = vmatpush1.msra.mxu0 %v189
    %712 = vmatprep.subr.mxu0 %v194
    %713 = vmatpush1.msra.mxu0 %v193
    %714 = vmatprep.subr.mxu0 %v198
    %715 = vmatpush1.msra.mxu0 %v197
    %716 = vmatprep.subr.mxu0 %v202
    %717 = vmatpush1.msra.mxu0 %v201
    %718 = vmatprep.subr.mxu0 %v206
    %719 = vmatpush1.msra.mxu0 %v205
    %720 = vmatprep.subr.mxu0 %v210
    %721 = vmatpush1.msra.mxu0 %v209
    %722 = vmatprep.subr.mxu0 %v214
    %723 = vmatpush1.msra.mxu0 %v213
    %724 = vmatprep.subr.mxu0 %v218
    %725 = vmatpush1.msra.mxu0 %v217
    %726 = vmatprep.subr.mxu0 %v222
    %727 = vmatpush1.msra.mxu0 %v221
    %728 = vmatprep.subr.mxu0 %v226
    %729 = vmatpush1.msra.mxu0 %v225
    %730 = vmatprep.subr.mxu0 %v230
    %731 = vmatpush1.msra.mxu0 %v229
    %732 = vmatprep.subr.mxu0 %v234
    %733 = vmatpush1.msra.mxu0 %v233
    %734 = vmatprep.subr.mxu0 %v238
    %735 = vmatpush1.msra.mxu0 %v237
    %736 = vmatprep.subr.mxu0 %v242
    %737 = vmatpush1.msra.mxu0 %v241
    %738 = vmatprep.subr.mxu0 %v246
    %739 = vmatpush1.msra.mxu0 %v245
    %740 = vmatprep.subr.mxu0 %v250
    %741 = vmatpush1.msra.mxu0 %v249
    %742 = vmatprep.subr.mxu0 %v254
    %743 = vmatpush1.msra.mxu0 %v253
    %744 = vmatprep.subr.mxu0 %v258
    %745 = vmatpush1.msra.mxu0 %v257
    %746 = vmatprep.subr.mxu0 %v262
    %747 = vmatpush1.msra.mxu0 %v261
    %748 = vmatprep.subr.mxu0 %v266
    %749 = vmatpush1.msra.mxu0 %v265
    %750 = vmatprep.subr.mxu0 %v270
    %751 = vmatpush1.msra.mxu0 %v269
    %752 = vmatprep.subr.mxu0 %v274
    %753 = vmatpush1.msra.mxu0 %v273
    %754 = vmatprep.subr.mxu0 %v278
    %755 = vmatpush1.msra.mxu0 %v277
    %756 = vmatprep.subr.mxu0 %v282
    %757 = vmatpush1.msra.mxu0 %v281
    %758 = vmatprep.mubr.f32.mxu0 %v613
    %759 = vmatmul.mubr.f32.gmra.mrb[0].mxu0 %v611
    %v760 = vpop.f32.mrb[0].mxu0
    %v761 = vadd.f32 %v690, %v760
    %v762 = vpop.f32.mrb[0].mxu0
    %v763 = vadd.f32 %v692, %v762
    %764 = vdwg.mxu0
    %765 = vmatprep.subr.mxu0 %v286
    %766 = vmatpush1.msra.mxu0 %v285
    %767 = vmatprep.subr.mxu0 %v290
    %768 = vmatpush1.msra.mxu0 %v289
    %769 = vmatprep.subr.mxu0 %v294
    %770 = vmatpush1.msra.mxu0 %v293
    %771 = vmatprep.subr.mxu0 %v298
    %772 = vmatpush1.msra.mxu0 %v297
    %773 = vmatprep.subr.mxu0 %v302
    %774 = vmatpush1.msra.mxu0 %v301
    %775 = vmatprep.subr.mxu0 %v306
    %776 = vmatpush1.msra.mxu0 %v305
    %777 = vmatprep.subr.mxu0 %v310
    %778 = vmatpush1.msra.mxu0 %v309
    %779 = vmatprep.subr.mxu0 %v314
    %780 = vmatpush1.msra.mxu0 %v313
    %781 = vmatprep.subr.mxu0 %v318
    %782 = vmatpush1.msra.mxu0 %v317
    %783 = vmatprep.subr.mxu0 %v322
    %784 = vmatpush1.msra.mxu0 %v321
    %785 = vmatprep.subr.mxu0 %v326
    %786 = vmatpush1.msra.mxu0 %v325
    %787 = vmatprep.subr.mxu0 %v330
    %788 = vmatpush1.msra.mxu0 %v329
    %789 = vmatprep.subr.mxu0 %v334
    %790 = vmatpush1.msra.mxu0 %v333
    %791 = vmatprep.subr.mxu0 %v338
    %792 = vmatpush1.msra.mxu0 %v337
    %793 = vmatprep.subr.mxu0 %v342
    %794 = vmatpush1.msra.mxu0 %v341
    %795 = vmatprep.subr.mxu0 %v346
    %796 = vmatpush1.msra.mxu0 %v345
    %797 = vmatprep.subr.mxu0 %v350
    %798 = vmatpush1.msra.mxu0 %v349
    %799 = vmatprep.subr.mxu0 %v354
    %800 = vmatpush1.msra.mxu0 %v353
    %801 = vmatprep.subr.mxu0 %v358
    %802 = vmatpush1.msra.mxu0 %v357
    %803 = vmatprep.subr.mxu0 %v362
    %804 = vmatpush1.msra.mxu0 %v361
    %805 = vmatprep.subr.mxu0 %v366
    %806 = vmatpush1.msra.mxu0 %v365
    %807 = vmatprep.subr.mxu0 %v370
    %808 = vmatpush1.msra.mxu0 %v369
    %809 = vmatprep.subr.mxu0 %v374
    %810 = vmatpush1.msra.mxu0 %v373
    %811 = vmatprep.subr.mxu0 %v378
    %812 = vmatpush1.msra.mxu0 %v377
    %813 = vmatprep.subr.mxu0 %v382
    %814 = vmatpush1.msra.mxu0 %v381
    %815 = vmatprep.subr.mxu0 %v386
    %816 = vmatpush1.msra.mxu0 %v385
    %817 = vmatprep.subr.mxu0 %v390
    %818 = vmatpush1.msra.mxu0 %v389
    %819 = vmatprep.subr.mxu0 %v394
    %820 = vmatpush1.msra.mxu0 %v393
    %821 = vmatprep.subr.mxu0 %v398
    %822 = vmatpush1.msra.mxu0 %v397
    %823 = vmatprep.subr.mxu0 %v402
    %824 = vmatpush1.msra.mxu0 %v401
    %825 = vmatprep.subr.mxu0 %v406
    %826 = vmatpush1.msra.mxu0 %v405
    %827 = vmatprep.subr.mxu0 %v410
    %828 = vmatpush1.msra.mxu0 %v409
    %829 = vmatprep.mubr.f32.mxu0 %v610
    %830 = vmatmul.mubr.f32.gmra.mrb[0].mxu0 %v596
    %v831 = vpop.f32.mrb[0].mxu0
    %v832 = vadd.f32 %v761, %v831
    %v833 = vpop.f32.mrb[0].mxu0
    %v834 = vadd.f32 %v763, %v833
    %835 = vdwg.mxu0
    %836 = vmatprep.subr.mxu0 %v414
    %837 = vmatpush1.msra.mxu0 %v413
    %838 = vmatprep.subr.mxu0 %v418
    %839 = vmatpush1.msra.mxu0 %v417
    %840 = vmatprep.subr.mxu0 %v422
    %841 = vmatpush1.msra.mxu0 %v421
    %842 = vmatprep.subr.mxu0 %v426
    %843 = vmatpush1.msra.mxu0 %v425
    %844 = vmatprep.subr.mxu0 %v430
    %845 = vmatpush1.msra.mxu0 %v429
    %846 = vmatprep.subr.mxu0 %v434
    %847 = vmatpush1.msra.mxu0 %v433
    %848 = vmatprep.subr.mxu0 %v438
    %849 = vmatpush1.msra.mxu0 %v437
    %850 = vmatprep.subr.mxu0 %v442
    %851 = vmatpush1.msra.mxu0 %v441
    %852 = vmatprep.subr.mxu0 %v446
    %853 = vmatpush1.msra.mxu0 %v445
    %854 = vmatprep.subr.mxu0 %v450
    %855 = vmatpush1.msra.mxu0 %v449
    %856 = vmatprep.subr.mxu0 %v454
    %857 = vmatpush1.msra.mxu0 %v453
    %858 = vmatprep.subr.mxu0 %v458
    %859 = vmatpush1.msra.mxu0 %v457
    %860 = vmatprep.subr.mxu0 %v462
    %861 = vmatpush1.msra.mxu0 %v461
    %862 = vmatprep.subr.mxu0 %v466
    %863 = vmatpush1.msra.mxu0 %v465
    %864 = vmatprep.subr.mxu0 %v470
    %865 = vmatpush1.msra.mxu0 %v469
    %866 = vmatprep.subr.mxu0 %v474
    %867 = vmatpush1.msra.mxu0 %v473
    %868 = vmatprep.subr.mxu0 %v478
    %869 = vmatpush1.msra.mxu0 %v477
    %870 = vmatprep.subr.mxu0 %v482
    %871 = vmatpush1.msra.mxu0 %v481
    %872 = vmatprep.subr.mxu0 %v486
    %873 = vmatpush1.msra.mxu0 %v485
    %874 = vmatprep.subr.mxu0 %v490
    %875 = vmatpush1.msra.mxu0 %v489
    %876 = vmatprep.subr.mxu0 %v494
    %877 = vmatpush1.msra.mxu0 %v493
    %878 = vmatprep.subr.mxu0 %v498
    %879 = vmatpush1.msra.mxu0 %v497
    %880 = vmatprep.subr.mxu0 %v502
    %881 = vmatpush1.msra.mxu0 %v501
    %882 = vmatprep.subr.mxu0 %v506
    %883 = vmatpush1.msra.mxu0 %v505
    %884 = vmatprep.subr.mxu0 %v510
    %885 = vmatpush1.msra.mxu0 %v509
    %886 = vmatprep.subr.mxu0 %v514
    %887 = vmatpush1.msra.mxu0 %v513
    %888 = vmatprep.subr.mxu0 %v518
    %889 = vmatpush1.msra.mxu0 %v517
    %890 = vmatprep.subr.mxu0 %v522
    %891 = vmatpush1.msra.mxu0 %v521
    %892 = vmatprep.subr.mxu0 %v526
    %893 = vmatpush1.msra.mxu0 %v525
    %894 = vmatprep.subr.mxu0 %v530
    %895 = vmatpush1.msra.mxu0 %v529
    %896 = vmatprep.subr.mxu0 %v534
    %897 = vmatpush1.msra.mxu0 %v533
    %898 = vmatprep.subr.mxu0 %v538
    %899 = vmatpush1.msra.mxu0 %v537
    %900 = vmatprep.mubr.f32.mxu0 %v614
    %901 = vmatmul.mubr.f32.gmra.mrb[0].mxu0 %v612
    %v902 = vpop.f32.mrb[0].mxu0
    %v903 = vadd.f32 %v832, %v902
    %v904 = vpop.f32.mrb[0].mxu0
    %v905 = vadd.f32 %v834, %v904
    %906 = vdwg.mxu0
    %907 = vmatprep.subr.mxu0 %v32
    %908 = vmatpush1.msra.mxu0 %v31
    %909 = vmatprep.subr.mxu0 %v36
    %910 = vmatpush1.msra.mxu0 %v35
    %911 = vmatprep.subr.mxu0 %v40
    %912 = vmatpush1.msra.mxu0 %v39
    %913 = vmatprep.subr.mxu0 %v44
    %914 = vmatpush1.msra.mxu0 %v43
    %915 = vmatprep.subr.mxu0 %v48
    %916 = vmatpush1.msra.mxu0 %v47
    %917 = vmatprep.subr.mxu0 %v52
    %918 = vmatpush1.msra.mxu0 %v51
    %919 = vmatprep.subr.mxu0 %v56
    %920 = vmatpush1.msra.mxu0 %v55
    %921 = vmatprep.subr.mxu0 %v60
    %922 = vmatpush1.msra.mxu0 %v59
    %923 = vmatprep.subr.mxu0 %v64
    %924 = vmatpush1.msra.mxu0 %v63
    %925 = vmatprep.subr.mxu0 %v68
    %926 = vmatpush1.msra.mxu0 %v67
    %927 = vmatprep.subr.mxu0 %v72
    %928 = vmatpush1.msra.mxu0 %v71
    %929 = vmatprep.subr.mxu0 %v76
    %930 = vmatpush1.msra.mxu0 %v75
    %931 = vmatprep.subr.mxu0 %v80
    %932 = vmatpush1.msra.mxu0 %v79
    %933 = vmatprep.subr.mxu0 %v84
    %934 = vmatpush1.msra.mxu0 %v83
    %935 = vmatprep.subr.mxu0 %v88
    %936 = vmatpush1.msra.mxu0 %v87
    %937 = vmatprep.subr.mxu0 %v92
    %938 = vmatpush1.msra.mxu0 %v91
    %939 = vmatprep.subr.mxu0 %v96
    %940 = vmatpush1.msra.mxu0 %v95
    %941 = vmatprep.subr.mxu0 %v100
    %942 = vmatpush1.msra.mxu0 %v99
    %943 = vmatprep.subr.mxu0 %v104
    %944 = vmatpush1.msra.mxu0 %v103
    %945 = vmatprep.subr.mxu0 %v108
    %946 = vmatpush1.msra.mxu0 %v107
    %947 = vmatprep.subr.mxu0 %v112
    %948 = vmatpush1.msra.mxu0 %v111
    %949 = vmatprep.subr.mxu0 %v116
    %950 = vmatpush1.msra.mxu0 %v115
    %951 = vmatprep.subr.mxu0 %v120
    %952 = vmatpush1.msra.mxu0 %v119
    %953 = vmatprep.subr.mxu0 %v124
    %954 = vmatpush1.msra.mxu0 %v123
    %955 = vmatprep.subr.mxu0 %v128
    %956 = vmatpush1.msra.mxu0 %v127
    %957 = vmatprep.subr.mxu0 %v132
    %958 = vmatpush1.msra.mxu0 %v131
    %959 = vmatprep.subr.mxu0 %v136
    %960 = vmatpush1.msra.mxu0 %v135
    %961 = vmatprep.subr.mxu0 %v140
    %962 = vmatpush1.msra.mxu0 %v139
    %963 = vmatprep.subr.mxu0 %v144
    %964 = vmatpush1.msra.mxu0 %v143
    %965 = vmatprep.subr.mxu0 %v148
    %966 = vmatpush1.msra.mxu0 %v147
    %967 = vmatprep.subr.mxu0 %v152
    %968 = vmatpush1.msra.mxu0 %v151
    %969 = vmatprep.subr.mxu0 %v156
    %970 = vmatpush1.msra.mxu0 %v155
    %971 = vmatprep.mubr.f32.mxu0 %v603
    %972 = vmatmul.mubr.f32.gmra.mrb[0].mxu0 %v589
    %v973 = vpop.f32.mrb[0].mxu0
    %v974 = vadd.f32 %v554, %v973
    %v975 = vpop.f32.mrb[0].mxu0
    %v976 = vadd.f32 %v558, %v975
    %977 = vdwg.mxu0
    %978 = vmatprep.subr.mxu0 %v160
    %979 = vmatpush1.msra.mxu0 %v159
    %980 = vmatprep.subr.mxu0 %v164
    %981 = vmatpush1.msra.mxu0 %v163
    %982 = vmatprep.subr.mxu0 %v168
    %983 = vmatpush1.msra.mxu0 %v167
    %984 = vmatprep.subr.mxu0 %v172
    %985 = vmatpush1.msra.mxu0 %v171
    %986 = vmatprep.subr.mxu0 %v176
    %987 = vmatpush1.msra.mxu0 %v175
    %988 = vmatprep.subr.mxu0 %v180
    %989 = vmatpush1.msra.mxu0 %v179
    %990 = vmatprep.subr.mxu0 %v184
    %991 = vmatpush1.msra.mxu0 %v183
    %992 = vmatprep.subr.mxu0 %v188
    %993 = vmatpush1.msra.mxu0 %v187
    %994 = vmatprep.subr.mxu0 %v192
    %995 = vmatpush1.msra.mxu0 %v191
    %996 = vmatprep.subr.mxu0 %v196
    %997 = vmatpush1.msra.mxu0 %v195
    %998 = vmatprep.subr.mxu0 %v200
    %999 = vmatpush1.msra.mxu0 %v199
    %1000 = vmatprep.subr.mxu0 %v204
    %1001 = vmatpush1.msra.mxu0 %v203
    %1002 = vmatprep.subr.mxu0 %v208
    %1003 = vmatpush1.msra.mxu0 %v207
    %1004 = vmatprep.subr.mxu0 %v212
    %1005 = vmatpush1.msra.mxu0 %v211
    %1006 = vmatprep.subr.mxu0 %v216
    %1007 = vmatpush1.msra.mxu0 %v215
    %1008 = vmatprep.subr.mxu0 %v220
    %1009 = vmatpush1.msra.mxu0 %v219
    %1010 = vmatprep.subr.mxu0 %v224
    %1011 = vmatpush1.msra.mxu0 %v223
    %1012 = vmatprep.subr.mxu0 %v228
    %1013 = vmatpush1.msra.mxu0 %v227
    %1014 = vmatprep.subr.mxu0 %v232
    %1015 = vmatpush1.msra.mxu0 %v231
    %1016 = vmatprep.subr.mxu0 %v236
    %1017 = vmatpush1.msra.mxu0 %v235
    %1018 = vmatprep.subr.mxu0 %v240
    %1019 = vmatpush1.msra.mxu0 %v239
    %1020 = vmatprep.subr.mxu0 %v244
    %1021 = vmatpush1.msra.mxu0 %v243
    %1022 = vmatprep.subr.mxu0 %v248
    %1023 = vmatpush1.msra.mxu0 %v247
    %1024 = vmatprep.subr.mxu0 %v252
    %1025 = vmatpush1.msra.mxu0 %v251
    %1026 = vmatprep.subr.mxu0 %v256
    %1027 = vmatpush1.msra.mxu0 %v255
    %1028 = vmatprep.subr.mxu0 %v260
    %1029 = vmatpush1.msra.mxu0 %v259
    %1030 = vmatprep.subr.mxu0 %v264
    %1031 = vmatpush1.msra.mxu0 %v263
    %1032 = vmatprep.subr.mxu0 %v268
    %1033 = vmatpush1.msra.mxu0 %v267
    %1034 = vmatprep.subr.mxu0 %v272
    %1035 = vmatpush1.msra.mxu0 %v271
    %1036 = vmatprep.subr.mxu0 %v276
    %1037 = vmatpush1.msra.mxu0 %v275
    %1038 = vmatprep.subr.mxu0 %v280
    %1039 = vmatpush1.msra.mxu0 %v279
    %1040 = vmatprep.subr.mxu0 %v284
    %1041 = vmatpush1.msra.mxu0 %v283
    %1042 = vmatprep.mubr.f32.mxu0 %v613
    %1043 = vmatmul.mubr.f32.gmra.mrb[0].mxu0 %v611
    %v1044 = vpop.f32.mrb[0].mxu0
    %v1045 = vadd.f32 %v974, %v1044
    %v1046 = vpop.f32.mrb[0].mxu0
    %v1047 = vadd.f32 %v976, %v1046
    %1048 = vdwg.mxu0
    %1049 = vmatprep.subr.mxu0 %v288
    %1050 = vmatpush1.msra.mxu0 %v287
    %1051 = vmatprep.subr.mxu0 %v292
    %1052 = vmatpush1.msra.mxu0 %v291
    %1053 = vmatprep.subr.mxu0 %v296
    %1054 = vmatpush1.msra.mxu0 %v295
    %1055 = vmatprep.subr.mxu0 %v300
    %1056 = vmatpush1.msra.mxu0 %v299
    %1057 = vmatprep.subr.mxu0 %v304
    %1058 = vmatpush1.msra.mxu0 %v303
    %1059 = vmatprep.subr.mxu0 %v308
    %1060 = vmatpush1.msra.mxu0 %v307
    %1061 = vmatprep.subr.mxu0 %v312
    %1062 = vmatpush1.msra.mxu0 %v311
    %1063 = vmatprep.subr.mxu0 %v316
    %1064 = vmatpush1.msra.mxu0 %v315
    %1065 = vmatprep.subr.mxu0 %v320
    %1066 = vmatpush1.msra.mxu0 %v319
    %1067 = vmatprep.subr.mxu0 %v324
    %1068 = vmatpush1.msra.mxu0 %v323
    %1069 = vmatprep.subr.mxu0 %v328
    %1070 = vmatpush1.msra.mxu0 %v327
    %1071 = vmatprep.subr.mxu0 %v332
    %1072 = vmatpush1.msra.mxu0 %v331
    %1073 = vmatprep.subr.mxu0 %v336
    %1074 = vmatpush1.msra.mxu0 %v335
    %1075 = vmatprep.subr.mxu0 %v340
    %1076 = vmatpush1.msra.mxu0 %v339
    %1077 = vmatprep.subr.mxu0 %v344
    %1078 = vmatpush1.msra.mxu0 %v343
    %1079 = vmatprep.subr.mxu0 %v348
    %1080 = vmatpush1.msra.mxu0 %v347
    %1081 = vmatprep.subr.mxu0 %v352
    %1082 = vmatpush1.msra.mxu0 %v351
    %1083 = vmatprep.subr.mxu0 %v356
    %1084 = vmatpush1.msra.mxu0 %v355
    %1085 = vmatprep.subr.mxu0 %v360
    %1086 = vmatpush1.msra.mxu0 %v359
    %1087 = vmatprep.subr.mxu0 %v364
    %1088 = vmatpush1.msra.mxu0 %v363
    %1089 = vmatprep.subr.mxu0 %v368
    %1090 = vmatpush1.msra.mxu0 %v367
    %1091 = vmatprep.subr.mxu0 %v372
    %1092 = vmatpush1.msra.mxu0 %v371
    %1093 = vmatprep.subr.mxu0 %v376
    %1094 = vmatpush1.msra.mxu0 %v375
    %1095 = vmatprep.subr.mxu0 %v380
    %1096 = vmatpush1.msra.mxu0 %v379
    %1097 = vmatprep.subr.mxu0 %v384
    %1098 = vmatpush1.msra.mxu0 %v383
    %1099 = vmatprep.subr.mxu0 %v388
    %1100 = vmatpush1.msra.mxu0 %v387
    %1101 = vmatprep.subr.mxu0 %v392
    %1102 = vmatpush1.msra.mxu0 %v391
    %1103 = vmatprep.subr.mxu0 %v396
    %1104 = vmatpush1.msra.mxu0 %v395
    %1105 = vmatprep.subr.mxu0 %v400
    %1106 = vmatpush1.msra.mxu0 %v399
    %1107 = vmatprep.subr.mxu0 %v404
    %1108 = vmatpush1.msra.mxu0 %v403
    %1109 = vmatprep.subr.mxu0 %v408
    %1110 = vmatpush1.msra.mxu0 %v407
    %1111 = vmatprep.subr.mxu0 %v412
    %1112 = vmatpush1.msra.mxu0 %v411
    %1113 = vmatprep.mubr.f32.mxu0 %v610
    %1114 = vmatmul.mubr.f32.gmra.mrb[0].mxu0 %v596
    %v1115 = vpop.f32.mrb[0].mxu0
    %v1116 = vadd.f32 %v1045, %v1115
    %v1117 = vpop.f32.mrb[0].mxu0
    %v1118 = vadd.f32 %v1047, %v1117
    %1119 = vdwg.mxu0
    %1120 = vmatprep.subr.mxu0 %v416
    %1121 = vmatpush1.msra.mxu0 %v415
    %1122 = vmatprep.subr.mxu0 %v420
    %1123 = vmatpush1.msra.mxu0 %v419
    %1124 = vmatprep.subr.mxu0 %v424
    %1125 = vmatpush1.msra.mxu0 %v423
    %1126 = vmatprep.subr.mxu0 %v428
    %1127 = vmatpush1.msra.mxu0 %v427
    %1128 = vmatprep.subr.mxu0 %v432
    %1129 = vmatpush1.msra.mxu0 %v431
    %1130 = vmatprep.subr.mxu0 %v436
    %1131 = vmatpush1.msra.mxu0 %v435
    %1132 = vmatprep.subr.mxu0 %v440
    %1133 = vmatpush1.msra.mxu0 %v439
    %1134 = vmatprep.subr.mxu0 %v444
    %1135 = vmatpush1.msra.mxu0 %v443
    %1136 = vmatprep.subr.mxu0 %v448
    %1137 = vmatpush1.msra.mxu0 %v447
    %1138 = vmatprep.subr.mxu0 %v452
    %1139 = vmatpush1.msra.mxu0 %v451
    %1140 = vmatprep.subr.mxu0 %v456
    %1141 = vmatpush1.msra.mxu0 %v455
    %1142 = vmatprep.subr.mxu0 %v460
    %1143 = vmatpush1.msra.mxu0 %v459
    %1144 = vmatprep.subr.mxu0 %v464
    %1145 = vmatpush1.msra.mxu0 %v463
    %1146 = vmatprep.subr.mxu0 %v468
    %1147 = vmatpush1.msra.mxu0 %v467
    %1148 = vmatprep.subr.mxu0 %v472
    %1149 = vmatpush1.msra.mxu0 %v471
    %1150 = vmatprep.subr.mxu0 %v476
    %1151 = vmatpush1.msra.mxu0 %v475
    %1152 = vmatprep.subr.mxu0 %v480
    %1153 = vmatpush1.msra.mxu0 %v479
    %1154 = vmatprep.subr.mxu0 %v484
    %1155 = vmatpush1.msra.mxu0 %v483
    %1156 = vmatprep.subr.mxu0 %v488
    %1157 = vmatpush1.msra.mxu0 %v487
    %1158 = vmatprep.subr.mxu0 %v492
    %1159 = vmatpush1.msra.mxu0 %v491
    %1160 = vmatprep.subr.mxu0 %v496
    %1161 = vmatpush1.msra.mxu0 %v495
    %1162 = vmatprep.subr.mxu0 %v500
    %1163 = vmatpush1.msra.mxu0 %v499
    %1164 = vmatprep.subr.mxu0 %v504
    %1165 = vmatpush1.msra.mxu0 %v503
    %1166 = vmatprep.subr.mxu0 %v508
    %1167 = vmatpush1.msra.mxu0 %v507
    %1168 = vmatprep.subr.mxu0 %v512
    %1169 = vmatpush1.msra.mxu0 %v511
    %1170 = vmatprep.subr.mxu0 %v516
    %1171 = vmatpush1.msra.mxu0 %v515
    %1172 = vmatprep.subr.mxu0 %v520
    %1173 = vmatpush1.msra.mxu0 %v519
    %1174 = vmatprep.subr.mxu0 %v524
    %1175 = vmatpush1.msra.mxu0 %v523
    %1176 = vmatprep.subr.mxu0 %v528
    %1177 = vmatpush1.msra.mxu0 %v527
    %1178 = vmatprep.subr.mxu0 %v532
    %1179 = vmatpush1.msra.mxu0 %v531
    %1180 = vmatprep.subr.mxu0 %v536
    %1181 = vmatpush1.msra.mxu0 %v535
    %1182 = vmatprep.subr.mxu0 %v540
    %1183 = vmatpush1.msra.mxu0 %v539
    %1184 = vmatprep.mubr.f32.mxu0 %v614
    %1185 = vmatmul.mubr.f32.gmra.mrb[0].mxu0 %v612
    %v1186 = vpop.f32.mrb[0].mxu0
    %v1187 = vadd.f32 %v1116, %v1186
    %v1188 = vpop.f32.mrb[0].mxu0
    %v1189 = vadd.f32 %v1118, %v1188
    %1190 = vdwg.mxu0
    %v1191 = vmax.f32 %v903, 0.0
    %v1192 = vmax.f32 %v905, 0.0
    %v1193 = vmax.f32 %v1187, 0.0
    %v1194 = vmax.f32 %v1189, 0.0
    %v1195 = vld [vmem:[%s3] sm:$0xff]
    %v1196 = vld [vmem:[%s3 + $0x8] sm:$0xff]
    %v1197 = vld [vmem:[%s3 + $0x10] sm:$0xff]
    %v1198 = vld [vmem:[%s3 + $0x18] sm:$0xff]
    %v1199 = vld [vmem:[%s3 + $0x20] sm:$0xff]
    %v1200 = vld [vmem:[%s3 + $0x28] sm:$0xff]
    %v1201 = vld [vmem:[%s3 + $0x30] sm:$0xff]
    %v1202 = vld [vmem:[%s3 + $0x38] sm:$0xff]
    %v1203 = vld [vmem:[%s3 + $0x40] sm:$0xff]
    %v1204 = vld [vmem:[%s3 + $0x48] sm:$0xff]
    %v1205 = vld [vmem:[%s3 + $0x50] sm:$0xff]
    %v1206 = vld [vmem:[%s3 + $0x58] sm:$0xff]
    %v1207 = vld [vmem:[%s3 + $0x60] sm:$0xff]
    %v1208 = vld [vmem:[%s3 + $0x68] sm:$0xff]
    %v1209 = vld [vmem:[%s3 + $0x70] sm:$0xff]
    %v1210 = vld [vmem:[%s3 + $0x78] sm:$0xff]
    %v1211 = vld [vmem:[%s3 + $0x80] sm:$0xff]
    %v1212 = vld [vmem:[%s3 + $0x88] sm:$0xff]
    %v1213 = vld [vmem:[%s3 + $0x90] sm:$0xff]
    %v1214 = vld [vmem:[%s3 + $0x98] sm:$0xff]
    %v1215 = vld [vmem:[%s3 + $0xa0] sm:$0xff]
    %v1216 = vld [vmem:[%s3 + $0xa8] sm:$0xff]
    %v1217 = vld [vmem:[%s3 + $0xb0] sm:$0xff]
    %v1218 = vld [vmem:[%s3 + $0xb8] sm:$0xff]
    %v1219 = vld [vmem:[%s3 + $0xc0] sm:$0xff]
    %v1220 = vld [vmem:[%s3 + $0xc8] sm:$0xff]
    %v1221 = vld [vmem:[%s3 + $0xd0] sm:$0xff]
    %v1222 = vld [vmem:[%s3 + $0xd8] sm:$0xff]
    %v1223 = vld [vmem:[%s3 + $0xe0] sm:$0xff]
    %v1224 = vld [vmem:[%s3 + $0xe8] sm:$0xff]
    %v1225 = vld [vmem:[%s3 + $0xf0] sm:$0xff]
    %v1226 = vld [vmem:[%s3 + $0xf8] sm:$0xff]
    %v1227 = vld [vmem:[%s3 + $0x100] sm:$0xff]
    %v1228 = vld [vmem:[%s3 + $0x108] sm:$0xff]
    %v1229 = vld [vmem:[%s3 + $0x110] sm:$0xff]
    %v1230 = vld [vmem:[%s3 + $0x118] sm:$0xff]
    %v1231 = vld [vmem:[%s3 + $0x120] sm:$0xff]
    %v1232 = vld [vmem:[%s3 + $0x128] sm:$0xff]
    %v1233 = vld [vmem:[%s3 + $0x130] sm:$0xff]
    %v1234 = vld [vmem:[%s3 + $0x138] sm:$0xff]
    %v1235 = vld [vmem:[%s3 + $0x140] sm:$0xff]
    %v1236 = vld [vmem:[%s3 + $0x148] sm:$0xff]
    %v1237 = vld [vmem:[%s3 + $0x150] sm:$0xff]
    %v1238 = vld [vmem:[%s3 + $0x158] sm:$0xff]
    %v1239 = vld [vmem:[%s3 + $0x160] sm:$0xff]
    %v1240 = vld [vmem:[%s3 + $0x168] sm:$0xff]
    %v1241 = vld [vmem:[%s3 + $0x170] sm:$0xff]
    %v1242 = vld [vmem:[%s3 + $0x178] sm:$0xff]
    %v1243 = vld [vmem:[%s3 + $0x180] sm:$0xff]
    %v1244 = vld [vmem:[%s3 + $0x188] sm:$0xff]
    %v1245 = vld [vmem:[%s3 + $0x190] sm:$0xff]
    %v1246 = vld [vmem:[%s3 + $0x198] sm:$0xff]
    %v1247 = vld [vmem:[%s3 + $0x1a0] sm:$0xff]
    %v1248 = vld [vmem:[%s3 + $0x1a8] sm:$0xff]
    %v1249 = vld [vmem:[%s3 + $0x1b0] sm:$0xff]
    %v1250 = vld [vmem:[%s3 + $0x1b8] sm:$0xff]
    %v1251 = vld [vmem:[%s3 + $0x1c0] sm:$0xff]
    %v1252 = vld [vmem:[%s3 + $0x1c8] sm:$0xff]
    %v1253 = vld [vmem:[%s3 + $0x1d0] sm:$0xff]
    %v1254 = vld [vmem:[%s3 + $0x1d8] sm:$0xff]
    %v1255 = vld [vmem:[%s3 + $0x1e0] sm:$0xff]
    %v1256 = vld [vmem:[%s3 + $0x1e8] sm:$0xff]
    %v1257 = vld [vmem:[%s3 + $0x1f0] sm:$0xff]
    %v1258 = vld [vmem:[%s3 + $0x1f8] sm:$0xff]
    %v1259 = vld [vmem:[%s3 + $0x200] sm:$0xff]
    %v1260 = vld [vmem:[%s3 + $0x208] sm:$0xff]
    %v1261 = vld [vmem:[%s3 + $0x210] sm:$0xff]
    %v1262 = vld [vmem:[%s3 + $0x218] sm:$0xff]
    %v1263 = vld [vmem:[%s3 + $0x220] sm:$0xff]
    %v1264 = vld [vmem:[%s3 + $0x228] sm:$0xff]
    %v1265 = vld [vmem:[%s3 + $0x230] sm:$0xff]
    %v1266 = vld [vmem:[%s3 + $0x238] sm:$0xff]
    %v1267 = vld [vmem:[%s3 + $0x240] sm:$0xff]
    %v1268 = vld [vmem:[%s3 + $0x248] sm:$0xff]
    %v1269 = vld [vmem:[%s3 + $0x250] sm:$0xff]
    %v1270 = vld [vmem:[%s3 + $0x258] sm:$0xff]
    %v1271 = vld [vmem:[%s3 + $0x260] sm:$0xff]
    %v1272 = vld [vmem:[%s3 + $0x268] sm:$0xff]
    %v1273 = vld [vmem:[%s3 + $0x270] sm:$0xff]
    %v1274 = vld [vmem:[%s3 + $0x278] sm:$0xff]
    %v1275 = vld [vmem:[%s3 + $0x280] sm:$0xff]
    %v1276 = vld [vmem:[%s3 + $0x288] sm:$0xff]
    %v1277 = vld [vmem:[%s3 + $0x290] sm:$0xff]
    %v1278 = vld [vmem:[%s3 + $0x298] sm:$0xff]
    %v1279 = vld [vmem:[%s3 + $0x2a0] sm:$0xff]
    %v1280 = vld [vmem:[%s3 + $0x2a8] sm:$0xff]
    %v1281 = vld [vmem:[%s3 + $0x2b0] sm:$0xff]
    %v1282 = vld [vmem:[%s3 + $0x2b8] sm:$0xff]
    %v1283 = vld [vmem:[%s3 + $0x2c0] sm:$0xff]
    %v1284 = vld [vmem:[%s3 + $0x2c8] sm:$0xff]
    %v1285 = vld [vmem:[%s3 + $0x2d0] sm:$0xff]
    %v1286 = vld [vmem:[%s3 + $0x2d8] sm:$0xff]
    %v1287 = vld [vmem:[%s3 + $0x2e0] sm:$0xff]
    %v1288 = vld [vmem:[%s3 + $0x2e8] sm:$0xff]
    %v1289 = vld [vmem:[%s3 + $0x2f0] sm:$0xff]
    %v1290 = vld [vmem:[%s3 + $0x2f8] sm:$0xff]
    %v1291 = vld [vmem:[%s3 + $0x300] sm:$0xff]
    %v1292 = vld [vmem:[%s3 + $0x308] sm:$0xff]
    %v1293 = vld [vmem:[%s3 + $0x310] sm:$0xff]
    %v1294 = vld [vmem:[%s3 + $0x318] sm:$0xff]
    %v1295 = vld [vmem:[%s3 + $0x320] sm:$0xff]
    %v1296 = vld [vmem:[%s3 + $0x328] sm:$0xff]
    %v1297 = vld [vmem:[%s3 + $0x330] sm:$0xff]
    %v1298 = vld [vmem:[%s3 + $0x338] sm:$0xff]
    %v1299 = vld [vmem:[%s3 + $0x340] sm:$0xff]
    %v1300 = vld [vmem:[%s3 + $0x348] sm:$0xff]
    %v1301 = vld [vmem:[%s3 + $0x350] sm:$0xff]
    %v1302 = vld [vmem:[%s3 + $0x358] sm:$0xff]
    %v1303 = vld [vmem:[%s3 + $0x360] sm:$0xff]
    %v1304 = vld [vmem:[%s3 + $0x368] sm:$0xff]
    %v1305 = vld [vmem:[%s3 + $0x370] sm:$0xff]
    %v1306 = vld [vmem:[%s3 + $0x378] sm:$0xff]
    %v1307 = vld [vmem:[%s3 + $0x380] sm:$0xff]
    %v1308 = vld [vmem:[%s3 + $0x388] sm:$0xff]
    %v1309 = vld [vmem:[%s3 + $0x390] sm:$0xff]
    %v1310 = vld [vmem:[%s3 + $0x398] sm:$0xff]
    %v1311 = vld [vmem:[%s3 + $0x3a0] sm:$0xff]
    %v1312 = vld [vmem:[%s3 + $0x3a8] sm:$0xff]
    %v1313 = vld [vmem:[%s3 + $0x3b0] sm:$0xff]
    %v1314 = vld [vmem:[%s3 + $0x3b8] sm:$0xff]
    %v1315 = vld [vmem:[%s3 + $0x3c0] sm:$0xff]
    %v1316 = vld [vmem:[%s3 + $0x3c8] sm:$0xff]
    %v1317 = vld [vmem:[%s3 + $0x3d0] sm:$0xff]
    %v1318 = vld [vmem:[%s3 + $0x3d8] sm:$0xff]
    %v1319 = vld [vmem:[%s3 + $0x3e0] sm:$0xff]
    %v1320 = vld [vmem:[%s3 + $0x3e8] sm:$0xff]
    %v1321 = vld [vmem:[%s3 + $0x3f0] sm:$0xff]
    %v1322 = vld [vmem:[%s3 + $0x3f8] sm:$0xff]
    %v1323 = vld [vmem:[%s4] sm:$0x3]
    %v1325 = vlaneseq
    %v1326 = vshrl.u32 %v1325, 7
    %v1327 = vsub.s32 0, %v1326
    %v1328 = vrot.slane %v1323, %v1327
    %v1329 = vlaneseq
    %v1330 = vshrl.u32 %v1329, 7
    %v1331 = vsub.s32 1, %v1330
    %v1332 = vrot.slane %v1323, %v1331
    %1335 = vmatprep.subr.mxu0 %v1196
    %1336 = vmatpush1.msra.mxu0 %v1195
    %1337 = vmatprep.subr.mxu0 %v1198
    %1338 = vmatpush1.msra.mxu0 %v1197
    %1339 = vmatprep.subr.mxu0 %v1200
    %1340 = vmatpush1.msra.mxu0 %v1199
    %1341 = vmatprep.subr.mxu0 %v1202
    %1342 = vmatpush1.msra.mxu0 %v1201
    %1343 = vmatprep.subr.mxu0 %v1204
    %1344 = vmatpush1.msra.mxu0 %v1203
    %1345 = vmatprep.subr.mxu0 %v1206
    %1346 = vmatpush1.msra.mxu0 %v1205
    %1347 = vmatprep.subr.mxu0 %v1208
    %1348 = vmatpush1.msra.mxu0 %v1207
    %1349 = vmatprep.subr.mxu0 %v1210
    %1350 = vmatpush1.msra.mxu0 %v1209
    %1351 = vmatprep.subr.mxu0 %v1212
    %1352 = vmatpush1.msra.mxu0 %v1211
    %1353 = vmatprep.subr.mxu0 %v1214
    %1354 = vmatpush1.msra.mxu0 %v1213
    %1355 = vmatprep.subr.mxu0 %v1216
    %1356 = vmatpush1.msra.mxu0 %v1215
    %1357 = vmatprep.subr.mxu0 %v1218
    %1358 = vmatpush1.msra.mxu0 %v1217
    %1359 = vmatprep.subr.mxu0 %v1220
    %1360 = vmatpush1.msra.mxu0 %v1219
    %1361 = vmatprep.subr.mxu0 %v1222
    %1362 = vmatpush1.msra.mxu0 %v1221
    %1363 = vmatprep.subr.mxu0 %v1224
    %1364 = vmatpush1.msra.mxu0 %v1223
    %1365 = vmatprep.subr.mxu0 %v1226
    %1366 = vmatpush1.msra.mxu0 %v1225
    %1367 = vmatprep.subr.mxu0 %v1228
    %1368 = vmatpush1.msra.mxu0 %v1227
    %1369 = vmatprep.subr.mxu0 %v1230
    %1370 = vmatpush1.msra.mxu0 %v1229
    %1371 = vmatprep.subr.mxu0 %v1232
    %1372 = vmatpush1.msra.mxu0 %v1231
    %1373 = vmatprep.subr.mxu0 %v1234
    %1374 = vmatpush1.msra.mxu0 %v1233
    %1375 = vmatprep.subr.mxu0 %v1236
    %1376 = vmatpush1.msra.mxu0 %v1235
    %1377 = vmatprep.subr.mxu0 %v1238
    %1378 = vmatpush1.msra.mxu0 %v1237
    %1379 = vmatprep.subr.mxu0 %v1240
    %1380 = vmatpush1.msra.mxu0 %v1239
    %1381 = vmatprep.subr.mxu0 %v1242
    %1382 = vmatpush1.msra.mxu0 %v1241
    %1383 = vmatprep.subr.mxu0 %v1244
    %1384 = vmatpush1.msra.mxu0 %v1243
    %1385 = vmatprep.subr.mxu0 %v1246
    %1386 = vmatpush1.msra.mxu0 %v1245
    %1387 = vmatprep.subr.mxu0 %v1248
    %1388 = vmatpush1.msra.mxu0 %v1247
    %1389 = vmatprep.subr.mxu0 %v1250
    %1390 = vmatpush1.msra.mxu0 %v1249
    %1391 = vmatprep.subr.mxu0 %v1252
    %1392 = vmatpush1.msra.mxu0 %v1251
    %1393 = vmatprep.subr.mxu0 %v1254
    %1394 = vmatpush1.msra.mxu0 %v1253
    %1395 = vmatprep.subr.mxu0 %v1256
    %1396 = vmatpush1.msra.mxu0 %v1255
    %1397 = vmatprep.subr.mxu0 %v1258
    %1398 = vmatpush1.msra.mxu0 %v1257
    %1399 = vmatprep.mubr.f32.mxu0 %v1192
    %1400 = vmatmul.mubr.f32.gmra.mrb[0].mxu0 %v1191
    %v1401 = vpop.f32.mrb[0].mxu0
    %v1402 = vadd.f32 %v1328, %v1401
    %v1403 = vpop.f32.mrb[0].mxu0
    %v1404 = vadd.f32 %v1332, %v1403
    %1405 = vdwg.mxu0
    %1406 = vmatprep.subr.mxu0 %v1260
    %1407 = vmatpush1.msra.mxu0 %v1259
    %1408 = vmatprep.subr.mxu0 %v1262
    %1409 = vmatpush1.msra.mxu0 %v1261
    %1410 = vmatprep.subr.mxu0 %v1264
    %1411 = vmatpush1.msra.mxu0 %v1263
    %1412 = vmatprep.subr.mxu0 %v1266
    %1413 = vmatpush1.msra.mxu0 %v1265
    %1414 = vmatprep.subr.mxu0 %v1268
    %1415 = vmatpush1.msra.mxu0 %v1267
    %1416 = vmatprep.subr.mxu0 %v1270
    %1417 = vmatpush1.msra.mxu0 %v1269
    %1418 = vmatprep.subr.mxu0 %v1272
    %1419 = vmatpush1.msra.mxu0 %v1271
    %1420 = vmatprep.subr.mxu0 %v1274
    %1421 = vmatpush1.msra.mxu0 %v1273
    %1422 = vmatprep.subr.mxu0 %v1276
    %1423 = vmatpush1.msra.mxu0 %v1275
    %1424 = vmatprep.subr.mxu0 %v1278
    %1425 = vmatpush1.msra.mxu0 %v1277
    %1426 = vmatprep.subr.mxu0 %v1280
    %1427 = vmatpush1.msra.mxu0 %v1279
    %1428 = vmatprep.subr.mxu0 %v1282
    %1429 = vmatpush1.msra.mxu0 %v1281
    %1430 = vmatprep.subr.mxu0 %v1284
    %1431 = vmatpush1.msra.mxu0 %v1283
    %1432 = vmatprep.subr.mxu0 %v1286
    %1433 = vmatpush1.msra.mxu0 %v1285
    %1434 = vmatprep.subr.mxu0 %v1288
    %1435 = vmatpush1.msra.mxu0 %v1287
    %1436 = vmatprep.subr.mxu0 %v1290
    %1437 = vmatpush1.msra.mxu0 %v1289
    %1438 = vmatprep.subr.mxu0 %v1292
    %1439 = vmatpush1.msra.mxu0 %v1291
    %1440 = vmatprep.subr.mxu0 %v1294
    %1441 = vmatpush1.msra.mxu0 %v1293
    %1442 = vmatprep.subr.mxu0 %v1296
    %1443 = vmatpush1.msra.mxu0 %v1295
    %1444 = vmatprep.subr.mxu0 %v1298
    %1445 = vmatpush1.msra.mxu0 %v1297
    %1446 = vmatprep.subr.mxu0 %v1300
    %1447 = vmatpush1.msra.mxu0 %v1299
    %1448 = vmatprep.subr.mxu0 %v1302
    %1449 = vmatpush1.msra.mxu0 %v1301
    %1450 = vmatprep.subr.mxu0 %v1304
    %1451 = vmatpush1.msra.mxu0 %v1303
    %1452 = vmatprep.subr.mxu0 %v1306
    %1453 = vmatpush1.msra.mxu0 %v1305
    %1454 = vmatprep.subr.mxu0 %v1308
    %1455 = vmatpush1.msra.mxu0 %v1307
    %1456 = vmatprep.subr.mxu0 %v1310
    %1457 = vmatpush1.msra.mxu0 %v1309
    %1458 = vmatprep.subr.mxu0 %v1312
    %1459 = vmatpush1.msra.mxu0 %v1311
    %1460 = vmatprep.subr.mxu0 %v1314
    %1461 = vmatpush1.msra.mxu0 %v1313
    %1462 = vmatprep.subr.mxu0 %v1316
    %1463 = vmatpush1.msra.mxu0 %v1315
    %1464 = vmatprep.subr.mxu0 %v1318
    %1465 = vmatpush1.msra.mxu0 %v1317
    %1466 = vmatprep.subr.mxu0 %v1320
    %1467 = vmatpush1.msra.mxu0 %v1319
    %1468 = vmatprep.subr.mxu0 %v1322
    %1469 = vmatpush1.msra.mxu0 %v1321
    %1470 = vmatprep.mubr.f32.mxu0 %v1194
    %1471 = vmatmul.mubr.f32.gmra.mrb[0].mxu0 %v1193
    %v1472 = vpop.f32.mrb[0].mxu0
    %v1473 = vadd.f32 %v1402, %v1472
    %v1474 = vpop.f32.mrb[0].mxu0
    %v1475 = vadd.f32 %v1404, %v1474
    %1476 = vdwg.mxu0
    %v1477 = vmax.f32 %v1473, 0.0
    %v1478 = vmax.f32 %v1475, 0.0
    %v1479 = vld [vmem:[%s5] sm:$0xff]
    %v1480 = vld [vmem:[%s5 + $0x8] sm:$0xff]
    %v1481 = vld [vmem:[%s5 + $0x10] sm:$0xff]
    %v1482 = vld [vmem:[%s5 + $0x18] sm:$0xff]
    %v1483 = vld [vmem:[%s5 + $0x20] sm:$0xff]
    %v1484 = vld [vmem:[%s5 + $0x28] sm:$0xff]
    %v1485 = vld [vmem:[%s5 + $0x30] sm:$0xff]
    %v1486 = vld [vmem:[%s5 + $0x38] sm:$0xff]
    %v1487 = vld [vmem:[%s5 + $0x40] sm:$0xff]
    %v1488 = vld [vmem:[%s5 + $0x48] sm:$0xff]
    %v1489 = vld [vmem:[%s5 + $0x50] sm:$0xff]
    %v1490 = vld [vmem:[%s5 + $0x58] sm:$0xff]
    %v1491 = vld [vmem:[%s5 + $0x60] sm:$0xff]
    %v1492 = vld [vmem:[%s5 + $0x68] sm:$0xff]
    %v1493 = vld [vmem:[%s5 + $0x70] sm:$0xff]
    %v1494 = vld [vmem:[%s5 + $0x78] sm:$0xff]
    %v1495 = vld [vmem:[%s5 + $0x80] sm:$0xff]
    %v1496 = vld [vmem:[%s5 + $0x88] sm:$0xff]
    %v1497 = vld [vmem:[%s5 + $0x90] sm:$0xff]
    %v1498 = vld [vmem:[%s5 + $0x98] sm:$0xff]
    %v1499 = vld [vmem:[%s5 + $0xa0] sm:$0xff]
    %v1500 = vld [vmem:[%s5 + $0xa8] sm:$0xff]
    %v1501 = vld [vmem:[%s5 + $0xb0] sm:$0xff]
    %v1502 = vld [vmem:[%s5 + $0xb8] sm:$0xff]
    %v1503 = vld [vmem:[%s5 + $0xc0] sm:$0xff]
    %v1504 = vld [vmem:[%s5 + $0xc8] sm:$0xff]
    %v1505 = vld [vmem:[%s5 + $0xd0] sm:$0xff]
    %v1506 = vld [vmem:[%s5 + $0xd8] sm:$0xff]
    %v1507 = vld [vmem:[%s5 + $0xe0] sm:$0xff]
    %v1508 = vld [vmem:[%s5 + $0xe8] sm:$0xff]
    %v1509 = vld [vmem:[%s5 + $0xf0] sm:$0xff]
    %v1510 = vld [vmem:[%s5 + $0xf8] sm:$0xff]
    %v1511 = vld [vmem:[%s6] sm:$0x1]
    %v1513 = vlaneseq
    %v1514 = vshrl.u32 %v1513, 7
    %v1515 = vsub.s32 0, %v1514
    %v1516 = vrot.slane %v1511, %v1515
    %1518 = vmatprep.subr.mxu0 0.0
    %1519 = vmatpush1.msra.mxu0 %v1479
    %1520 = vmatprep.subr.mxu0 0.0
    %1521 = vmatpush1.msra.mxu0 %v1480
    %1522 = vmatprep.subr.mxu0 0.0
    %1523 = vmatpush1.msra.mxu0 %v1481
    %1524 = vmatprep.subr.mxu0 0.0
    %1525 = vmatpush1.msra.mxu0 %v1482
    %1526 = vmatprep.subr.mxu0 0.0
    %1527 = vmatpush1.msra.mxu0 %v1483
    %1528 = vmatprep.subr.mxu0 0.0
    %1529 = vmatpush1.msra.mxu0 %v1484
    %1530 = vmatprep.subr.mxu0 0.0
    %1531 = vmatpush1.msra.mxu0 %v1485
    %1532 = vmatprep.subr.mxu0 0.0
    %1533 = vmatpush1.msra.mxu0 %v1486
    %1534 = vmatprep.subr.mxu0 0.0
    %1535 = vmatpush1.msra.mxu0 %v1487
    %1536 = vmatprep.subr.mxu0 0.0
    %1537 = vmatpush1.msra.mxu0 %v1488
    %1538 = vmatprep.subr.mxu0 0.0
    %1539 = vmatpush1.msra.mxu0 %v1489
    %1540 = vmatprep.subr.mxu0 0.0
    %1541 = vmatpush1.msra.mxu0 %v1490
    %1542 = vmatprep.subr.mxu0 0.0
    %1543 = vmatpush1.msra.mxu0 %v1491
    %1544 = vmatprep.subr.mxu0 0.0
    %1545 = vmatpush1.msra.mxu0 %v1492
    %1546 = vmatprep.subr.mxu0 0.0
    %1547 = vmatpush1.msra.mxu0 %v1493
    %1548 = vmatprep.subr.mxu0 0.0
    %1549 = vmatpush1.msra.mxu0 %v1494
    %1550 = vmatprep.subr.mxu0 0.0
    %1551 = vmatpush1.msra.mxu0 %v1495
    %1552 = vmatprep.subr.mxu0 0.0
    %1553 = vmatpush1.msra.mxu0 %v1496
    %1554 = vmatprep.subr.mxu0 0.0
    %1555 = vmatpush1.msra.mxu0 %v1497
    %1556 = vmatprep.subr.mxu0 0.0
    %1557 = vmatpush1.msra.mxu0 %v1498
    %1558 = vmatprep.subr.mxu0 0.0
    %1559 = vmatpush1.msra.mxu0 %v1499
    %1560 = vmatprep.subr.mxu0 0.0
    %1561 = vmatpush1.msra.mxu0 %v1500
    %1562 = vmatprep.subr.mxu0 0.0
    %1563 = vmatpush1.msra.mxu0 %v1501
    %1564 = vmatprep.subr.mxu0 0.0
    %1565 = vmatpush1.msra.mxu0 %v1502
    %1566 = vmatprep.subr.mxu0 0.0
    %1567 = vmatpush1.msra.mxu0 %v1503
    %1568 = vmatprep.subr.mxu0 0.0
    %1569 = vmatpush1.msra.mxu0 %v1504
    %1570 = vmatprep.subr.mxu0 0.0
    %1571 = vmatpush1.msra.mxu0 %v1505
    %1572 = vmatprep.subr.mxu0 0.0
    %1573 = vmatpush1.msra.mxu0 %v1506
    %1574 = vmatprep.subr.mxu0 0.0
    %1575 = vmatpush1.msra.mxu0 %v1507
    %1576 = vmatprep.subr.mxu0 0.0
    %1577 = vmatpush1.msra.mxu0 %v1508
    %1578 = vmatprep.subr.mxu0 0.0
    %1579 = vmatpush1.msra.mxu0 %v1509
    %1580 = vmatprep.subr.mxu0 0.0
    %1581 = vmatpush1.msra.mxu0 %v1510
    %1582 = vmatprep.mubr.f32.mxu0 %v1478
    %1583 = vmatmul.mubr.f32.gmra.mrb[0].mxu0 %v1477
    %v1584 = vpop.f32.mrb[0].mxu0
    %v1585 = vadd.f32 %v1516, %v1584
    %v1586 = vpop.f32.mrb[0].mxu0
    %1587 = vdwg.mxu0
    %vm1588 = vcmask 9216
    %v1589 = vsel %vm1588, %v1585, -inf
    %1590 = vmax.xlane.f32.xlu0 %v1589
    %v1591 = vpop.xlane.xlu0 %1590
    %v1592 = vsub.f32 %v1585, %v1591
    %v1593 = vmul.f32 %v1592, 1.442695
    %v1594 = vpow.pop %v1593
    %v1595 = vsel %vm1588, %v1594, 0.0
    %1596 = vadd.xlane.f32.xlu0 %v1595
    %v1597 = vpop.xlane.xlu0 %1596
    %v1598 = vlog2.pop %v1597
    %v1599 = vmul.f32 %v1598, 0.6931472
    %v1600 = vsub.f32 %v1592, %v1599
    %1601 = vst.msk [vmem:[#allocation2] sm:$0x3] %vm1588, %v1600
    // Predicated region
    $region30: #{pointnetcls_forward.7} parent=1 // pred_check
      _
    $region31: #{pointnetcls_forward.7} parent=1 // pred_check_branch
      %1603 = sbr.rel (0) target = $region33
    $region32: #{pointnetcls_forward.7} parent=1 // pred_region
      %s1605 = ssub.s32 32, 32
      %1606 = vsyncadd [#allocation3], %s1605
      %s1608 = sshll.u32 [#allocation2], 4
      %s1609 = int_to_ptr.vmem [resolvable:$true] %s1608
      %1611 = dma.vmem_to_hbm [thread:$0]  %s1609, 32, %s7, [#allocation3]
    $region33: #{pointnetcls_forward.7} parent=1 // pred_fallthru
      _
    // Predicated region
    $region34: #{pointnetcls_forward.7} parent=1 // pred_check
      _
    $region35: #{pointnetcls_forward.7} parent=1 // pred_check_branch
      %1613 = sbr.rel (0) target = $region37
    $region36: #{pointnetcls_forward.7} parent=1 // pred_region
      %1614 = dma.done [#allocation3], 32
    $region37: #{pointnetcls_forward.7} parent=1 // pred_fallthru
      _
    %1615 = vsyncpa [#allocation3], 1

</llo_original>
